<compile_context>
chip_gen: v6e
topology: v6e:2x2x1
jax: 0.10.0
libtpu: 0.0.40
codegen_flags: <defaults>
</compile_context>

<pallas_src>
import math

import jax
import jax.numpy as jnp
from jax.experimental import pallas as pl


# ----------------------------------------------------------------------------
# Fused kernel
# ----------------------------------------------------------------------------

def make_fused_kernel(num_layers, nhead, d_model, B, S):
    dh = d_model // nhead
    scale = 1.0 / math.sqrt(dh)

    def layernorm(x, g, b):
        # nn.LayerNorm over the last dim, eps=1e-5, biased variance.
        mu = jnp.mean(x, axis=-1, keepdims=True)
        var = jnp.mean(jnp.square(x - mu), axis=-1, keepdims=True)
        return (x - mu) * jax.lax.rsqrt(var + 1e-5) * g + b

    def kernel(*refs):
        # refs = [x, enc_mask, pool_mask, *flat_params, out]
        x_ref, enc_mask_ref, pool_mask_ref = refs[0], refs[1], refs[2]
        o_ref = refs[-1]
        it = iter(refs[3:-1])
        nxt = lambda: next(it)[...]

        def masked_mha(xin, mask, wq, wk, wv, bq, bk, bv, wo, bo):
            """Self-attention over the whole (B*S, D) slab, restricted by an
            additive block mask. One (R,dh)x(dh,R) MXU matmul per head; each
            head's output is accumulated straight into the out-projection."""
            q = jnp.dot(xin, wq, preferred_element_type=jnp.float32) + bq
            k = jnp.dot(xin, wk, preferred_element_type=jnp.float32) + bk
            v = jnp.dot(xin, wv, preferred_element_type=jnp.float32) + bv
            out = None
            for hd in range(nhead):
                sl = slice(hd * dh, (hd + 1) * dh)
                # scores over all rows: (R, dh) . (R, dh)^T -> (R, R)
                s = jax.lax.dot_general(
                    q[:, sl], k[:, sl], (((1,), (1,)), ((), ())),
                    preferred_element_type=jnp.float32) * scale + mask
                s = s - jnp.max(s, axis=-1, keepdims=True)
                p = jnp.exp(s)                                  # masked -> 0.0
                p = p * pl.reciprocal(jnp.sum(p, axis=-1, keepdims=True),
                                      approx=True)
                oh = jnp.dot(p, v[:, sl], preferred_element_type=jnp.float32)
                c = jnp.dot(oh, wo[sl, :], preferred_element_type=jnp.float32)
                out = c if out is None else out + c
            return out + bo

        enc_mask = enc_mask_ref[...]
        pool_mask = pool_mask_ref[...]

        # ---------------- input embedding: Linear(input_dim, d_model) -------
        we, be = nxt(), nxt()
        h = jnp.dot(x_ref[...], we, preferred_element_type=jnp.float32) + be

        # ---------------- encoder layers (pre-norm, dropout = identity) -----
        for _ in range(num_layers):
            ln1_g, ln1_b = nxt(), nxt()
            wq, wk, wv = nxt(), nxt(), nxt()
            bq, bk, bv = nxt(), nxt(), nxt()
            wo, bo = nxt(), nxt()
            ln2_g, ln2_b = nxt(), nxt()
            fw1, fb1, fw2, fb2 = nxt(), nxt(), nxt(), nxt()

            # x = x + MHA(norm1(x), norm1(x), norm1(x))   (attention over S)
            hn = layernorm(h, ln1_g, ln1_b)
            h = h + masked_mha(hn, enc_mask, wq, wk, wv, bq, bk, bv, wo, bo)

            # x = x + FeedForward(norm2(x))
            hn2 = layernorm(h, ln2_g, ln2_b)
            f = jnp.maximum(
                jnp.dot(hn2, fw1, preferred_element_type=jnp.float32) + fb1, 0.0)
            h = h + jnp.dot(f, fw2, preferred_element_type=jnp.float32) + fb2

        # ---------------- attention pooling (over the batch axis) -----------
        pwq, pwk, pwv = nxt(), nxt(), nxt()
        pbq, pbk, pbv = nxt(), nxt(), nxt()
        pwo, pbo = nxt(), nxt()
        po = masked_mha(h, pool_mask, pwq, pwk, pwv, pbq, pbk, pbv, pwo, pbo)

        # torch.max(pooled_output, dim=1).values : (B, S, D) -> (B, D)
        pooled = jnp.concatenate(
            [jnp.max(po[b * S:(b + 1) * S, :], axis=0, keepdims=True)
             for b in range(B)], axis=0)

        # ---------------- classifier head -----------------------------------
        w1, b1 = nxt(), nxt()
        rw1, rb1, rw2, rb2 = nxt(), nxt(), nxt(), nxt()
        w2, b2 = nxt(), nxt()
        w3, b3 = nxt(), nxt()

        def lrelu(z):                       # nn.LeakyReLU default slope 0.01
            return jnp.where(z > 0, z, 0.01 * z)

        c = lrelu(jnp.dot(pooled, w1, preferred_element_type=jnp.float32) + b1)
        # TODO(synk): ResidualBlock(128) is not defined in the source file;
        # assumed as x + Linear(ReLU(Linear(x))) (standard MLP residual block).
        r = jnp.maximum(
            jnp.dot(c, rw1, preferred_element_type=jnp.float32) + rb1, 0.0)
        c = c + jnp.dot(r, rw2, preferred_element_type=jnp.float32) + rb2
        c = lrelu(jnp.dot(c, w2, preferred_element_type=jnp.float32) + b2)
        # single final store (B, 1) from the fused kernel
        o_ref[...] = jnp.dot(c, w3, preferred_element_type=jnp.float32) + b3

    return kernel


# ----------------------------------------------------------------------------
# Host-side helpers (run once, outside the kernel)
# ----------------------------------------------------------------------------

def make_masks(B, S, neg=-1e30):
    """Additive attention masks over the flattened row index r = b*S + s."""
    r = jnp.arange(B * S)
    same_batch = (r[:, None] // S) == (r[None, :] // S)   # encoder: same b
    same_elem = (r[:, None] % S) == (r[None, :] % S)       # pooling: same s
    enc_mask = jnp.where(same_batch, 0.0, neg).astype(jnp.float32)
    pool_mask = jnp.where(same_elem, 0.0, neg).astype(jnp.float32)
    return enc_mask, pool_mask


def pack_params(params):
    """Flatten params to the kernel argument order, pre-transposing every
    Linear weight from PyTorch's (out, in) to (in, out) so the kernel computes
    x @ W directly (no in-kernel transposes)."""
    flat = [params["embed_w"].T, params["embed_b"]]
    for lp in params["layers"]:
        a = lp["attn"]
        flat += [lp["ln1_g"], lp["ln1_b"],
                 a["wq"].T, a["wk"].T, a["wv"].T,
                 a["bq"], a["bk"], a["bv"],
                 a["wo"].T, a["bo"],
                 lp["ln2_g"], lp["ln2_b"],
                 lp["ff_w1"].T, lp["ff_b1"], lp["ff_w2"].T, lp["ff_b2"]]
    a = params["pool_attn"]
    flat += [a["wq"].T, a["wk"].T, a["wv"].T,
             a["bq"], a["bk"], a["bv"], a["wo"].T, a["bo"]]
    c = params["cls"]
    flat += [c["w1"].T, c["b1"],
             c["rb_w1"].T, c["rb_b1"], c["rb_w2"].T, c["rb_b2"],
             c["w2"].T, c["b2"], c["w3"].T, c["b3"]]
    return [jnp.asarray(p, jnp.float32) for p in flat]


def sets_transformer_forward(flat_params, x, x_coords, *, nhead, num_layers):
    del x_coords  # accepted but never used, exactly like the PyTorch forward
    B, S, input_dim = x.shape
    d_model = flat_params[0].shape[1]      # embed weight stored (in, out)
    enc_mask, pool_mask = make_masks(B, S)
    x2 = x.reshape(B * S, input_dim)
    kernel = make_fused_kernel(num_layers, nhead, d_model, B, S)
    return pl.pallas_call(
        kernel,
        out_shape=jax.ShapeDtypeStruct((B, 1), jnp.float32),
    )(x2, enc_mask, pool_mask, *flat_params)


# ----------------------------------------------------------------------------
# Deterministic parameter init (synthetic; shapes follow the module __init__,
# stored in PyTorch convention and pre-transposed by pack_params)
# ----------------------------------------------------------------------------

def init_params(key, input_dim, d_model, num_layers):
    keys = iter(jax.random.split(key, 256))

    def w(shape, scale=0.08):
        return (scale * jax.random.normal(next(keys), shape)).astype(jnp.float32)

    def mha_params(d):
        return dict(wq=w((d, d)), wk=w((d, d)), wv=w((d, d)),
                    bq=w((1, d), 0.02), bk=w((1, d), 0.02), bv=w((1, d), 0.02),
                    wo=w((d, d)), bo=w((1, d), 0.02))

    layers = []
    for _ in range(num_layers):
        layers.append(dict(
            ln1_g=jnp.ones((1, d_model), jnp.float32),
            ln1_b=jnp.zeros((1, d_model), jnp.float32),
            ln2_g=jnp.ones((1, d_model), jnp.float32),
            ln2_b=jnp.zeros((1, d_model), jnp.float32),
            attn=mha_params(d_model),
            ff_w1=w((d_model, d_model)), ff_b1=w((1, d_model), 0.02),
            ff_w2=w((d_model, d_model)), ff_b2=w((1, d_model), 0.02),
        ))
        # NOTE: each layer also owns an unused `cross_attention`; it never runs
        # in forward, so its parameters are not materialized here.

    cls = dict(
        w1=w((128, d_model)), b1=w((1, 128), 0.02),
        rb_w1=w((128, 128)), rb_b1=w((1, 128), 0.02),
        rb_w2=w((128, 128)), rb_b2=w((1, 128), 0.02),
        w2=w((64, 128)), b2=w((1, 64), 0.02),
        w3=w((1, 64)), b3=w((1, 1), 0.02),
    )
    return dict(
        embed_w=w((d_model, input_dim)), embed_b=w((1, d_model), 0.02),
        layers=layers,
        pool_attn=mha_params(d_model),
        cls=cls,
    )


# ----------------------------------------------------------------------------
# main
# ----------------------------------------------------------------------------

if __name__ == "__main__":
    INPUT_DIM, D_MODEL, NHEAD, NUM_LAYERS = 6, 32, 4, 2
    B, S = 2, 8

    root = jax.random.PRNGKey(0)
    k_params, k_x, k_coords = jax.random.split(root, 3)

    params = init_params(k_params, INPUT_DIM, D_MODEL, NUM_LAYERS)
    flat_params = pack_params(params)          # pre-transpose weights once
    x = jax.random.normal(k_x, (B, S, INPUT_DIM), jnp.float32)
    x_coords = jax.random.normal(k_coords, (B, S, 2), jnp.float32)  # unused

    out = sets_transformer_forward(flat_params, x, x_coords,
                                   nhead=NHEAD, num_layers=NUM_LAYERS)
    out = jax.block_until_ready(out)

    assert out.shape == (B, 1), out.shape
    assert bool(jnp.all(jnp.isfinite(out)))
    print("KERNEL_OK")
</pallas_src>

<mosaic_0001>
module attributes {stable_mosaic.version = 11 : i64} {
  func.func @kernel(%arg0: memref<16x6xf32, #tpu.memory_space<vmem>>, %arg1: memref<16x16xf32, #tpu.memory_space<vmem>>, %arg2: memref<16x16xf32, #tpu.memory_space<vmem>>, %arg3: memref<6x32xf32, #tpu.memory_space<vmem>>, %arg4: memref<1x32xf32, #tpu.memory_space<vmem>>, %arg5: memref<1x32xf32, #tpu.memory_space<vmem>>, %arg6: memref<1x32xf32, #tpu.memory_space<vmem>>, %arg7: memref<32x32xf32, #tpu.memory_space<vmem>>, %arg8: memref<32x32xf32, #tpu.memory_space<vmem>>, %arg9: memref<32x32xf32, #tpu.memory_space<vmem>>, %arg10: memref<1x32xf32, #tpu.memory_space<vmem>>, %arg11: memref<1x32xf32, #tpu.memory_space<vmem>>, %arg12: memref<1x32xf32, #tpu.memory_space<vmem>>, %arg13: memref<32x32xf32, #tpu.memory_space<vmem>>, %arg14: memref<1x32xf32, #tpu.memory_space<vmem>>, %arg15: memref<1x32xf32, #tpu.memory_space<vmem>>, %arg16: memref<1x32xf32, #tpu.memory_space<vmem>>, %arg17: memref<32x32xf32, #tpu.memory_space<vmem>>, %arg18: memref<1x32xf32, #tpu.memory_space<vmem>>, %arg19: memref<32x32xf32, #tpu.memory_space<vmem>>, %arg20: memref<1x32xf32, #tpu.memory_space<vmem>>, %arg21: memref<1x32xf32, #tpu.memory_space<vmem>>, %arg22: memref<1x32xf32, #tpu.memory_space<vmem>>, %arg23: memref<32x32xf32, #tpu.memory_space<vmem>>, %arg24: memref<32x32xf32, #tpu.memory_space<vmem>>, %arg25: memref<32x32xf32, #tpu.memory_space<vmem>>, %arg26: memref<1x32xf32, #tpu.memory_space<vmem>>, %arg27: memref<1x32xf32, #tpu.memory_space<vmem>>, %arg28: memref<1x32xf32, #tpu.memory_space<vmem>>, %arg29: memref<32x32xf32, #tpu.memory_space<vmem>>, %arg30: memref<1x32xf32, #tpu.memory_space<vmem>>, %arg31: memref<1x32xf32, #tpu.memory_space<vmem>>, %arg32: memref<1x32xf32, #tpu.memory_space<vmem>>, %arg33: memref<32x32xf32, #tpu.memory_space<vmem>>, %arg34: memref<1x32xf32, #tpu.memory_space<vmem>>, %arg35: memref<32x32xf32, #tpu.memory_space<vmem>>, %arg36: memref<1x32xf32, #tpu.memory_space<vmem>>, %arg37: memref<32x32xf32, #tpu.memory_space<vmem>>, %arg38: memref<32x32xf32, #tpu.memory_space<vmem>>, %arg39: memref<32x32xf32, #tpu.memory_space<vmem>>, %arg40: memref<1x32xf32, #tpu.memory_space<vmem>>, %arg41: memref<1x32xf32, #tpu.memory_space<vmem>>, %arg42: memref<1x32xf32, #tpu.memory_space<vmem>>, %arg43: memref<32x32xf32, #tpu.memory_space<vmem>>, %arg44: memref<1x32xf32, #tpu.memory_space<vmem>>, %arg45: memref<32x128xf32, #tpu.memory_space<vmem>>, %arg46: memref<1x128xf32, #tpu.memory_space<vmem>>, %arg47: memref<128x128xf32, #tpu.memory_space<vmem>>, %arg48: memref<1x128xf32, #tpu.memory_space<vmem>>, %arg49: memref<128x128xf32, #tpu.memory_space<vmem>>, %arg50: memref<1x128xf32, #tpu.memory_space<vmem>>, %arg51: memref<128x64xf32, #tpu.memory_space<vmem>>, %arg52: memref<1x64xf32, #tpu.memory_space<vmem>>, %arg53: memref<64x1xf32, #tpu.memory_space<vmem>>, %arg54: memref<1x1xf32, #tpu.memory_space<vmem>>, %arg55: memref<2x1xf32, #tpu.memory_space<vmem>>) attributes {dimension_semantics = [], scalar_prefetch = 0 : i64, scratch_operands = 0 : i64, tpu.core_type = #tpu.core_type<tc>} {
    %c0 = arith.constant 0 : index
    %c0_0 = arith.constant 0 : index
    %0 = vector.load %arg1[%c0, %c0_0] : memref<16x16xf32, #tpu.memory_space<vmem>>, vector<16x16xf32>
    %c0_1 = arith.constant 0 : index
    %c0_2 = arith.constant 0 : index
    %1 = vector.load %arg2[%c0_1, %c0_2] : memref<16x16xf32, #tpu.memory_space<vmem>>, vector<16x16xf32>
    %c0_3 = arith.constant 0 : index
    %c0_4 = arith.constant 0 : index
    %2 = vector.load %arg3[%c0_3, %c0_4] : memref<6x32xf32, #tpu.memory_space<vmem>>, vector<6x32xf32>
    %c0_5 = arith.constant 0 : index
    %c0_6 = arith.constant 0 : index
    %3 = vector.load %arg4[%c0_5, %c0_6] : memref<1x32xf32, #tpu.memory_space<vmem>>, vector<1x32xf32>
    %c0_7 = arith.constant 0 : index
    %c0_8 = arith.constant 0 : index
    %4 = vector.load %arg0[%c0_7, %c0_8] : memref<16x6xf32, #tpu.memory_space<vmem>>, vector<16x6xf32>
    %cst = arith.constant dense<0.000000e+00> : vector<16x32xf32>
    %5 = tpu.matmul %4, %2, %cst {dimension_numbers = #tpu.dot_dimension_numbers<[1], [0], [0], [1], [0, 0, 1, 1], [], []>} : vector<16x6xf32>, vector<6x32xf32>, vector<16x32xf32> -> vector<16x32xf32>
    %6 = vector.broadcast %3 : vector<1x32xf32> to vector<16x32xf32>
    %7 = arith.addf %5, %6 : vector<16x32xf32>
    %c0_9 = arith.constant 0 : index
    %c0_10 = arith.constant 0 : index
    %8 = vector.load %arg5[%c0_9, %c0_10] : memref<1x32xf32, #tpu.memory_space<vmem>>, vector<1x32xf32>
    %c0_11 = arith.constant 0 : index
    %c0_12 = arith.constant 0 : index
    %9 = vector.load %arg6[%c0_11, %c0_12] : memref<1x32xf32, #tpu.memory_space<vmem>>, vector<1x32xf32>
    %c0_13 = arith.constant 0 : index
    %c0_14 = arith.constant 0 : index
    %10 = vector.load %arg7[%c0_13, %c0_14] : memref<32x32xf32, #tpu.memory_space<vmem>>, vector<32x32xf32>
    %c0_15 = arith.constant 0 : index
    %c0_16 = arith.constant 0 : index
    %11 = vector.load %arg8[%c0_15, %c0_16] : memref<32x32xf32, #tpu.memory_space<vmem>>, vector<32x32xf32>
    %c0_17 = arith.constant 0 : index
    %c0_18 = arith.constant 0 : index
    %12 = vector.load %arg9[%c0_17, %c0_18] : memref<32x32xf32, #tpu.memory_space<vmem>>, vector<32x32xf32>
    %c0_19 = arith.constant 0 : index
    %c0_20 = arith.constant 0 : index
    %13 = vector.load %arg10[%c0_19, %c0_20] : memref<1x32xf32, #tpu.memory_space<vmem>>, vector<1x32xf32>
    %c0_21 = arith.constant 0 : index
    %c0_22 = arith.constant 0 : index
    %14 = vector.load %arg11[%c0_21, %c0_22] : memref<1x32xf32, #tpu.memory_space<vmem>>, vector<1x32xf32>
    %c0_23 = arith.constant 0 : index
    %c0_24 = arith.constant 0 : index
    %15 = vector.load %arg12[%c0_23, %c0_24] : memref<1x32xf32, #tpu.memory_space<vmem>>, vector<1x32xf32>
    %c0_25 = arith.constant 0 : index
    %c0_26 = arith.constant 0 : index
    %16 = vector.load %arg13[%c0_25, %c0_26] : memref<32x32xf32, #tpu.memory_space<vmem>>, vector<32x32xf32>
    %c0_27 = arith.constant 0 : index
    %c0_28 = arith.constant 0 : index
    %17 = vector.load %arg14[%c0_27, %c0_28] : memref<1x32xf32, #tpu.memory_space<vmem>>, vector<1x32xf32>
    %c0_29 = arith.constant 0 : index
    %c0_30 = arith.constant 0 : index
    %18 = vector.load %arg15[%c0_29, %c0_30] : memref<1x32xf32, #tpu.memory_space<vmem>>, vector<1x32xf32>
    %c0_31 = arith.constant 0 : index
    %c0_32 = arith.constant 0 : index
    %19 = vector.load %arg16[%c0_31, %c0_32] : memref<1x32xf32, #tpu.memory_space<vmem>>, vector<1x32xf32>
    %c0_33 = arith.constant 0 : index
    %c0_34 = arith.constant 0 : index
    %20 = vector.load %arg17[%c0_33, %c0_34] : memref<32x32xf32, #tpu.memory_space<vmem>>, vector<32x32xf32>
    %c0_35 = arith.constant 0 : index
    %c0_36 = arith.constant 0 : index
    %21 = vector.load %arg18[%c0_35, %c0_36] : memref<1x32xf32, #tpu.memory_space<vmem>>, vector<1x32xf32>
    %c0_37 = arith.constant 0 : index
    %c0_38 = arith.constant 0 : index
    %22 = vector.load %arg19[%c0_37, %c0_38] : memref<32x32xf32, #tpu.memory_space<vmem>>, vector<32x32xf32>
    %c0_39 = arith.constant 0 : index
    %c0_40 = arith.constant 0 : index
    %23 = vector.load %arg20[%c0_39, %c0_40] : memref<1x32xf32, #tpu.memory_space<vmem>>, vector<1x32xf32>
    %cst_41 = arith.constant dense<0.000000e+00> : vector<16xf32>
    %24 = vector.multi_reduction <add>, %7, %cst_41 [1] : vector<16x32xf32> to vector<16xf32>
    %25 = vector.shape_cast %24 : vector<16xf32> to vector<16x1xf32>
    %cst_42 = arith.constant 3.200000e+01 : f32
    %26 = vector.broadcast %cst_42 : f32 to vector<16x1xf32>
    %27 = arith.divf %25, %26 : vector<16x1xf32>
    %28 = vector.broadcast %27 : vector<16x1xf32> to vector<16x32xf32>
    %29 = arith.subf %7, %28 : vector<16x32xf32>
    %30 = arith.mulf %29, %29 : vector<16x32xf32>
    %cst_43 = arith.constant dense<0.000000e+00> : vector<16xf32>
    %31 = vector.multi_reduction <add>, %30, %cst_43 [1] : vector<16x32xf32> to vector<16xf32>
    %32 = vector.shape_cast %31 : vector<16xf32> to vector<16x1xf32>
    %cst_44 = arith.constant 3.200000e+01 : f32
    %33 = vector.broadcast %cst_44 : f32 to vector<16x1xf32>
    %34 = arith.divf %32, %33 : vector<16x1xf32>
    %35 = vector.broadcast %27 : vector<16x1xf32> to vector<16x32xf32>
    %36 = arith.subf %7, %35 : vector<16x32xf32>
    %cst_45 = arith.constant 9.99999974E-6 : f32
    %37 = vector.broadcast %cst_45 : f32 to vector<16x1xf32>
    %38 = arith.addf %34, %37 : vector<16x1xf32>
    %39 = math.rsqrt %38 : vector<16x1xf32>
    %40 = vector.broadcast %39 : vector<16x1xf32> to vector<16x32xf32>
    %41 = arith.mulf %36, %40 : vector<16x32xf32>
    %42 = vector.broadcast %8 : vector<1x32xf32> to vector<16x32xf32>
    %43 = arith.mulf %41, %42 : vector<16x32xf32>
    %44 = vector.broadcast %9 : vector<1x32xf32> to vector<16x32xf32>
    %45 = arith.addf %43, %44 : vector<16x32xf32>
    %cst_46 = arith.constant dense<0.000000e+00> : vector<16x32xf32>
    %46 = tpu.matmul %45, %10, %cst_46 {dimension_numbers = #tpu.dot_dimension_numbers<[1], [0], [0], [1], [0, 0, 1, 1], [], []>} : vector<16x32xf32>, vector<32x32xf32>, vector<16x32xf32> -> vector<16x32xf32>
    %47 = vector.broadcast %13 : vector<1x32xf32> to vector<16x32xf32>
    %48 = arith.addf %46, %47 : vector<16x32xf32>
    %cst_47 = arith.constant dense<0.000000e+00> : vector<16x32xf32>
    %49 = tpu.matmul %45, %11, %cst_47 {dimension_numbers = #tpu.dot_dimension_numbers<[1], [0], [0], [1], [0, 0, 1, 1], [], []>} : vector<16x32xf32>, vector<32x32xf32>, vector<16x32xf32> -> vector<16x32xf32>
    %50 = vector.broadcast %14 : vector<1x32xf32> to vector<16x32xf32>
    %51 = arith.addf %49, %50 : vector<16x32xf32>
    %cst_48 = arith.constant dense<0.000000e+00> : vector<16x32xf32>
    %52 = tpu.matmul %45, %12, %cst_48 {dimension_numbers = #tpu.dot_dimension_numbers<[1], [0], [0], [1], [0, 0, 1, 1], [], []>} : vector<16x32xf32>, vector<32x32xf32>, vector<16x32xf32> -> vector<16x32xf32>
    %53 = vector.broadcast %15 : vector<1x32xf32> to vector<16x32xf32>
    %54 = arith.addf %52, %53 : vector<16x32xf32>
    %55 = vector.extract_strided_slice %48 {offsets = [0, 0], sizes = [16, 8], strides = [1, 1]} : vector<16x32xf32> to vector<16x8xf32>
    %56 = vector.extract_strided_slice %51 {offsets = [0, 0], sizes = [16, 8], strides = [1, 1]} : vector<16x32xf32> to vector<16x8xf32>
    %cst_49 = arith.constant dense<0.000000e+00> : vector<16x16xf32>
    %57 = tpu.matmul %55, %56, %cst_49 {dimension_numbers = #tpu.dot_dimension_numbers<[1], [1], [0], [0], [0, 0, 1, 0], [], []>} : vector<16x8xf32>, vector<16x8xf32>, vector<16x16xf32> -> vector<16x16xf32>
    %cst_50 = arith.constant 0.353553385 : f32
    %58 = vector.broadcast %cst_50 : f32 to vector<16x16xf32>
    %59 = arith.mulf %57, %58 : vector<16x16xf32>
    %60 = arith.addf %59, %0 : vector<16x16xf32>
    %cst_51 = arith.constant dense<0xFF800000> : vector<16xf32>
    %61 = vector.multi_reduction <maximumf>, %60, %cst_51 [1] : vector<16x16xf32> to vector<16xf32>
    %62 = vector.shape_cast %61 : vector<16xf32> to vector<16x1xf32>
    %63 = vector.broadcast %62 : vector<16x1xf32> to vector<16x16xf32>
    %64 = arith.subf %60, %63 : vector<16x16xf32>
    %65 = math.exp %64 : vector<16x16xf32>
    %cst_52 = arith.constant dense<0.000000e+00> : vector<16xf32>
    %66 = vector.multi_reduction <add>, %65, %cst_52 [1] : vector<16x16xf32> to vector<16xf32>
    %67 = vector.shape_cast %66 : vector<16xf32> to vector<16x1xf32>
    %68 = tpu.reciprocal %67 {approx = true} : vector<16x1xf32> -> vector<16x1xf32>
    %69 = vector.broadcast %68 : vector<16x1xf32> to vector<16x16xf32>
    %70 = arith.mulf %65, %69 : vector<16x16xf32>
    %71 = vector.extract_strided_slice %54 {offsets = [0, 0], sizes = [16, 8], strides = [1, 1]} : vector<16x32xf32> to vector<16x8xf32>
    %cst_53 = arith.constant dense<0.000000e+00> : vector<16x8xf32>
    %72 = tpu.matmul %70, %71, %cst_53 {dimension_numbers = #tpu.dot_dimension_numbers<[1], [0], [0], [1], [0, 0, 1, 1], [], []>} : vector<16x16xf32>, vector<16x8xf32>, vector<16x8xf32> -> vector<16x8xf32>
    %73 = vector.extract_strided_slice %16 {offsets = [0, 0], sizes = [8, 32], strides = [1, 1]} : vector<32x32xf32> to vector<8x32xf32>
    %cst_54 = arith.constant dense<0.000000e+00> : vector<16x32xf32>
    %74 = tpu.matmul %72, %73, %cst_54 {dimension_numbers = #tpu.dot_dimension_numbers<[1], [0], [0], [1], [0, 0, 1, 1], [], []>} : vector<16x8xf32>, vector<8x32xf32>, vector<16x32xf32> -> vector<16x32xf32>
    %75 = vector.extract_strided_slice %48 {offsets = [0, 8], sizes = [16, 8], strides = [1, 1]} : vector<16x32xf32> to vector<16x8xf32>
    %76 = vector.extract_strided_slice %51 {offsets = [0, 8], sizes = [16, 8], strides = [1, 1]} : vector<16x32xf32> to vector<16x8xf32>
    %cst_55 = arith.constant dense<0.000000e+00> : vector<16x16xf32>
    %77 = tpu.matmul %75, %76, %cst_55 {dimension_numbers = #tpu.dot_dimension_numbers<[1], [1], [0], [0], [0, 0, 1, 0], [], []>} : vector<16x8xf32>, vector<16x8xf32>, vector<16x16xf32> -> vector<16x16xf32>
    %cst_56 = arith.constant 0.353553385 : f32
    %78 = vector.broadcast %cst_56 : f32 to vector<16x16xf32>
    %79 = arith.mulf %77, %78 : vector<16x16xf32>
    %80 = arith.addf %79, %0 : vector<16x16xf32>
    %cst_57 = arith.constant dense<0xFF800000> : vector<16xf32>
    %81 = vector.multi_reduction <maximumf>, %80, %cst_57 [1] : vector<16x16xf32> to vector<16xf32>
    %82 = vector.shape_cast %81 : vector<16xf32> to vector<16x1xf32>
    %83 = vector.broadcast %82 : vector<16x1xf32> to vector<16x16xf32>
    %84 = arith.subf %80, %83 : vector<16x16xf32>
    %85 = math.exp %84 : vector<16x16xf32>
    %cst_58 = arith.constant dense<0.000000e+00> : vector<16xf32>
    %86 = vector.multi_reduction <add>, %85, %cst_58 [1] : vector<16x16xf32> to vector<16xf32>
    %87 = vector.shape_cast %86 : vector<16xf32> to vector<16x1xf32>
    %88 = tpu.reciprocal %87 {approx = true} : vector<16x1xf32> -> vector<16x1xf32>
    %89 = vector.broadcast %88 : vector<16x1xf32> to vector<16x16xf32>
    %90 = arith.mulf %85, %89 : vector<16x16xf32>
    %91 = vector.extract_strided_slice %54 {offsets = [0, 8], sizes = [16, 8], strides = [1, 1]} : vector<16x32xf32> to vector<16x8xf32>
    %cst_59 = arith.constant dense<0.000000e+00> : vector<16x8xf32>
    %92 = tpu.matmul %90, %91, %cst_59 {dimension_numbers = #tpu.dot_dimension_numbers<[1], [0], [0], [1], [0, 0, 1, 1], [], []>} : vector<16x16xf32>, vector<16x8xf32>, vector<16x8xf32> -> vector<16x8xf32>
    %93 = vector.extract_strided_slice %16 {offsets = [8, 0], sizes = [8, 32], strides = [1, 1]} : vector<32x32xf32> to vector<8x32xf32>
    %cst_60 = arith.constant dense<0.000000e+00> : vector<16x32xf32>
    %94 = tpu.matmul %92, %93, %cst_60 {dimension_numbers = #tpu.dot_dimension_numbers<[1], [0], [0], [1], [0, 0, 1, 1], [], []>} : vector<16x8xf32>, vector<8x32xf32>, vector<16x32xf32> -> vector<16x32xf32>
    %95 = arith.addf %74, %94 : vector<16x32xf32>
    %96 = vector.extract_strided_slice %48 {offsets = [0, 16], sizes = [16, 8], strides = [1, 1]} : vector<16x32xf32> to vector<16x8xf32>
    %97 = vector.extract_strided_slice %51 {offsets = [0, 16], sizes = [16, 8], strides = [1, 1]} : vector<16x32xf32> to vector<16x8xf32>
    %cst_61 = arith.constant dense<0.000000e+00> : vector<16x16xf32>
    %98 = tpu.matmul %96, %97, %cst_61 {dimension_numbers = #tpu.dot_dimension_numbers<[1], [1], [0], [0], [0, 0, 1, 0], [], []>} : vector<16x8xf32>, vector<16x8xf32>, vector<16x16xf32> -> vector<16x16xf32>
    %cst_62 = arith.constant 0.353553385 : f32
    %99 = vector.broadcast %cst_62 : f32 to vector<16x16xf32>
    %100 = arith.mulf %98, %99 : vector<16x16xf32>
    %101 = arith.addf %100, %0 : vector<16x16xf32>
    %cst_63 = arith.constant dense<0xFF800000> : vector<16xf32>
    %102 = vector.multi_reduction <maximumf>, %101, %cst_63 [1] : vector<16x16xf32> to vector<16xf32>
    %103 = vector.shape_cast %102 : vector<16xf32> to vector<16x1xf32>
    %104 = vector.broadcast %103 : vector<16x1xf32> to vector<16x16xf32>
    %105 = arith.subf %101, %104 : vector<16x16xf32>
    %106 = math.exp %105 : vector<16x16xf32>
    %cst_64 = arith.constant dense<0.000000e+00> : vector<16xf32>
    %107 = vector.multi_reduction <add>, %106, %cst_64 [1] : vector<16x16xf32> to vector<16xf32>
    %108 = vector.shape_cast %107 : vector<16xf32> to vector<16x1xf32>
    %109 = tpu.reciprocal %108 {approx = true} : vector<16x1xf32> -> vector<16x1xf32>
    %110 = vector.broadcast %109 : vector<16x1xf32> to vector<16x16xf32>
    %111 = arith.mulf %106, %110 : vector<16x16xf32>
    %112 = vector.extract_strided_slice %54 {offsets = [0, 16], sizes = [16, 8], strides = [1, 1]} : vector<16x32xf32> to vector<16x8xf32>
    %cst_65 = arith.constant dense<0.000000e+00> : vector<16x8xf32>
    %113 = tpu.matmul %111, %112, %cst_65 {dimension_numbers = #tpu.dot_dimension_numbers<[1], [0], [0], [1], [0, 0, 1, 1], [], []>} : vector<16x16xf32>, vector<16x8xf32>, vector<16x8xf32> -> vector<16x8xf32>
    %114 = vector.extract_strided_slice %16 {offsets = [16, 0], sizes = [8, 32], strides = [1, 1]} : vector<32x32xf32> to vector<8x32xf32>
    %cst_66 = arith.constant dense<0.000000e+00> : vector<16x32xf32>
    %115 = tpu.matmul %113, %114, %cst_66 {dimension_numbers = #tpu.dot_dimension_numbers<[1], [0], [0], [1], [0, 0, 1, 1], [], []>} : vector<16x8xf32>, vector<8x32xf32>, vector<16x32xf32> -> vector<16x32xf32>
    %116 = arith.addf %95, %115 : vector<16x32xf32>
    %117 = vector.extract_strided_slice %48 {offsets = [0, 24], sizes = [16, 8], strides = [1, 1]} : vector<16x32xf32> to vector<16x8xf32>
    %118 = vector.extract_strided_slice %51 {offsets = [0, 24], sizes = [16, 8], strides = [1, 1]} : vector<16x32xf32> to vector<16x8xf32>
    %cst_67 = arith.constant dense<0.000000e+00> : vector<16x16xf32>
    %119 = tpu.matmul %117, %118, %cst_67 {dimension_numbers = #tpu.dot_dimension_numbers<[1], [1], [0], [0], [0, 0, 1, 0], [], []>} : vector<16x8xf32>, vector<16x8xf32>, vector<16x16xf32> -> vector<16x16xf32>
    %cst_68 = arith.constant 0.353553385 : f32
    %120 = vector.broadcast %cst_68 : f32 to vector<16x16xf32>
    %121 = arith.mulf %119, %120 : vector<16x16xf32>
    %122 = arith.addf %121, %0 : vector<16x16xf32>
    %cst_69 = arith.constant dense<0xFF800000> : vector<16xf32>
    %123 = vector.multi_reduction <maximumf>, %122, %cst_69 [1] : vector<16x16xf32> to vector<16xf32>
    %124 = vector.shape_cast %123 : vector<16xf32> to vector<16x1xf32>
    %125 = vector.broadcast %124 : vector<16x1xf32> to vector<16x16xf32>
    %126 = arith.subf %122, %125 : vector<16x16xf32>
    %127 = math.exp %126 : vector<16x16xf32>
    %cst_70 = arith.constant dense<0.000000e+00> : vector<16xf32>
    %128 = vector.multi_reduction <add>, %127, %cst_70 [1] : vector<16x16xf32> to vector<16xf32>
    %129 = vector.shape_cast %128 : vector<16xf32> to vector<16x1xf32>
    %130 = tpu.reciprocal %129 {approx = true} : vector<16x1xf32> -> vector<16x1xf32>
    %131 = vector.broadcast %130 : vector<16x1xf32> to vector<16x16xf32>
    %132 = arith.mulf %127, %131 : vector<16x16xf32>
    %133 = vector.extract_strided_slice %54 {offsets = [0, 24], sizes = [16, 8], strides = [1, 1]} : vector<16x32xf32> to vector<16x8xf32>
    %cst_71 = arith.constant dense<0.000000e+00> : vector<16x8xf32>
    %134 = tpu.matmul %132, %133, %cst_71 {dimension_numbers = #tpu.dot_dimension_numbers<[1], [0], [0], [1], [0, 0, 1, 1], [], []>} : vector<16x16xf32>, vector<16x8xf32>, vector<16x8xf32> -> vector<16x8xf32>
    %135 = vector.extract_strided_slice %16 {offsets = [24, 0], sizes = [8, 32], strides = [1, 1]} : vector<32x32xf32> to vector<8x32xf32>
    %cst_72 = arith.constant dense<0.000000e+00> : vector<16x32xf32>
    %136 = tpu.matmul %134, %135, %cst_72 {dimension_numbers = #tpu.dot_dimension_numbers<[1], [0], [0], [1], [0, 0, 1, 1], [], []>} : vector<16x8xf32>, vector<8x32xf32>, vector<16x32xf32> -> vector<16x32xf32>
    %137 = arith.addf %116, %136 : vector<16x32xf32>
    %138 = vector.broadcast %17 : vector<1x32xf32> to vector<16x32xf32>
    %139 = arith.addf %137, %138 : vector<16x32xf32>
    %140 = arith.addf %7, %139 : vector<16x32xf32>
    %cst_73 = arith.constant dense<0.000000e+00> : vector<16xf32>
    %141 = vector.multi_reduction <add>, %140, %cst_73 [1] : vector<16x32xf32> to vector<16xf32>
    %142 = vector.shape_cast %141 : vector<16xf32> to vector<16x1xf32>
    %cst_74 = arith.constant 3.200000e+01 : f32
    %143 = vector.broadcast %cst_74 : f32 to vector<16x1xf32>
    %144 = arith.divf %142, %143 : vector<16x1xf32>
    %145 = vector.broadcast %144 : vector<16x1xf32> to vector<16x32xf32>
    %146 = arith.subf %140, %145 : vector<16x32xf32>
    %147 = arith.mulf %146, %146 : vector<16x32xf32>
    %cst_75 = arith.constant dense<0.000000e+00> : vector<16xf32>
    %148 = vector.multi_reduction <add>, %147, %cst_75 [1] : vector<16x32xf32> to vector<16xf32>
    %149 = vector.shape_cast %148 : vector<16xf32> to vector<16x1xf32>
    %cst_76 = arith.constant 3.200000e+01 : f32
    %150 = vector.broadcast %cst_76 : f32 to vector<16x1xf32>
    %151 = arith.divf %149, %150 : vector<16x1xf32>
    %152 = vector.broadcast %144 : vector<16x1xf32> to vector<16x32xf32>
    %153 = arith.subf %140, %152 : vector<16x32xf32>
    %cst_77 = arith.constant 9.99999974E-6 : f32
    %154 = vector.broadcast %cst_77 : f32 to vector<16x1xf32>
    %155 = arith.addf %151, %154 : vector<16x1xf32>
    %156 = math.rsqrt %155 : vector<16x1xf32>
    %157 = vector.broadcast %156 : vector<16x1xf32> to vector<16x32xf32>
    %158 = arith.mulf %153, %157 : vector<16x32xf32>
    %159 = vector.broadcast %18 : vector<1x32xf32> to vector<16x32xf32>
    %160 = arith.mulf %158, %159 : vector<16x32xf32>
    %161 = vector.broadcast %19 : vector<1x32xf32> to vector<16x32xf32>
    %162 = arith.addf %160, %161 : vector<16x32xf32>
    %cst_78 = arith.constant dense<0.000000e+00> : vector<16x32xf32>
    %163 = tpu.matmul %162, %20, %cst_78 {dimension_numbers = #tpu.dot_dimension_numbers<[1], [0], [0], [1], [0, 0, 1, 1], [], []>} : vector<16x32xf32>, vector<32x32xf32>, vector<16x32xf32> -> vector<16x32xf32>
    %164 = vector.broadcast %21 : vector<1x32xf32> to vector<16x32xf32>
    %165 = arith.addf %163, %164 : vector<16x32xf32>
    %cst_79 = arith.constant 0.000000e+00 : f32
    %166 = vector.broadcast %cst_79 : f32 to vector<16x32xf32>
    %167 = arith.maximumf %165, %166 : vector<16x32xf32>
    %cst_80 = arith.constant dense<0.000000e+00> : vector<16x32xf32>
    %168 = tpu.matmul %167, %22, %cst_80 {dimension_numbers = #tpu.dot_dimension_numbers<[1], [0], [0], [1], [0, 0, 1, 1], [], []>} : vector<16x32xf32>, vector<32x32xf32>, vector<16x32xf32> -> vector<16x32xf32>
    %169 = arith.addf %140, %168 : vector<16x32xf32>
    %170 = vector.broadcast %23 : vector<1x32xf32> to vector<16x32xf32>
    %171 = arith.addf %169, %170 : vector<16x32xf32>
    %c0_81 = arith.constant 0 : index
    %c0_82 = arith.constant 0 : index
    %172 = vector.load %arg21[%c0_81, %c0_82] : memref<1x32xf32, #tpu.memory_space<vmem>>, vector<1x32xf32>
    %c0_83 = arith.constant 0 : index
    %c0_84 = arith.constant 0 : index
    %173 = vector.load %arg22[%c0_83, %c0_84] : memref<1x32xf32, #tpu.memory_space<vmem>>, vector<1x32xf32>
    %c0_85 = arith.constant 0 : index
    %c0_86 = arith.constant 0 : index
    %174 = vector.load %arg23[%c0_85, %c0_86] : memref<32x32xf32, #tpu.memory_space<vmem>>, vector<32x32xf32>
    %c0_87 = arith.constant 0 : index
    %c0_88 = arith.constant 0 : index
    %175 = vector.load %arg24[%c0_87, %c0_88] : memref<32x32xf32, #tpu.memory_space<vmem>>, vector<32x32xf32>
    %c0_89 = arith.constant 0 : index
    %c0_90 = arith.constant 0 : index
    %176 = vector.load %arg25[%c0_89, %c0_90] : memref<32x32xf32, #tpu.memory_space<vmem>>, vector<32x32xf32>
    %c0_91 = arith.constant 0 : index
    %c0_92 = arith.constant 0 : index
    %177 = vector.load %arg26[%c0_91, %c0_92] : memref<1x32xf32, #tpu.memory_space<vmem>>, vector<1x32xf32>
    %c0_93 = arith.constant 0 : index
    %c0_94 = arith.constant 0 : index
    %178 = vector.load %arg27[%c0_93, %c0_94] : memref<1x32xf32, #tpu.memory_space<vmem>>, vector<1x32xf32>
    %c0_95 = arith.constant 0 : index
    %c0_96 = arith.constant 0 : index
    %179 = vector.load %arg28[%c0_95, %c0_96] : memref<1x32xf32, #tpu.memory_space<vmem>>, vector<1x32xf32>
    %c0_97 = arith.constant 0 : index
    %c0_98 = arith.constant 0 : index
    %180 = vector.load %arg29[%c0_97, %c0_98] : memref<32x32xf32, #tpu.memory_space<vmem>>, vector<32x32xf32>
    %c0_99 = arith.constant 0 : index
    %c0_100 = arith.constant 0 : index
    %181 = vector.load %arg30[%c0_99, %c0_100] : memref<1x32xf32, #tpu.memory_space<vmem>>, vector<1x32xf32>
    %c0_101 = arith.constant 0 : index
    %c0_102 = arith.constant 0 : index
    %182 = vector.load %arg31[%c0_101, %c0_102] : memref<1x32xf32, #tpu.memory_space<vmem>>, vector<1x32xf32>
    %c0_103 = arith.constant 0 : index
    %c0_104 = arith.constant 0 : index
    %183 = vector.load %arg32[%c0_103, %c0_104] : memref<1x32xf32, #tpu.memory_space<vmem>>, vector<1x32xf32>
    %c0_105 = arith.constant 0 : index
    %c0_106 = arith.constant 0 : index
    %184 = vector.load %arg33[%c0_105, %c0_106] : memref<32x32xf32, #tpu.memory_space<vmem>>, vector<32x32xf32>
    %c0_107 = arith.constant 0 : index
    %c0_108 = arith.constant 0 : index
    %185 = vector.load %arg34[%c0_107, %c0_108] : memref<1x32xf32, #tpu.memory_space<vmem>>, vector<1x32xf32>
    %c0_109 = arith.constant 0 : index
    %c0_110 = arith.constant 0 : index
    %186 = vector.load %arg35[%c0_109, %c0_110] : memref<32x32xf32, #tpu.memory_space<vmem>>, vector<32x32xf32>
    %c0_111 = arith.constant 0 : index
    %c0_112 = arith.constant 0 : index
    %187 = vector.load %arg36[%c0_111, %c0_112] : memref<1x32xf32, #tpu.memory_space<vmem>>, vector<1x32xf32>
    %cst_113 = arith.constant dense<0.000000e+00> : vector<16xf32>
    %188 = vector.multi_reduction <add>, %171, %cst_113 [1] : vector<16x32xf32> to vector<16xf32>
    %189 = vector.shape_cast %188 : vector<16xf32> to vector<16x1xf32>
    %cst_114 = arith.constant 3.200000e+01 : f32
    %190 = vector.broadcast %cst_114 : f32 to vector<16x1xf32>
    %191 = arith.divf %189, %190 : vector<16x1xf32>
    %192 = vector.broadcast %191 : vector<16x1xf32> to vector<16x32xf32>
    %193 = arith.subf %171, %192 : vector<16x32xf32>
    %194 = arith.mulf %193, %193 : vector<16x32xf32>
    %cst_115 = arith.constant dense<0.000000e+00> : vector<16xf32>
    %195 = vector.multi_reduction <add>, %194, %cst_115 [1] : vector<16x32xf32> to vector<16xf32>
    %196 = vector.shape_cast %195 : vector<16xf32> to vector<16x1xf32>
    %cst_116 = arith.constant 3.200000e+01 : f32
    %197 = vector.broadcast %cst_116 : f32 to vector<16x1xf32>
    %198 = arith.divf %196, %197 : vector<16x1xf32>
    %199 = vector.broadcast %191 : vector<16x1xf32> to vector<16x32xf32>
    %200 = arith.subf %171, %199 : vector<16x32xf32>
    %cst_117 = arith.constant 9.99999974E-6 : f32
    %201 = vector.broadcast %cst_117 : f32 to vector<16x1xf32>
    %202 = arith.addf %198, %201 : vector<16x1xf32>
    %203 = math.rsqrt %202 : vector<16x1xf32>
    %204 = vector.broadcast %203 : vector<16x1xf32> to vector<16x32xf32>
    %205 = arith.mulf %200, %204 : vector<16x32xf32>
    %206 = vector.broadcast %172 : vector<1x32xf32> to vector<16x32xf32>
    %207 = arith.mulf %205, %206 : vector<16x32xf32>
    %208 = vector.broadcast %173 : vector<1x32xf32> to vector<16x32xf32>
    %209 = arith.addf %207, %208 : vector<16x32xf32>
    %cst_118 = arith.constant dense<0.000000e+00> : vector<16x32xf32>
    %210 = tpu.matmul %209, %174, %cst_118 {dimension_numbers = #tpu.dot_dimension_numbers<[1], [0], [0], [1], [0, 0, 1, 1], [], []>} : vector<16x32xf32>, vector<32x32xf32>, vector<16x32xf32> -> vector<16x32xf32>
    %211 = vector.broadcast %177 : vector<1x32xf32> to vector<16x32xf32>
    %212 = arith.addf %210, %211 : vector<16x32xf32>
    %cst_119 = arith.constant dense<0.000000e+00> : vector<16x32xf32>
    %213 = tpu.matmul %209, %175, %cst_119 {dimension_numbers = #tpu.dot_dimension_numbers<[1], [0], [0], [1], [0, 0, 1, 1], [], []>} : vector<16x32xf32>, vector<32x32xf32>, vector<16x32xf32> -> vector<16x32xf32>
    %214 = vector.broadcast %178 : vector<1x32xf32> to vector<16x32xf32>
    %215 = arith.addf %213, %214 : vector<16x32xf32>
    %cst_120 = arith.constant dense<0.000000e+00> : vector<16x32xf32>
    %216 = tpu.matmul %209, %176, %cst_120 {dimension_numbers = #tpu.dot_dimension_numbers<[1], [0], [0], [1], [0, 0, 1, 1], [], []>} : vector<16x32xf32>, vector<32x32xf32>, vector<16x32xf32> -> vector<16x32xf32>
    %217 = vector.broadcast %179 : vector<1x32xf32> to vector<16x32xf32>
    %218 = arith.addf %216, %217 : vector<16x32xf32>
    %219 = vector.extract_strided_slice %212 {offsets = [0, 0], sizes = [16, 8], strides = [1, 1]} : vector<16x32xf32> to vector<16x8xf32>
    %220 = vector.extract_strided_slice %215 {offsets = [0, 0], sizes = [16, 8], strides = [1, 1]} : vector<16x32xf32> to vector<16x8xf32>
    %cst_121 = arith.constant dense<0.000000e+00> : vector<16x16xf32>
    %221 = tpu.matmul %219, %220, %cst_121 {dimension_numbers = #tpu.dot_dimension_numbers<[1], [1], [0], [0], [0, 0, 1, 0], [], []>} : vector<16x8xf32>, vector<16x8xf32>, vector<16x16xf32> -> vector<16x16xf32>
    %cst_122 = arith.constant 0.353553385 : f32
    %222 = vector.broadcast %cst_122 : f32 to vector<16x16xf32>
    %223 = arith.mulf %221, %222 : vector<16x16xf32>
    %224 = arith.addf %223, %0 : vector<16x16xf32>
    %cst_123 = arith.constant dense<0xFF800000> : vector<16xf32>
    %225 = vector.multi_reduction <maximumf>, %224, %cst_123 [1] : vector<16x16xf32> to vector<16xf32>
    %226 = vector.shape_cast %225 : vector<16xf32> to vector<16x1xf32>
    %227 = vector.broadcast %226 : vector<16x1xf32> to vector<16x16xf32>
    %228 = arith.subf %224, %227 : vector<16x16xf32>
    %229 = math.exp %228 : vector<16x16xf32>
    %cst_124 = arith.constant dense<0.000000e+00> : vector<16xf32>
    %230 = vector.multi_reduction <add>, %229, %cst_124 [1] : vector<16x16xf32> to vector<16xf32>
    %231 = vector.shape_cast %230 : vector<16xf32> to vector<16x1xf32>
    %232 = tpu.reciprocal %231 {approx = true} : vector<16x1xf32> -> vector<16x1xf32>
    %233 = vector.broadcast %232 : vector<16x1xf32> to vector<16x16xf32>
    %234 = arith.mulf %229, %233 : vector<16x16xf32>
    %235 = vector.extract_strided_slice %218 {offsets = [0, 0], sizes = [16, 8], strides = [1, 1]} : vector<16x32xf32> to vector<16x8xf32>
    %cst_125 = arith.constant dense<0.000000e+00> : vector<16x8xf32>
    %236 = tpu.matmul %234, %235, %cst_125 {dimension_numbers = #tpu.dot_dimension_numbers<[1], [0], [0], [1], [0, 0, 1, 1], [], []>} : vector<16x16xf32>, vector<16x8xf32>, vector<16x8xf32> -> vector<16x8xf32>
    %237 = vector.extract_strided_slice %180 {offsets = [0, 0], sizes = [8, 32], strides = [1, 1]} : vector<32x32xf32> to vector<8x32xf32>
    %cst_126 = arith.constant dense<0.000000e+00> : vector<16x32xf32>
    %238 = tpu.matmul %236, %237, %cst_126 {dimension_numbers = #tpu.dot_dimension_numbers<[1], [0], [0], [1], [0, 0, 1, 1], [], []>} : vector<16x8xf32>, vector<8x32xf32>, vector<16x32xf32> -> vector<16x32xf32>
    %239 = vector.extract_strided_slice %212 {offsets = [0, 8], sizes = [16, 8], strides = [1, 1]} : vector<16x32xf32> to vector<16x8xf32>
    %240 = vector.extract_strided_slice %215 {offsets = [0, 8], sizes = [16, 8], strides = [1, 1]} : vector<16x32xf32> to vector<16x8xf32>
    %cst_127 = arith.constant dense<0.000000e+00> : vector<16x16xf32>
    %241 = tpu.matmul %239, %240, %cst_127 {dimension_numbers = #tpu.dot_dimension_numbers<[1], [1], [0], [0], [0, 0, 1, 0], [], []>} : vector<16x8xf32>, vector<16x8xf32>, vector<16x16xf32> -> vector<16x16xf32>
    %cst_128 = arith.constant 0.353553385 : f32
    %242 = vector.broadcast %cst_128 : f32 to vector<16x16xf32>
    %243 = arith.mulf %241, %242 : vector<16x16xf32>
    %244 = arith.addf %243, %0 : vector<16x16xf32>
    %cst_129 = arith.constant dense<0xFF800000> : vector<16xf32>
    %245 = vector.multi_reduction <maximumf>, %244, %cst_129 [1] : vector<16x16xf32> to vector<16xf32>
    %246 = vector.shape_cast %245 : vector<16xf32> to vector<16x1xf32>
    %247 = vector.broadcast %246 : vector<16x1xf32> to vector<16x16xf32>
    %248 = arith.subf %244, %247 : vector<16x16xf32>
    %249 = math.exp %248 : vector<16x16xf32>
    %cst_130 = arith.constant dense<0.000000e+00> : vector<16xf32>
    %250 = vector.multi_reduction <add>, %249, %cst_130 [1] : vector<16x16xf32> to vector<16xf32>
    %251 = vector.shape_cast %250 : vector<16xf32> to vector<16x1xf32>
    %252 = tpu.reciprocal %251 {approx = true} : vector<16x1xf32> -> vector<16x1xf32>
    %253 = vector.broadcast %252 : vector<16x1xf32> to vector<16x16xf32>
    %254 = arith.mulf %249, %253 : vector<16x16xf32>
    %255 = vector.extract_strided_slice %218 {offsets = [0, 8], sizes = [16, 8], strides = [1, 1]} : vector<16x32xf32> to vector<16x8xf32>
    %cst_131 = arith.constant dense<0.000000e+00> : vector<16x8xf32>
    %256 = tpu.matmul %254, %255, %cst_131 {dimension_numbers = #tpu.dot_dimension_numbers<[1], [0], [0], [1], [0, 0, 1, 1], [], []>} : vector<16x16xf32>, vector<16x8xf32>, vector<16x8xf32> -> vector<16x8xf32>
    %257 = vector.extract_strided_slice %180 {offsets = [8, 0], sizes = [8, 32], strides = [1, 1]} : vector<32x32xf32> to vector<8x32xf32>
    %cst_132 = arith.constant dense<0.000000e+00> : vector<16x32xf32>
    %258 = tpu.matmul %256, %257, %cst_132 {dimension_numbers = #tpu.dot_dimension_numbers<[1], [0], [0], [1], [0, 0, 1, 1], [], []>} : vector<16x8xf32>, vector<8x32xf32>, vector<16x32xf32> -> vector<16x32xf32>
    %259 = arith.addf %238, %258 : vector<16x32xf32>
    %260 = vector.extract_strided_slice %212 {offsets = [0, 16], sizes = [16, 8], strides = [1, 1]} : vector<16x32xf32> to vector<16x8xf32>
    %261 = vector.extract_strided_slice %215 {offsets = [0, 16], sizes = [16, 8], strides = [1, 1]} : vector<16x32xf32> to vector<16x8xf32>
    %cst_133 = arith.constant dense<0.000000e+00> : vector<16x16xf32>
    %262 = tpu.matmul %260, %261, %cst_133 {dimension_numbers = #tpu.dot_dimension_numbers<[1], [1], [0], [0], [0, 0, 1, 0], [], []>} : vector<16x8xf32>, vector<16x8xf32>, vector<16x16xf32> -> vector<16x16xf32>
    %cst_134 = arith.constant 0.353553385 : f32
    %263 = vector.broadcast %cst_134 : f32 to vector<16x16xf32>
    %264 = arith.mulf %262, %263 : vector<16x16xf32>
    %265 = arith.addf %264, %0 : vector<16x16xf32>
    %cst_135 = arith.constant dense<0xFF800000> : vector<16xf32>
    %266 = vector.multi_reduction <maximumf>, %265, %cst_135 [1] : vector<16x16xf32> to vector<16xf32>
    %267 = vector.shape_cast %266 : vector<16xf32> to vector<16x1xf32>
    %268 = vector.broadcast %267 : vector<16x1xf32> to vector<16x16xf32>
    %269 = arith.subf %265, %268 : vector<16x16xf32>
    %270 = math.exp %269 : vector<16x16xf32>
    %cst_136 = arith.constant dense<0.000000e+00> : vector<16xf32>
    %271 = vector.multi_reduction <add>, %270, %cst_136 [1] : vector<16x16xf32> to vector<16xf32>
    %272 = vector.shape_cast %271 : vector<16xf32> to vector<16x1xf32>
    %273 = tpu.reciprocal %272 {approx = true} : vector<16x1xf32> -> vector<16x1xf32>
    %274 = vector.broadcast %273 : vector<16x1xf32> to vector<16x16xf32>
    %275 = arith.mulf %270, %274 : vector<16x16xf32>
    %276 = vector.extract_strided_slice %218 {offsets = [0, 16], sizes = [16, 8], strides = [1, 1]} : vector<16x32xf32> to vector<16x8xf32>
    %cst_137 = arith.constant dense<0.000000e+00> : vector<16x8xf32>
    %277 = tpu.matmul %275, %276, %cst_137 {dimension_numbers = #tpu.dot_dimension_numbers<[1], [0], [0], [1], [0, 0, 1, 1], [], []>} : vector<16x16xf32>, vector<16x8xf32>, vector<16x8xf32> -> vector<16x8xf32>
    %278 = vector.extract_strided_slice %180 {offsets = [16, 0], sizes = [8, 32], strides = [1, 1]} : vector<32x32xf32> to vector<8x32xf32>
    %cst_138 = arith.constant dense<0.000000e+00> : vector<16x32xf32>
    %279 = tpu.matmul %277, %278, %cst_138 {dimension_numbers = #tpu.dot_dimension_numbers<[1], [0], [0], [1], [0, 0, 1, 1], [], []>} : vector<16x8xf32>, vector<8x32xf32>, vector<16x32xf32> -> vector<16x32xf32>
    %280 = arith.addf %259, %279 : vector<16x32xf32>
    %281 = vector.extract_strided_slice %212 {offsets = [0, 24], sizes = [16, 8], strides = [1, 1]} : vector<16x32xf32> to vector<16x8xf32>
    %282 = vector.extract_strided_slice %215 {offsets = [0, 24], sizes = [16, 8], strides = [1, 1]} : vector<16x32xf32> to vector<16x8xf32>
    %cst_139 = arith.constant dense<0.000000e+00> : vector<16x16xf32>
    %283 = tpu.matmul %281, %282, %cst_139 {dimension_numbers = #tpu.dot_dimension_numbers<[1], [1], [0], [0], [0, 0, 1, 0], [], []>} : vector<16x8xf32>, vector<16x8xf32>, vector<16x16xf32> -> vector<16x16xf32>
    %cst_140 = arith.constant 0.353553385 : f32
    %284 = vector.broadcast %cst_140 : f32 to vector<16x16xf32>
    %285 = arith.mulf %283, %284 : vector<16x16xf32>
    %286 = arith.addf %285, %0 : vector<16x16xf32>
    %cst_141 = arith.constant dense<0xFF800000> : vector<16xf32>
    %287 = vector.multi_reduction <maximumf>, %286, %cst_141 [1] : vector<16x16xf32> to vector<16xf32>
    %288 = vector.shape_cast %287 : vector<16xf32> to vector<16x1xf32>
    %289 = vector.broadcast %288 : vector<16x1xf32> to vector<16x16xf32>
    %290 = arith.subf %286, %289 : vector<16x16xf32>
    %291 = math.exp %290 : vector<16x16xf32>
    %cst_142 = arith.constant dense<0.000000e+00> : vector<16xf32>
    %292 = vector.multi_reduction <add>, %291, %cst_142 [1] : vector<16x16xf32> to vector<16xf32>
    %293 = vector.shape_cast %292 : vector<16xf32> to vector<16x1xf32>
    %294 = tpu.reciprocal %293 {approx = true} : vector<16x1xf32> -> vector<16x1xf32>
    %295 = vector.broadcast %294 : vector<16x1xf32> to vector<16x16xf32>
    %296 = arith.mulf %291, %295 : vector<16x16xf32>
    %297 = vector.extract_strided_slice %218 {offsets = [0, 24], sizes = [16, 8], strides = [1, 1]} : vector<16x32xf32> to vector<16x8xf32>
    %cst_143 = arith.constant dense<0.000000e+00> : vector<16x8xf32>
    %298 = tpu.matmul %296, %297, %cst_143 {dimension_numbers = #tpu.dot_dimension_numbers<[1], [0], [0], [1], [0, 0, 1, 1], [], []>} : vector<16x16xf32>, vector<16x8xf32>, vector<16x8xf32> -> vector<16x8xf32>
    %299 = vector.extract_strided_slice %180 {offsets = [24, 0], sizes = [8, 32], strides = [1, 1]} : vector<32x32xf32> to vector<8x32xf32>
    %cst_144 = arith.constant dense<0.000000e+00> : vector<16x32xf32>
    %300 = tpu.matmul %298, %299, %cst_144 {dimension_numbers = #tpu.dot_dimension_numbers<[1], [0], [0], [1], [0, 0, 1, 1], [], []>} : vector<16x8xf32>, vector<8x32xf32>, vector<16x32xf32> -> vector<16x32xf32>
    %301 = arith.addf %280, %300 : vector<16x32xf32>
    %302 = vector.broadcast %181 : vector<1x32xf32> to vector<16x32xf32>
    %303 = arith.addf %301, %302 : vector<16x32xf32>
    %304 = arith.addf %171, %303 : vector<16x32xf32>
    %cst_145 = arith.constant dense<0.000000e+00> : vector<16xf32>
    %305 = vector.multi_reduction <add>, %304, %cst_145 [1] : vector<16x32xf32> to vector<16xf32>
    %306 = vector.shape_cast %305 : vector<16xf32> to vector<16x1xf32>
    %cst_146 = arith.constant 3.200000e+01 : f32
    %307 = vector.broadcast %cst_146 : f32 to vector<16x1xf32>
    %308 = arith.divf %306, %307 : vector<16x1xf32>
    %309 = vector.broadcast %308 : vector<16x1xf32> to vector<16x32xf32>
    %310 = arith.subf %304, %309 : vector<16x32xf32>
    %311 = arith.mulf %310, %310 : vector<16x32xf32>
    %cst_147 = arith.constant dense<0.000000e+00> : vector<16xf32>
    %312 = vector.multi_reduction <add>, %311, %cst_147 [1] : vector<16x32xf32> to vector<16xf32>
    %313 = vector.shape_cast %312 : vector<16xf32> to vector<16x1xf32>
    %cst_148 = arith.constant 3.200000e+01 : f32
    %314 = vector.broadcast %cst_148 : f32 to vector<16x1xf32>
    %315 = arith.divf %313, %314 : vector<16x1xf32>
    %316 = vector.broadcast %308 : vector<16x1xf32> to vector<16x32xf32>
    %317 = arith.subf %304, %316 : vector<16x32xf32>
    %cst_149 = arith.constant 9.99999974E-6 : f32
    %318 = vector.broadcast %cst_149 : f32 to vector<16x1xf32>
    %319 = arith.addf %315, %318 : vector<16x1xf32>
    %320 = math.rsqrt %319 : vector<16x1xf32>
    %321 = vector.broadcast %320 : vector<16x1xf32> to vector<16x32xf32>
    %322 = arith.mulf %317, %321 : vector<16x32xf32>
    %323 = vector.broadcast %182 : vector<1x32xf32> to vector<16x32xf32>
    %324 = arith.mulf %322, %323 : vector<16x32xf32>
    %325 = vector.broadcast %183 : vector<1x32xf32> to vector<16x32xf32>
    %326 = arith.addf %324, %325 : vector<16x32xf32>
    %cst_150 = arith.constant dense<0.000000e+00> : vector<16x32xf32>
    %327 = tpu.matmul %326, %184, %cst_150 {dimension_numbers = #tpu.dot_dimension_numbers<[1], [0], [0], [1], [0, 0, 1, 1], [], []>} : vector<16x32xf32>, vector<32x32xf32>, vector<16x32xf32> -> vector<16x32xf32>
    %328 = vector.broadcast %185 : vector<1x32xf32> to vector<16x32xf32>
    %329 = arith.addf %327, %328 : vector<16x32xf32>
    %cst_151 = arith.constant 0.000000e+00 : f32
    %330 = vector.broadcast %cst_151 : f32 to vector<16x32xf32>
    %331 = arith.maximumf %329, %330 : vector<16x32xf32>
    %cst_152 = arith.constant dense<0.000000e+00> : vector<16x32xf32>
    %332 = tpu.matmul %331, %186, %cst_152 {dimension_numbers = #tpu.dot_dimension_numbers<[1], [0], [0], [1], [0, 0, 1, 1], [], []>} : vector<16x32xf32>, vector<32x32xf32>, vector<16x32xf32> -> vector<16x32xf32>
    %333 = arith.addf %304, %332 : vector<16x32xf32>
    %334 = vector.broadcast %187 : vector<1x32xf32> to vector<16x32xf32>
    %335 = arith.addf %333, %334 : vector<16x32xf32>
    %c0_153 = arith.constant 0 : index
    %c0_154 = arith.constant 0 : index
    %336 = vector.load %arg37[%c0_153, %c0_154] : memref<32x32xf32, #tpu.memory_space<vmem>>, vector<32x32xf32>
    %c0_155 = arith.constant 0 : index
    %c0_156 = arith.constant 0 : index
    %337 = vector.load %arg38[%c0_155, %c0_156] : memref<32x32xf32, #tpu.memory_space<vmem>>, vector<32x32xf32>
    %c0_157 = arith.constant 0 : index
    %c0_158 = arith.constant 0 : index
    %338 = vector.load %arg39[%c0_157, %c0_158] : memref<32x32xf32, #tpu.memory_space<vmem>>, vector<32x32xf32>
    %c0_159 = arith.constant 0 : index
    %c0_160 = arith.constant 0 : index
    %339 = vector.load %arg40[%c0_159, %c0_160] : memref<1x32xf32, #tpu.memory_space<vmem>>, vector<1x32xf32>
    %c0_161 = arith.constant 0 : index
    %c0_162 = arith.constant 0 : index
    %340 = vector.load %arg41[%c0_161, %c0_162] : memref<1x32xf32, #tpu.memory_space<vmem>>, vector<1x32xf32>
    %c0_163 = arith.constant 0 : index
    %c0_164 = arith.constant 0 : index
    %341 = vector.load %arg42[%c0_163, %c0_164] : memref<1x32xf32, #tpu.memory_space<vmem>>, vector<1x32xf32>
    %c0_165 = arith.constant 0 : index
    %c0_166 = arith.constant 0 : index
    %342 = vector.load %arg43[%c0_165, %c0_166] : memref<32x32xf32, #tpu.memory_space<vmem>>, vector<32x32xf32>
    %c0_167 = arith.constant 0 : index
    %c0_168 = arith.constant 0 : index
    %343 = vector.load %arg44[%c0_167, %c0_168] : memref<1x32xf32, #tpu.memory_space<vmem>>, vector<1x32xf32>
    %cst_169 = arith.constant dense<0.000000e+00> : vector<16x32xf32>
    %344 = tpu.matmul %335, %336, %cst_169 {dimension_numbers = #tpu.dot_dimension_numbers<[1], [0], [0], [1], [0, 0, 1, 1], [], []>} : vector<16x32xf32>, vector<32x32xf32>, vector<16x32xf32> -> vector<16x32xf32>
    %345 = vector.broadcast %339 : vector<1x32xf32> to vector<16x32xf32>
    %346 = arith.addf %344, %345 : vector<16x32xf32>
    %cst_170 = arith.constant dense<0.000000e+00> : vector<16x32xf32>
    %347 = tpu.matmul %335, %337, %cst_170 {dimension_numbers = #tpu.dot_dimension_numbers<[1], [0], [0], [1], [0, 0, 1, 1], [], []>} : vector<16x32xf32>, vector<32x32xf32>, vector<16x32xf32> -> vector<16x32xf32>
    %348 = vector.broadcast %340 : vector<1x32xf32> to vector<16x32xf32>
    %349 = arith.addf %347, %348 : vector<16x32xf32>
    %cst_171 = arith.constant dense<0.000000e+00> : vector<16x32xf32>
    %350 = tpu.matmul %335, %338, %cst_171 {dimension_numbers = #tpu.dot_dimension_numbers<[1], [0], [0], [1], [0, 0, 1, 1], [], []>} : vector<16x32xf32>, vector<32x32xf32>, vector<16x32xf32> -> vector<16x32xf32>
    %351 = vector.broadcast %341 : vector<1x32xf32> to vector<16x32xf32>
    %352 = arith.addf %350, %351 : vector<16x32xf32>
    %353 = vector.extract_strided_slice %346 {offsets = [0, 0], sizes = [16, 8], strides = [1, 1]} : vector<16x32xf32> to vector<16x8xf32>
    %354 = vector.extract_strided_slice %349 {offsets = [0, 0], sizes = [16, 8], strides = [1, 1]} : vector<16x32xf32> to vector<16x8xf32>
    %cst_172 = arith.constant dense<0.000000e+00> : vector<16x16xf32>
    %355 = tpu.matmul %353, %354, %cst_172 {dimension_numbers = #tpu.dot_dimension_numbers<[1], [1], [0], [0], [0, 0, 1, 0], [], []>} : vector<16x8xf32>, vector<16x8xf32>, vector<16x16xf32> -> vector<16x16xf32>
    %cst_173 = arith.constant 0.353553385 : f32
    %356 = vector.broadcast %cst_173 : f32 to vector<16x16xf32>
    %357 = arith.mulf %355, %356 : vector<16x16xf32>
    %358 = arith.addf %357, %1 : vector<16x16xf32>
    %cst_174 = arith.constant dense<0xFF800000> : vector<16xf32>
    %359 = vector.multi_reduction <maximumf>, %358, %cst_174 [1] : vector<16x16xf32> to vector<16xf32>
    %360 = vector.shape_cast %359 : vector<16xf32> to vector<16x1xf32>
    %361 = vector.broadcast %360 : vector<16x1xf32> to vector<16x16xf32>
    %362 = arith.subf %358, %361 : vector<16x16xf32>
    %363 = math.exp %362 : vector<16x16xf32>
    %cst_175 = arith.constant dense<0.000000e+00> : vector<16xf32>
    %364 = vector.multi_reduction <add>, %363, %cst_175 [1] : vector<16x16xf32> to vector<16xf32>
    %365 = vector.shape_cast %364 : vector<16xf32> to vector<16x1xf32>
    %366 = tpu.reciprocal %365 {approx = true} : vector<16x1xf32> -> vector<16x1xf32>
    %367 = vector.broadcast %366 : vector<16x1xf32> to vector<16x16xf32>
    %368 = arith.mulf %363, %367 : vector<16x16xf32>
    %369 = vector.extract_strided_slice %352 {offsets = [0, 0], sizes = [16, 8], strides = [1, 1]} : vector<16x32xf32> to vector<16x8xf32>
    %cst_176 = arith.constant dense<0.000000e+00> : vector<16x8xf32>
    %370 = tpu.matmul %368, %369, %cst_176 {dimension_numbers = #tpu.dot_dimension_numbers<[1], [0], [0], [1], [0, 0, 1, 1], [], []>} : vector<16x16xf32>, vector<16x8xf32>, vector<16x8xf32> -> vector<16x8xf32>
    %371 = vector.extract_strided_slice %342 {offsets = [0, 0], sizes = [8, 32], strides = [1, 1]} : vector<32x32xf32> to vector<8x32xf32>
    %cst_177 = arith.constant dense<0.000000e+00> : vector<16x32xf32>
    %372 = tpu.matmul %370, %371, %cst_177 {dimension_numbers = #tpu.dot_dimension_numbers<[1], [0], [0], [1], [0, 0, 1, 1], [], []>} : vector<16x8xf32>, vector<8x32xf32>, vector<16x32xf32> -> vector<16x32xf32>
    %373 = vector.extract_strided_slice %346 {offsets = [0, 8], sizes = [16, 8], strides = [1, 1]} : vector<16x32xf32> to vector<16x8xf32>
    %374 = vector.extract_strided_slice %349 {offsets = [0, 8], sizes = [16, 8], strides = [1, 1]} : vector<16x32xf32> to vector<16x8xf32>
    %cst_178 = arith.constant dense<0.000000e+00> : vector<16x16xf32>
    %375 = tpu.matmul %373, %374, %cst_178 {dimension_numbers = #tpu.dot_dimension_numbers<[1], [1], [0], [0], [0, 0, 1, 0], [], []>} : vector<16x8xf32>, vector<16x8xf32>, vector<16x16xf32> -> vector<16x16xf32>
    %cst_179 = arith.constant 0.353553385 : f32
    %376 = vector.broadcast %cst_179 : f32 to vector<16x16xf32>
    %377 = arith.mulf %375, %376 : vector<16x16xf32>
    %378 = arith.addf %377, %1 : vector<16x16xf32>
    %cst_180 = arith.constant dense<0xFF800000> : vector<16xf32>
    %379 = vector.multi_reduction <maximumf>, %378, %cst_180 [1] : vector<16x16xf32> to vector<16xf32>
    %380 = vector.shape_cast %379 : vector<16xf32> to vector<16x1xf32>
    %381 = vector.broadcast %380 : vector<16x1xf32> to vector<16x16xf32>
    %382 = arith.subf %378, %381 : vector<16x16xf32>
    %383 = math.exp %382 : vector<16x16xf32>
    %cst_181 = arith.constant dense<0.000000e+00> : vector<16xf32>
    %384 = vector.multi_reduction <add>, %383, %cst_181 [1] : vector<16x16xf32> to vector<16xf32>
    %385 = vector.shape_cast %384 : vector<16xf32> to vector<16x1xf32>
    %386 = tpu.reciprocal %385 {approx = true} : vector<16x1xf32> -> vector<16x1xf32>
    %387 = vector.broadcast %386 : vector<16x1xf32> to vector<16x16xf32>
    %388 = arith.mulf %383, %387 : vector<16x16xf32>
    %389 = vector.extract_strided_slice %352 {offsets = [0, 8], sizes = [16, 8], strides = [1, 1]} : vector<16x32xf32> to vector<16x8xf32>
    %cst_182 = arith.constant dense<0.000000e+00> : vector<16x8xf32>
    %390 = tpu.matmul %388, %389, %cst_182 {dimension_numbers = #tpu.dot_dimension_numbers<[1], [0], [0], [1], [0, 0, 1, 1], [], []>} : vector<16x16xf32>, vector<16x8xf32>, vector<16x8xf32> -> vector<16x8xf32>
    %391 = vector.extract_strided_slice %342 {offsets = [8, 0], sizes = [8, 32], strides = [1, 1]} : vector<32x32xf32> to vector<8x32xf32>
    %cst_183 = arith.constant dense<0.000000e+00> : vector<16x32xf32>
    %392 = tpu.matmul %390, %391, %cst_183 {dimension_numbers = #tpu.dot_dimension_numbers<[1], [0], [0], [1], [0, 0, 1, 1], [], []>} : vector<16x8xf32>, vector<8x32xf32>, vector<16x32xf32> -> vector<16x32xf32>
    %393 = arith.addf %372, %392 : vector<16x32xf32>
    %394 = vector.extract_strided_slice %346 {offsets = [0, 16], sizes = [16, 8], strides = [1, 1]} : vector<16x32xf32> to vector<16x8xf32>
    %395 = vector.extract_strided_slice %349 {offsets = [0, 16], sizes = [16, 8], strides = [1, 1]} : vector<16x32xf32> to vector<16x8xf32>
    %cst_184 = arith.constant dense<0.000000e+00> : vector<16x16xf32>
    %396 = tpu.matmul %394, %395, %cst_184 {dimension_numbers = #tpu.dot_dimension_numbers<[1], [1], [0], [0], [0, 0, 1, 0], [], []>} : vector<16x8xf32>, vector<16x8xf32>, vector<16x16xf32> -> vector<16x16xf32>
    %cst_185 = arith.constant 0.353553385 : f32
    %397 = vector.broadcast %cst_185 : f32 to vector<16x16xf32>
    %398 = arith.mulf %396, %397 : vector<16x16xf32>
    %399 = arith.addf %398, %1 : vector<16x16xf32>
    %cst_186 = arith.constant dense<0xFF800000> : vector<16xf32>
    %400 = vector.multi_reduction <maximumf>, %399, %cst_186 [1] : vector<16x16xf32> to vector<16xf32>
    %401 = vector.shape_cast %400 : vector<16xf32> to vector<16x1xf32>
    %402 = vector.broadcast %401 : vector<16x1xf32> to vector<16x16xf32>
    %403 = arith.subf %399, %402 : vector<16x16xf32>
    %404 = math.exp %403 : vector<16x16xf32>
    %cst_187 = arith.constant dense<0.000000e+00> : vector<16xf32>
    %405 = vector.multi_reduction <add>, %404, %cst_187 [1] : vector<16x16xf32> to vector<16xf32>
    %406 = vector.shape_cast %405 : vector<16xf32> to vector<16x1xf32>
    %407 = tpu.reciprocal %406 {approx = true} : vector<16x1xf32> -> vector<16x1xf32>
    %408 = vector.broadcast %407 : vector<16x1xf32> to vector<16x16xf32>
    %409 = arith.mulf %404, %408 : vector<16x16xf32>
    %410 = vector.extract_strided_slice %352 {offsets = [0, 16], sizes = [16, 8], strides = [1, 1]} : vector<16x32xf32> to vector<16x8xf32>
    %cst_188 = arith.constant dense<0.000000e+00> : vector<16x8xf32>
    %411 = tpu.matmul %409, %410, %cst_188 {dimension_numbers = #tpu.dot_dimension_numbers<[1], [0], [0], [1], [0, 0, 1, 1], [], []>} : vector<16x16xf32>, vector<16x8xf32>, vector<16x8xf32> -> vector<16x8xf32>
    %412 = vector.extract_strided_slice %342 {offsets = [16, 0], sizes = [8, 32], strides = [1, 1]} : vector<32x32xf32> to vector<8x32xf32>
    %cst_189 = arith.constant dense<0.000000e+00> : vector<16x32xf32>
    %413 = tpu.matmul %411, %412, %cst_189 {dimension_numbers = #tpu.dot_dimension_numbers<[1], [0], [0], [1], [0, 0, 1, 1], [], []>} : vector<16x8xf32>, vector<8x32xf32>, vector<16x32xf32> -> vector<16x32xf32>
    %414 = arith.addf %393, %413 : vector<16x32xf32>
    %415 = vector.extract_strided_slice %346 {offsets = [0, 24], sizes = [16, 8], strides = [1, 1]} : vector<16x32xf32> to vector<16x8xf32>
    %416 = vector.extract_strided_slice %349 {offsets = [0, 24], sizes = [16, 8], strides = [1, 1]} : vector<16x32xf32> to vector<16x8xf32>
    %cst_190 = arith.constant dense<0.000000e+00> : vector<16x16xf32>
    %417 = tpu.matmul %415, %416, %cst_190 {dimension_numbers = #tpu.dot_dimension_numbers<[1], [1], [0], [0], [0, 0, 1, 0], [], []>} : vector<16x8xf32>, vector<16x8xf32>, vector<16x16xf32> -> vector<16x16xf32>
    %cst_191 = arith.constant 0.353553385 : f32
    %418 = vector.broadcast %cst_191 : f32 to vector<16x16xf32>
    %419 = arith.mulf %417, %418 : vector<16x16xf32>
    %420 = arith.addf %419, %1 : vector<16x16xf32>
    %cst_192 = arith.constant dense<0xFF800000> : vector<16xf32>
    %421 = vector.multi_reduction <maximumf>, %420, %cst_192 [1] : vector<16x16xf32> to vector<16xf32>
    %422 = vector.shape_cast %421 : vector<16xf32> to vector<16x1xf32>
    %423 = vector.broadcast %422 : vector<16x1xf32> to vector<16x16xf32>
    %424 = arith.subf %420, %423 : vector<16x16xf32>
    %425 = math.exp %424 : vector<16x16xf32>
    %cst_193 = arith.constant dense<0.000000e+00> : vector<16xf32>
    %426 = vector.multi_reduction <add>, %425, %cst_193 [1] : vector<16x16xf32> to vector<16xf32>
    %427 = vector.shape_cast %426 : vector<16xf32> to vector<16x1xf32>
    %428 = tpu.reciprocal %427 {approx = true} : vector<16x1xf32> -> vector<16x1xf32>
    %429 = vector.broadcast %428 : vector<16x1xf32> to vector<16x16xf32>
    %430 = arith.mulf %425, %429 : vector<16x16xf32>
    %431 = vector.extract_strided_slice %352 {offsets = [0, 24], sizes = [16, 8], strides = [1, 1]} : vector<16x32xf32> to vector<16x8xf32>
    %cst_194 = arith.constant dense<0.000000e+00> : vector<16x8xf32>
    %432 = tpu.matmul %430, %431, %cst_194 {dimension_numbers = #tpu.dot_dimension_numbers<[1], [0], [0], [1], [0, 0, 1, 1], [], []>} : vector<16x16xf32>, vector<16x8xf32>, vector<16x8xf32> -> vector<16x8xf32>
    %433 = vector.extract_strided_slice %342 {offsets = [24, 0], sizes = [8, 32], strides = [1, 1]} : vector<32x32xf32> to vector<8x32xf32>
    %cst_195 = arith.constant dense<0.000000e+00> : vector<16x32xf32>
    %434 = tpu.matmul %432, %433, %cst_195 {dimension_numbers = #tpu.dot_dimension_numbers<[1], [0], [0], [1], [0, 0, 1, 1], [], []>} : vector<16x8xf32>, vector<8x32xf32>, vector<16x32xf32> -> vector<16x32xf32>
    %435 = arith.addf %414, %434 : vector<16x32xf32>
    %436 = vector.broadcast %343 : vector<1x32xf32> to vector<16x32xf32>
    %437 = arith.addf %435, %436 : vector<16x32xf32>
    %438 = vector.extract_strided_slice %437 {offsets = [0, 0], sizes = [8, 32], strides = [1, 1]} : vector<16x32xf32> to vector<8x32xf32>
    %cst_196 = arith.constant dense<0xFF800000> : vector<32xf32>
    %439 = vector.multi_reduction <maximumf>, %438, %cst_196 [0] : vector<8x32xf32> to vector<32xf32>
    %440 = vector.shape_cast %439 : vector<32xf32> to vector<1x32xf32>
    %441 = vector.extract_strided_slice %437 {offsets = [8, 0], sizes = [8, 32], strides = [1, 1]} : vector<16x32xf32> to vector<8x32xf32>
    %cst_197 = arith.constant dense<0xFF800000> : vector<32xf32>
    %442 = vector.multi_reduction <maximumf>, %441, %cst_197 [0] : vector<8x32xf32> to vector<32xf32>
    %443 = vector.shape_cast %442 : vector<32xf32> to vector<1x32xf32>
    %444 = tpu.concatenate %440, %443 in 0 : vector<1x32xf32>, vector<1x32xf32> -> vector<2x32xf32>
    %c0_198 = arith.constant 0 : index
    %c0_199 = arith.constant 0 : index
    %445 = vector.load %arg45[%c0_198, %c0_199] : memref<32x128xf32, #tpu.memory_space<vmem>>, vector<32x128xf32>
    %c0_200 = arith.constant 0 : index
    %c0_201 = arith.constant 0 : index
    %446 = vector.load %arg46[%c0_200, %c0_201] : memref<1x128xf32, #tpu.memory_space<vmem>>, vector<1x128xf32>
    %c0_202 = arith.constant 0 : index
    %c0_203 = arith.constant 0 : index
    %447 = vector.load %arg47[%c0_202, %c0_203] : memref<128x128xf32, #tpu.memory_space<vmem>>, vector<128x128xf32>
    %c0_204 = arith.constant 0 : index
    %c0_205 = arith.constant 0 : index
    %448 = vector.load %arg48[%c0_204, %c0_205] : memref<1x128xf32, #tpu.memory_space<vmem>>, vector<1x128xf32>
    %c0_206 = arith.constant 0 : index
    %c0_207 = arith.constant 0 : index
    %449 = vector.load %arg49[%c0_206, %c0_207] : memref<128x128xf32, #tpu.memory_space<vmem>>, vector<128x128xf32>
    %c0_208 = arith.constant 0 : index
    %c0_209 = arith.constant 0 : index
    %450 = vector.load %arg50[%c0_208, %c0_209] : memref<1x128xf32, #tpu.memory_space<vmem>>, vector<1x128xf32>
    %c0_210 = arith.constant 0 : index
    %c0_211 = arith.constant 0 : index
    %451 = vector.load %arg51[%c0_210, %c0_211] : memref<128x64xf32, #tpu.memory_space<vmem>>, vector<128x64xf32>
    %c0_212 = arith.constant 0 : index
    %c0_213 = arith.constant 0 : index
    %452 = vector.load %arg52[%c0_212, %c0_213] : memref<1x64xf32, #tpu.memory_space<vmem>>, vector<1x64xf32>
    %c0_214 = arith.constant 0 : index
    %c0_215 = arith.constant 0 : index
    %453 = vector.load %arg53[%c0_214, %c0_215] : memref<64x1xf32, #tpu.memory_space<vmem>>, vector<64x1xf32>
    %c0_216 = arith.constant 0 : index
    %c0_217 = arith.constant 0 : index
    %454 = vector.load %arg54[%c0_216, %c0_217] : memref<1x1xf32, #tpu.memory_space<vmem>>, vector<1x1xf32>
    %cst_218 = arith.constant dense<0.000000e+00> : vector<2x128xf32>
    %455 = tpu.matmul %444, %445, %cst_218 {dimension_numbers = #tpu.dot_dimension_numbers<[1], [0], [0], [1], [0, 0, 1, 1], [], []>} : vector<2x32xf32>, vector<32x128xf32>, vector<2x128xf32> -> vector<2x128xf32>
    %456 = vector.broadcast %446 : vector<1x128xf32> to vector<2x128xf32>
    %457 = arith.addf %455, %456 : vector<2x128xf32>
    %cst_219 = arith.constant 0.000000e+00 : f32
    %458 = vector.broadcast %cst_219 : f32 to vector<2x128xf32>
    %459 = arith.cmpf ogt, %457, %458 : vector<2x128xf32>
    %cst_220 = arith.constant 0.00999999977 : f32
    %460 = vector.broadcast %cst_220 : f32 to vector<2x128xf32>
    %461 = arith.mulf %460, %457 : vector<2x128xf32>
    %462 = arith.select %459, %457, %461 : vector<2x128xi1>, vector<2x128xf32>
    %cst_221 = arith.constant dense<0.000000e+00> : vector<2x128xf32>
    %463 = tpu.matmul %462, %447, %cst_221 {dimension_numbers = #tpu.dot_dimension_numbers<[1], [0], [0], [1], [0, 0, 1, 1], [], []>} : vector<2x128xf32>, vector<128x128xf32>, vector<2x128xf32> -> vector<2x128xf32>
    %464 = vector.broadcast %448 : vector<1x128xf32> to vector<2x128xf32>
    %465 = arith.addf %463, %464 : vector<2x128xf32>
    %cst_222 = arith.constant 0.000000e+00 : f32
    %466 = vector.broadcast %cst_222 : f32 to vector<2x128xf32>
    %467 = arith.maximumf %465, %466 : vector<2x128xf32>
    %cst_223 = arith.constant dense<0.000000e+00> : vector<2x128xf32>
    %468 = tpu.matmul %467, %449, %cst_223 {dimension_numbers = #tpu.dot_dimension_numbers<[1], [0], [0], [1], [0, 0, 1, 1], [], []>} : vector<2x128xf32>, vector<128x128xf32>, vector<2x128xf32> -> vector<2x128xf32>
    %469 = arith.addf %462, %468 : vector<2x128xf32>
    %470 = vector.broadcast %450 : vector<1x128xf32> to vector<2x128xf32>
    %471 = arith.addf %469, %470 : vector<2x128xf32>
    %cst_224 = arith.constant dense<0.000000e+00> : vector<2x64xf32>
    %472 = tpu.matmul %471, %451, %cst_224 {dimension_numbers = #tpu.dot_dimension_numbers<[1], [0], [0], [1], [0, 0, 1, 1], [], []>} : vector<2x128xf32>, vector<128x64xf32>, vector<2x64xf32> -> vector<2x64xf32>
    %473 = vector.broadcast %452 : vector<1x64xf32> to vector<2x64xf32>
    %474 = arith.addf %472, %473 : vector<2x64xf32>
    %cst_225 = arith.constant 0.000000e+00 : f32
    %475 = vector.broadcast %cst_225 : f32 to vector<2x64xf32>
    %476 = arith.cmpf ogt, %474, %475 : vector<2x64xf32>
    %cst_226 = arith.constant 0.00999999977 : f32
    %477 = vector.broadcast %cst_226 : f32 to vector<2x64xf32>
    %478 = arith.mulf %477, %474 : vector<2x64xf32>
    %479 = arith.select %476, %474, %478 : vector<2x64xi1>, vector<2x64xf32>
    %cst_227 = arith.constant dense<0.000000e+00> : vector<2x1xf32>
    %480 = tpu.matmul %479, %453, %cst_227 {dimension_numbers = #tpu.dot_dimension_numbers<[1], [0], [0], [1], [0, 0, 1, 1], [], []>} : vector<2x64xf32>, vector<64x1xf32>, vector<2x1xf32> -> vector<2x1xf32>
    %481 = vector.broadcast %454 : vector<1x1xf32> to vector<2x1xf32>
    %482 = arith.addf %480, %481 : vector<2x1xf32>
    %c0_228 = arith.constant 0 : index
    %c0_229 = arith.constant 0 : index
    %483 = vector.load %arg55[%c0_228, %c0_229] : memref<2x1xf32, #tpu.memory_space<vmem>>, vector<2x1xf32>
    tpu.vector_store %arg55[%c0_228, %c0_229], %482 {strides = array<i32>} : memref<2x1xf32, #tpu.memory_space<vmem>>, vector<2x1xf32>,
    return
  }
}

</mosaic_0001>

<llo_original>
// kernel: tpu_custom_call.1
$region0: #{tpu_custom_call.1}
  #allocation0 [shape = 'u32[]', space=smem, size = 0x4, offset = 0x4, fixed_abs, tag = 'smem constant byte address 0x4 - core index']
  #allocation1 [shape = 'u32[144,128]{1,0:T(1,128)}', space=vmem, size = 0x12000, scoped, tag = 'internal scratch']
  #allocation2 [shape = 'f32[1,1]{1,0:T(1,128)S(1)}', space=vmem, size = 0x200, scoped, tag = 'scoped memory for tpu_custom_call.1']
  %s0 = inlined_call_operand.smem [shape: u32[56], index: -1, kind: input, shape index: {}]
  %s1 = sld [smem:[%s0]]
  %s2 = scalar_lea.smem %s0, 1
  %s3 = sld [smem:[%s2]]
  %s4 = scalar_lea.smem %s0, 2
  %s5 = sld [smem:[%s4]]
  %s6 = scalar_lea.smem %s0, 3
  %s7 = sld [smem:[%s6]]
  %s8 = scalar_lea.smem %s0, 4
  %s9 = sld [smem:[%s8]]
  %s10 = scalar_lea.smem %s0, 5
  %s11 = sld [smem:[%s10]]
  %s12 = scalar_lea.smem %s0, 6
  %s13 = sld [smem:[%s12]]
  %s14 = scalar_lea.smem %s0, 7
  %s15 = sld [smem:[%s14]]
  %s16 = scalar_lea.smem %s0, 8
  %s17 = sld [smem:[%s16]]
  %s18 = scalar_lea.smem %s0, 9
  %s19 = sld [smem:[%s18]]
  %s20 = scalar_lea.smem %s0, 10
  %s21 = sld [smem:[%s20]]
  %s22 = scalar_lea.smem %s0, 11
  %s23 = sld [smem:[%s22]]
  %s24 = scalar_lea.smem %s0, 12
  %s25 = sld [smem:[%s24]]
  %s26 = scalar_lea.smem %s0, 13
  %s27 = sld [smem:[%s26]]
  %s28 = scalar_lea.smem %s0, 14
  %s29 = sld [smem:[%s28]]
  %s30 = scalar_lea.smem %s0, 15
  %s31 = sld [smem:[%s30]]
  %s32 = scalar_lea.smem %s0, 16
  %s33 = sld [smem:[%s32]]
  %s34 = scalar_lea.smem %s0, 17
  %s35 = sld [smem:[%s34]]
  %s36 = scalar_lea.smem %s0, 18
  %s37 = sld [smem:[%s36]]
  %s38 = scalar_lea.smem %s0, 19
  %s39 = sld [smem:[%s38]]
  %s40 = scalar_lea.smem %s0, 20
  %s41 = sld [smem:[%s40]]
  %s42 = scalar_lea.smem %s0, 21
  %s43 = sld [smem:[%s42]]
  %s44 = scalar_lea.smem %s0, 22
  %s45 = sld [smem:[%s44]]
  %s46 = scalar_lea.smem %s0, 23
  %s47 = sld [smem:[%s46]]
  %s48 = scalar_lea.smem %s0, 24
  %s49 = sld [smem:[%s48]]
  %s50 = scalar_lea.smem %s0, 25
  %s51 = sld [smem:[%s50]]
  %s52 = scalar_lea.smem %s0, 26
  %s53 = sld [smem:[%s52]]
  %s54 = scalar_lea.smem %s0, 27
  %s55 = sld [smem:[%s54]]
  %s56 = scalar_lea.smem %s0, 28
  %s57 = sld [smem:[%s56]]
  %s58 = scalar_lea.smem %s0, 29
  %s59 = sld [smem:[%s58]]
  %s60 = scalar_lea.smem %s0, 30
  %s61 = sld [smem:[%s60]]
  %s62 = scalar_lea.smem %s0, 31
  %s63 = sld [smem:[%s62]]
  %s64 = scalar_lea.smem %s0, 32
  %s65 = sld [smem:[%s64]]
  %s66 = scalar_lea.smem %s0, 33
  %s67 = sld [smem:[%s66]]
  %s68 = scalar_lea.smem %s0, 34
  %s69 = sld [smem:[%s68]]
  %s70 = scalar_lea.smem %s0, 35
  %s71 = sld [smem:[%s70]]
  %s72 = scalar_lea.smem %s0, 36
  %s73 = sld [smem:[%s72]]
  %s74 = scalar_lea.smem %s0, 37
  %s75 = sld [smem:[%s74]]
  %s76 = scalar_lea.smem %s0, 38
  %s77 = sld [smem:[%s76]]
  %s78 = scalar_lea.smem %s0, 39
  %s79 = sld [smem:[%s78]]
  %s80 = scalar_lea.smem %s0, 40
  %s81 = sld [smem:[%s80]]
  %s82 = scalar_lea.smem %s0, 41
  %s83 = sld [smem:[%s82]]
  %s84 = scalar_lea.smem %s0, 42
  %s85 = sld [smem:[%s84]]
  %s86 = scalar_lea.smem %s0, 43
  %s87 = sld [smem:[%s86]]
  %s88 = scalar_lea.smem %s0, 44
  %s89 = sld [smem:[%s88]]
  %s90 = scalar_lea.smem %s0, 45
  %s91 = sld [smem:[%s90]]
  %s92 = scalar_lea.smem %s0, 46
  %s93 = sld [smem:[%s92]]
  %s94 = scalar_lea.smem %s0, 47
  %s95 = sld [smem:[%s94]]
  %s96 = scalar_lea.smem %s0, 48
  %s97 = sld [smem:[%s96]]
  %s98 = scalar_lea.smem %s0, 49
  %s99 = sld [smem:[%s98]]
  %s100 = scalar_lea.smem %s0, 50
  %s101 = sld [smem:[%s100]]
  %s102 = scalar_lea.smem %s0, 51
  %s103 = sld [smem:[%s102]]
  %s104 = scalar_lea.smem %s0, 52
  %s105 = sld [smem:[%s104]]
  %s106 = scalar_lea.smem %s0, 53
  %s107 = sld [smem:[%s106]]
  %s108 = scalar_lea.smem %s0, 54
  %s109 = sld [smem:[%s108]]
  %s110 = scalar_lea.smem %s0, 55
  %s111 = sld [smem:[%s110]]
  %s112 = sld [smem:[#allocation0]]
  $region390: #{tpu_custom_call.1} parent=0
    _
  %s114 = ssub.s32 1, %s112
  %s115 = scalar_select 0, %s114, %s112
  %v116 = vstv %s109
  %117 = vst [vmem:[#allocation2] sm:$0x1] %v116
  $region1: #{tpu_custom_call.1} parent=0
    #allocation3 [shape = 'u8[8192]{0}', space=vmem, size = 0x2000, scoped, tag = 'input window, operand 1, single buffered']
    #allocation4 [shape = 's32[1]{0}', space=sflag, size = 0x4, scoped, tag = 'scoped memory for tpu_custom_call.1']
    #allocation5 [shape = 'u8[8192]{0}', space=vmem, size = 0x2000, scoped, tag = 'input window, operand 2, single buffered']
    #allocation6 [shape = 's32[1]{0}', space=sflag, size = 0x4, scoped, tag = 'scoped memory for tpu_custom_call.1']
    #allocation7 [shape = 'u8[4096]{0}', space=vmem, size = 0x1000, scoped, tag = 'input window, operand 3, single buffered']
    #allocation8 [shape = 'u8[512]{0}', space=vmem, size = 0x400, scoped, tag = 'input window, operand 5, single buffered']
    #allocation9 [shape = 's32[1]{0}', space=sflag, size = 0x4, scoped, tag = 'scoped memory for tpu_custom_call.1']
    #allocation10 [shape = 'u8[512]{0}', space=vmem, size = 0x400, scoped, tag = 'input window, operand 6, single buffered']
    #allocation11 [shape = 'u8[16384]{0}', space=vmem, size = 0x4000, scoped, tag = 'input window, operand 7, single buffered']
    #allocation12 [shape = 's32[1]{0}', space=sflag, size = 0x4, scoped, tag = 'scoped memory for tpu_custom_call.1']
    #allocation13 [shape = 'u8[16384]{0}', space=vmem, size = 0x4000, scoped, tag = 'input window, operand 8, single buffered']
    #allocation14 [shape = 'u8[16384]{0}', space=vmem, size = 0x4000, scoped, tag = 'input window, operand 9, single buffered']
    #allocation15 [shape = 's32[1]{0}', space=sflag, size = 0x4, scoped, tag = 'scoped memory for tpu_custom_call.1']
    #allocation16 [shape = 'u8[512]{0}', space=vmem, size = 0x400, scoped, tag = 'input window, operand 10, single buffered']
    #allocation17 [shape = 'u8[512]{0}', space=vmem, size = 0x400, scoped, tag = 'input window, operand 11, single buffered']
    #allocation18 [shape = 's32[1]{0}', space=sflag, size = 0x4, scoped, tag = 'scoped memory for tpu_custom_call.1']
    #allocation19 [shape = 'u8[512]{0}', space=vmem, size = 0x400, scoped, tag = 'input window, operand 12, single buffered']
    #allocation20 [shape = 'u8[16384]{0}', space=vmem, size = 0x4000, scoped, tag = 'input window, operand 13, single buffered']
    #allocation21 [shape = 's32[1]{0}', space=sflag, size = 0x4, scoped, tag = 'scoped memory for tpu_custom_call.1']
    #allocation22 [shape = 'u8[512]{0}', space=vmem, size = 0x400, scoped, tag = 'input window, operand 14, single buffered']
    #allocation23 [shape = 'u8[512]{0}', space=vmem, size = 0x400, scoped, tag = 'input window, operand 15, single buffered']
    #allocation24 [shape = 's32[1]{0}', space=sflag, size = 0x4, scoped, tag = 'scoped memory for tpu_custom_call.1']
    #allocation25 [shape = 'u8[512]{0}', space=vmem, size = 0x400, scoped, tag = 'input window, operand 16, single buffered']
    #allocation26 [shape = 'u8[16384]{0}', space=vmem, size = 0x4000, scoped, tag = 'input window, operand 17, single buffered']
    #allocation27 [shape = 's32[1]{0}', space=sflag, size = 0x4, scoped, tag = 'scoped memory for tpu_custom_call.1']
    #allocation28 [shape = 'u8[512]{0}', space=vmem, size = 0x400, scoped, tag = 'input window, operand 18, single buffered']
    #allocation29 [shape = 'u8[16384]{0}', space=vmem, size = 0x4000, scoped, tag = 'input window, operand 19, single buffered']
    #allocation30 [shape = 's32[1]{0}', space=sflag, size = 0x4, scoped, tag = 'scoped memory for tpu_custom_call.1']
    #allocation31 [shape = 'u8[512]{0}', space=vmem, size = 0x400, scoped, tag = 'input window, operand 20, single buffered']
    #allocation32 [shape = 'u8[512]{0}', space=vmem, size = 0x400, scoped, tag = 'input window, operand 21, single buffered']
    #allocation33 [shape = 's32[1]{0}', space=sflag, size = 0x4, scoped, tag = 'scoped memory for tpu_custom_call.1']
    #allocation34 [shape = 'u8[512]{0}', space=vmem, size = 0x400, scoped, tag = 'input window, operand 22, single buffered']
    #allocation35 [shape = 'u8[16384]{0}', space=vmem, size = 0x4000, scoped, tag = 'input window, operand 23, single buffered']
    #allocation36 [shape = 's32[1]{0}', space=sflag, size = 0x4, scoped, tag = 'scoped memory for tpu_custom_call.1']
    #allocation37 [shape = 'u8[16384]{0}', space=vmem, size = 0x4000, scoped, tag = 'input window, operand 24, single buffered']
    #allocation38 [shape = 'u8[16384]{0}', space=vmem, size = 0x4000, scoped, tag = 'input window, operand 25, single buffered']
    #allocation39 [shape = 's32[1]{0}', space=sflag, size = 0x4, scoped, tag = 'scoped memory for tpu_custom_call.1']
    #allocation40 [shape = 'u8[512]{0}', space=vmem, size = 0x400, scoped, tag = 'input window, operand 26, single buffered']
    #allocation41 [shape = 'u8[512]{0}', space=vmem, size = 0x400, scoped, tag = 'input window, operand 27, single buffered']
    #allocation42 [shape = 's32[1]{0}', space=sflag, size = 0x4, scoped, tag = 'scoped memory for tpu_custom_call.1']
    #allocation43 [shape = 'u8[512]{0}', space=vmem, size = 0x400, scoped, tag = 'input window, operand 28, single buffered']
    #allocation44 [shape = 'u8[16384]{0}', space=vmem, size = 0x4000, scoped, tag = 'input window, operand 29, single buffered']
    #allocation45 [shape = 's32[1]{0}', space=sflag, size = 0x4, scoped, tag = 'scoped memory for tpu_custom_call.1']
    #allocation46 [shape = 'u8[512]{0}', space=vmem, size = 0x400, scoped, tag = 'input window, operand 30, single buffered']
    #allocation47 [shape = 'u8[512]{0}', space=vmem, size = 0x400, scoped, tag = 'input window, operand 31, single buffered']
    #allocation48 [shape = 's32[1]{0}', space=sflag, size = 0x4, scoped, tag = 'scoped memory for tpu_custom_call.1']
    #allocation49 [shape = 'u8[512]{0}', space=vmem, size = 0x400, scoped, tag = 'input window, operand 32, single buffered']
    #allocation50 [shape = 'u8[16384]{0}', space=vmem, size = 0x4000, scoped, tag = 'input window, operand 33, single buffered']
    #allocation51 [shape = 's32[1]{0}', space=sflag, size = 0x4, scoped, tag = 'scoped memory for tpu_custom_call.1']
    #allocation52 [shape = 'u8[512]{0}', space=vmem, size = 0x400, scoped, tag = 'input window, operand 34, single buffered']
    #allocation53 [shape = 'u8[16384]{0}', space=vmem, size = 0x4000, scoped, tag = 'input window, operand 35, single buffered']
    #allocation54 [shape = 's32[1]{0}', space=sflag, size = 0x4, scoped, tag = 'scoped memory for tpu_custom_call.1']
    #allocation55 [shape = 'u8[512]{0}', space=vmem, size = 0x400, scoped, tag = 'input window, operand 36, single buffered']
    #allocation56 [shape = 'u8[16384]{0}', space=vmem, size = 0x4000, scoped, tag = 'input window, operand 37, single buffered']
    #allocation57 [shape = 's32[1]{0}', space=sflag, size = 0x4, scoped, tag = 'scoped memory for tpu_custom_call.1']
    #allocation58 [shape = 'u8[16384]{0}', space=vmem, size = 0x4000, scoped, tag = 'input window, operand 38, single buffered']
    #allocation59 [shape = 'u8[512]{0}', space=vmem, size = 0x400, scoped, tag = 'input window, operand 40, single buffered']
    #allocation60 [shape = 's32[1]{0}', space=sflag, size = 0x4, scoped, tag = 'scoped memory for tpu_custom_call.1']
    #allocation61 [shape = 'u8[16384]{0}', space=vmem, size = 0x4000, scoped, tag = 'input window, operand 43, single buffered']
    #allocation62 [shape = 'u8[16384]{0}', space=vmem, size = 0x4000, scoped, tag = 'input window, operand 45, single buffered']
    #allocation63 [shape = 's32[1]{0}', space=sflag, size = 0x4, scoped, tag = 'scoped memory for tpu_custom_call.1']
    %118 = vsyncpa [#allocation4], 0
    %119 = vsyncpa [#allocation6], 0
    %120 = vsyncpa [#allocation9], 0
    %121 = vsyncpa [#allocation12], 0
    %122 = vsyncpa [#allocation15], 0
    %123 = vsyncpa [#allocation18], 0
    %124 = vsyncpa [#allocation21], 0
    %125 = vsyncpa [#allocation24], 0
    %126 = vsyncpa [#allocation27], 0
    %127 = vsyncpa [#allocation30], 0
    %128 = vsyncpa [#allocation33], 0
    %129 = vsyncpa [#allocation36], 0
    %130 = vsyncpa [#allocation39], 0
    %131 = vsyncpa [#allocation42], 0
    %132 = vsyncpa [#allocation45], 0
    %133 = vsyncpa [#allocation48], 0
    %134 = vsyncpa [#allocation51], 0
    %135 = vsyncpa [#allocation54], 0
    %136 = vsyncpa [#allocation57], 0
    %137 = vsyncpa [#allocation60], 0
    %138 = vsyncpa [#allocation63], 0
    // Predicated region
    $region2: #{tpu_custom_call.1} parent=1 // pred_check
      _
    $region3: #{tpu_custom_call.1} parent=1 // pred_check_branch
      %140 = sbr.rel (0) target = $region5
    $region4: #{tpu_custom_call.1} parent=1 // pred_region
      _
    $region5: #{tpu_custom_call.1} parent=1 // pred_fallthru
      _
    // Predicated region
    $region6: #{tpu_custom_call.1} parent=1 // pred_check
      _
    $region7: #{tpu_custom_call.1} parent=1 // pred_check_branch
      %142 = sbr.rel (0) target = $region9
    $region8: #{tpu_custom_call.1} parent=1 // pred_region
      %s144 = ssub.s32 256, 256
      %145 = vsyncadd [#allocation4], %s144
      %s146 = sshll.u32 [#allocation3], 4
      %s147 = int_to_ptr.vmem [resolvable:$true] %s146
      %152 = dma.hbm_to_vmem [thread:$0]  %s3, 256, %s147, [#allocation4], 128, 128, 8
    $region9: #{tpu_custom_call.1} parent=1 // pred_fallthru
      _
    // Predicated region
    $region10: #{tpu_custom_call.1} parent=1 // pred_check
      _
    $region11: #{tpu_custom_call.1} parent=1 // pred_check_branch
      %154 = sbr.rel (0) target = $region13
    $region12: #{tpu_custom_call.1} parent=1 // pred_region
      %s156 = ssub.s32 256, 256
      %157 = vsyncadd [#allocation6], %s156
      %s158 = sshll.u32 [#allocation5], 4
      %s159 = int_to_ptr.vmem [resolvable:$true] %s158
      %164 = dma.hbm_to_vmem [thread:$0]  %s5, 256, %s159, [#allocation6], 128, 128, 8
    $region13: #{tpu_custom_call.1} parent=1 // pred_fallthru
      _
    // Predicated region
    $region14: #{tpu_custom_call.1} parent=1 // pred_check
      _
    $region15: #{tpu_custom_call.1} parent=1 // pred_check_branch
      %166 = sbr.rel (0) target = $region17
    $region16: #{tpu_custom_call.1} parent=1 // pred_region
      %s168 = ssub.s32 128, 128
      %169 = vsyncadd [#allocation6], %s168
      %s171 = sshll.u32 [#allocation7], 4
      %s172 = int_to_ptr.vmem [resolvable:$true] %s171
      %174 = dma.hbm_to_vmem [thread:$0]  %s7, 128, %s172, [#allocation6]
    $region17: #{tpu_custom_call.1} parent=1 // pred_fallthru
      _
    // Predicated region
    $region18: #{tpu_custom_call.1} parent=1 // pred_check
      _
    $region19: #{tpu_custom_call.1} parent=1 // pred_check_branch
      %176 = sbr.rel (0) target = $region21
    $region20: #{tpu_custom_call.1} parent=1 // pred_region
      _
    $region21: #{tpu_custom_call.1} parent=1 // pred_fallthru
      _
    // Predicated region
    $region22: #{tpu_custom_call.1} parent=1 // pred_check
      _
    $region23: #{tpu_custom_call.1} parent=1 // pred_check_branch
      %178 = sbr.rel (0) target = $region25
    $region24: #{tpu_custom_call.1} parent=1 // pred_region
      %s180 = ssub.s32 16, 16
      %181 = vsyncadd [#allocation9], %s180
      %s183 = sshll.u32 [#allocation8], 4
      %s184 = int_to_ptr.vmem [resolvable:$true] %s183
      %186 = dma.hbm_to_vmem [thread:$0]  %s11, 16, %s184, [#allocation9]
    $region25: #{tpu_custom_call.1} parent=1 // pred_fallthru
      _
    // Predicated region
    $region26: #{tpu_custom_call.1} parent=1 // pred_check
      _
    $region27: #{tpu_custom_call.1} parent=1 // pred_check_branch
      %188 = sbr.rel (0) target = $region29
    $region28: #{tpu_custom_call.1} parent=1 // pred_region
      %s190 = ssub.s32 16, 16
      %191 = vsyncadd [#allocation9], %s190
      %s193 = sshll.u32 [#allocation10], 4
      %s194 = int_to_ptr.vmem [resolvable:$true] %s193
      %196 = dma.hbm_to_vmem [thread:$0]  %s13, 16, %s194, [#allocation9]
    $region29: #{tpu_custom_call.1} parent=1 // pred_fallthru
      _
    // Predicated region
    $region30: #{tpu_custom_call.1} parent=1 // pred_check
      _
    $region31: #{tpu_custom_call.1} parent=1 // pred_check_branch
      %198 = sbr.rel (0) target = $region33
    $region32: #{tpu_custom_call.1} parent=1 // pred_region
      %s200 = ssub.s32 512, 512
      %201 = vsyncadd [#allocation12], %s200
      %s202 = sshll.u32 [#allocation11], 4
      %s203 = int_to_ptr.vmem [resolvable:$true] %s202
      %208 = dma.hbm_to_vmem [thread:$0]  %s15, 512, %s203, [#allocation12], 128, 128, 8
    $region33: #{tpu_custom_call.1} parent=1 // pred_fallthru
      _
    // Predicated region
    $region34: #{tpu_custom_call.1} parent=1 // pred_check
      _
    $region35: #{tpu_custom_call.1} parent=1 // pred_check_branch
      %210 = sbr.rel (0) target = $region37
    $region36: #{tpu_custom_call.1} parent=1 // pred_region
      %s212 = ssub.s32 512, 512
      %213 = vsyncadd [#allocation12], %s212
      %s214 = sshll.u32 [#allocation13], 4
      %s215 = int_to_ptr.vmem [resolvable:$true] %s214
      %220 = dma.hbm_to_vmem [thread:$0]  %s17, 512, %s215, [#allocation12], 128, 128, 8
    $region37: #{tpu_custom_call.1} parent=1 // pred_fallthru
      _
    // Predicated region
    $region38: #{tpu_custom_call.1} parent=1 // pred_check
      _
    $region39: #{tpu_custom_call.1} parent=1 // pred_check_branch
      %222 = sbr.rel (0) target = $region41
    $region40: #{tpu_custom_call.1} parent=1 // pred_region
      %s224 = ssub.s32 512, 512
      %225 = vsyncadd [#allocation15], %s224
      %s226 = sshll.u32 [#allocation14], 4
      %s227 = int_to_ptr.vmem [resolvable:$true] %s226
      %232 = dma.hbm_to_vmem [thread:$0]  %s19, 512, %s227, [#allocation15], 128, 128, 8
    $region41: #{tpu_custom_call.1} parent=1 // pred_fallthru
      _
    // Predicated region
    $region42: #{tpu_custom_call.1} parent=1 // pred_check
      _
    $region43: #{tpu_custom_call.1} parent=1 // pred_check_branch
      %234 = sbr.rel (0) target = $region45
    $region44: #{tpu_custom_call.1} parent=1 // pred_region
      %s236 = ssub.s32 16, 16
      %237 = vsyncadd [#allocation15], %s236
      %s239 = sshll.u32 [#allocation16], 4
      %s240 = int_to_ptr.vmem [resolvable:$true] %s239
      %242 = dma.hbm_to_vmem [thread:$0]  %s21, 16, %s240, [#allocation15]
    $region45: #{tpu_custom_call.1} parent=1 // pred_fallthru
      _
    // Predicated region
    $region46: #{tpu_custom_call.1} parent=1 // pred_check
      _
    $region47: #{tpu_custom_call.1} parent=1 // pred_check_branch
      %244 = sbr.rel (0) target = $region49
    $region48: #{tpu_custom_call.1} parent=1 // pred_region
      %s246 = ssub.s32 16, 16
      %247 = vsyncadd [#allocation18], %s246
      %s249 = sshll.u32 [#allocation17], 4
      %s250 = int_to_ptr.vmem [resolvable:$true] %s249
      %252 = dma.hbm_to_vmem [thread:$0]  %s23, 16, %s250, [#allocation18]
    $region49: #{tpu_custom_call.1} parent=1 // pred_fallthru
      _
    // Predicated region
    $region50: #{tpu_custom_call.1} parent=1 // pred_check
      _
    $region51: #{tpu_custom_call.1} parent=1 // pred_check_branch
      %254 = sbr.rel (0) target = $region53
    $region52: #{tpu_custom_call.1} parent=1 // pred_region
      %s256 = ssub.s32 16, 16
      %257 = vsyncadd [#allocation18], %s256
      %s259 = sshll.u32 [#allocation19], 4
      %s260 = int_to_ptr.vmem [resolvable:$true] %s259
      %262 = dma.hbm_to_vmem [thread:$0]  %s25, 16, %s260, [#allocation18]
    $region53: #{tpu_custom_call.1} parent=1 // pred_fallthru
      _
    // Predicated region
    $region54: #{tpu_custom_call.1} parent=1 // pred_check
      _
    $region55: #{tpu_custom_call.1} parent=1 // pred_check_branch
      %264 = sbr.rel (0) target = $region57
    $region56: #{tpu_custom_call.1} parent=1 // pred_region
      %s266 = ssub.s32 512, 512
      %267 = vsyncadd [#allocation21], %s266
      %s268 = sshll.u32 [#allocation20], 4
      %s269 = int_to_ptr.vmem [resolvable:$true] %s268
      %274 = dma.hbm_to_vmem [thread:$0]  %s27, 512, %s269, [#allocation21], 128, 128, 8
    $region57: #{tpu_custom_call.1} parent=1 // pred_fallthru
      _
    // Predicated region
    $region58: #{tpu_custom_call.1} parent=1 // pred_check
      _
    $region59: #{tpu_custom_call.1} parent=1 // pred_check_branch
      %276 = sbr.rel (0) target = $region61
    $region60: #{tpu_custom_call.1} parent=1 // pred_region
      %s278 = ssub.s32 16, 16
      %279 = vsyncadd [#allocation21], %s278
      %s281 = sshll.u32 [#allocation22], 4
      %s282 = int_to_ptr.vmem [resolvable:$true] %s281
      %284 = dma.hbm_to_vmem [thread:$0]  %s29, 16, %s282, [#allocation21]
    $region61: #{tpu_custom_call.1} parent=1 // pred_fallthru
      _
    // Predicated region
    $region62: #{tpu_custom_call.1} parent=1 // pred_check
      _
    $region63: #{tpu_custom_call.1} parent=1 // pred_check_branch
      %286 = sbr.rel (0) target = $region65
    $region64: #{tpu_custom_call.1} parent=1 // pred_region
      %s288 = ssub.s32 16, 16
      %289 = vsyncadd [#allocation24], %s288
      %s291 = sshll.u32 [#allocation23], 4
      %s292 = int_to_ptr.vmem [resolvable:$true] %s291
      %294 = dma.hbm_to_vmem [thread:$0]  %s31, 16, %s292, [#allocation24]
    $region65: #{tpu_custom_call.1} parent=1 // pred_fallthru
      _
    // Predicated region
    $region66: #{tpu_custom_call.1} parent=1 // pred_check
      _
    $region67: #{tpu_custom_call.1} parent=1 // pred_check_branch
      %296 = sbr.rel (0) target = $region69
    $region68: #{tpu_custom_call.1} parent=1 // pred_region
      %s298 = ssub.s32 16, 16
      %299 = vsyncadd [#allocation24], %s298
      %s301 = sshll.u32 [#allocation25], 4
      %s302 = int_to_ptr.vmem [resolvable:$true] %s301
      %304 = dma.hbm_to_vmem [thread:$0]  %s33, 16, %s302, [#allocation24]
    $region69: #{tpu_custom_call.1} parent=1 // pred_fallthru
      _
    // Predicated region
    $region70: #{tpu_custom_call.1} parent=1 // pred_check
      _
    $region71: #{tpu_custom_call.1} parent=1 // pred_check_branch
      %306 = sbr.rel (0) target = $region73
    $region72: #{tpu_custom_call.1} parent=1 // pred_region
      %s308 = ssub.s32 512, 512
      %309 = vsyncadd [#allocation27], %s308
      %s310 = sshll.u32 [#allocation26], 4
      %s311 = int_to_ptr.vmem [resolvable:$true] %s310
      %316 = dma.hbm_to_vmem [thread:$0]  %s35, 512, %s311, [#allocation27], 128, 128, 8
    $region73: #{tpu_custom_call.1} parent=1 // pred_fallthru
      _
    // Predicated region
    $region74: #{tpu_custom_call.1} parent=1 // pred_check
      _
    $region75: #{tpu_custom_call.1} parent=1 // pred_check_branch
      %318 = sbr.rel (0) target = $region77
    $region76: #{tpu_custom_call.1} parent=1 // pred_region
      %s320 = ssub.s32 16, 16
      %321 = vsyncadd [#allocation27], %s320
      %s323 = sshll.u32 [#allocation28], 4
      %s324 = int_to_ptr.vmem [resolvable:$true] %s323
      %326 = dma.hbm_to_vmem [thread:$0]  %s37, 16, %s324, [#allocation27]
    $region77: #{tpu_custom_call.1} parent=1 // pred_fallthru
      _
    // Predicated region
    $region78: #{tpu_custom_call.1} parent=1 // pred_check
      _
    $region79: #{tpu_custom_call.1} parent=1 // pred_check_branch
      %328 = sbr.rel (0) target = $region81
    $region80: #{tpu_custom_call.1} parent=1 // pred_region
      %s330 = ssub.s32 512, 512
      %331 = vsyncadd [#allocation30], %s330
      %s332 = sshll.u32 [#allocation29], 4
      %s333 = int_to_ptr.vmem [resolvable:$true] %s332
      %338 = dma.hbm_to_vmem [thread:$0]  %s39, 512, %s333, [#allocation30], 128, 128, 8
    $region81: #{tpu_custom_call.1} parent=1 // pred_fallthru
      _
    // Predicated region
    $region82: #{tpu_custom_call.1} parent=1 // pred_check
      _
    $region83: #{tpu_custom_call.1} parent=1 // pred_check_branch
      %340 = sbr.rel (0) target = $region85
    $region84: #{tpu_custom_call.1} parent=1 // pred_region
      %s342 = ssub.s32 16, 16
      %343 = vsyncadd [#allocation30], %s342
      %s345 = sshll.u32 [#allocation31], 4
      %s346 = int_to_ptr.vmem [resolvable:$true] %s345
      %348 = dma.hbm_to_vmem [thread:$0]  %s41, 16, %s346, [#allocation30]
    $region85: #{tpu_custom_call.1} parent=1 // pred_fallthru
      _
    // Predicated region
    $region86: #{tpu_custom_call.1} parent=1 // pred_check
      _
    $region87: #{tpu_custom_call.1} parent=1 // pred_check_branch
      %350 = sbr.rel (0) target = $region89
    $region88: #{tpu_custom_call.1} parent=1 // pred_region
      %s352 = ssub.s32 16, 16
      %353 = vsyncadd [#allocation33], %s352
      %s355 = sshll.u32 [#allocation32], 4
      %s356 = int_to_ptr.vmem [resolvable:$true] %s355
      %358 = dma.hbm_to_vmem [thread:$0]  %s43, 16, %s356, [#allocation33]
    $region89: #{tpu_custom_call.1} parent=1 // pred_fallthru
      _
    // Predicated region
    $region90: #{tpu_custom_call.1} parent=1 // pred_check
      _
    $region91: #{tpu_custom_call.1} parent=1 // pred_check_branch
      %360 = sbr.rel (0) target = $region93
    $region92: #{tpu_custom_call.1} parent=1 // pred_region
      %s362 = ssub.s32 16, 16
      %363 = vsyncadd [#allocation33], %s362
      %s365 = sshll.u32 [#allocation34], 4
      %s366 = int_to_ptr.vmem [resolvable:$true] %s365
      %368 = dma.hbm_to_vmem [thread:$0]  %s45, 16, %s366, [#allocation33]
    $region93: #{tpu_custom_call.1} parent=1 // pred_fallthru
      _
    // Predicated region
    $region94: #{tpu_custom_call.1} parent=1 // pred_check
      _
    $region95: #{tpu_custom_call.1} parent=1 // pred_check_branch
      %370 = sbr.rel (0) target = $region97
    $region96: #{tpu_custom_call.1} parent=1 // pred_region
      %s372 = ssub.s32 512, 512
      %373 = vsyncadd [#allocation36], %s372
      %s374 = sshll.u32 [#allocation35], 4
      %s375 = int_to_ptr.vmem [resolvable:$true] %s374
      %380 = dma.hbm_to_vmem [thread:$0]  %s47, 512, %s375, [#allocation36], 128, 128, 8
    $region97: #{tpu_custom_call.1} parent=1 // pred_fallthru
      _
    // Predicated region
    $region98: #{tpu_custom_call.1} parent=1 // pred_check
      _
    $region99: #{tpu_custom_call.1} parent=1 // pred_check_branch
      %382 = sbr.rel (0) target = $region101
    $region100: #{tpu_custom_call.1} parent=1 // pred_region
      %s384 = ssub.s32 512, 512
      %385 = vsyncadd [#allocation36], %s384
      %s386 = sshll.u32 [#allocation37], 4
      %s387 = int_to_ptr.vmem [resolvable:$true] %s386
      %392 = dma.hbm_to_vmem [thread:$0]  %s49, 512, %s387, [#allocation36], 128, 128, 8
    $region101: #{tpu_custom_call.1} parent=1 // pred_fallthru
      _
    // Predicated region
    $region102: #{tpu_custom_call.1} parent=1 // pred_check
      _
    $region103: #{tpu_custom_call.1} parent=1 // pred_check_branch
      %394 = sbr.rel (0) target = $region105
    $region104: #{tpu_custom_call.1} parent=1 // pred_region
      %s396 = ssub.s32 512, 512
      %397 = vsyncadd [#allocation39], %s396
      %s398 = sshll.u32 [#allocation38], 4
      %s399 = int_to_ptr.vmem [resolvable:$true] %s398
      %404 = dma.hbm_to_vmem [thread:$0]  %s51, 512, %s399, [#allocation39], 128, 128, 8
    $region105: #{tpu_custom_call.1} parent=1 // pred_fallthru
      _
    // Predicated region
    $region106: #{tpu_custom_call.1} parent=1 // pred_check
      _
    $region107: #{tpu_custom_call.1} parent=1 // pred_check_branch
      %406 = sbr.rel (0) target = $region109
    $region108: #{tpu_custom_call.1} parent=1 // pred_region
      %s408 = ssub.s32 16, 16
      %409 = vsyncadd [#allocation39], %s408
      %s411 = sshll.u32 [#allocation40], 4
      %s412 = int_to_ptr.vmem [resolvable:$true] %s411
      %414 = dma.hbm_to_vmem [thread:$0]  %s53, 16, %s412, [#allocation39]
    $region109: #{tpu_custom_call.1} parent=1 // pred_fallthru
      _
    // Predicated region
    $region110: #{tpu_custom_call.1} parent=1 // pred_check
      _
    $region111: #{tpu_custom_call.1} parent=1 // pred_check_branch
      %416 = sbr.rel (0) target = $region113
    $region112: #{tpu_custom_call.1} parent=1 // pred_region
      %s418 = ssub.s32 16, 16
      %419 = vsyncadd [#allocation42], %s418
      %s421 = sshll.u32 [#allocation41], 4
      %s422 = int_to_ptr.vmem [resolvable:$true] %s421
      %424 = dma.hbm_to_vmem [thread:$0]  %s55, 16, %s422, [#allocation42]
    $region113: #{tpu_custom_call.1} parent=1 // pred_fallthru
      _
    // Predicated region
    $region114: #{tpu_custom_call.1} parent=1 // pred_check
      _
    $region115: #{tpu_custom_call.1} parent=1 // pred_check_branch
      %426 = sbr.rel (0) target = $region117
    $region116: #{tpu_custom_call.1} parent=1 // pred_region
      %s428 = ssub.s32 16, 16
      %429 = vsyncadd [#allocation42], %s428
      %s431 = sshll.u32 [#allocation43], 4
      %s432 = int_to_ptr.vmem [resolvable:$true] %s431
      %434 = dma.hbm_to_vmem [thread:$0]  %s57, 16, %s432, [#allocation42]
    $region117: #{tpu_custom_call.1} parent=1 // pred_fallthru
      _
    // Predicated region
    $region118: #{tpu_custom_call.1} parent=1 // pred_check
      _
    $region119: #{tpu_custom_call.1} parent=1 // pred_check_branch
      %436 = sbr.rel (0) target = $region121
    $region120: #{tpu_custom_call.1} parent=1 // pred_region
      %s438 = ssub.s32 512, 512
      %439 = vsyncadd [#allocation45], %s438
      %s440 = sshll.u32 [#allocation44], 4
      %s441 = int_to_ptr.vmem [resolvable:$true] %s440
      %446 = dma.hbm_to_vmem [thread:$0]  %s59, 512, %s441, [#allocation45], 128, 128, 8
    $region121: #{tpu_custom_call.1} parent=1 // pred_fallthru
      _
    // Predicated region
    $region122: #{tpu_custom_call.1} parent=1 // pred_check
      _
    $region123: #{tpu_custom_call.1} parent=1 // pred_check_branch
      %448 = sbr.rel (0) target = $region125
    $region124: #{tpu_custom_call.1} parent=1 // pred_region
      %s450 = ssub.s32 16, 16
      %451 = vsyncadd [#allocation45], %s450
      %s453 = sshll.u32 [#allocation46], 4
      %s454 = int_to_ptr.vmem [resolvable:$true] %s453
      %456 = dma.hbm_to_vmem [thread:$0]  %s61, 16, %s454, [#allocation45]
    $region125: #{tpu_custom_call.1} parent=1 // pred_fallthru
      _
    // Predicated region
    $region126: #{tpu_custom_call.1} parent=1 // pred_check
      _
    $region127: #{tpu_custom_call.1} parent=1 // pred_check_branch
      %458 = sbr.rel (0) target = $region129
    $region128: #{tpu_custom_call.1} parent=1 // pred_region
      %s460 = ssub.s32 16, 16
      %461 = vsyncadd [#allocation48], %s460
      %s463 = sshll.u32 [#allocation47], 4
      %s464 = int_to_ptr.vmem [resolvable:$true] %s463
      %466 = dma.hbm_to_vmem [thread:$0]  %s63, 16, %s464, [#allocation48]
    $region129: #{tpu_custom_call.1} parent=1 // pred_fallthru
      _
    // Predicated region
    $region130: #{tpu_custom_call.1} parent=1 // pred_check
      _
    $region131: #{tpu_custom_call.1} parent=1 // pred_check_branch
      %468 = sbr.rel (0) target = $region133
    $region132: #{tpu_custom_call.1} parent=1 // pred_region
      %s470 = ssub.s32 16, 16
      %471 = vsyncadd [#allocation48], %s470
      %s473 = sshll.u32 [#allocation49], 4
      %s474 = int_to_ptr.vmem [resolvable:$true] %s473
      %476 = dma.hbm_to_vmem [thread:$0]  %s65, 16, %s474, [#allocation48]
    $region133: #{tpu_custom_call.1} parent=1 // pred_fallthru
      _
    // Predicated region
    $region134: #{tpu_custom_call.1} parent=1 // pred_check
      _
    $region135: #{tpu_custom_call.1} parent=1 // pred_check_branch
      %478 = sbr.rel (0) target = $region137
    $region136: #{tpu_custom_call.1} parent=1 // pred_region
      %s480 = ssub.s32 512, 512
      %481 = vsyncadd [#allocation51], %s480
      %s482 = sshll.u32 [#allocation50], 4
      %s483 = int_to_ptr.vmem [resolvable:$true] %s482
      %488 = dma.hbm_to_vmem [thread:$0]  %s67, 512, %s483, [#allocation51], 128, 128, 8
    $region137: #{tpu_custom_call.1} parent=1 // pred_fallthru
      _
    // Predicated region
    $region138: #{tpu_custom_call.1} parent=1 // pred_check
      _
    $region139: #{tpu_custom_call.1} parent=1 // pred_check_branch
      %490 = sbr.rel (0) target = $region141
    $region140: #{tpu_custom_call.1} parent=1 // pred_region
      %s492 = ssub.s32 16, 16
      %493 = vsyncadd [#allocation51], %s492
      %s495 = sshll.u32 [#allocation52], 4
      %s496 = int_to_ptr.vmem [resolvable:$true] %s495
      %498 = dma.hbm_to_vmem [thread:$0]  %s69, 16, %s496, [#allocation51]
    $region141: #{tpu_custom_call.1} parent=1 // pred_fallthru
      _
    // Predicated region
    $region142: #{tpu_custom_call.1} parent=1 // pred_check
      _
    $region143: #{tpu_custom_call.1} parent=1 // pred_check_branch
      %500 = sbr.rel (0) target = $region145
    $region144: #{tpu_custom_call.1} parent=1 // pred_region
      %s502 = ssub.s32 512, 512
      %503 = vsyncadd [#allocation54], %s502
      %s504 = sshll.u32 [#allocation53], 4
      %s505 = int_to_ptr.vmem [resolvable:$true] %s504
      %510 = dma.hbm_to_vmem [thread:$0]  %s71, 512, %s505, [#allocation54], 128, 128, 8
    $region145: #{tpu_custom_call.1} parent=1 // pred_fallthru
      _
    // Predicated region
    $region146: #{tpu_custom_call.1} parent=1 // pred_check
      _
    $region147: #{tpu_custom_call.1} parent=1 // pred_check_branch
      %512 = sbr.rel (0) target = $region149
    $region148: #{tpu_custom_call.1} parent=1 // pred_region
      %s514 = ssub.s32 16, 16
      %515 = vsyncadd [#allocation54], %s514
      %s517 = sshll.u32 [#allocation55], 4
      %s518 = int_to_ptr.vmem [resolvable:$true] %s517
      %520 = dma.hbm_to_vmem [thread:$0]  %s73, 16, %s518, [#allocation54]
    $region149: #{tpu_custom_call.1} parent=1 // pred_fallthru
      _
    // Predicated region
    $region150: #{tpu_custom_call.1} parent=1 // pred_check
      _
    $region151: #{tpu_custom_call.1} parent=1 // pred_check_branch
      %522 = sbr.rel (0) target = $region153
    $region152: #{tpu_custom_call.1} parent=1 // pred_region
      %s524 = ssub.s32 512, 512
      %525 = vsyncadd [#allocation57], %s524
      %s526 = sshll.u32 [#allocation56], 4
      %s527 = int_to_ptr.vmem [resolvable:$true] %s526
      %532 = dma.hbm_to_vmem [thread:$0]  %s75, 512, %s527, [#allocation57], 128, 128, 8
    $region153: #{tpu_custom_call.1} parent=1 // pred_fallthru
      _
    // Predicated region
    $region154: #{tpu_custom_call.1} parent=1 // pred_check
      _
    $region155: #{tpu_custom_call.1} parent=1 // pred_check_branch
      %534 = sbr.rel (0) target = $region157
    $region156: #{tpu_custom_call.1} parent=1 // pred_region
      %s536 = ssub.s32 512, 512
      %537 = vsyncadd [#allocation57], %s536
      %s538 = sshll.u32 [#allocation58], 4
      %s539 = int_to_ptr.vmem [resolvable:$true] %s538
      %544 = dma.hbm_to_vmem [thread:$0]  %s77, 512, %s539, [#allocation57], 128, 128, 8
    $region157: #{tpu_custom_call.1} parent=1 // pred_fallthru
      _
    // Predicated region
    $region158: #{tpu_custom_call.1} parent=1 // pred_check
      _
    $region159: #{tpu_custom_call.1} parent=1 // pred_check_branch
      %546 = sbr.rel (0) target = $region161
    $region160: #{tpu_custom_call.1} parent=1 // pred_region
      _
    $region161: #{tpu_custom_call.1} parent=1 // pred_fallthru
      _
    // Predicated region
    $region162: #{tpu_custom_call.1} parent=1 // pred_check
      _
    $region163: #{tpu_custom_call.1} parent=1 // pred_check_branch
      %548 = sbr.rel (0) target = $region165
    $region164: #{tpu_custom_call.1} parent=1 // pred_region
      %s550 = ssub.s32 16, 16
      %551 = vsyncadd [#allocation60], %s550
      %s553 = sshll.u32 [#allocation59], 4
      %s554 = int_to_ptr.vmem [resolvable:$true] %s553
      %556 = dma.hbm_to_vmem [thread:$0]  %s81, 16, %s554, [#allocation60]
    $region165: #{tpu_custom_call.1} parent=1 // pred_fallthru
      _
    // Predicated region
    $region166: #{tpu_custom_call.1} parent=1 // pred_check
      _
    $region167: #{tpu_custom_call.1} parent=1 // pred_check_branch
      %558 = sbr.rel (0) target = $region169
    $region168: #{tpu_custom_call.1} parent=1 // pred_region
      _
    $region169: #{tpu_custom_call.1} parent=1 // pred_fallthru
      _
    // Predicated region
    $region170: #{tpu_custom_call.1} parent=1 // pred_check
      _
    $region171: #{tpu_custom_call.1} parent=1 // pred_check_branch
      %560 = sbr.rel (0) target = $region173
    $region172: #{tpu_custom_call.1} parent=1 // pred_region
      _
    $region173: #{tpu_custom_call.1} parent=1 // pred_fallthru
      _
    // Predicated region
    $region174: #{tpu_custom_call.1} parent=1 // pred_check
      _
    $region175: #{tpu_custom_call.1} parent=1 // pred_check_branch
      %562 = sbr.rel (0) target = $region177
    $region176: #{tpu_custom_call.1} parent=1 // pred_region
      %s564 = ssub.s32 512, 512
      %565 = vsyncadd [#allocation60], %s564
      %s566 = sshll.u32 [#allocation61], 4
      %s567 = int_to_ptr.vmem [resolvable:$true] %s566
      %572 = dma.hbm_to_vmem [thread:$0]  %s87, 512, %s567, [#allocation60], 128, 128, 8
    $region177: #{tpu_custom_call.1} parent=1 // pred_fallthru
      _
    // Predicated region
    $region178: #{tpu_custom_call.1} parent=1 // pred_check
      _
    $region179: #{tpu_custom_call.1} parent=1 // pred_check_branch
      %574 = sbr.rel (0) target = $region181
    $region180: #{tpu_custom_call.1} parent=1 // pred_region
      _
    $region181: #{tpu_custom_call.1} parent=1 // pred_fallthru
      _
    // Predicated region
    $region182: #{tpu_custom_call.1} parent=1 // pred_check
      _
    $region183: #{tpu_custom_call.1} parent=1 // pred_check_branch
      %576 = sbr.rel (0) target = $region185
    $region184: #{tpu_custom_call.1} parent=1 // pred_region
      %s578 = ssub.s32 512, 512
      %579 = vsyncadd [#allocation63], %s578
      %s580 = sshll.u32 [#allocation62], 4
      %s581 = int_to_ptr.vmem [resolvable:$true] %s580
      %586 = dma.hbm_to_vmem [thread:$0]  %s91, 512, %s581, [#allocation63], 128, 128, 8
    $region185: #{tpu_custom_call.1} parent=1 // pred_fallthru
      _
    // Predicated region
    $region186: #{tpu_custom_call.1} parent=1 // pred_check
      _
    $region187: #{tpu_custom_call.1} parent=1 // pred_check_branch
      %588 = sbr.rel (0) target = $region189
    $region188: #{tpu_custom_call.1} parent=1 // pred_region
      _
    $region189: #{tpu_custom_call.1} parent=1 // pred_fallthru
      _
    // Predicated region
    $region190: #{tpu_custom_call.1} parent=1 // pred_check
      _
    $region191: #{tpu_custom_call.1} parent=1 // pred_check_branch
      %590 = sbr.rel (0) target = $region193
    $region192: #{tpu_custom_call.1} parent=1 // pred_region
      _
    $region193: #{tpu_custom_call.1} parent=1 // pred_fallthru
      _
    // Predicated region
    $region194: #{tpu_custom_call.1} parent=1 // pred_check
      _
    $region195: #{tpu_custom_call.1} parent=1 // pred_check_branch
      %592 = sbr.rel (0) target = $region197
    $region196: #{tpu_custom_call.1} parent=1 // pred_region
      _
    $region197: #{tpu_custom_call.1} parent=1 // pred_fallthru
      _
    // Predicated region
    $region198: #{tpu_custom_call.1} parent=1 // pred_check
      _
    $region199: #{tpu_custom_call.1} parent=1 // pred_check_branch
      %594 = sbr.rel (0) target = $region201
    $region200: #{tpu_custom_call.1} parent=1 // pred_region
      _
    $region201: #{tpu_custom_call.1} parent=1 // pred_fallthru
      _
    // Predicated region
    $region202: #{tpu_custom_call.1} parent=1 // pred_check
      _
    $region203: #{tpu_custom_call.1} parent=1 // pred_check_branch
      %596 = sbr.rel (0) target = $region205
    $region204: #{tpu_custom_call.1} parent=1 // pred_region
      _
    $region205: #{tpu_custom_call.1} parent=1 // pred_fallthru
      _
    // Predicated region
    $region206: #{tpu_custom_call.1} parent=1 // pred_check
      _
    $region207: #{tpu_custom_call.1} parent=1 // pred_check_branch
      %598 = sbr.rel (0) target = $region209
    $region208: #{tpu_custom_call.1} parent=1 // pred_region
      _
    $region209: #{tpu_custom_call.1} parent=1 // pred_fallthru
      _
    // Predicated region
    $region210: #{tpu_custom_call.1} parent=1 // pred_check
      _
    $region211: #{tpu_custom_call.1} parent=1 // pred_check_branch
      %600 = sbr.rel (0) target = $region213
    $region212: #{tpu_custom_call.1} parent=1 // pred_region
      _
    $region213: #{tpu_custom_call.1} parent=1 // pred_fallthru
      _
    // Predicated region
    $region214: #{tpu_custom_call.1} parent=1 // pred_check
      _
    $region215: #{tpu_custom_call.1} parent=1 // pred_check_branch
      %602 = sbr.rel (0) target = $region217
    $region216: #{tpu_custom_call.1} parent=1 // pred_region
      _
    $region217: #{tpu_custom_call.1} parent=1 // pred_fallthru
      _
    // Predicated region
    $region218: #{tpu_custom_call.1} parent=1 // pred_check
      _
    $region219: #{tpu_custom_call.1} parent=1 // pred_check_branch
      %604 = sbr.rel (0) target = $region221
    $region220: #{tpu_custom_call.1} parent=1 // pred_region
      _
    $region221: #{tpu_custom_call.1} parent=1 // pred_fallthru
      _
    // Predicated region
    $region222: #{tpu_custom_call.1} parent=1 // pred_check
      _
    $region223: #{tpu_custom_call.1} parent=1 // pred_check_branch
      %606 = sbr.rel (0) target = $region225
    $region224: #{tpu_custom_call.1} parent=1 // pred_region
      %607 = dma.done [#allocation4], 256
    $region225: #{tpu_custom_call.1} parent=1 // pred_fallthru
      _
    // Predicated region
    $region226: #{tpu_custom_call.1} parent=1 // pred_check
      _
    $region227: #{tpu_custom_call.1} parent=1 // pred_check_branch
      %609 = sbr.rel (0) target = $region229
    $region228: #{tpu_custom_call.1} parent=1 // pred_region
      %610 = dma.done [#allocation6], 256
    $region229: #{tpu_custom_call.1} parent=1 // pred_fallthru
      _
    // Predicated region
    $region230: #{tpu_custom_call.1} parent=1 // pred_check
      _
    $region231: #{tpu_custom_call.1} parent=1 // pred_check_branch
      %612 = sbr.rel (0) target = $region233
    $region232: #{tpu_custom_call.1} parent=1 // pred_region
      %613 = dma.done [#allocation6], 128
    $region233: #{tpu_custom_call.1} parent=1 // pred_fallthru
      _
    // Predicated region
    $region234: #{tpu_custom_call.1} parent=1 // pred_check
      _
    $region235: #{tpu_custom_call.1} parent=1 // pred_check_branch
      %615 = sbr.rel (0) target = $region237
    $region236: #{tpu_custom_call.1} parent=1 // pred_region
      %616 = dma.done [#allocation9], 16
    $region237: #{tpu_custom_call.1} parent=1 // pred_fallthru
      _
    // Predicated region
    $region238: #{tpu_custom_call.1} parent=1 // pred_check
      _
    $region239: #{tpu_custom_call.1} parent=1 // pred_check_branch
      %618 = sbr.rel (0) target = $region241
    $region240: #{tpu_custom_call.1} parent=1 // pred_region
      %619 = dma.done [#allocation9], 16
    $region241: #{tpu_custom_call.1} parent=1 // pred_fallthru
      _
    // Predicated region
    $region242: #{tpu_custom_call.1} parent=1 // pred_check
      _
    $region243: #{tpu_custom_call.1} parent=1 // pred_check_branch
      %621 = sbr.rel (0) target = $region245
    $region244: #{tpu_custom_call.1} parent=1 // pred_region
      %622 = dma.done [#allocation12], 512
    $region245: #{tpu_custom_call.1} parent=1 // pred_fallthru
      _
    // Predicated region
    $region246: #{tpu_custom_call.1} parent=1 // pred_check
      _
    $region247: #{tpu_custom_call.1} parent=1 // pred_check_branch
      %624 = sbr.rel (0) target = $region249
    $region248: #{tpu_custom_call.1} parent=1 // pred_region
      %625 = dma.done [#allocation12], 512
    $region249: #{tpu_custom_call.1} parent=1 // pred_fallthru
      _
    // Predicated region
    $region250: #{tpu_custom_call.1} parent=1 // pred_check
      _
    $region251: #{tpu_custom_call.1} parent=1 // pred_check_branch
      %627 = sbr.rel (0) target = $region253
    $region252: #{tpu_custom_call.1} parent=1 // pred_region
      %628 = dma.done [#allocation15], 512
    $region253: #{tpu_custom_call.1} parent=1 // pred_fallthru
      _
    // Predicated region
    $region254: #{tpu_custom_call.1} parent=1 // pred_check
      _
    $region255: #{tpu_custom_call.1} parent=1 // pred_check_branch
      %630 = sbr.rel (0) target = $region257
    $region256: #{tpu_custom_call.1} parent=1 // pred_region
      %631 = dma.done [#allocation15], 16
    $region257: #{tpu_custom_call.1} parent=1 // pred_fallthru
      _
    // Predicated region
    $region258: #{tpu_custom_call.1} parent=1 // pred_check
      _
    $region259: #{tpu_custom_call.1} parent=1 // pred_check_branch
      %633 = sbr.rel (0) target = $region261
    $region260: #{tpu_custom_call.1} parent=1 // pred_region
      %634 = dma.done [#allocation18], 16
    $region261: #{tpu_custom_call.1} parent=1 // pred_fallthru
      _
    // Predicated region
    $region262: #{tpu_custom_call.1} parent=1 // pred_check
      _
    $region263: #{tpu_custom_call.1} parent=1 // pred_check_branch
      %636 = sbr.rel (0) target = $region265
    $region264: #{tpu_custom_call.1} parent=1 // pred_region
      %637 = dma.done [#allocation18], 16
    $region265: #{tpu_custom_call.1} parent=1 // pred_fallthru
      _
    // Predicated region
    $region266: #{tpu_custom_call.1} parent=1 // pred_check
      _
    $region267: #{tpu_custom_call.1} parent=1 // pred_check_branch
      %639 = sbr.rel (0) target = $region269
    $region268: #{tpu_custom_call.1} parent=1 // pred_region
      %640 = dma.done [#allocation21], 512
    $region269: #{tpu_custom_call.1} parent=1 // pred_fallthru
      _
    // Predicated region
    $region270: #{tpu_custom_call.1} parent=1 // pred_check
      _
    $region271: #{tpu_custom_call.1} parent=1 // pred_check_branch
      %642 = sbr.rel (0) target = $region273
    $region272: #{tpu_custom_call.1} parent=1 // pred_region
      %643 = dma.done [#allocation21], 16
    $region273: #{tpu_custom_call.1} parent=1 // pred_fallthru
      _
    // Predicated region
    $region274: #{tpu_custom_call.1} parent=1 // pred_check
      _
    $region275: #{tpu_custom_call.1} parent=1 // pred_check_branch
      %645 = sbr.rel (0) target = $region277
    $region276: #{tpu_custom_call.1} parent=1 // pred_region
      %646 = dma.done [#allocation24], 16
    $region277: #{tpu_custom_call.1} parent=1 // pred_fallthru
      _
    // Predicated region
    $region278: #{tpu_custom_call.1} parent=1 // pred_check
      _
    $region279: #{tpu_custom_call.1} parent=1 // pred_check_branch
      %648 = sbr.rel (0) target = $region281
    $region280: #{tpu_custom_call.1} parent=1 // pred_region
      %649 = dma.done [#allocation24], 16
    $region281: #{tpu_custom_call.1} parent=1 // pred_fallthru
      _
    // Predicated region
    $region282: #{tpu_custom_call.1} parent=1 // pred_check
      _
    $region283: #{tpu_custom_call.1} parent=1 // pred_check_branch
      %651 = sbr.rel (0) target = $region285
    $region284: #{tpu_custom_call.1} parent=1 // pred_region
      %652 = dma.done [#allocation27], 512
    $region285: #{tpu_custom_call.1} parent=1 // pred_fallthru
      _
    // Predicated region
    $region286: #{tpu_custom_call.1} parent=1 // pred_check
      _
    $region287: #{tpu_custom_call.1} parent=1 // pred_check_branch
      %654 = sbr.rel (0) target = $region289
    $region288: #{tpu_custom_call.1} parent=1 // pred_region
      %655 = dma.done [#allocation27], 16
    $region289: #{tpu_custom_call.1} parent=1 // pred_fallthru
      _
    // Predicated region
    $region290: #{tpu_custom_call.1} parent=1 // pred_check
      _
    $region291: #{tpu_custom_call.1} parent=1 // pred_check_branch
      %657 = sbr.rel (0) target = $region293
    $region292: #{tpu_custom_call.1} parent=1 // pred_region
      %658 = dma.done [#allocation30], 512
    $region293: #{tpu_custom_call.1} parent=1 // pred_fallthru
      _
    // Predicated region
    $region294: #{tpu_custom_call.1} parent=1 // pred_check
      _
    $region295: #{tpu_custom_call.1} parent=1 // pred_check_branch
      %660 = sbr.rel (0) target = $region297
    $region296: #{tpu_custom_call.1} parent=1 // pred_region
      %661 = dma.done [#allocation30], 16
    $region297: #{tpu_custom_call.1} parent=1 // pred_fallthru
      _
    // Predicated region
    $region298: #{tpu_custom_call.1} parent=1 // pred_check
      _
    $region299: #{tpu_custom_call.1} parent=1 // pred_check_branch
      %663 = sbr.rel (0) target = $region301
    $region300: #{tpu_custom_call.1} parent=1 // pred_region
      %664 = dma.done [#allocation33], 16
    $region301: #{tpu_custom_call.1} parent=1 // pred_fallthru
      _
    // Predicated region
    $region302: #{tpu_custom_call.1} parent=1 // pred_check
      _
    $region303: #{tpu_custom_call.1} parent=1 // pred_check_branch
      %666 = sbr.rel (0) target = $region305
    $region304: #{tpu_custom_call.1} parent=1 // pred_region
      %667 = dma.done [#allocation33], 16
    $region305: #{tpu_custom_call.1} parent=1 // pred_fallthru
      _
    // Predicated region
    $region306: #{tpu_custom_call.1} parent=1 // pred_check
      _
    $region307: #{tpu_custom_call.1} parent=1 // pred_check_branch
      %669 = sbr.rel (0) target = $region309
    $region308: #{tpu_custom_call.1} parent=1 // pred_region
      %670 = dma.done [#allocation36], 512
    $region309: #{tpu_custom_call.1} parent=1 // pred_fallthru
      _
    // Predicated region
    $region310: #{tpu_custom_call.1} parent=1 // pred_check
      _
    $region311: #{tpu_custom_call.1} parent=1 // pred_check_branch
      %672 = sbr.rel (0) target = $region313
    $region312: #{tpu_custom_call.1} parent=1 // pred_region
      %673 = dma.done [#allocation36], 512
    $region313: #{tpu_custom_call.1} parent=1 // pred_fallthru
      _
    // Predicated region
    $region314: #{tpu_custom_call.1} parent=1 // pred_check
      _
    $region315: #{tpu_custom_call.1} parent=1 // pred_check_branch
      %675 = sbr.rel (0) target = $region317
    $region316: #{tpu_custom_call.1} parent=1 // pred_region
      %676 = dma.done [#allocation39], 512
    $region317: #{tpu_custom_call.1} parent=1 // pred_fallthru
      _
    // Predicated region
    $region318: #{tpu_custom_call.1} parent=1 // pred_check
      _
    $region319: #{tpu_custom_call.1} parent=1 // pred_check_branch
      %678 = sbr.rel (0) target = $region321
    $region320: #{tpu_custom_call.1} parent=1 // pred_region
      %679 = dma.done [#allocation39], 16
    $region321: #{tpu_custom_call.1} parent=1 // pred_fallthru
      _
    // Predicated region
    $region322: #{tpu_custom_call.1} parent=1 // pred_check
      _
    $region323: #{tpu_custom_call.1} parent=1 // pred_check_branch
      %681 = sbr.rel (0) target = $region325
    $region324: #{tpu_custom_call.1} parent=1 // pred_region
      %682 = dma.done [#allocation42], 16
    $region325: #{tpu_custom_call.1} parent=1 // pred_fallthru
      _
    // Predicated region
    $region326: #{tpu_custom_call.1} parent=1 // pred_check
      _
    $region327: #{tpu_custom_call.1} parent=1 // pred_check_branch
      %684 = sbr.rel (0) target = $region329
    $region328: #{tpu_custom_call.1} parent=1 // pred_region
      %685 = dma.done [#allocation42], 16
    $region329: #{tpu_custom_call.1} parent=1 // pred_fallthru
      _
    // Predicated region
    $region330: #{tpu_custom_call.1} parent=1 // pred_check
      _
    $region331: #{tpu_custom_call.1} parent=1 // pred_check_branch
      %687 = sbr.rel (0) target = $region333
    $region332: #{tpu_custom_call.1} parent=1 // pred_region
      %688 = dma.done [#allocation45], 512
    $region333: #{tpu_custom_call.1} parent=1 // pred_fallthru
      _
    // Predicated region
    $region334: #{tpu_custom_call.1} parent=1 // pred_check
      _
    $region335: #{tpu_custom_call.1} parent=1 // pred_check_branch
      %690 = sbr.rel (0) target = $region337
    $region336: #{tpu_custom_call.1} parent=1 // pred_region
      %691 = dma.done [#allocation45], 16
    $region337: #{tpu_custom_call.1} parent=1 // pred_fallthru
      _
    // Predicated region
    $region338: #{tpu_custom_call.1} parent=1 // pred_check
      _
    $region339: #{tpu_custom_call.1} parent=1 // pred_check_branch
      %693 = sbr.rel (0) target = $region341
    $region340: #{tpu_custom_call.1} parent=1 // pred_region
      %694 = dma.done [#allocation48], 16
    $region341: #{tpu_custom_call.1} parent=1 // pred_fallthru
      _
    // Predicated region
    $region342: #{tpu_custom_call.1} parent=1 // pred_check
      _
    $region343: #{tpu_custom_call.1} parent=1 // pred_check_branch
      %696 = sbr.rel (0) target = $region345
    $region344: #{tpu_custom_call.1} parent=1 // pred_region
      %697 = dma.done [#allocation48], 16
    $region345: #{tpu_custom_call.1} parent=1 // pred_fallthru
      _
    // Predicated region
    $region346: #{tpu_custom_call.1} parent=1 // pred_check
      _
    $region347: #{tpu_custom_call.1} parent=1 // pred_check_branch
      %699 = sbr.rel (0) target = $region349
    $region348: #{tpu_custom_call.1} parent=1 // pred_region
      %700 = dma.done [#allocation51], 512
    $region349: #{tpu_custom_call.1} parent=1 // pred_fallthru
      _
    // Predicated region
    $region350: #{tpu_custom_call.1} parent=1 // pred_check
      _
    $region351: #{tpu_custom_call.1} parent=1 // pred_check_branch
      %702 = sbr.rel (0) target = $region353
    $region352: #{tpu_custom_call.1} parent=1 // pred_region
      %703 = dma.done [#allocation51], 16
    $region353: #{tpu_custom_call.1} parent=1 // pred_fallthru
      _
    // Predicated region
    $region354: #{tpu_custom_call.1} parent=1 // pred_check
      _
    $region355: #{tpu_custom_call.1} parent=1 // pred_check_branch
      %705 = sbr.rel (0) target = $region357
    $region356: #{tpu_custom_call.1} parent=1 // pred_region
      %706 = dma.done [#allocation54], 512
    $region357: #{tpu_custom_call.1} parent=1 // pred_fallthru
      _
    // Predicated region
    $region358: #{tpu_custom_call.1} parent=1 // pred_check
      _
    $region359: #{tpu_custom_call.1} parent=1 // pred_check_branch
      %708 = sbr.rel (0) target = $region361
    $region360: #{tpu_custom_call.1} parent=1 // pred_region
      %709 = dma.done [#allocation54], 16
    $region361: #{tpu_custom_call.1} parent=1 // pred_fallthru
      _
    // Predicated region
    $region362: #{tpu_custom_call.1} parent=1 // pred_check
      _
    $region363: #{tpu_custom_call.1} parent=1 // pred_check_branch
      %711 = sbr.rel (0) target = $region365
    $region364: #{tpu_custom_call.1} parent=1 // pred_region
      %712 = dma.done [#allocation57], 512
    $region365: #{tpu_custom_call.1} parent=1 // pred_fallthru
      _
    // Predicated region
    $region366: #{tpu_custom_call.1} parent=1 // pred_check
      _
    $region367: #{tpu_custom_call.1} parent=1 // pred_check_branch
      %714 = sbr.rel (0) target = $region369
    $region368: #{tpu_custom_call.1} parent=1 // pred_region
      %715 = dma.done [#allocation57], 512
    $region369: #{tpu_custom_call.1} parent=1 // pred_fallthru
      _
    // Predicated region
    $region370: #{tpu_custom_call.1} parent=1 // pred_check
      _
    $region371: #{tpu_custom_call.1} parent=1 // pred_check_branch
      %717 = sbr.rel (0) target = $region373
    $region372: #{tpu_custom_call.1} parent=1 // pred_region
      %718 = dma.done [#allocation60], 16
    $region373: #{tpu_custom_call.1} parent=1 // pred_fallthru
      _
    // Predicated region
    $region374: #{tpu_custom_call.1} parent=1 // pred_check
      _
    $region375: #{tpu_custom_call.1} parent=1 // pred_check_branch
      %720 = sbr.rel (0) target = $region377
    $region376: #{tpu_custom_call.1} parent=1 // pred_region
      %721 = dma.done [#allocation60], 512
    $region377: #{tpu_custom_call.1} parent=1 // pred_fallthru
      _
    // Predicated region
    $region378: #{tpu_custom_call.1} parent=1 // pred_check
      _
    $region379: #{tpu_custom_call.1} parent=1 // pred_check_branch
      %723 = sbr.rel (0) target = $region381
    $region380: #{tpu_custom_call.1} parent=1 // pred_region
      %724 = dma.done [#allocation63], 512
    $region381: #{tpu_custom_call.1} parent=1 // pred_fallthru
      _
    %v725 = vld [vmem:[#allocation3] sm:$0xff]
    %v726 = vld [vmem:[#allocation3 + $0x8] sm:$0xff]
    %v727 = vld [vmem:[#allocation5] sm:$0xff]
    %v728 = vld [vmem:[#allocation5 + $0x8] sm:$0xff]
    %v729 = vld [vmem:[#allocation7] sm:$0x3f]
    %v730 = vld [vmem:[%s9] sm:$0x1]
    %v731 = vld [vmem:[%s1] sm:$0xff]
    %v732 = vld [vmem:[%s1 + $0x8] sm:$0xff]
    %v734 = vlaneseq
    %v735 = vshrl.u32 %v734, 7
    %v736 = vsub.s32 0, %v735
    %v737 = vrot.slane %v730, %v736
    %vm739 = vcmask 48128
    %v741 = vsel %vm739, %v731, 0
    %v744 = vsel %vm739, %v732, 0
    %vm746 = vcmask 1045504
    %v748 = vsel %vm746, %v729, 0
    %750 = vmatprep.subr.mxu0 0.0
    %751 = vmatpush1.msra.mxu0 0.0
    %752 = vmatprep.subr.mxu0 0.0
    %753 = vmatpush1.msra.mxu0 0.0
    %754 = vmatprep.subr.mxu0 0.0
    %755 = vmatpush1.msra.mxu0 0.0
    %756 = vmatprep.subr.mxu0 0.0
    %757 = vmatpush1.msra.mxu0 0.0
    %758 = vmatprep.subr.mxu0 0.0
    %759 = vmatpush1.msra.mxu0 0.0
    %760 = vmatprep.subr.mxu0 0.0
    %761 = vmatpush1.msra.mxu0 0.0
    %762 = vmatprep.subr.mxu0 0.0
    %763 = vmatpush1.msra.mxu0 0.0
    %764 = vmatprep.subr.mxu0 0.0
    %765 = vmatpush1.msra.mxu0 0.0
    %766 = vmatprep.subr.mxu0 0.0
    %767 = vmatpush1.msra.mxu0 0.0
    %768 = vmatprep.subr.mxu0 0.0
    %769 = vmatpush1.msra.mxu0 0.0
    %770 = vmatprep.subr.mxu0 0.0
    %771 = vmatpush1.msra.mxu0 0.0
    %772 = vmatprep.subr.mxu0 0.0
    %773 = vmatpush1.msra.mxu0 0.0
    %774 = vmatprep.subr.mxu0 0.0
    %775 = vmatpush1.msra.mxu0 0.0
    %776 = vmatprep.subr.mxu0 0.0
    %777 = vmatpush1.msra.mxu0 0.0
    %778 = vmatprep.subr.mxu0 0.0
    %779 = vmatpush1.msra.mxu0 0.0
    %780 = vmatprep.subr.mxu0 0.0
    %781 = vmatpush1.msra.mxu0 %v748
    %782 = vmatprep.subr.mxu0 0.0
    %783 = vmatpush2.msra.mxu0 0.0
    %784 = vmatprep.subr.mxu0 0.0
    %785 = vmatpush2.msra.mxu0 0.0
    %786 = vmatprep.subr.mxu0 0.0
    %787 = vmatpush2.msra.mxu0 0.0
    %788 = vmatprep.subr.mxu0 0.0
    %789 = vmatpush2.msra.mxu0 0.0
    %790 = vmatprep.subr.mxu0 0.0
    %791 = vmatpush2.msra.mxu0 0.0
    %792 = vmatprep.subr.mxu0 0.0
    %793 = vmatpush2.msra.mxu0 0.0
    %794 = vmatprep.subr.mxu0 0.0
    %795 = vmatpush2.msra.mxu0 0.0
    %796 = vmatprep.subr.mxu0 0.0
    %797 = vmatpush2.msra.mxu0 0.0
    %798 = vmatprep.subr.mxu0 0.0
    %799 = vmatpush2.msra.mxu0 0.0
    %800 = vmatprep.subr.mxu0 0.0
    %801 = vmatpush2.msra.mxu0 0.0
    %802 = vmatprep.subr.mxu0 0.0
    %803 = vmatpush2.msra.mxu0 0.0
    %804 = vmatprep.subr.mxu0 0.0
    %805 = vmatpush2.msra.mxu0 0.0
    %806 = vmatprep.subr.mxu0 0.0
    %807 = vmatpush2.msra.mxu0 0.0
    %808 = vmatprep.subr.mxu0 0.0
    %809 = vmatpush2.msra.mxu0 0.0
    %810 = vmatprep.subr.mxu0 0.0
    %811 = vmatpush2.msra.mxu0 0.0
    %812 = vmatprep.subr.mxu0 0.0
    %813 = vmatpush2.msra.mxu0 0.0
    %814 = vmatprep.mubr.f32.mxu0 0.0
    %815 = vmatmul.mubr.f32.gmra.mxu0 %v741
    %v816 = vpop.f32.mrf.mxu0
    %v817 = vadd.f32 %v737, %v816
    %v818 = vpop.f32.mrf.mxu0
    %819 = vmatprep.mubr.f32.mxu0 0.0
    %820 = vmatmul.mubr.f32.gmra.mxu0 %v744
    %v821 = vpop.f32.mrf.mxu0
    %v822 = vadd.f32 %v737, %v821
    %v823 = vpop.f32.mrf.mxu0
    %824 = vdwg.mxu0
    %v825 = vld [vmem:[#allocation8] sm:$0x1]
    %v826 = vld [vmem:[#allocation10] sm:$0x1]
    %v827 = vld [vmem:[#allocation11] sm:$0xff]
    %v828 = vld [vmem:[#allocation11 + $0x8] sm:$0xff]
    %v829 = vld [vmem:[#allocation11 + $0x10] sm:$0xff]
    %v830 = vld [vmem:[#allocation11 + $0x18] sm:$0xff]
    %v831 = vld [vmem:[#allocation13] sm:$0xff]
    %v832 = vld [vmem:[#allocation13 + $0x8] sm:$0xff]
    %v833 = vld [vmem:[#allocation13 + $0x10] sm:$0xff]
    %v834 = vld [vmem:[#allocation13 + $0x18] sm:$0xff]
    %v835 = vld [vmem:[#allocation14] sm:$0xff]
    %v836 = vld [vmem:[#allocation14 + $0x8] sm:$0xff]
    %v837 = vld [vmem:[#allocation14 + $0x10] sm:$0xff]
    %v838 = vld [vmem:[#allocation14 + $0x18] sm:$0xff]
    %v839 = vld [vmem:[#allocation16] sm:$0x1]
    %v840 = vld [vmem:[#allocation17] sm:$0x1]
    %v841 = vld [vmem:[#allocation19] sm:$0x1]
    %v842 = vld [vmem:[#allocation20] sm:$0xff]
    %v843 = vld [vmem:[#allocation20 + $0x8] sm:$0xff]
    %v844 = vld [vmem:[#allocation20 + $0x10] sm:$0xff]
    %v845 = vld [vmem:[#allocation20 + $0x18] sm:$0xff]
    %v846 = vld [vmem:[#allocation22] sm:$0x1]
    %v847 = vld [vmem:[#allocation23] sm:$0x1]
    %v848 = vld [vmem:[#allocation25] sm:$0x1]
    %v849 = vld [vmem:[#allocation26] sm:$0xff]
    %v850 = vld [vmem:[#allocation26 + $0x8] sm:$0xff]
    %v851 = vld [vmem:[#allocation26 + $0x10] sm:$0xff]
    %v852 = vld [vmem:[#allocation26 + $0x18] sm:$0xff]
    %v853 = vld [vmem:[#allocation28] sm:$0x1]
    %v854 = vld [vmem:[#allocation29] sm:$0xff]
    %v855 = vld [vmem:[#allocation29 + $0x8] sm:$0xff]
    %v856 = vld [vmem:[#allocation29 + $0x10] sm:$0xff]
    %v857 = vld [vmem:[#allocation29 + $0x18] sm:$0xff]
    %v858 = vld [vmem:[#allocation31] sm:$0x1]
    %vm859 = vcmask 261120
    %v860 = vsel %vm859, %v817, 0.0
    %861 = vadd.xlane.f32.xlu0 %v860
    %v862 = vpop.xlane.xlu0 %861
    %v863 = vsel %vm859, %v822, 0.0
    %864 = vadd.xlane.f32.xlu0 %v863
    %v865 = vpop.xlane.xlu0 %864
    %v866 = vrcp.pop 32.0
    %v867 = vmul.f32 %v862, %v866
    %v868 = vmul.f32 %v865, %v866
    %v869 = vsub.f32 %v817, %v867
    %v870 = vsub.f32 %v822, %v868
    %v871 = vmul.f32 %v869, %v869
    %v872 = vmul.f32 %v870, %v870
    %v873 = vsel %vm859, %v871, 0.0
    %874 = vadd.xlane.f32.xlu0 %v873
    %v875 = vpop.xlane.xlu0 %874
    %v876 = vsel %vm859, %v872, 0.0
    %877 = vadd.xlane.f32.xlu0 %v876
    %v878 = vpop.xlane.xlu0 %877
    %v879 = vmul.f32 %v875, %v866
    %v880 = vmul.f32 %v878, %v866
    %v881 = vadd.f32 %v879, 1e-05
    %v882 = vadd.f32 %v880, 1e-05
    %v883 = vrsqrt.pop %v881
    %v884 = vrsqrt.pop %v882
    %v885 = vmul.f32 %v869, %v883
    %v886 = vmul.f32 %v870, %v884
    %v888 = vlaneseq
    %v889 = vshrl.u32 %v888, 7
    %v890 = vsub.s32 0, %v889
    %v891 = vrot.slane %v825, %v890
    %v893 = vmul.f32 %v885, %v891
    %v894 = vmul.f32 %v886, %v891
    %v896 = vlaneseq
    %v897 = vshrl.u32 %v896, 7
    %v898 = vsub.s32 0, %v897
    %v899 = vrot.slane %v826, %v898
    %v901 = vadd.f32 %v893, %v899
    %v902 = vadd.f32 %v894, %v899
    %v904 = vlaneseq
    %v905 = vshrl.u32 %v904, 7
    %v906 = vsub.s32 0, %v905
    %v907 = vrot.slane %v839, %v906
    %v910 = vsel %vm859, %v901, 0
    %v913 = vsel %vm859, %v902, 0
    %915 = vmatprep.subr.mxu0 0.0
    %916 = vmatpush1.msra.mxu0 0.0
    %917 = vmatprep.subr.mxu0 0.0
    %918 = vmatpush1.msra.mxu0 0.0
    %919 = vmatprep.subr.mxu0 0.0
    %920 = vmatpush1.msra.mxu0 0.0
    %921 = vmatprep.subr.mxu0 0.0
    %922 = vmatpush1.msra.mxu0 0.0
    %923 = vmatprep.subr.mxu0 0.0
    %924 = vmatpush1.msra.mxu0 0.0
    %925 = vmatprep.subr.mxu0 0.0
    %926 = vmatpush1.msra.mxu0 0.0
    %927 = vmatprep.subr.mxu0 0.0
    %928 = vmatpush1.msra.mxu0 0.0
    %929 = vmatprep.subr.mxu0 0.0
    %930 = vmatpush1.msra.mxu0 0.0
    %931 = vmatprep.subr.mxu0 0.0
    %932 = vmatpush1.msra.mxu0 0.0
    %933 = vmatprep.subr.mxu0 0.0
    %934 = vmatpush1.msra.mxu0 0.0
    %935 = vmatprep.subr.mxu0 0.0
    %936 = vmatpush1.msra.mxu0 0.0
    %937 = vmatprep.subr.mxu0 0.0
    %938 = vmatpush1.msra.mxu0 0.0
    %939 = vmatprep.subr.mxu0 0.0
    %940 = vmatpush1.msra.mxu0 %v830
    %941 = vmatprep.subr.mxu0 0.0
    %942 = vmatpush1.msra.mxu0 %v829
    %943 = vmatprep.subr.mxu0 0.0
    %944 = vmatpush1.msra.mxu0 %v828
    %945 = vmatprep.subr.mxu0 0.0
    %946 = vmatpush1.msra.mxu0 %v827
    %947 = vmatprep.subr.mxu0 0.0
    %948 = vmatpush2.msra.mxu0 0.0
    %949 = vmatprep.subr.mxu0 0.0
    %950 = vmatpush2.msra.mxu0 0.0
    %951 = vmatprep.subr.mxu0 0.0
    %952 = vmatpush2.msra.mxu0 0.0
    %953 = vmatprep.subr.mxu0 0.0
    %954 = vmatpush2.msra.mxu0 0.0
    %955 = vmatprep.subr.mxu0 0.0
    %956 = vmatpush2.msra.mxu0 0.0
    %957 = vmatprep.subr.mxu0 0.0
    %958 = vmatpush2.msra.mxu0 0.0
    %959 = vmatprep.subr.mxu0 0.0
    %960 = vmatpush2.msra.mxu0 0.0
    %961 = vmatprep.subr.mxu0 0.0
    %962 = vmatpush2.msra.mxu0 0.0
    %963 = vmatprep.subr.mxu0 0.0
    %964 = vmatpush2.msra.mxu0 0.0
    %965 = vmatprep.subr.mxu0 0.0
    %966 = vmatpush2.msra.mxu0 0.0
    %967 = vmatprep.subr.mxu0 0.0
    %968 = vmatpush2.msra.mxu0 0.0
    %969 = vmatprep.subr.mxu0 0.0
    %970 = vmatpush2.msra.mxu0 0.0
    %971 = vmatprep.subr.mxu0 0.0
    %972 = vmatpush2.msra.mxu0 0.0
    %973 = vmatprep.subr.mxu0 0.0
    %974 = vmatpush2.msra.mxu0 0.0
    %975 = vmatprep.subr.mxu0 0.0
    %976 = vmatpush2.msra.mxu0 0.0
    %977 = vmatprep.subr.mxu0 0.0
    %978 = vmatpush2.msra.mxu0 0.0
    %979 = vmatprep.mubr.f32.mxu0 0.0
    %980 = vmatmul.mubr.f32.gmra.mxu0 %v910
    %v981 = vpop.f32.mrf.mxu0
    %v982 = vadd.f32 %v907, %v981
    %v983 = vpop.f32.mrf.mxu0
    %984 = vmatprep.mubr.f32.mxu0 0.0
    %985 = vmatmul.mubr.f32.gmra.mxu0 %v913
    %v986 = vpop.f32.mrf.mxu0
    %v987 = vadd.f32 %v907, %v986
    %v988 = vpop.f32.mrf.mxu0
    %989 = vdwg.mxu0
    %v991 = vlaneseq
    %v992 = vshrl.u32 %v991, 7
    %v993 = vsub.s32 0, %v992
    %v994 = vrot.slane %v840, %v993
    %996 = vmatprep.subr.mxu0 0.0
    %997 = vmatpush1.msra.mxu0 0.0
    %998 = vmatprep.subr.mxu0 0.0
    %999 = vmatpush1.msra.mxu0 0.0
    %1000 = vmatprep.subr.mxu0 0.0
    %1001 = vmatpush1.msra.mxu0 0.0
    %1002 = vmatprep.subr.mxu0 0.0
    %1003 = vmatpush1.msra.mxu0 0.0
    %1004 = vmatprep.subr.mxu0 0.0
    %1005 = vmatpush1.msra.mxu0 0.0
    %1006 = vmatprep.subr.mxu0 0.0
    %1007 = vmatpush1.msra.mxu0 0.0
    %1008 = vmatprep.subr.mxu0 0.0
    %1009 = vmatpush1.msra.mxu0 0.0
    %1010 = vmatprep.subr.mxu0 0.0
    %1011 = vmatpush1.msra.mxu0 0.0
    %1012 = vmatprep.subr.mxu0 0.0
    %1013 = vmatpush1.msra.mxu0 0.0
    %1014 = vmatprep.subr.mxu0 0.0
    %1015 = vmatpush1.msra.mxu0 0.0
    %1016 = vmatprep.subr.mxu0 0.0
    %1017 = vmatpush1.msra.mxu0 0.0
    %1018 = vmatprep.subr.mxu0 0.0
    %1019 = vmatpush1.msra.mxu0 0.0
    %1020 = vmatprep.subr.mxu0 0.0
    %1021 = vmatpush1.msra.mxu0 %v834
    %1022 = vmatprep.subr.mxu0 0.0
    %1023 = vmatpush1.msra.mxu0 %v833
    %1024 = vmatprep.subr.mxu0 0.0
    %1025 = vmatpush1.msra.mxu0 %v832
    %1026 = vmatprep.subr.mxu0 0.0
    %1027 = vmatpush1.msra.mxu0 %v831
    %1028 = vmatprep.subr.mxu0 0.0
    %1029 = vmatpush2.msra.mxu0 0.0
    %1030 = vmatprep.subr.mxu0 0.0
    %1031 = vmatpush2.msra.mxu0 0.0
    %1032 = vmatprep.subr.mxu0 0.0
    %1033 = vmatpush2.msra.mxu0 0.0
    %1034 = vmatprep.subr.mxu0 0.0
    %1035 = vmatpush2.msra.mxu0 0.0
    %1036 = vmatprep.subr.mxu0 0.0
    %1037 = vmatpush2.msra.mxu0 0.0
    %1038 = vmatprep.subr.mxu0 0.0
    %1039 = vmatpush2.msra.mxu0 0.0
    %1040 = vmatprep.subr.mxu0 0.0
    %1041 = vmatpush2.msra.mxu0 0.0
    %1042 = vmatprep.subr.mxu0 0.0
    %1043 = vmatpush2.msra.mxu0 0.0
    %1044 = vmatprep.subr.mxu0 0.0
    %1045 = vmatpush2.msra.mxu0 0.0
    %1046 = vmatprep.subr.mxu0 0.0
    %1047 = vmatpush2.msra.mxu0 0.0
    %1048 = vmatprep.subr.mxu0 0.0
    %1049 = vmatpush2.msra.mxu0 0.0
    %1050 = vmatprep.subr.mxu0 0.0
    %1051 = vmatpush2.msra.mxu0 0.0
    %1052 = vmatprep.subr.mxu0 0.0
    %1053 = vmatpush2.msra.mxu0 0.0
    %1054 = vmatprep.subr.mxu0 0.0
    %1055 = vmatpush2.msra.mxu0 0.0
    %1056 = vmatprep.subr.mxu0 0.0
    %1057 = vmatpush2.msra.mxu0 0.0
    %1058 = vmatprep.subr.mxu0 0.0
    %1059 = vmatpush2.msra.mxu0 0.0
    %1060 = vmatprep.mubr.f32.mxu0 0.0
    %1061 = vmatmul.mubr.f32.gmra.mxu0 %v910
    %v1062 = vpop.f32.mrf.mxu0
    %v1063 = vadd.f32 %v994, %v1062
    %v1064 = vpop.f32.mrf.mxu0
    %1065 = vmatprep.mubr.f32.mxu0 0.0
    %1066 = vmatmul.mubr.f32.gmra.mxu0 %v913
    %v1067 = vpop.f32.mrf.mxu0
    %v1068 = vadd.f32 %v994, %v1067
    %v1069 = vpop.f32.mrf.mxu0
    %1070 = vdwg.mxu0
    %v1072 = vlaneseq
    %v1073 = vshrl.u32 %v1072, 7
    %v1074 = vsub.s32 0, %v1073
    %v1075 = vrot.slane %v841, %v1074
    %1077 = vmatprep.subr.mxu0 0.0
    %1078 = vmatpush1.msra.mxu0 0.0
    %1079 = vmatprep.subr.mxu0 0.0
    %1080 = vmatpush1.msra.mxu0 0.0
    %1081 = vmatprep.subr.mxu0 0.0
    %1082 = vmatpush1.msra.mxu0 0.0
    %1083 = vmatprep.subr.mxu0 0.0
    %1084 = vmatpush1.msra.mxu0 0.0
    %1085 = vmatprep.subr.mxu0 0.0
    %1086 = vmatpush1.msra.mxu0 0.0
    %1087 = vmatprep.subr.mxu0 0.0
    %1088 = vmatpush1.msra.mxu0 0.0
    %1089 = vmatprep.subr.mxu0 0.0
    %1090 = vmatpush1.msra.mxu0 0.0
    %1091 = vmatprep.subr.mxu0 0.0
    %1092 = vmatpush1.msra.mxu0 0.0
    %1093 = vmatprep.subr.mxu0 0.0
    %1094 = vmatpush1.msra.mxu0 0.0
    %1095 = vmatprep.subr.mxu0 0.0
    %1096 = vmatpush1.msra.mxu0 0.0
    %1097 = vmatprep.subr.mxu0 0.0
    %1098 = vmatpush1.msra.mxu0 0.0
    %1099 = vmatprep.subr.mxu0 0.0
    %1100 = vmatpush1.msra.mxu0 0.0
    %1101 = vmatprep.subr.mxu0 0.0
    %1102 = vmatpush1.msra.mxu0 %v838
    %1103 = vmatprep.subr.mxu0 0.0
    %1104 = vmatpush1.msra.mxu0 %v837
    %1105 = vmatprep.subr.mxu0 0.0
    %1106 = vmatpush1.msra.mxu0 %v836
    %1107 = vmatprep.subr.mxu0 0.0
    %1108 = vmatpush1.msra.mxu0 %v835
    %1109 = vmatprep.subr.mxu0 0.0
    %1110 = vmatpush2.msra.mxu0 0.0
    %1111 = vmatprep.subr.mxu0 0.0
    %1112 = vmatpush2.msra.mxu0 0.0
    %1113 = vmatprep.subr.mxu0 0.0
    %1114 = vmatpush2.msra.mxu0 0.0
    %1115 = vmatprep.subr.mxu0 0.0
    %1116 = vmatpush2.msra.mxu0 0.0
    %1117 = vmatprep.subr.mxu0 0.0
    %1118 = vmatpush2.msra.mxu0 0.0
    %1119 = vmatprep.subr.mxu0 0.0
    %1120 = vmatpush2.msra.mxu0 0.0
    %1121 = vmatprep.subr.mxu0 0.0
    %1122 = vmatpush2.msra.mxu0 0.0
    %1123 = vmatprep.subr.mxu0 0.0
    %1124 = vmatpush2.msra.mxu0 0.0
    %1125 = vmatprep.subr.mxu0 0.0
    %1126 = vmatpush2.msra.mxu0 0.0
    %1127 = vmatprep.subr.mxu0 0.0
    %1128 = vmatpush2.msra.mxu0 0.0
    %1129 = vmatprep.subr.mxu0 0.0
    %1130 = vmatpush2.msra.mxu0 0.0
    %1131 = vmatprep.subr.mxu0 0.0
    %1132 = vmatpush2.msra.mxu0 0.0
    %1133 = vmatprep.subr.mxu0 0.0
    %1134 = vmatpush2.msra.mxu0 0.0
    %1135 = vmatprep.subr.mxu0 0.0
    %1136 = vmatpush2.msra.mxu0 0.0
    %1137 = vmatprep.subr.mxu0 0.0
    %1138 = vmatpush2.msra.mxu0 0.0
    %1139 = vmatprep.subr.mxu0 0.0
    %1140 = vmatpush2.msra.mxu0 0.0
    %1141 = vmatprep.mubr.f32.mxu0 0.0
    %1142 = vmatmul.mubr.f32.gmra.mxu0 %v910
    %v1143 = vpop.f32.mrf.mxu0
    %v1144 = vadd.f32 %v1075, %v1143
    %v1145 = vpop.f32.mrf.mxu0
    %1146 = vmatprep.mubr.f32.mxu0 0.0
    %1147 = vmatmul.mubr.f32.gmra.mxu0 %v913
    %v1148 = vpop.f32.mrf.mxu0
    %v1149 = vadd.f32 %v1075, %v1148
    %v1150 = vpop.f32.mrf.mxu0
    %1151 = vdwg.mxu0
    %vm1152 = vcmask 64512
    %v1154 = vsel %vm1152, %v982, 0
    %v1157 = vsel %vm1152, %v987, 0
    %v1160 = vsel %vm1152, %v1063, 0
    %v1163 = vsel %vm1152, %v1068, 0
    %1165 = vmatprep.subr.mxu0 0.0
    %1166 = vmatpush1.xpose.msra.mxu0 0.0
    %1167 = vmatprep.subr.mxu0 0.0
    %1168 = vmatpush1.xpose.msra.mxu0 0.0
    %1169 = vmatprep.subr.mxu0 0.0
    %1170 = vmatpush1.xpose.msra.mxu0 0.0
    %1171 = vmatprep.subr.mxu0 0.0
    %1172 = vmatpush1.xpose.msra.mxu0 0.0
    %1173 = vmatprep.subr.mxu0 0.0
    %1174 = vmatpush1.xpose.msra.mxu0 0.0
    %1175 = vmatprep.subr.mxu0 0.0
    %1176 = vmatpush1.xpose.msra.mxu0 0.0
    %1177 = vmatprep.subr.mxu0 0.0
    %1178 = vmatpush1.xpose.msra.mxu0 0.0
    %1179 = vmatprep.subr.mxu0 0.0
    %1180 = vmatpush1.xpose.msra.mxu0 0.0
    %1181 = vmatprep.subr.mxu0 0.0
    %1182 = vmatpush1.xpose.msra.mxu0 0.0
    %1183 = vmatprep.subr.mxu0 0.0
    %1184 = vmatpush1.xpose.msra.mxu0 0.0
    %1185 = vmatprep.subr.mxu0 0.0
    %1186 = vmatpush1.xpose.msra.mxu0 0.0
    %1187 = vmatprep.subr.mxu0 0.0
    %1188 = vmatpush1.xpose.msra.mxu0 0.0
    %1189 = vmatprep.subr.mxu0 0.0
    %1190 = vmatpush1.xpose.msra.mxu0 0.0
    %1191 = vmatprep.subr.mxu0 0.0
    %1192 = vmatpush1.xpose.msra.mxu0 0.0
    %1193 = vmatprep.subr.mxu0 0.0
    %1194 = vmatpush1.xpose.msra.mxu0 %v1163
    %1195 = vmatprep.subr.mxu0 0.0
    %1196 = vmatpush1.xpose.msra.mxu0 %v1160
    %1197 = vmatprep.subr.mxu0 0.0
    %1198 = vmatpush2.xpose.msra.mxu0 0.0
    %1199 = vmatprep.subr.mxu0 0.0
    %1200 = vmatpush2.xpose.msra.mxu0 0.0
    %1201 = vmatprep.subr.mxu0 0.0
    %1202 = vmatpush2.xpose.msra.mxu0 0.0
    %1203 = vmatprep.subr.mxu0 0.0
    %1204 = vmatpush2.xpose.msra.mxu0 0.0
    %1205 = vmatprep.subr.mxu0 0.0
    %1206 = vmatpush2.xpose.msra.mxu0 0.0
    %1207 = vmatprep.subr.mxu0 0.0
    %1208 = vmatpush2.xpose.msra.mxu0 0.0
    %1209 = vmatprep.subr.mxu0 0.0
    %1210 = vmatpush2.xpose.msra.mxu0 0.0
    %1211 = vmatprep.subr.mxu0 0.0
    %1212 = vmatpush2.xpose.msra.mxu0 0.0
    %1213 = vmatprep.subr.mxu0 0.0
    %1214 = vmatpush2.xpose.msra.mxu0 0.0
    %1215 = vmatprep.subr.mxu0 0.0
    %1216 = vmatpush2.xpose.msra.mxu0 0.0
    %1217 = vmatprep.subr.mxu0 0.0
    %1218 = vmatpush2.xpose.msra.mxu0 0.0
    %1219 = vmatprep.subr.mxu0 0.0
    %1220 = vmatpush2.xpose.msra.mxu0 0.0
    %1221 = vmatprep.subr.mxu0 0.0
    %1222 = vmatpush2.xpose.msra.mxu0 0.0
    %1223 = vmatprep.subr.mxu0 0.0
    %1224 = vmatpush2.xpose.msra.mxu0 0.0
    %1225 = vmatprep.subr.mxu0 0.0
    %1226 = vmatpush2.xpose.msra.mxu0 0.0
    %1227 = vmatprep.subr.mxu0 0.0
    %1228 = vmatpush2.xpose.msra.mxu0 0.0
    %1229 = vmatprep.mubr.f32.mxu0 0.0
    %1230 = vmatmul.mubr.f32.gmra.mxu0 %v1154
    %v1231 = vpop.f32.mrf.mxu0
    %v1232 = vadd.f32 0.0, %v1231
    %v1233 = vpop.f32.mrf.mxu0
    %1234 = vmatprep.mubr.f32.mxu0 0.0
    %1235 = vmatmul.mubr.f32.gmra.mxu0 %v1157
    %v1236 = vpop.f32.mrf.mxu0
    %v1237 = vadd.f32 0.0, %v1236
    %v1238 = vpop.f32.mrf.mxu0
    %1239 = vdwg.mxu0
    %v1240 = vmul.f32 %v1232, 0.35355338
    %v1241 = vmul.f32 %v1237, 0.35355338
    %v1242 = vadd.f32 %v1240, %v725
    %v1243 = vadd.f32 %v1241, %v726
    %vm1244 = vcmask 130048
    %v1245 = vsel %vm1244, %v1242, -inf
    %1246 = vmax.xlane.f32.xlu0 %v1245
    %v1247 = vpop.xlane.xlu0 %1246
    %v1248 = vsel %vm1244, %v1243, -inf
    %1249 = vmax.xlane.f32.xlu0 %v1248
    %v1250 = vpop.xlane.xlu0 %1249
    %v1251 = vsub.f32 %v1242, %v1247
    %v1252 = vsub.f32 %v1243, %v1250
    %v1253 = vmul.f32 %v1251, 1.442695
    %v1254 = vpow.pop %v1253
    %v1255 = vmul.f32 %v1252, 1.442695
    %v1256 = vpow.pop %v1255
    %v1257 = vsel %vm1244, %v1254, 0.0
    %1258 = vadd.xlane.f32.xlu0 %v1257
    %v1259 = vpop.xlane.xlu0 %1258
    %v1260 = vsel %vm1244, %v1256, 0.0
    %1261 = vadd.xlane.f32.xlu0 %v1260
    %v1262 = vpop.xlane.xlu0 %1261
    %v1263 = vrcp.pop %v1259
    %v1264 = vrcp.pop %v1262
    %v1265 = vmul.f32 %v1254, %v1263
    %v1266 = vmul.f32 %v1256, %v1264
    %v1268 = vsel %vm1244, %v1265, 0
    %v1271 = vsel %vm1244, %v1266, 0
    %1273 = vmatprep.subr.mxu0 0.0
    %1274 = vmatpush1.msra.mxu0 0.0
    %1275 = vmatprep.subr.mxu0 0.0
    %1276 = vmatpush1.msra.mxu0 0.0
    %1277 = vmatprep.subr.mxu0 0.0
    %1278 = vmatpush1.msra.mxu0 0.0
    %1279 = vmatprep.subr.mxu0 0.0
    %1280 = vmatpush1.msra.mxu0 0.0
    %1281 = vmatprep.subr.mxu0 0.0
    %1282 = vmatpush1.msra.mxu0 0.0
    %1283 = vmatprep.subr.mxu0 0.0
    %1284 = vmatpush1.msra.mxu0 0.0
    %1285 = vmatprep.subr.mxu0 0.0
    %1286 = vmatpush1.msra.mxu0 0.0
    %1287 = vmatprep.subr.mxu0 0.0
    %1288 = vmatpush1.msra.mxu0 0.0
    %1289 = vmatprep.subr.mxu0 0.0
    %1290 = vmatpush1.msra.mxu0 0.0
    %1291 = vmatprep.subr.mxu0 0.0
    %1292 = vmatpush1.msra.mxu0 0.0
    %1293 = vmatprep.subr.mxu0 0.0
    %1294 = vmatpush1.msra.mxu0 0.0
    %1295 = vmatprep.subr.mxu0 0.0
    %1296 = vmatpush1.msra.mxu0 0.0
    %1297 = vmatprep.subr.mxu0 0.0
    %1298 = vmatpush1.msra.mxu0 0.0
    %1299 = vmatprep.subr.mxu0 0.0
    %1300 = vmatpush1.msra.mxu0 0.0
    %1301 = vmatprep.subr.mxu0 0.0
    %1302 = vmatpush1.msra.mxu0 %v1149
    %1303 = vmatprep.subr.mxu0 0.0
    %1304 = vmatpush1.msra.mxu0 %v1144
    %1305 = vmatprep.subr.mxu0 0.0
    %1306 = vmatpush2.msra.mxu0 0.0
    %1307 = vmatprep.subr.mxu0 0.0
    %1308 = vmatpush2.msra.mxu0 0.0
    %1309 = vmatprep.subr.mxu0 0.0
    %1310 = vmatpush2.msra.mxu0 0.0
    %1311 = vmatprep.subr.mxu0 0.0
    %1312 = vmatpush2.msra.mxu0 0.0
    %1313 = vmatprep.subr.mxu0 0.0
    %1314 = vmatpush2.msra.mxu0 0.0
    %1315 = vmatprep.subr.mxu0 0.0
    %1316 = vmatpush2.msra.mxu0 0.0
    %1317 = vmatprep.subr.mxu0 0.0
    %1318 = vmatpush2.msra.mxu0 0.0
    %1319 = vmatprep.subr.mxu0 0.0
    %1320 = vmatpush2.msra.mxu0 0.0
    %1321 = vmatprep.subr.mxu0 0.0
    %1322 = vmatpush2.msra.mxu0 0.0
    %1323 = vmatprep.subr.mxu0 0.0
    %1324 = vmatpush2.msra.mxu0 0.0
    %1325 = vmatprep.subr.mxu0 0.0
    %1326 = vmatpush2.msra.mxu0 0.0
    %1327 = vmatprep.subr.mxu0 0.0
    %1328 = vmatpush2.msra.mxu0 0.0
    %1329 = vmatprep.subr.mxu0 0.0
    %1330 = vmatpush2.msra.mxu0 0.0
    %1331 = vmatprep.subr.mxu0 0.0
    %1332 = vmatpush2.msra.mxu0 0.0
    %1333 = vmatprep.subr.mxu0 0.0
    %1334 = vmatpush2.msra.mxu0 0.0
    %1335 = vmatprep.subr.mxu0 0.0
    %1336 = vmatpush2.msra.mxu0 0.0
    %1337 = vmatprep.mubr.f32.mxu0 0.0
    %1338 = vmatmul.mubr.f32.gmra.mxu0 %v1268
    %v1339 = vpop.f32.mrf.mxu0
    %v1340 = vadd.f32 0.0, %v1339
    %v1341 = vpop.f32.mrf.mxu0
    %1342 = vmatprep.mubr.f32.mxu0 0.0
    %1343 = vmatmul.mubr.f32.gmra.mxu0 %v1271
    %v1344 = vpop.f32.mrf.mxu0
    %v1345 = vadd.f32 0.0, %v1344
    %v1346 = vpop.f32.mrf.mxu0
    %1347 = vdwg.mxu0
    %1348 = vrot.lane.b32.xlu0 %v982, 120
    %v1349 = vpop.permute.xlu0 %1348
    %1350 = vrot.lane.b32.xlu0 %v987, 120
    %v1351 = vpop.permute.xlu0 %1350
    %1352 = vrot.lane.b32.xlu0 %v1063, 120
    %v1353 = vpop.permute.xlu0 %1352
    %1354 = vrot.lane.b32.xlu0 %v1068, 120
    %v1355 = vpop.permute.xlu0 %1354
    %v1356 = vsel %vm1152, %v1349, 0
    %v1358 = vsel %vm1152, %v1351, 0
    %v1360 = vsel %vm1152, %v1353, 0
    %v1362 = vsel %vm1152, %v1355, 0
    %1364 = vmatprep.subr.mxu0 0.0
    %1365 = vmatpush1.xpose.msra.mxu0 0.0
    %1366 = vmatprep.subr.mxu0 0.0
    %1367 = vmatpush1.xpose.msra.mxu0 0.0
    %1368 = vmatprep.subr.mxu0 0.0
    %1369 = vmatpush1.xpose.msra.mxu0 0.0
    %1370 = vmatprep.subr.mxu0 0.0
    %1371 = vmatpush1.xpose.msra.mxu0 0.0
    %1372 = vmatprep.subr.mxu0 0.0
    %1373 = vmatpush1.xpose.msra.mxu0 0.0
    %1374 = vmatprep.subr.mxu0 0.0
    %1375 = vmatpush1.xpose.msra.mxu0 0.0
    %1376 = vmatprep.subr.mxu0 0.0
    %1377 = vmatpush1.xpose.msra.mxu0 0.0
    %1378 = vmatprep.subr.mxu0 0.0
    %1379 = vmatpush1.xpose.msra.mxu0 0.0
    %1380 = vmatprep.subr.mxu0 0.0
    %1381 = vmatpush1.xpose.msra.mxu0 0.0
    %1382 = vmatprep.subr.mxu0 0.0
    %1383 = vmatpush1.xpose.msra.mxu0 0.0
    %1384 = vmatprep.subr.mxu0 0.0
    %1385 = vmatpush1.xpose.msra.mxu0 0.0
    %1386 = vmatprep.subr.mxu0 0.0
    %1387 = vmatpush1.xpose.msra.mxu0 0.0
    %1388 = vmatprep.subr.mxu0 0.0
    %1389 = vmatpush1.xpose.msra.mxu0 0.0
    %1390 = vmatprep.subr.mxu0 0.0
    %1391 = vmatpush1.xpose.msra.mxu0 0.0
    %1392 = vmatprep.subr.mxu0 0.0
    %1393 = vmatpush1.xpose.msra.mxu0 %v1362
    %1394 = vmatprep.subr.mxu0 0.0
    %1395 = vmatpush1.xpose.msra.mxu0 %v1360
    %1396 = vmatprep.subr.mxu0 0.0
    %1397 = vmatpush2.xpose.msra.mxu0 0.0
    %1398 = vmatprep.subr.mxu0 0.0
    %1399 = vmatpush2.xpose.msra.mxu0 0.0
    %1400 = vmatprep.subr.mxu0 0.0
    %1401 = vmatpush2.xpose.msra.mxu0 0.0
    %1402 = vmatprep.subr.mxu0 0.0
    %1403 = vmatpush2.xpose.msra.mxu0 0.0
    %1404 = vmatprep.subr.mxu0 0.0
    %1405 = vmatpush2.xpose.msra.mxu0 0.0
    %1406 = vmatprep.subr.mxu0 0.0
    %1407 = vmatpush2.xpose.msra.mxu0 0.0
    %1408 = vmatprep.subr.mxu0 0.0
    %1409 = vmatpush2.xpose.msra.mxu0 0.0
    %1410 = vmatprep.subr.mxu0 0.0
    %1411 = vmatpush2.xpose.msra.mxu0 0.0
    %1412 = vmatprep.subr.mxu0 0.0
    %1413 = vmatpush2.xpose.msra.mxu0 0.0
    %1414 = vmatprep.subr.mxu0 0.0
    %1415 = vmatpush2.xpose.msra.mxu0 0.0
    %1416 = vmatprep.subr.mxu0 0.0
    %1417 = vmatpush2.xpose.msra.mxu0 0.0
    %1418 = vmatprep.subr.mxu0 0.0
    %1419 = vmatpush2.xpose.msra.mxu0 0.0
    %1420 = vmatprep.subr.mxu0 0.0
    %1421 = vmatpush2.xpose.msra.mxu0 0.0
    %1422 = vmatprep.subr.mxu0 0.0
    %1423 = vmatpush2.xpose.msra.mxu0 0.0
    %1424 = vmatprep.subr.mxu0 0.0
    %1425 = vmatpush2.xpose.msra.mxu0 0.0
    %1426 = vmatprep.subr.mxu0 0.0
    %1427 = vmatpush2.xpose.msra.mxu0 0.0
    %1428 = vmatprep.mubr.f32.mxu0 0.0
    %1429 = vmatmul.mubr.f32.gmra.mxu0 %v1356
    %v1430 = vpop.f32.mrf.mxu0
    %v1431 = vadd.f32 0.0, %v1430
    %v1432 = vpop.f32.mrf.mxu0
    %1433 = vmatprep.mubr.f32.mxu0 0.0
    %1434 = vmatmul.mubr.f32.gmra.mxu0 %v1358
    %v1435 = vpop.f32.mrf.mxu0
    %v1436 = vadd.f32 0.0, %v1435
    %v1437 = vpop.f32.mrf.mxu0
    %1438 = vdwg.mxu0
    %v1439 = vmul.f32 %v1431, 0.35355338
    %v1440 = vmul.f32 %v1436, 0.35355338
    %v1441 = vadd.f32 %v1439, %v725
    %v1442 = vadd.f32 %v1440, %v726
    %v1443 = vsel %vm1244, %v1441, -inf
    %1444 = vmax.xlane.f32.xlu0 %v1443
    %v1445 = vpop.xlane.xlu0 %1444
    %v1446 = vsel %vm1244, %v1442, -inf
    %1447 = vmax.xlane.f32.xlu0 %v1446
    %v1448 = vpop.xlane.xlu0 %1447
    %v1449 = vsub.f32 %v1441, %v1445
    %v1450 = vsub.f32 %v1442, %v1448
    %v1451 = vmul.f32 %v1449, 1.442695
    %v1452 = vpow.pop %v1451
    %v1453 = vmul.f32 %v1450, 1.442695
    %v1454 = vpow.pop %v1453
    %v1455 = vsel %vm1244, %v1452, 0.0
    %1456 = vadd.xlane.f32.xlu0 %v1455
    %v1457 = vpop.xlane.xlu0 %1456
    %v1458 = vsel %vm1244, %v1454, 0.0
    %1459 = vadd.xlane.f32.xlu0 %v1458
    %v1460 = vpop.xlane.xlu0 %1459
    %v1461 = vrcp.pop %v1457
    %v1462 = vrcp.pop %v1460
    %v1463 = vmul.f32 %v1452, %v1461
    %v1464 = vmul.f32 %v1454, %v1462
    %1467 = vrot.lane.b32.xlu0 %v1144, 120
    %v1468 = vpop.permute.xlu0 %1467
    %1469 = vrot.lane.b32.xlu0 %v1149, 120
    %v1470 = vpop.permute.xlu0 %1469
    %v1474 = vsel %vm1244, %v1463, 0
    %v1477 = vsel %vm1244, %v1464, 0
    %1479 = vmatprep.subr.mxu0 0.0
    %1480 = vmatpush1.msra.mxu0 0.0
    %1481 = vmatprep.subr.mxu0 0.0
    %1482 = vmatpush1.msra.mxu0 0.0
    %1483 = vmatprep.subr.mxu0 0.0
    %1484 = vmatpush1.msra.mxu0 0.0
    %1485 = vmatprep.subr.mxu0 0.0
    %1486 = vmatpush1.msra.mxu0 0.0
    %1487 = vmatprep.subr.mxu0 0.0
    %1488 = vmatpush1.msra.mxu0 0.0
    %1489 = vmatprep.subr.mxu0 0.0
    %1490 = vmatpush1.msra.mxu0 0.0
    %1491 = vmatprep.subr.mxu0 0.0
    %1492 = vmatpush1.msra.mxu0 0.0
    %1493 = vmatprep.subr.mxu0 0.0
    %1494 = vmatpush1.msra.mxu0 0.0
    %1495 = vmatprep.subr.mxu0 0.0
    %1496 = vmatpush1.msra.mxu0 0.0
    %1497 = vmatprep.subr.mxu0 0.0
    %1498 = vmatpush1.msra.mxu0 0.0
    %1499 = vmatprep.subr.mxu0 0.0
    %1500 = vmatpush1.msra.mxu0 0.0
    %1501 = vmatprep.subr.mxu0 0.0
    %1502 = vmatpush1.msra.mxu0 0.0
    %1503 = vmatprep.subr.mxu0 0.0
    %1504 = vmatpush1.msra.mxu0 0.0
    %1505 = vmatprep.subr.mxu0 0.0
    %1506 = vmatpush1.msra.mxu0 0.0
    %1507 = vmatprep.subr.mxu0 0.0
    %1508 = vmatpush1.msra.mxu0 %v1470
    %1509 = vmatprep.subr.mxu0 0.0
    %1510 = vmatpush1.msra.mxu0 %v1468
    %1511 = vmatprep.subr.mxu0 0.0
    %1512 = vmatpush2.msra.mxu0 0.0
    %1513 = vmatprep.subr.mxu0 0.0
    %1514 = vmatpush2.msra.mxu0 0.0
    %1515 = vmatprep.subr.mxu0 0.0
    %1516 = vmatpush2.msra.mxu0 0.0
    %1517 = vmatprep.subr.mxu0 0.0
    %1518 = vmatpush2.msra.mxu0 0.0
    %1519 = vmatprep.subr.mxu0 0.0
    %1520 = vmatpush2.msra.mxu0 0.0
    %1521 = vmatprep.subr.mxu0 0.0
    %1522 = vmatpush2.msra.mxu0 0.0
    %1523 = vmatprep.subr.mxu0 0.0
    %1524 = vmatpush2.msra.mxu0 0.0
    %1525 = vmatprep.subr.mxu0 0.0
    %1526 = vmatpush2.msra.mxu0 0.0
    %1527 = vmatprep.subr.mxu0 0.0
    %1528 = vmatpush2.msra.mxu0 0.0
    %1529 = vmatprep.subr.mxu0 0.0
    %1530 = vmatpush2.msra.mxu0 0.0
    %1531 = vmatprep.subr.mxu0 0.0
    %1532 = vmatpush2.msra.mxu0 0.0
    %1533 = vmatprep.subr.mxu0 0.0
    %1534 = vmatpush2.msra.mxu0 0.0
    %1535 = vmatprep.subr.mxu0 0.0
    %1536 = vmatpush2.msra.mxu0 0.0
    %1537 = vmatprep.subr.mxu0 0.0
    %1538 = vmatpush2.msra.mxu0 0.0
    %1539 = vmatprep.subr.mxu0 0.0
    %1540 = vmatpush2.msra.mxu0 0.0
    %1541 = vmatprep.subr.mxu0 0.0
    %1542 = vmatpush2.msra.mxu0 0.0
    %1543 = vmatprep.mubr.f32.mxu0 0.0
    %1544 = vmatmul.mubr.f32.gmra.mxu0 %v1474
    %v1545 = vpop.f32.mrf.mxu0
    %v1546 = vadd.f32 0.0, %v1545
    %v1547 = vpop.f32.mrf.mxu0
    %1548 = vmatprep.mubr.f32.mxu0 0.0
    %1549 = vmatmul.mubr.f32.gmra.mxu0 %v1477
    %v1550 = vpop.f32.mrf.mxu0
    %v1551 = vadd.f32 0.0, %v1550
    %v1552 = vpop.f32.mrf.mxu0
    %1553 = vdwg.mxu0
    %v1555 = vsel %vm1152, %v1546, 0
    %v1558 = vsel %vm1152, %v1551, 0
    %1560 = vmatprep.subr.mxu0 0.0
    %1561 = vmatpush1.msra.mxu0 0.0
    %1562 = vmatprep.subr.mxu0 0.0
    %1563 = vmatpush1.msra.mxu0 0.0
    %1564 = vmatprep.subr.mxu0 0.0
    %1565 = vmatpush1.msra.mxu0 0.0
    %1566 = vmatprep.subr.mxu0 0.0
    %1567 = vmatpush1.msra.mxu0 0.0
    %1568 = vmatprep.subr.mxu0 0.0
    %1569 = vmatpush1.msra.mxu0 0.0
    %1570 = vmatprep.subr.mxu0 0.0
    %1571 = vmatpush1.msra.mxu0 0.0
    %1572 = vmatprep.subr.mxu0 0.0
    %1573 = vmatpush1.msra.mxu0 0.0
    %1574 = vmatprep.subr.mxu0 0.0
    %1575 = vmatpush1.msra.mxu0 0.0
    %1576 = vmatprep.subr.mxu0 0.0
    %1577 = vmatpush1.msra.mxu0 0.0
    %1578 = vmatprep.subr.mxu0 0.0
    %1579 = vmatpush1.msra.mxu0 0.0
    %1580 = vmatprep.subr.mxu0 0.0
    %1581 = vmatpush1.msra.mxu0 0.0
    %1582 = vmatprep.subr.mxu0 0.0
    %1583 = vmatpush1.msra.mxu0 0.0
    %1584 = vmatprep.subr.mxu0 0.0
    %1585 = vmatpush1.msra.mxu0 0.0
    %1586 = vmatprep.subr.mxu0 0.0
    %1587 = vmatpush1.msra.mxu0 0.0
    %1588 = vmatprep.subr.mxu0 0.0
    %1589 = vmatpush1.msra.mxu0 0.0
    %1590 = vmatprep.subr.mxu0 0.0
    %1591 = vmatpush1.msra.mxu0 %v843
    %1592 = vmatprep.subr.mxu0 0.0
    %1593 = vmatpush2.msra.mxu0 0.0
    %1594 = vmatprep.subr.mxu0 0.0
    %1595 = vmatpush2.msra.mxu0 0.0
    %1596 = vmatprep.subr.mxu0 0.0
    %1597 = vmatpush2.msra.mxu0 0.0
    %1598 = vmatprep.subr.mxu0 0.0
    %1599 = vmatpush2.msra.mxu0 0.0
    %1600 = vmatprep.subr.mxu0 0.0
    %1601 = vmatpush2.msra.mxu0 0.0
    %1602 = vmatprep.subr.mxu0 0.0
    %1603 = vmatpush2.msra.mxu0 0.0
    %1604 = vmatprep.subr.mxu0 0.0
    %1605 = vmatpush2.msra.mxu0 0.0
    %1606 = vmatprep.subr.mxu0 0.0
    %1607 = vmatpush2.msra.mxu0 0.0
    %1608 = vmatprep.subr.mxu0 0.0
    %1609 = vmatpush2.msra.mxu0 0.0
    %1610 = vmatprep.subr.mxu0 0.0
    %1611 = vmatpush2.msra.mxu0 0.0
    %1612 = vmatprep.subr.mxu0 0.0
    %1613 = vmatpush2.msra.mxu0 0.0
    %1614 = vmatprep.subr.mxu0 0.0
    %1615 = vmatpush2.msra.mxu0 0.0
    %1616 = vmatprep.subr.mxu0 0.0
    %1617 = vmatpush2.msra.mxu0 0.0
    %1618 = vmatprep.subr.mxu0 0.0
    %1619 = vmatpush2.msra.mxu0 0.0
    %1620 = vmatprep.subr.mxu0 0.0
    %1621 = vmatpush2.msra.mxu0 0.0
    %1622 = vmatprep.subr.mxu0 0.0
    %1623 = vmatpush2.msra.mxu0 0.0
    %1624 = vmatprep.mubr.f32.mxu0 0.0
    %1625 = vmatmul.mubr.f32.gmra.mxu0 %v1555
    %v1626 = vpop.f32.mrf.mxu0
    %v1627 = vadd.f32 0.0, %v1626
    %v1628 = vpop.f32.mrf.mxu0
    %1629 = vmatprep.mubr.f32.mxu0 0.0
    %1630 = vmatmul.mubr.f32.gmra.mxu0 %v1558
    %v1631 = vpop.f32.mrf.mxu0
    %v1632 = vadd.f32 0.0, %v1631
    %v1633 = vpop.f32.mrf.mxu0
    %1634 = vdwg.mxu0
    %v1636 = vsel %vm1152, %v1340, 0
    %v1639 = vsel %vm1152, %v1345, 0
    %1641 = vmatprep.subr.mxu0 0.0
    %1642 = vmatpush1.msra.mxu0 0.0
    %1643 = vmatprep.subr.mxu0 0.0
    %1644 = vmatpush1.msra.mxu0 0.0
    %1645 = vmatprep.subr.mxu0 0.0
    %1646 = vmatpush1.msra.mxu0 0.0
    %1647 = vmatprep.subr.mxu0 0.0
    %1648 = vmatpush1.msra.mxu0 0.0
    %1649 = vmatprep.subr.mxu0 0.0
    %1650 = vmatpush1.msra.mxu0 0.0
    %1651 = vmatprep.subr.mxu0 0.0
    %1652 = vmatpush1.msra.mxu0 0.0
    %1653 = vmatprep.subr.mxu0 0.0
    %1654 = vmatpush1.msra.mxu0 0.0
    %1655 = vmatprep.subr.mxu0 0.0
    %1656 = vmatpush1.msra.mxu0 0.0
    %1657 = vmatprep.subr.mxu0 0.0
    %1658 = vmatpush1.msra.mxu0 0.0
    %1659 = vmatprep.subr.mxu0 0.0
    %1660 = vmatpush1.msra.mxu0 0.0
    %1661 = vmatprep.subr.mxu0 0.0
    %1662 = vmatpush1.msra.mxu0 0.0
    %1663 = vmatprep.subr.mxu0 0.0
    %1664 = vmatpush1.msra.mxu0 0.0
    %1665 = vmatprep.subr.mxu0 0.0
    %1666 = vmatpush1.msra.mxu0 0.0
    %1667 = vmatprep.subr.mxu0 0.0
    %1668 = vmatpush1.msra.mxu0 0.0
    %1669 = vmatprep.subr.mxu0 0.0
    %1670 = vmatpush1.msra.mxu0 0.0
    %1671 = vmatprep.subr.mxu0 0.0
    %1672 = vmatpush1.msra.mxu0 %v842
    %1673 = vmatprep.subr.mxu0 0.0
    %1674 = vmatpush2.msra.mxu0 0.0
    %1675 = vmatprep.subr.mxu0 0.0
    %1676 = vmatpush2.msra.mxu0 0.0
    %1677 = vmatprep.subr.mxu0 0.0
    %1678 = vmatpush2.msra.mxu0 0.0
    %1679 = vmatprep.subr.mxu0 0.0
    %1680 = vmatpush2.msra.mxu0 0.0
    %1681 = vmatprep.subr.mxu0 0.0
    %1682 = vmatpush2.msra.mxu0 0.0
    %1683 = vmatprep.subr.mxu0 0.0
    %1684 = vmatpush2.msra.mxu0 0.0
    %1685 = vmatprep.subr.mxu0 0.0
    %1686 = vmatpush2.msra.mxu0 0.0
    %1687 = vmatprep.subr.mxu0 0.0
    %1688 = vmatpush2.msra.mxu0 0.0
    %1689 = vmatprep.subr.mxu0 0.0
    %1690 = vmatpush2.msra.mxu0 0.0
    %1691 = vmatprep.subr.mxu0 0.0
    %1692 = vmatpush2.msra.mxu0 0.0
    %1693 = vmatprep.subr.mxu0 0.0
    %1694 = vmatpush2.msra.mxu0 0.0
    %1695 = vmatprep.subr.mxu0 0.0
    %1696 = vmatpush2.msra.mxu0 0.0
    %1697 = vmatprep.subr.mxu0 0.0
    %1698 = vmatpush2.msra.mxu0 0.0
    %1699 = vmatprep.subr.mxu0 0.0
    %1700 = vmatpush2.msra.mxu0 0.0
    %1701 = vmatprep.subr.mxu0 0.0
    %1702 = vmatpush2.msra.mxu0 0.0
    %1703 = vmatprep.subr.mxu0 0.0
    %1704 = vmatpush2.msra.mxu0 0.0
    %1705 = vmatprep.mubr.f32.mxu0 0.0
    %1706 = vmatmul.mubr.f32.gmra.mxu0 %v1636
    %v1707 = vpop.f32.mrf.mxu0
    %v1708 = vadd.f32 %v1627, %v1707
    %v1709 = vpop.f32.mrf.mxu0
    %1710 = vmatprep.mubr.f32.mxu0 0.0
    %1711 = vmatmul.mubr.f32.gmra.mxu0 %v1639
    %v1712 = vpop.f32.mrf.mxu0
    %v1713 = vadd.f32 %v1632, %v1712
    %v1714 = vpop.f32.mrf.mxu0
    %1715 = vdwg.mxu0
    %1716 = vrot.lane.b32.xlu0 %v982, 112
    %v1717 = vpop.permute.xlu0 %1716
    %1718 = vrot.lane.b32.xlu0 %v987, 112
    %v1719 = vpop.permute.xlu0 %1718
    %1720 = vrot.lane.b32.xlu0 %v1063, 112
    %v1721 = vpop.permute.xlu0 %1720
    %1722 = vrot.lane.b32.xlu0 %v1068, 112
    %v1723 = vpop.permute.xlu0 %1722
    %v1724 = vsel %vm1152, %v1717, 0
    %v1726 = vsel %vm1152, %v1719, 0
    %v1728 = vsel %vm1152, %v1721, 0
    %v1730 = vsel %vm1152, %v1723, 0
    %1732 = vmatprep.subr.mxu0 0.0
    %1733 = vmatpush1.xpose.msra.mxu0 0.0
    %1734 = vmatprep.subr.mxu0 0.0
    %1735 = vmatpush1.xpose.msra.mxu0 0.0
    %1736 = vmatprep.subr.mxu0 0.0
    %1737 = vmatpush1.xpose.msra.mxu0 0.0
    %1738 = vmatprep.subr.mxu0 0.0
    %1739 = vmatpush1.xpose.msra.mxu0 0.0
    %1740 = vmatprep.subr.mxu0 0.0
    %1741 = vmatpush1.xpose.msra.mxu0 0.0
    %1742 = vmatprep.subr.mxu0 0.0
    %1743 = vmatpush1.xpose.msra.mxu0 0.0
    %1744 = vmatprep.subr.mxu0 0.0
    %1745 = vmatpush1.xpose.msra.mxu0 0.0
    %1746 = vmatprep.subr.mxu0 0.0
    %1747 = vmatpush1.xpose.msra.mxu0 0.0
    %1748 = vmatprep.subr.mxu0 0.0
    %1749 = vmatpush1.xpose.msra.mxu0 0.0
    %1750 = vmatprep.subr.mxu0 0.0
    %1751 = vmatpush1.xpose.msra.mxu0 0.0
    %1752 = vmatprep.subr.mxu0 0.0
    %1753 = vmatpush1.xpose.msra.mxu0 0.0
    %1754 = vmatprep.subr.mxu0 0.0
    %1755 = vmatpush1.xpose.msra.mxu0 0.0
    %1756 = vmatprep.subr.mxu0 0.0
    %1757 = vmatpush1.xpose.msra.mxu0 0.0
    %1758 = vmatprep.subr.mxu0 0.0
    %1759 = vmatpush1.xpose.msra.mxu0 0.0
    %1760 = vmatprep.subr.mxu0 0.0
    %1761 = vmatpush1.xpose.msra.mxu0 %v1730
    %1762 = vmatprep.subr.mxu0 0.0
    %1763 = vmatpush1.xpose.msra.mxu0 %v1728
    %1764 = vmatprep.subr.mxu0 0.0
    %1765 = vmatpush2.xpose.msra.mxu0 0.0
    %1766 = vmatprep.subr.mxu0 0.0
    %1767 = vmatpush2.xpose.msra.mxu0 0.0
    %1768 = vmatprep.subr.mxu0 0.0
    %1769 = vmatpush2.xpose.msra.mxu0 0.0
    %1770 = vmatprep.subr.mxu0 0.0
    %1771 = vmatpush2.xpose.msra.mxu0 0.0
    %1772 = vmatprep.subr.mxu0 0.0
    %1773 = vmatpush2.xpose.msra.mxu0 0.0
    %1774 = vmatprep.subr.mxu0 0.0
    %1775 = vmatpush2.xpose.msra.mxu0 0.0
    %1776 = vmatprep.subr.mxu0 0.0
    %1777 = vmatpush2.xpose.msra.mxu0 0.0
    %1778 = vmatprep.subr.mxu0 0.0
    %1779 = vmatpush2.xpose.msra.mxu0 0.0
    %1780 = vmatprep.subr.mxu0 0.0
    %1781 = vmatpush2.xpose.msra.mxu0 0.0
    %1782 = vmatprep.subr.mxu0 0.0
    %1783 = vmatpush2.xpose.msra.mxu0 0.0
    %1784 = vmatprep.subr.mxu0 0.0
    %1785 = vmatpush2.xpose.msra.mxu0 0.0
    %1786 = vmatprep.subr.mxu0 0.0
    %1787 = vmatpush2.xpose.msra.mxu0 0.0
    %1788 = vmatprep.subr.mxu0 0.0
    %1789 = vmatpush2.xpose.msra.mxu0 0.0
    %1790 = vmatprep.subr.mxu0 0.0
    %1791 = vmatpush2.xpose.msra.mxu0 0.0
    %1792 = vmatprep.subr.mxu0 0.0
    %1793 = vmatpush2.xpose.msra.mxu0 0.0
    %1794 = vmatprep.subr.mxu0 0.0
    %1795 = vmatpush2.xpose.msra.mxu0 0.0
    %1796 = vmatprep.mubr.f32.mxu0 0.0
    %1797 = vmatmul.mubr.f32.gmra.mxu0 %v1724
    %v1798 = vpop.f32.mrf.mxu0
    %v1799 = vadd.f32 0.0, %v1798
    %v1800 = vpop.f32.mrf.mxu0
    %1801 = vmatprep.mubr.f32.mxu0 0.0
    %1802 = vmatmul.mubr.f32.gmra.mxu0 %v1726
    %v1803 = vpop.f32.mrf.mxu0
    %v1804 = vadd.f32 0.0, %v1803
    %v1805 = vpop.f32.mrf.mxu0
    %1806 = vdwg.mxu0
    %v1807 = vmul.f32 %v1799, 0.35355338
    %v1808 = vmul.f32 %v1804, 0.35355338
    %v1809 = vadd.f32 %v1807, %v725
    %v1810 = vadd.f32 %v1808, %v726
    %v1811 = vsel %vm1244, %v1809, -inf
    %1812 = vmax.xlane.f32.xlu0 %v1811
    %v1813 = vpop.xlane.xlu0 %1812
    %v1814 = vsel %vm1244, %v1810, -inf
    %1815 = vmax.xlane.f32.xlu0 %v1814
    %v1816 = vpop.xlane.xlu0 %1815
    %v1817 = vsub.f32 %v1809, %v1813
    %v1818 = vsub.f32 %v1810, %v1816
    %v1819 = vmul.f32 %v1817, 1.442695
    %v1820 = vpow.pop %v1819
    %v1821 = vmul.f32 %v1818, 1.442695
    %v1822 = vpow.pop %v1821
    %v1823 = vsel %vm1244, %v1820, 0.0
    %1824 = vadd.xlane.f32.xlu0 %v1823
    %v1825 = vpop.xlane.xlu0 %1824
    %v1826 = vsel %vm1244, %v1822, 0.0
    %1827 = vadd.xlane.f32.xlu0 %v1826
    %v1828 = vpop.xlane.xlu0 %1827
    %v1829 = vrcp.pop %v1825
    %v1830 = vrcp.pop %v1828
    %v1831 = vmul.f32 %v1820, %v1829
    %v1832 = vmul.f32 %v1822, %v1830
    %1833 = vrot.lane.b32.xlu0 %v1144, 112
    %v1834 = vpop.permute.xlu0 %1833
    %1835 = vrot.lane.b32.xlu0 %v1149, 112
    %v1836 = vpop.permute.xlu0 %1835
    %v1840 = vsel %vm1244, %v1831, 0
    %v1843 = vsel %vm1244, %v1832, 0
    %1845 = vmatprep.subr.mxu0 0.0
    %1846 = vmatpush1.msra.mxu0 0.0
    %1847 = vmatprep.subr.mxu0 0.0
    %1848 = vmatpush1.msra.mxu0 0.0
    %1849 = vmatprep.subr.mxu0 0.0
    %1850 = vmatpush1.msra.mxu0 0.0
    %1851 = vmatprep.subr.mxu0 0.0
    %1852 = vmatpush1.msra.mxu0 0.0
    %1853 = vmatprep.subr.mxu0 0.0
    %1854 = vmatpush1.msra.mxu0 0.0
    %1855 = vmatprep.subr.mxu0 0.0
    %1856 = vmatpush1.msra.mxu0 0.0
    %1857 = vmatprep.subr.mxu0 0.0
    %1858 = vmatpush1.msra.mxu0 0.0
    %1859 = vmatprep.subr.mxu0 0.0
    %1860 = vmatpush1.msra.mxu0 0.0
    %1861 = vmatprep.subr.mxu0 0.0
    %1862 = vmatpush1.msra.mxu0 0.0
    %1863 = vmatprep.subr.mxu0 0.0
    %1864 = vmatpush1.msra.mxu0 0.0
    %1865 = vmatprep.subr.mxu0 0.0
    %1866 = vmatpush1.msra.mxu0 0.0
    %1867 = vmatprep.subr.mxu0 0.0
    %1868 = vmatpush1.msra.mxu0 0.0
    %1869 = vmatprep.subr.mxu0 0.0
    %1870 = vmatpush1.msra.mxu0 0.0
    %1871 = vmatprep.subr.mxu0 0.0
    %1872 = vmatpush1.msra.mxu0 0.0
    %1873 = vmatprep.subr.mxu0 0.0
    %1874 = vmatpush1.msra.mxu0 %v1836
    %1875 = vmatprep.subr.mxu0 0.0
    %1876 = vmatpush1.msra.mxu0 %v1834
    %1877 = vmatprep.subr.mxu0 0.0
    %1878 = vmatpush2.msra.mxu0 0.0
    %1879 = vmatprep.subr.mxu0 0.0
    %1880 = vmatpush2.msra.mxu0 0.0
    %1881 = vmatprep.subr.mxu0 0.0
    %1882 = vmatpush2.msra.mxu0 0.0
    %1883 = vmatprep.subr.mxu0 0.0
    %1884 = vmatpush2.msra.mxu0 0.0
    %1885 = vmatprep.subr.mxu0 0.0
    %1886 = vmatpush2.msra.mxu0 0.0
    %1887 = vmatprep.subr.mxu0 0.0
    %1888 = vmatpush2.msra.mxu0 0.0
    %1889 = vmatprep.subr.mxu0 0.0
    %1890 = vmatpush2.msra.mxu0 0.0
    %1891 = vmatprep.subr.mxu0 0.0
    %1892 = vmatpush2.msra.mxu0 0.0
    %1893 = vmatprep.subr.mxu0 0.0
    %1894 = vmatpush2.msra.mxu0 0.0
    %1895 = vmatprep.subr.mxu0 0.0
    %1896 = vmatpush2.msra.mxu0 0.0
    %1897 = vmatprep.subr.mxu0 0.0
    %1898 = vmatpush2.msra.mxu0 0.0
    %1899 = vmatprep.subr.mxu0 0.0
    %1900 = vmatpush2.msra.mxu0 0.0
    %1901 = vmatprep.subr.mxu0 0.0
    %1902 = vmatpush2.msra.mxu0 0.0
    %1903 = vmatprep.subr.mxu0 0.0
    %1904 = vmatpush2.msra.mxu0 0.0
    %1905 = vmatprep.subr.mxu0 0.0
    %1906 = vmatpush2.msra.mxu0 0.0
    %1907 = vmatprep.subr.mxu0 0.0
    %1908 = vmatpush2.msra.mxu0 0.0
    %1909 = vmatprep.mubr.f32.mxu0 0.0
    %1910 = vmatmul.mubr.f32.gmra.mxu0 %v1840
    %v1911 = vpop.f32.mrf.mxu0
    %v1912 = vadd.f32 0.0, %v1911
    %v1913 = vpop.f32.mrf.mxu0
    %1914 = vmatprep.mubr.f32.mxu0 0.0
    %1915 = vmatmul.mubr.f32.gmra.mxu0 %v1843
    %v1916 = vpop.f32.mrf.mxu0
    %v1917 = vadd.f32 0.0, %v1916
    %v1918 = vpop.f32.mrf.mxu0
    %1919 = vdwg.mxu0
    %v1921 = vsel %vm1152, %v1912, 0
    %v1924 = vsel %vm1152, %v1917, 0
    %1926 = vmatprep.subr.mxu0 0.0
    %1927 = vmatpush1.msra.mxu0 0.0
    %1928 = vmatprep.subr.mxu0 0.0
    %1929 = vmatpush1.msra.mxu0 0.0
    %1930 = vmatprep.subr.mxu0 0.0
    %1931 = vmatpush1.msra.mxu0 0.0
    %1932 = vmatprep.subr.mxu0 0.0
    %1933 = vmatpush1.msra.mxu0 0.0
    %1934 = vmatprep.subr.mxu0 0.0
    %1935 = vmatpush1.msra.mxu0 0.0
    %1936 = vmatprep.subr.mxu0 0.0
    %1937 = vmatpush1.msra.mxu0 0.0
    %1938 = vmatprep.subr.mxu0 0.0
    %1939 = vmatpush1.msra.mxu0 0.0
    %1940 = vmatprep.subr.mxu0 0.0
    %1941 = vmatpush1.msra.mxu0 0.0
    %1942 = vmatprep.subr.mxu0 0.0
    %1943 = vmatpush1.msra.mxu0 0.0
    %1944 = vmatprep.subr.mxu0 0.0
    %1945 = vmatpush1.msra.mxu0 0.0
    %1946 = vmatprep.subr.mxu0 0.0
    %1947 = vmatpush1.msra.mxu0 0.0
    %1948 = vmatprep.subr.mxu0 0.0
    %1949 = vmatpush1.msra.mxu0 0.0
    %1950 = vmatprep.subr.mxu0 0.0
    %1951 = vmatpush1.msra.mxu0 0.0
    %1952 = vmatprep.subr.mxu0 0.0
    %1953 = vmatpush1.msra.mxu0 0.0
    %1954 = vmatprep.subr.mxu0 0.0
    %1955 = vmatpush1.msra.mxu0 0.0
    %1956 = vmatprep.subr.mxu0 0.0
    %1957 = vmatpush1.msra.mxu0 %v844
    %1958 = vmatprep.subr.mxu0 0.0
    %1959 = vmatpush2.msra.mxu0 0.0
    %1960 = vmatprep.subr.mxu0 0.0
    %1961 = vmatpush2.msra.mxu0 0.0
    %1962 = vmatprep.subr.mxu0 0.0
    %1963 = vmatpush2.msra.mxu0 0.0
    %1964 = vmatprep.subr.mxu0 0.0
    %1965 = vmatpush2.msra.mxu0 0.0
    %1966 = vmatprep.subr.mxu0 0.0
    %1967 = vmatpush2.msra.mxu0 0.0
    %1968 = vmatprep.subr.mxu0 0.0
    %1969 = vmatpush2.msra.mxu0 0.0
    %1970 = vmatprep.subr.mxu0 0.0
    %1971 = vmatpush2.msra.mxu0 0.0
    %1972 = vmatprep.subr.mxu0 0.0
    %1973 = vmatpush2.msra.mxu0 0.0
    %1974 = vmatprep.subr.mxu0 0.0
    %1975 = vmatpush2.msra.mxu0 0.0
    %1976 = vmatprep.subr.mxu0 0.0
    %1977 = vmatpush2.msra.mxu0 0.0
    %1978 = vmatprep.subr.mxu0 0.0
    %1979 = vmatpush2.msra.mxu0 0.0
    %1980 = vmatprep.subr.mxu0 0.0
    %1981 = vmatpush2.msra.mxu0 0.0
    %1982 = vmatprep.subr.mxu0 0.0
    %1983 = vmatpush2.msra.mxu0 0.0
    %1984 = vmatprep.subr.mxu0 0.0
    %1985 = vmatpush2.msra.mxu0 0.0
    %1986 = vmatprep.subr.mxu0 0.0
    %1987 = vmatpush2.msra.mxu0 0.0
    %1988 = vmatprep.subr.mxu0 0.0
    %1989 = vmatpush2.msra.mxu0 0.0
    %1990 = vmatprep.mubr.f32.mxu0 0.0
    %1991 = vmatmul.mubr.f32.gmra.mxu0 %v1921
    %v1992 = vpop.f32.mrf.mxu0
    %v1993 = vadd.f32 0.0, %v1992
    %v1994 = vpop.f32.mrf.mxu0
    %1995 = vmatprep.mubr.f32.mxu0 0.0
    %1996 = vmatmul.mubr.f32.gmra.mxu0 %v1924
    %v1997 = vpop.f32.mrf.mxu0
    %v1998 = vadd.f32 0.0, %v1997
    %v1999 = vpop.f32.mrf.mxu0
    %2000 = vdwg.mxu0
    %v2001 = vadd.f32 %v1708, %v1993
    %v2002 = vadd.f32 %v1713, %v1998
    %2003 = vrot.lane.b32.xlu0 %v982, 104
    %v2004 = vpop.permute.xlu0 %2003
    %2005 = vrot.lane.b32.xlu0 %v987, 104
    %v2006 = vpop.permute.xlu0 %2005
    %2007 = vrot.lane.b32.xlu0 %v1063, 104
    %v2008 = vpop.permute.xlu0 %2007
    %2009 = vrot.lane.b32.xlu0 %v1068, 104
    %v2010 = vpop.permute.xlu0 %2009
    %v2011 = vsel %vm1152, %v2004, 0
    %v2013 = vsel %vm1152, %v2006, 0
    %v2015 = vsel %vm1152, %v2008, 0
    %v2017 = vsel %vm1152, %v2010, 0
    %2019 = vmatprep.subr.mxu0 0.0
    %2020 = vmatpush1.xpose.msra.mxu0 0.0
    %2021 = vmatprep.subr.mxu0 0.0
    %2022 = vmatpush1.xpose.msra.mxu0 0.0
    %2023 = vmatprep.subr.mxu0 0.0
    %2024 = vmatpush1.xpose.msra.mxu0 0.0
    %2025 = vmatprep.subr.mxu0 0.0
    %2026 = vmatpush1.xpose.msra.mxu0 0.0
    %2027 = vmatprep.subr.mxu0 0.0
    %2028 = vmatpush1.xpose.msra.mxu0 0.0
    %2029 = vmatprep.subr.mxu0 0.0
    %2030 = vmatpush1.xpose.msra.mxu0 0.0
    %2031 = vmatprep.subr.mxu0 0.0
    %2032 = vmatpush1.xpose.msra.mxu0 0.0
    %2033 = vmatprep.subr.mxu0 0.0
    %2034 = vmatpush1.xpose.msra.mxu0 0.0
    %2035 = vmatprep.subr.mxu0 0.0
    %2036 = vmatpush1.xpose.msra.mxu0 0.0
    %2037 = vmatprep.subr.mxu0 0.0
    %2038 = vmatpush1.xpose.msra.mxu0 0.0
    %2039 = vmatprep.subr.mxu0 0.0
    %2040 = vmatpush1.xpose.msra.mxu0 0.0
    %2041 = vmatprep.subr.mxu0 0.0
    %2042 = vmatpush1.xpose.msra.mxu0 0.0
    %2043 = vmatprep.subr.mxu0 0.0
    %2044 = vmatpush1.xpose.msra.mxu0 0.0
    %2045 = vmatprep.subr.mxu0 0.0
    %2046 = vmatpush1.xpose.msra.mxu0 0.0
    %2047 = vmatprep.subr.mxu0 0.0
    %2048 = vmatpush1.xpose.msra.mxu0 %v2017
    %2049 = vmatprep.subr.mxu0 0.0
    %2050 = vmatpush1.xpose.msra.mxu0 %v2015
    %2051 = vmatprep.subr.mxu0 0.0
    %2052 = vmatpush2.xpose.msra.mxu0 0.0
    %2053 = vmatprep.subr.mxu0 0.0
    %2054 = vmatpush2.xpose.msra.mxu0 0.0
    %2055 = vmatprep.subr.mxu0 0.0
    %2056 = vmatpush2.xpose.msra.mxu0 0.0
    %2057 = vmatprep.subr.mxu0 0.0
    %2058 = vmatpush2.xpose.msra.mxu0 0.0
    %2059 = vmatprep.subr.mxu0 0.0
    %2060 = vmatpush2.xpose.msra.mxu0 0.0
    %2061 = vmatprep.subr.mxu0 0.0
    %2062 = vmatpush2.xpose.msra.mxu0 0.0
    %2063 = vmatprep.subr.mxu0 0.0
    %2064 = vmatpush2.xpose.msra.mxu0 0.0
    %2065 = vmatprep.subr.mxu0 0.0
    %2066 = vmatpush2.xpose.msra.mxu0 0.0
    %2067 = vmatprep.subr.mxu0 0.0
    %2068 = vmatpush2.xpose.msra.mxu0 0.0
    %2069 = vmatprep.subr.mxu0 0.0
    %2070 = vmatpush2.xpose.msra.mxu0 0.0
    %2071 = vmatprep.subr.mxu0 0.0
    %2072 = vmatpush2.xpose.msra.mxu0 0.0
    %2073 = vmatprep.subr.mxu0 0.0
    %2074 = vmatpush2.xpose.msra.mxu0 0.0
    %2075 = vmatprep.subr.mxu0 0.0
    %2076 = vmatpush2.xpose.msra.mxu0 0.0
    %2077 = vmatprep.subr.mxu0 0.0
    %2078 = vmatpush2.xpose.msra.mxu0 0.0
    %2079 = vmatprep.subr.mxu0 0.0
    %2080 = vmatpush2.xpose.msra.mxu0 0.0
    %2081 = vmatprep.subr.mxu0 0.0
    %2082 = vmatpush2.xpose.msra.mxu0 0.0
    %2083 = vmatprep.mubr.f32.mxu0 0.0
    %2084 = vmatmul.mubr.f32.gmra.mxu0 %v2011
    %v2085 = vpop.f32.mrf.mxu0
    %v2086 = vadd.f32 0.0, %v2085
    %v2087 = vpop.f32.mrf.mxu0
    %2088 = vmatprep.mubr.f32.mxu0 0.0
    %2089 = vmatmul.mubr.f32.gmra.mxu0 %v2013
    %v2090 = vpop.f32.mrf.mxu0
    %v2091 = vadd.f32 0.0, %v2090
    %v2092 = vpop.f32.mrf.mxu0
    %2093 = vdwg.mxu0
    %v2094 = vmul.f32 %v2086, 0.35355338
    %v2095 = vmul.f32 %v2091, 0.35355338
    %v2096 = vadd.f32 %v2094, %v725
    %v2097 = vadd.f32 %v2095, %v726
    %v2098 = vsel %vm1244, %v2096, -inf
    %2099 = vmax.xlane.f32.xlu0 %v2098
    %v2100 = vpop.xlane.xlu0 %2099
    %v2101 = vsel %vm1244, %v2097, -inf
    %2102 = vmax.xlane.f32.xlu0 %v2101
    %v2103 = vpop.xlane.xlu0 %2102
    %v2104 = vsub.f32 %v2096, %v2100
    %v2105 = vsub.f32 %v2097, %v2103
    %v2106 = vmul.f32 %v2104, 1.442695
    %v2107 = vpow.pop %v2106
    %v2108 = vmul.f32 %v2105, 1.442695
    %v2109 = vpow.pop %v2108
    %v2110 = vsel %vm1244, %v2107, 0.0
    %2111 = vadd.xlane.f32.xlu0 %v2110
    %v2112 = vpop.xlane.xlu0 %2111
    %v2113 = vsel %vm1244, %v2109, 0.0
    %2114 = vadd.xlane.f32.xlu0 %v2113
    %v2115 = vpop.xlane.xlu0 %2114
    %v2116 = vrcp.pop %v2112
    %v2117 = vrcp.pop %v2115
    %v2118 = vmul.f32 %v2107, %v2116
    %v2119 = vmul.f32 %v2109, %v2117
    %2120 = vrot.lane.b32.xlu0 %v1144, 104
    %v2121 = vpop.permute.xlu0 %2120
    %2122 = vrot.lane.b32.xlu0 %v1149, 104
    %v2123 = vpop.permute.xlu0 %2122
    %v2127 = vsel %vm1244, %v2118, 0
    %v2130 = vsel %vm1244, %v2119, 0
    %2132 = vmatprep.subr.mxu0 0.0
    %2133 = vmatpush1.msra.mxu0 0.0
    %2134 = vmatprep.subr.mxu0 0.0
    %2135 = vmatpush1.msra.mxu0 0.0
    %2136 = vmatprep.subr.mxu0 0.0
    %2137 = vmatpush1.msra.mxu0 0.0
    %2138 = vmatprep.subr.mxu0 0.0
    %2139 = vmatpush1.msra.mxu0 0.0
    %2140 = vmatprep.subr.mxu0 0.0
    %2141 = vmatpush1.msra.mxu0 0.0
    %2142 = vmatprep.subr.mxu0 0.0
    %2143 = vmatpush1.msra.mxu0 0.0
    %2144 = vmatprep.subr.mxu0 0.0
    %2145 = vmatpush1.msra.mxu0 0.0
    %2146 = vmatprep.subr.mxu0 0.0
    %2147 = vmatpush1.msra.mxu0 0.0
    %2148 = vmatprep.subr.mxu0 0.0
    %2149 = vmatpush1.msra.mxu0 0.0
    %2150 = vmatprep.subr.mxu0 0.0
    %2151 = vmatpush1.msra.mxu0 0.0
    %2152 = vmatprep.subr.mxu0 0.0
    %2153 = vmatpush1.msra.mxu0 0.0
    %2154 = vmatprep.subr.mxu0 0.0
    %2155 = vmatpush1.msra.mxu0 0.0
    %2156 = vmatprep.subr.mxu0 0.0
    %2157 = vmatpush1.msra.mxu0 0.0
    %2158 = vmatprep.subr.mxu0 0.0
    %2159 = vmatpush1.msra.mxu0 0.0
    %2160 = vmatprep.subr.mxu0 0.0
    %2161 = vmatpush1.msra.mxu0 %v2123
    %2162 = vmatprep.subr.mxu0 0.0
    %2163 = vmatpush1.msra.mxu0 %v2121
    %2164 = vmatprep.subr.mxu0 0.0
    %2165 = vmatpush2.msra.mxu0 0.0
    %2166 = vmatprep.subr.mxu0 0.0
    %2167 = vmatpush2.msra.mxu0 0.0
    %2168 = vmatprep.subr.mxu0 0.0
    %2169 = vmatpush2.msra.mxu0 0.0
    %2170 = vmatprep.subr.mxu0 0.0
    %2171 = vmatpush2.msra.mxu0 0.0
    %2172 = vmatprep.subr.mxu0 0.0
    %2173 = vmatpush2.msra.mxu0 0.0
    %2174 = vmatprep.subr.mxu0 0.0
    %2175 = vmatpush2.msra.mxu0 0.0
    %2176 = vmatprep.subr.mxu0 0.0
    %2177 = vmatpush2.msra.mxu0 0.0
    %2178 = vmatprep.subr.mxu0 0.0
    %2179 = vmatpush2.msra.mxu0 0.0
    %2180 = vmatprep.subr.mxu0 0.0
    %2181 = vmatpush2.msra.mxu0 0.0
    %2182 = vmatprep.subr.mxu0 0.0
    %2183 = vmatpush2.msra.mxu0 0.0
    %2184 = vmatprep.subr.mxu0 0.0
    %2185 = vmatpush2.msra.mxu0 0.0
    %2186 = vmatprep.subr.mxu0 0.0
    %2187 = vmatpush2.msra.mxu0 0.0
    %2188 = vmatprep.subr.mxu0 0.0
    %2189 = vmatpush2.msra.mxu0 0.0
    %2190 = vmatprep.subr.mxu0 0.0
    %2191 = vmatpush2.msra.mxu0 0.0
    %2192 = vmatprep.subr.mxu0 0.0
    %2193 = vmatpush2.msra.mxu0 0.0
    %2194 = vmatprep.subr.mxu0 0.0
    %2195 = vmatpush2.msra.mxu0 0.0
    %2196 = vmatprep.mubr.f32.mxu0 0.0
    %2197 = vmatmul.mubr.f32.gmra.mxu0 %v2127
    %v2198 = vpop.f32.mrf.mxu0
    %v2199 = vadd.f32 0.0, %v2198
    %v2200 = vpop.f32.mrf.mxu0
    %2201 = vmatprep.mubr.f32.mxu0 0.0
    %2202 = vmatmul.mubr.f32.gmra.mxu0 %v2130
    %v2203 = vpop.f32.mrf.mxu0
    %v2204 = vadd.f32 0.0, %v2203
    %v2205 = vpop.f32.mrf.mxu0
    %2206 = vdwg.mxu0
    %v2208 = vsel %vm1152, %v2199, 0
    %v2211 = vsel %vm1152, %v2204, 0
    %2213 = vmatprep.subr.mxu0 0.0
    %2214 = vmatpush1.msra.mxu0 0.0
    %2215 = vmatprep.subr.mxu0 0.0
    %2216 = vmatpush1.msra.mxu0 0.0
    %2217 = vmatprep.subr.mxu0 0.0
    %2218 = vmatpush1.msra.mxu0 0.0
    %2219 = vmatprep.subr.mxu0 0.0
    %2220 = vmatpush1.msra.mxu0 0.0
    %2221 = vmatprep.subr.mxu0 0.0
    %2222 = vmatpush1.msra.mxu0 0.0
    %2223 = vmatprep.subr.mxu0 0.0
    %2224 = vmatpush1.msra.mxu0 0.0
    %2225 = vmatprep.subr.mxu0 0.0
    %2226 = vmatpush1.msra.mxu0 0.0
    %2227 = vmatprep.subr.mxu0 0.0
    %2228 = vmatpush1.msra.mxu0 0.0
    %2229 = vmatprep.subr.mxu0 0.0
    %2230 = vmatpush1.msra.mxu0 0.0
    %2231 = vmatprep.subr.mxu0 0.0
    %2232 = vmatpush1.msra.mxu0 0.0
    %2233 = vmatprep.subr.mxu0 0.0
    %2234 = vmatpush1.msra.mxu0 0.0
    %2235 = vmatprep.subr.mxu0 0.0
    %2236 = vmatpush1.msra.mxu0 0.0
    %2237 = vmatprep.subr.mxu0 0.0
    %2238 = vmatpush1.msra.mxu0 0.0
    %2239 = vmatprep.subr.mxu0 0.0
    %2240 = vmatpush1.msra.mxu0 0.0
    %2241 = vmatprep.subr.mxu0 0.0
    %2242 = vmatpush1.msra.mxu0 0.0
    %2243 = vmatprep.subr.mxu0 0.0
    %2244 = vmatpush1.msra.mxu0 %v845
    %2245 = vmatprep.subr.mxu0 0.0
    %2246 = vmatpush2.msra.mxu0 0.0
    %2247 = vmatprep.subr.mxu0 0.0
    %2248 = vmatpush2.msra.mxu0 0.0
    %2249 = vmatprep.subr.mxu0 0.0
    %2250 = vmatpush2.msra.mxu0 0.0
    %2251 = vmatprep.subr.mxu0 0.0
    %2252 = vmatpush2.msra.mxu0 0.0
    %2253 = vmatprep.subr.mxu0 0.0
    %2254 = vmatpush2.msra.mxu0 0.0
    %2255 = vmatprep.subr.mxu0 0.0
    %2256 = vmatpush2.msra.mxu0 0.0
    %2257 = vmatprep.subr.mxu0 0.0
    %2258 = vmatpush2.msra.mxu0 0.0
    %2259 = vmatprep.subr.mxu0 0.0
    %2260 = vmatpush2.msra.mxu0 0.0
    %2261 = vmatprep.subr.mxu0 0.0
    %2262 = vmatpush2.msra.mxu0 0.0
    %2263 = vmatprep.subr.mxu0 0.0
    %2264 = vmatpush2.msra.mxu0 0.0
    %2265 = vmatprep.subr.mxu0 0.0
    %2266 = vmatpush2.msra.mxu0 0.0
    %2267 = vmatprep.subr.mxu0 0.0
    %2268 = vmatpush2.msra.mxu0 0.0
    %2269 = vmatprep.subr.mxu0 0.0
    %2270 = vmatpush2.msra.mxu0 0.0
    %2271 = vmatprep.subr.mxu0 0.0
    %2272 = vmatpush2.msra.mxu0 0.0
    %2273 = vmatprep.subr.mxu0 0.0
    %2274 = vmatpush2.msra.mxu0 0.0
    %2275 = vmatprep.subr.mxu0 0.0
    %2276 = vmatpush2.msra.mxu0 0.0
    %2277 = vmatprep.mubr.f32.mxu0 0.0
    %2278 = vmatmul.mubr.f32.gmra.mxu0 %v2208
    %v2279 = vpop.f32.mrf.mxu0
    %v2280 = vadd.f32 0.0, %v2279
    %v2281 = vpop.f32.mrf.mxu0
    %2282 = vmatprep.mubr.f32.mxu0 0.0
    %2283 = vmatmul.mubr.f32.gmra.mxu0 %v2211
    %v2284 = vpop.f32.mrf.mxu0
    %v2285 = vadd.f32 0.0, %v2284
    %v2286 = vpop.f32.mrf.mxu0
    %2287 = vdwg.mxu0
    %v2288 = vadd.f32 %v2001, %v2280
    %v2289 = vadd.f32 %v2002, %v2285
    %v2291 = vlaneseq
    %v2292 = vshrl.u32 %v2291, 7
    %v2293 = vsub.s32 0, %v2292
    %v2294 = vrot.slane %v846, %v2293
    %v2296 = vadd.f32 %v2288, %v2294
    %v2297 = vadd.f32 %v2289, %v2294
    %v2298 = vadd.f32 %v817, %v2296
    %v2299 = vadd.f32 %v822, %v2297
    %v2300 = vsel %vm859, %v2298, 0.0
    %2301 = vadd.xlane.f32.xlu0 %v2300
    %v2302 = vpop.xlane.xlu0 %2301
    %v2303 = vsel %vm859, %v2299, 0.0
    %2304 = vadd.xlane.f32.xlu0 %v2303
    %v2305 = vpop.xlane.xlu0 %2304
    %v2306 = vmul.f32 %v2302, %v866
    %v2307 = vmul.f32 %v2305, %v866
    %v2308 = vsub.f32 %v2298, %v2306
    %v2309 = vsub.f32 %v2299, %v2307
    %v2310 = vmul.f32 %v2308, %v2308
    %v2311 = vmul.f32 %v2309, %v2309
    %v2312 = vsel %vm859, %v2310, 0.0
    %2313 = vadd.xlane.f32.xlu0 %v2312
    %v2314 = vpop.xlane.xlu0 %2313
    %v2315 = vsel %vm859, %v2311, 0.0
    %2316 = vadd.xlane.f32.xlu0 %v2315
    %v2317 = vpop.xlane.xlu0 %2316
    %v2318 = vmul.f32 %v2314, %v866
    %v2319 = vmul.f32 %v2317, %v866
    %v2320 = vadd.f32 %v2318, 1e-05
    %v2321 = vadd.f32 %v2319, 1e-05
    %v2322 = vrsqrt.pop %v2320
    %v2323 = vrsqrt.pop %v2321
    %v2324 = vmul.f32 %v2308, %v2322
    %v2325 = vmul.f32 %v2309, %v2323
    %v2327 = vlaneseq
    %v2328 = vshrl.u32 %v2327, 7
    %v2329 = vsub.s32 0, %v2328
    %v2330 = vrot.slane %v847, %v2329
    %v2332 = vmul.f32 %v2324, %v2330
    %v2333 = vmul.f32 %v2325, %v2330
    %v2335 = vlaneseq
    %v2336 = vshrl.u32 %v2335, 7
    %v2337 = vsub.s32 0, %v2336
    %v2338 = vrot.slane %v848, %v2337
    %v2340 = vadd.f32 %v2332, %v2338
    %v2341 = vadd.f32 %v2333, %v2338
    %v2343 = vlaneseq
    %v2344 = vshrl.u32 %v2343, 7
    %v2345 = vsub.s32 0, %v2344
    %v2346 = vrot.slane %v853, %v2345
    %v2349 = vsel %vm859, %v2340, 0
    %v2352 = vsel %vm859, %v2341, 0
    %2354 = vmatprep.subr.mxu0 0.0
    %2355 = vmatpush1.msra.mxu0 0.0
    %2356 = vmatprep.subr.mxu0 0.0
    %2357 = vmatpush1.msra.mxu0 0.0
    %2358 = vmatprep.subr.mxu0 0.0
    %2359 = vmatpush1.msra.mxu0 0.0
    %2360 = vmatprep.subr.mxu0 0.0
    %2361 = vmatpush1.msra.mxu0 0.0
    %2362 = vmatprep.subr.mxu0 0.0
    %2363 = vmatpush1.msra.mxu0 0.0
    %2364 = vmatprep.subr.mxu0 0.0
    %2365 = vmatpush1.msra.mxu0 0.0
    %2366 = vmatprep.subr.mxu0 0.0
    %2367 = vmatpush1.msra.mxu0 0.0
    %2368 = vmatprep.subr.mxu0 0.0
    %2369 = vmatpush1.msra.mxu0 0.0
    %2370 = vmatprep.subr.mxu0 0.0
    %2371 = vmatpush1.msra.mxu0 0.0
    %2372 = vmatprep.subr.mxu0 0.0
    %2373 = vmatpush1.msra.mxu0 0.0
    %2374 = vmatprep.subr.mxu0 0.0
    %2375 = vmatpush1.msra.mxu0 0.0
    %2376 = vmatprep.subr.mxu0 0.0
    %2377 = vmatpush1.msra.mxu0 0.0
    %2378 = vmatprep.subr.mxu0 0.0
    %2379 = vmatpush1.msra.mxu0 %v852
    %2380 = vmatprep.subr.mxu0 0.0
    %2381 = vmatpush1.msra.mxu0 %v851
    %2382 = vmatprep.subr.mxu0 0.0
    %2383 = vmatpush1.msra.mxu0 %v850
    %2384 = vmatprep.subr.mxu0 0.0
    %2385 = vmatpush1.msra.mxu0 %v849
    %2386 = vmatprep.subr.mxu0 0.0
    %2387 = vmatpush2.msra.mxu0 0.0
    %2388 = vmatprep.subr.mxu0 0.0
    %2389 = vmatpush2.msra.mxu0 0.0
    %2390 = vmatprep.subr.mxu0 0.0
    %2391 = vmatpush2.msra.mxu0 0.0
    %2392 = vmatprep.subr.mxu0 0.0
    %2393 = vmatpush2.msra.mxu0 0.0
    %2394 = vmatprep.subr.mxu0 0.0
    %2395 = vmatpush2.msra.mxu0 0.0
    %2396 = vmatprep.subr.mxu0 0.0
    %2397 = vmatpush2.msra.mxu0 0.0
    %2398 = vmatprep.subr.mxu0 0.0
    %2399 = vmatpush2.msra.mxu0 0.0
    %2400 = vmatprep.subr.mxu0 0.0
    %2401 = vmatpush2.msra.mxu0 0.0
    %2402 = vmatprep.subr.mxu0 0.0
    %2403 = vmatpush2.msra.mxu0 0.0
    %2404 = vmatprep.subr.mxu0 0.0
    %2405 = vmatpush2.msra.mxu0 0.0
    %2406 = vmatprep.subr.mxu0 0.0
    %2407 = vmatpush2.msra.mxu0 0.0
    %2408 = vmatprep.subr.mxu0 0.0
    %2409 = vmatpush2.msra.mxu0 0.0
    %2410 = vmatprep.subr.mxu0 0.0
    %2411 = vmatpush2.msra.mxu0 0.0
    %2412 = vmatprep.subr.mxu0 0.0
    %2413 = vmatpush2.msra.mxu0 0.0
    %2414 = vmatprep.subr.mxu0 0.0
    %2415 = vmatpush2.msra.mxu0 0.0
    %2416 = vmatprep.subr.mxu0 0.0
    %2417 = vmatpush2.msra.mxu0 0.0
    %2418 = vmatprep.mubr.f32.mxu0 0.0
    %2419 = vmatmul.mubr.f32.gmra.mxu0 %v2349
    %v2420 = vpop.f32.mrf.mxu0
    %v2421 = vadd.f32 %v2346, %v2420
    %v2422 = vpop.f32.mrf.mxu0
    %2423 = vmatprep.mubr.f32.mxu0 0.0
    %2424 = vmatmul.mubr.f32.gmra.mxu0 %v2352
    %v2425 = vpop.f32.mrf.mxu0
    %v2426 = vadd.f32 %v2346, %v2425
    %v2427 = vpop.f32.mrf.mxu0
    %2428 = vdwg.mxu0
    %v2429 = vmax.f32 %v2421, 0.0
    %v2430 = vmax.f32 %v2426, 0.0
    %v2432 = vsel %vm859, %v2429, 0
    %v2435 = vsel %vm859, %v2430, 0
    %2437 = vmatprep.subr.mxu0 0.0
    %2438 = vmatpush1.msra.mxu0 0.0
    %2439 = vmatprep.subr.mxu0 0.0
    %2440 = vmatpush1.msra.mxu0 0.0
    %2441 = vmatprep.subr.mxu0 0.0
    %2442 = vmatpush1.msra.mxu0 0.0
    %2443 = vmatprep.subr.mxu0 0.0
    %2444 = vmatpush1.msra.mxu0 0.0
    %2445 = vmatprep.subr.mxu0 0.0
    %2446 = vmatpush1.msra.mxu0 0.0
    %2447 = vmatprep.subr.mxu0 0.0
    %2448 = vmatpush1.msra.mxu0 0.0
    %2449 = vmatprep.subr.mxu0 0.0
    %2450 = vmatpush1.msra.mxu0 0.0
    %2451 = vmatprep.subr.mxu0 0.0
    %2452 = vmatpush1.msra.mxu0 0.0
    %2453 = vmatprep.subr.mxu0 0.0
    %2454 = vmatpush1.msra.mxu0 0.0
    %2455 = vmatprep.subr.mxu0 0.0
    %2456 = vmatpush1.msra.mxu0 0.0
    %2457 = vmatprep.subr.mxu0 0.0
    %2458 = vmatpush1.msra.mxu0 0.0
    %2459 = vmatprep.subr.mxu0 0.0
    %2460 = vmatpush1.msra.mxu0 0.0
    %2461 = vmatprep.subr.mxu0 0.0
    %2462 = vmatpush1.msra.mxu0 %v857
    %2463 = vmatprep.subr.mxu0 0.0
    %2464 = vmatpush1.msra.mxu0 %v856
    %2465 = vmatprep.subr.mxu0 0.0
    %2466 = vmatpush1.msra.mxu0 %v855
    %2467 = vmatprep.subr.mxu0 0.0
    %2468 = vmatpush1.msra.mxu0 %v854
    %2469 = vmatprep.subr.mxu0 0.0
    %2470 = vmatpush2.msra.mxu0 0.0
    %2471 = vmatprep.subr.mxu0 0.0
    %2472 = vmatpush2.msra.mxu0 0.0
    %2473 = vmatprep.subr.mxu0 0.0
    %2474 = vmatpush2.msra.mxu0 0.0
    %2475 = vmatprep.subr.mxu0 0.0
    %2476 = vmatpush2.msra.mxu0 0.0
    %2477 = vmatprep.subr.mxu0 0.0
    %2478 = vmatpush2.msra.mxu0 0.0
    %2479 = vmatprep.subr.mxu0 0.0
    %2480 = vmatpush2.msra.mxu0 0.0
    %2481 = vmatprep.subr.mxu0 0.0
    %2482 = vmatpush2.msra.mxu0 0.0
    %2483 = vmatprep.subr.mxu0 0.0
    %2484 = vmatpush2.msra.mxu0 0.0
    %2485 = vmatprep.subr.mxu0 0.0
    %2486 = vmatpush2.msra.mxu0 0.0
    %2487 = vmatprep.subr.mxu0 0.0
    %2488 = vmatpush2.msra.mxu0 0.0
    %2489 = vmatprep.subr.mxu0 0.0
    %2490 = vmatpush2.msra.mxu0 0.0
    %2491 = vmatprep.subr.mxu0 0.0
    %2492 = vmatpush2.msra.mxu0 0.0
    %2493 = vmatprep.subr.mxu0 0.0
    %2494 = vmatpush2.msra.mxu0 0.0
    %2495 = vmatprep.subr.mxu0 0.0
    %2496 = vmatpush2.msra.mxu0 0.0
    %2497 = vmatprep.subr.mxu0 0.0
    %2498 = vmatpush2.msra.mxu0 0.0
    %2499 = vmatprep.subr.mxu0 0.0
    %2500 = vmatpush2.msra.mxu0 0.0
    %2501 = vmatprep.mubr.f32.mxu0 0.0
    %2502 = vmatmul.mubr.f32.gmra.mxu0 %v2432
    %v2503 = vpop.f32.mrf.mxu0
    %v2504 = vadd.f32 0.0, %v2503
    %v2505 = vpop.f32.mrf.mxu0
    %2506 = vmatprep.mubr.f32.mxu0 0.0
    %2507 = vmatmul.mubr.f32.gmra.mxu0 %v2435
    %v2508 = vpop.f32.mrf.mxu0
    %v2509 = vadd.f32 0.0, %v2508
    %v2510 = vpop.f32.mrf.mxu0
    %2511 = vdwg.mxu0
    %v2512 = vadd.f32 %v2298, %v2504
    %v2513 = vadd.f32 %v2299, %v2509
    %v2515 = vlaneseq
    %v2516 = vshrl.u32 %v2515, 7
    %v2517 = vsub.s32 0, %v2516
    %v2518 = vrot.slane %v858, %v2517
    %v2520 = vadd.f32 %v2512, %v2518
    %v2521 = vadd.f32 %v2513, %v2518
    %v2522 = vld [vmem:[#allocation32] sm:$0x1]
    %v2523 = vld [vmem:[#allocation34] sm:$0x1]
    %v2524 = vld [vmem:[#allocation35] sm:$0xff]
    %v2525 = vld [vmem:[#allocation35 + $0x8] sm:$0xff]
    %v2526 = vld [vmem:[#allocation35 + $0x10] sm:$0xff]
    %v2527 = vld [vmem:[#allocation35 + $0x18] sm:$0xff]
    %v2528 = vld [vmem:[#allocation37] sm:$0xff]
    %v2529 = vld [vmem:[#allocation37 + $0x8] sm:$0xff]
    %v2530 = vld [vmem:[#allocation37 + $0x10] sm:$0xff]
    %v2531 = vld [vmem:[#allocation37 + $0x18] sm:$0xff]
    %v2532 = vld [vmem:[#allocation38] sm:$0xff]
    %v2533 = vld [vmem:[#allocation38 + $0x8] sm:$0xff]
    %v2534 = vld [vmem:[#allocation38 + $0x10] sm:$0xff]
    %v2535 = vld [vmem:[#allocation38 + $0x18] sm:$0xff]
    %v2536 = vld [vmem:[#allocation40] sm:$0x1]
    %v2537 = vld [vmem:[#allocation41] sm:$0x1]
    %v2538 = vld [vmem:[#allocation43] sm:$0x1]
    %v2539 = vld [vmem:[#allocation44] sm:$0xff]
    %v2540 = vld [vmem:[#allocation44 + $0x8] sm:$0xff]
    %v2541 = vld [vmem:[#allocation44 + $0x10] sm:$0xff]
    %v2542 = vld [vmem:[#allocation44 + $0x18] sm:$0xff]
    %v2543 = vld [vmem:[#allocation46] sm:$0x1]
    %v2544 = vld [vmem:[#allocation47] sm:$0x1]
    %v2545 = vld [vmem:[#allocation49] sm:$0x1]
    %v2546 = vld [vmem:[#allocation50] sm:$0xff]
    %v2547 = vld [vmem:[#allocation50 + $0x8] sm:$0xff]
    %v2548 = vld [vmem:[#allocation50 + $0x10] sm:$0xff]
    %v2549 = vld [vmem:[#allocation50 + $0x18] sm:$0xff]
    %v2550 = vld [vmem:[#allocation52] sm:$0x1]
    %v2551 = vld [vmem:[#allocation53] sm:$0xff]
    %v2552 = vld [vmem:[#allocation53 + $0x8] sm:$0xff]
    %v2553 = vld [vmem:[#allocation53 + $0x10] sm:$0xff]
    %v2554 = vld [vmem:[#allocation53 + $0x18] sm:$0xff]
    %v2555 = vld [vmem:[#allocation55] sm:$0x1]
    %v2556 = vsel %vm859, %v2520, 0.0
    %2557 = vadd.xlane.f32.xlu0 %v2556
    %v2558 = vpop.xlane.xlu0 %2557
    %v2559 = vsel %vm859, %v2521, 0.0
    %2560 = vadd.xlane.f32.xlu0 %v2559
    %v2561 = vpop.xlane.xlu0 %2560
    %v2562 = vmul.f32 %v2558, %v866
    %v2563 = vmul.f32 %v2561, %v866
    %v2564 = vsub.f32 %v2520, %v2562
    %v2565 = vsub.f32 %v2521, %v2563
    %v2566 = vmul.f32 %v2564, %v2564
    %v2567 = vmul.f32 %v2565, %v2565
    %v2568 = vsel %vm859, %v2566, 0.0
    %2569 = vadd.xlane.f32.xlu0 %v2568
    %v2570 = vpop.xlane.xlu0 %2569
    %v2571 = vsel %vm859, %v2567, 0.0
    %2572 = vadd.xlane.f32.xlu0 %v2571
    %v2573 = vpop.xlane.xlu0 %2572
    %v2574 = vmul.f32 %v2570, %v866
    %v2575 = vmul.f32 %v2573, %v866
    %v2576 = vadd.f32 %v2574, 1e-05
    %v2577 = vadd.f32 %v2575, 1e-05
    %v2578 = vrsqrt.pop %v2576
    %v2579 = vrsqrt.pop %v2577
    %v2580 = vmul.f32 %v2564, %v2578
    %v2581 = vmul.f32 %v2565, %v2579
    %v2583 = vlaneseq
    %v2584 = vshrl.u32 %v2583, 7
    %v2585 = vsub.s32 0, %v2584
    %v2586 = vrot.slane %v2522, %v2585
    %v2588 = vmul.f32 %v2580, %v2586
    %v2589 = vmul.f32 %v2581, %v2586
    %v2591 = vlaneseq
    %v2592 = vshrl.u32 %v2591, 7
    %v2593 = vsub.s32 0, %v2592
    %v2594 = vrot.slane %v2523, %v2593
    %v2596 = vadd.f32 %v2588, %v2594
    %v2597 = vadd.f32 %v2589, %v2594
    %v2599 = vlaneseq
    %v2600 = vshrl.u32 %v2599, 7
    %v2601 = vsub.s32 0, %v2600
    %v2602 = vrot.slane %v2536, %v2601
    %v2605 = vsel %vm859, %v2596, 0
    %v2608 = vsel %vm859, %v2597, 0
    %2610 = vmatprep.subr.mxu0 0.0
    %2611 = vmatpush1.msra.mxu0 0.0
    %2612 = vmatprep.subr.mxu0 0.0
    %2613 = vmatpush1.msra.mxu0 0.0
    %2614 = vmatprep.subr.mxu0 0.0
    %2615 = vmatpush1.msra.mxu0 0.0
    %2616 = vmatprep.subr.mxu0 0.0
    %2617 = vmatpush1.msra.mxu0 0.0
    %2618 = vmatprep.subr.mxu0 0.0
    %2619 = vmatpush1.msra.mxu0 0.0
    %2620 = vmatprep.subr.mxu0 0.0
    %2621 = vmatpush1.msra.mxu0 0.0
    %2622 = vmatprep.subr.mxu0 0.0
    %2623 = vmatpush1.msra.mxu0 0.0
    %2624 = vmatprep.subr.mxu0 0.0
    %2625 = vmatpush1.msra.mxu0 0.0
    %2626 = vmatprep.subr.mxu0 0.0
    %2627 = vmatpush1.msra.mxu0 0.0
    %2628 = vmatprep.subr.mxu0 0.0
    %2629 = vmatpush1.msra.mxu0 0.0
    %2630 = vmatprep.subr.mxu0 0.0
    %2631 = vmatpush1.msra.mxu0 0.0
    %2632 = vmatprep.subr.mxu0 0.0
    %2633 = vmatpush1.msra.mxu0 0.0
    %2634 = vmatprep.subr.mxu0 0.0
    %2635 = vmatpush1.msra.mxu0 %v2527
    %2636 = vmatprep.subr.mxu0 0.0
    %2637 = vmatpush1.msra.mxu0 %v2526
    %2638 = vmatprep.subr.mxu0 0.0
    %2639 = vmatpush1.msra.mxu0 %v2525
    %2640 = vmatprep.subr.mxu0 0.0
    %2641 = vmatpush1.msra.mxu0 %v2524
    %2642 = vmatprep.subr.mxu0 0.0
    %2643 = vmatpush2.msra.mxu0 0.0
    %2644 = vmatprep.subr.mxu0 0.0
    %2645 = vmatpush2.msra.mxu0 0.0
    %2646 = vmatprep.subr.mxu0 0.0
    %2647 = vmatpush2.msra.mxu0 0.0
    %2648 = vmatprep.subr.mxu0 0.0
    %2649 = vmatpush2.msra.mxu0 0.0
    %2650 = vmatprep.subr.mxu0 0.0
    %2651 = vmatpush2.msra.mxu0 0.0
    %2652 = vmatprep.subr.mxu0 0.0
    %2653 = vmatpush2.msra.mxu0 0.0
    %2654 = vmatprep.subr.mxu0 0.0
    %2655 = vmatpush2.msra.mxu0 0.0
    %2656 = vmatprep.subr.mxu0 0.0
    %2657 = vmatpush2.msra.mxu0 0.0
    %2658 = vmatprep.subr.mxu0 0.0
    %2659 = vmatpush2.msra.mxu0 0.0
    %2660 = vmatprep.subr.mxu0 0.0
    %2661 = vmatpush2.msra.mxu0 0.0
    %2662 = vmatprep.subr.mxu0 0.0
    %2663 = vmatpush2.msra.mxu0 0.0
    %2664 = vmatprep.subr.mxu0 0.0
    %2665 = vmatpush2.msra.mxu0 0.0
    %2666 = vmatprep.subr.mxu0 0.0
    %2667 = vmatpush2.msra.mxu0 0.0
    %2668 = vmatprep.subr.mxu0 0.0
    %2669 = vmatpush2.msra.mxu0 0.0
    %2670 = vmatprep.subr.mxu0 0.0
    %2671 = vmatpush2.msra.mxu0 0.0
    %2672 = vmatprep.subr.mxu0 0.0
    %2673 = vmatpush2.msra.mxu0 0.0
    %2674 = vmatprep.mubr.f32.mxu0 0.0
    %2675 = vmatmul.mubr.f32.gmra.mxu0 %v2605
    %v2676 = vpop.f32.mrf.mxu0
    %v2677 = vadd.f32 %v2602, %v2676
    %v2678 = vpop.f32.mrf.mxu0
    %2679 = vmatprep.mubr.f32.mxu0 0.0
    %2680 = vmatmul.mubr.f32.gmra.mxu0 %v2608
    %v2681 = vpop.f32.mrf.mxu0
    %v2682 = vadd.f32 %v2602, %v2681
    %v2683 = vpop.f32.mrf.mxu0
    %2684 = vdwg.mxu0
    %v2686 = vlaneseq
    %v2687 = vshrl.u32 %v2686, 7
    %v2688 = vsub.s32 0, %v2687
    %v2689 = vrot.slane %v2537, %v2688
    %2691 = vmatprep.subr.mxu0 0.0
    %2692 = vmatpush1.msra.mxu0 0.0
    %2693 = vmatprep.subr.mxu0 0.0
    %2694 = vmatpush1.msra.mxu0 0.0
    %2695 = vmatprep.subr.mxu0 0.0
    %2696 = vmatpush1.msra.mxu0 0.0
    %2697 = vmatprep.subr.mxu0 0.0
    %2698 = vmatpush1.msra.mxu0 0.0
    %2699 = vmatprep.subr.mxu0 0.0
    %2700 = vmatpush1.msra.mxu0 0.0
    %2701 = vmatprep.subr.mxu0 0.0
    %2702 = vmatpush1.msra.mxu0 0.0
    %2703 = vmatprep.subr.mxu0 0.0
    %2704 = vmatpush1.msra.mxu0 0.0
    %2705 = vmatprep.subr.mxu0 0.0
    %2706 = vmatpush1.msra.mxu0 0.0
    %2707 = vmatprep.subr.mxu0 0.0
    %2708 = vmatpush1.msra.mxu0 0.0
    %2709 = vmatprep.subr.mxu0 0.0
    %2710 = vmatpush1.msra.mxu0 0.0
    %2711 = vmatprep.subr.mxu0 0.0
    %2712 = vmatpush1.msra.mxu0 0.0
    %2713 = vmatprep.subr.mxu0 0.0
    %2714 = vmatpush1.msra.mxu0 0.0
    %2715 = vmatprep.subr.mxu0 0.0
    %2716 = vmatpush1.msra.mxu0 %v2531
    %2717 = vmatprep.subr.mxu0 0.0
    %2718 = vmatpush1.msra.mxu0 %v2530
    %2719 = vmatprep.subr.mxu0 0.0
    %2720 = vmatpush1.msra.mxu0 %v2529
    %2721 = vmatprep.subr.mxu0 0.0
    %2722 = vmatpush1.msra.mxu0 %v2528
    %2723 = vmatprep.subr.mxu0 0.0
    %2724 = vmatpush2.msra.mxu0 0.0
    %2725 = vmatprep.subr.mxu0 0.0
    %2726 = vmatpush2.msra.mxu0 0.0
    %2727 = vmatprep.subr.mxu0 0.0
    %2728 = vmatpush2.msra.mxu0 0.0
    %2729 = vmatprep.subr.mxu0 0.0
    %2730 = vmatpush2.msra.mxu0 0.0
    %2731 = vmatprep.subr.mxu0 0.0
    %2732 = vmatpush2.msra.mxu0 0.0
    %2733 = vmatprep.subr.mxu0 0.0
    %2734 = vmatpush2.msra.mxu0 0.0
    %2735 = vmatprep.subr.mxu0 0.0
    %2736 = vmatpush2.msra.mxu0 0.0
    %2737 = vmatprep.subr.mxu0 0.0
    %2738 = vmatpush2.msra.mxu0 0.0
    %2739 = vmatprep.subr.mxu0 0.0
    %2740 = vmatpush2.msra.mxu0 0.0
    %2741 = vmatprep.subr.mxu0 0.0
    %2742 = vmatpush2.msra.mxu0 0.0
    %2743 = vmatprep.subr.mxu0 0.0
    %2744 = vmatpush2.msra.mxu0 0.0
    %2745 = vmatprep.subr.mxu0 0.0
    %2746 = vmatpush2.msra.mxu0 0.0
    %2747 = vmatprep.subr.mxu0 0.0
    %2748 = vmatpush2.msra.mxu0 0.0
    %2749 = vmatprep.subr.mxu0 0.0
    %2750 = vmatpush2.msra.mxu0 0.0
    %2751 = vmatprep.subr.mxu0 0.0
    %2752 = vmatpush2.msra.mxu0 0.0
    %2753 = vmatprep.subr.mxu0 0.0
    %2754 = vmatpush2.msra.mxu0 0.0
    %2755 = vmatprep.mubr.f32.mxu0 0.0
    %2756 = vmatmul.mubr.f32.gmra.mxu0 %v2605
    %v2757 = vpop.f32.mrf.mxu0
    %v2758 = vadd.f32 %v2689, %v2757
    %v2759 = vpop.f32.mrf.mxu0
    %2760 = vmatprep.mubr.f32.mxu0 0.0
    %2761 = vmatmul.mubr.f32.gmra.mxu0 %v2608
    %v2762 = vpop.f32.mrf.mxu0
    %v2763 = vadd.f32 %v2689, %v2762
    %v2764 = vpop.f32.mrf.mxu0
    %2765 = vdwg.mxu0
    %v2767 = vlaneseq
    %v2768 = vshrl.u32 %v2767, 7
    %v2769 = vsub.s32 0, %v2768
    %v2770 = vrot.slane %v2538, %v2769
    %2772 = vmatprep.subr.mxu0 0.0
    %2773 = vmatpush1.msra.mxu0 0.0
    %2774 = vmatprep.subr.mxu0 0.0
    %2775 = vmatpush1.msra.mxu0 0.0
    %2776 = vmatprep.subr.mxu0 0.0
    %2777 = vmatpush1.msra.mxu0 0.0
    %2778 = vmatprep.subr.mxu0 0.0
    %2779 = vmatpush1.msra.mxu0 0.0
    %2780 = vmatprep.subr.mxu0 0.0
    %2781 = vmatpush1.msra.mxu0 0.0
    %2782 = vmatprep.subr.mxu0 0.0
    %2783 = vmatpush1.msra.mxu0 0.0
    %2784 = vmatprep.subr.mxu0 0.0
    %2785 = vmatpush1.msra.mxu0 0.0
    %2786 = vmatprep.subr.mxu0 0.0
    %2787 = vmatpush1.msra.mxu0 0.0
    %2788 = vmatprep.subr.mxu0 0.0
    %2789 = vmatpush1.msra.mxu0 0.0
    %2790 = vmatprep.subr.mxu0 0.0
    %2791 = vmatpush1.msra.mxu0 0.0
    %2792 = vmatprep.subr.mxu0 0.0
    %2793 = vmatpush1.msra.mxu0 0.0
    %2794 = vmatprep.subr.mxu0 0.0
    %2795 = vmatpush1.msra.mxu0 0.0
    %2796 = vmatprep.subr.mxu0 0.0
    %2797 = vmatpush1.msra.mxu0 %v2535
    %2798 = vmatprep.subr.mxu0 0.0
    %2799 = vmatpush1.msra.mxu0 %v2534
    %2800 = vmatprep.subr.mxu0 0.0
    %2801 = vmatpush1.msra.mxu0 %v2533
    %2802 = vmatprep.subr.mxu0 0.0
    %2803 = vmatpush1.msra.mxu0 %v2532
    %2804 = vmatprep.subr.mxu0 0.0
    %2805 = vmatpush2.msra.mxu0 0.0
    %2806 = vmatprep.subr.mxu0 0.0
    %2807 = vmatpush2.msra.mxu0 0.0
    %2808 = vmatprep.subr.mxu0 0.0
    %2809 = vmatpush2.msra.mxu0 0.0
    %2810 = vmatprep.subr.mxu0 0.0
    %2811 = vmatpush2.msra.mxu0 0.0
    %2812 = vmatprep.subr.mxu0 0.0
    %2813 = vmatpush2.msra.mxu0 0.0
    %2814 = vmatprep.subr.mxu0 0.0
    %2815 = vmatpush2.msra.mxu0 0.0
    %2816 = vmatprep.subr.mxu0 0.0
    %2817 = vmatpush2.msra.mxu0 0.0
    %2818 = vmatprep.subr.mxu0 0.0
    %2819 = vmatpush2.msra.mxu0 0.0
    %2820 = vmatprep.subr.mxu0 0.0
    %2821 = vmatpush2.msra.mxu0 0.0
    %2822 = vmatprep.subr.mxu0 0.0
    %2823 = vmatpush2.msra.mxu0 0.0
    %2824 = vmatprep.subr.mxu0 0.0
    %2825 = vmatpush2.msra.mxu0 0.0
    %2826 = vmatprep.subr.mxu0 0.0
    %2827 = vmatpush2.msra.mxu0 0.0
    %2828 = vmatprep.subr.mxu0 0.0
    %2829 = vmatpush2.msra.mxu0 0.0
    %2830 = vmatprep.subr.mxu0 0.0
    %2831 = vmatpush2.msra.mxu0 0.0
    %2832 = vmatprep.subr.mxu0 0.0
    %2833 = vmatpush2.msra.mxu0 0.0
    %2834 = vmatprep.subr.mxu0 0.0
    %2835 = vmatpush2.msra.mxu0 0.0
    %2836 = vmatprep.mubr.f32.mxu0 0.0
    %2837 = vmatmul.mubr.f32.gmra.mxu0 %v2605
    %v2838 = vpop.f32.mrf.mxu0
    %v2839 = vadd.f32 %v2770, %v2838
    %v2840 = vpop.f32.mrf.mxu0
    %2841 = vmatprep.mubr.f32.mxu0 0.0
    %2842 = vmatmul.mubr.f32.gmra.mxu0 %v2608
    %v2843 = vpop.f32.mrf.mxu0
    %v2844 = vadd.f32 %v2770, %v2843
    %v2845 = vpop.f32.mrf.mxu0
    %2846 = vdwg.mxu0
    %v2848 = vsel %vm1152, %v2677, 0
    %v2851 = vsel %vm1152, %v2682, 0
    %v2854 = vsel %vm1152, %v2758, 0
    %v2857 = vsel %vm1152, %v2763, 0
    %2859 = vmatprep.subr.mxu0 0.0
    %2860 = vmatpush1.xpose.msra.mxu0 0.0
    %2861 = vmatprep.subr.mxu0 0.0
    %2862 = vmatpush1.xpose.msra.mxu0 0.0
    %2863 = vmatprep.subr.mxu0 0.0
    %2864 = vmatpush1.xpose.msra.mxu0 0.0
    %2865 = vmatprep.subr.mxu0 0.0
    %2866 = vmatpush1.xpose.msra.mxu0 0.0
    %2867 = vmatprep.subr.mxu0 0.0
    %2868 = vmatpush1.xpose.msra.mxu0 0.0
    %2869 = vmatprep.subr.mxu0 0.0
    %2870 = vmatpush1.xpose.msra.mxu0 0.0
    %2871 = vmatprep.subr.mxu0 0.0
    %2872 = vmatpush1.xpose.msra.mxu0 0.0
    %2873 = vmatprep.subr.mxu0 0.0
    %2874 = vmatpush1.xpose.msra.mxu0 0.0
    %2875 = vmatprep.subr.mxu0 0.0
    %2876 = vmatpush1.xpose.msra.mxu0 0.0
    %2877 = vmatprep.subr.mxu0 0.0
    %2878 = vmatpush1.xpose.msra.mxu0 0.0
    %2879 = vmatprep.subr.mxu0 0.0
    %2880 = vmatpush1.xpose.msra.mxu0 0.0
    %2881 = vmatprep.subr.mxu0 0.0
    %2882 = vmatpush1.xpose.msra.mxu0 0.0
    %2883 = vmatprep.subr.mxu0 0.0
    %2884 = vmatpush1.xpose.msra.mxu0 0.0
    %2885 = vmatprep.subr.mxu0 0.0
    %2886 = vmatpush1.xpose.msra.mxu0 0.0
    %2887 = vmatprep.subr.mxu0 0.0
    %2888 = vmatpush1.xpose.msra.mxu0 %v2857
    %2889 = vmatprep.subr.mxu0 0.0
    %2890 = vmatpush1.xpose.msra.mxu0 %v2854
    %2891 = vmatprep.subr.mxu0 0.0
    %2892 = vmatpush2.xpose.msra.mxu0 0.0
    %2893 = vmatprep.subr.mxu0 0.0
    %2894 = vmatpush2.xpose.msra.mxu0 0.0
    %2895 = vmatprep.subr.mxu0 0.0
    %2896 = vmatpush2.xpose.msra.mxu0 0.0
    %2897 = vmatprep.subr.mxu0 0.0
    %2898 = vmatpush2.xpose.msra.mxu0 0.0
    %2899 = vmatprep.subr.mxu0 0.0
    %2900 = vmatpush2.xpose.msra.mxu0 0.0
    %2901 = vmatprep.subr.mxu0 0.0
    %2902 = vmatpush2.xpose.msra.mxu0 0.0
    %2903 = vmatprep.subr.mxu0 0.0
    %2904 = vmatpush2.xpose.msra.mxu0 0.0
    %2905 = vmatprep.subr.mxu0 0.0
    %2906 = vmatpush2.xpose.msra.mxu0 0.0
    %2907 = vmatprep.subr.mxu0 0.0
    %2908 = vmatpush2.xpose.msra.mxu0 0.0
    %2909 = vmatprep.subr.mxu0 0.0
    %2910 = vmatpush2.xpose.msra.mxu0 0.0
    %2911 = vmatprep.subr.mxu0 0.0
    %2912 = vmatpush2.xpose.msra.mxu0 0.0
    %2913 = vmatprep.subr.mxu0 0.0
    %2914 = vmatpush2.xpose.msra.mxu0 0.0
    %2915 = vmatprep.subr.mxu0 0.0
    %2916 = vmatpush2.xpose.msra.mxu0 0.0
    %2917 = vmatprep.subr.mxu0 0.0
    %2918 = vmatpush2.xpose.msra.mxu0 0.0
    %2919 = vmatprep.subr.mxu0 0.0
    %2920 = vmatpush2.xpose.msra.mxu0 0.0
    %2921 = vmatprep.subr.mxu0 0.0
    %2922 = vmatpush2.xpose.msra.mxu0 0.0
    %2923 = vmatprep.mubr.f32.mxu0 0.0
    %2924 = vmatmul.mubr.f32.gmra.mxu0 %v2848
    %v2925 = vpop.f32.mrf.mxu0
    %v2926 = vadd.f32 0.0, %v2925
    %v2927 = vpop.f32.mrf.mxu0
    %2928 = vmatprep.mubr.f32.mxu0 0.0
    %2929 = vmatmul.mubr.f32.gmra.mxu0 %v2851
    %v2930 = vpop.f32.mrf.mxu0
    %v2931 = vadd.f32 0.0, %v2930
    %v2932 = vpop.f32.mrf.mxu0
    %2933 = vdwg.mxu0
    %v2934 = vmul.f32 %v2926, 0.35355338
    %v2935 = vmul.f32 %v2931, 0.35355338
    %v2936 = vadd.f32 %v2934, %v725
    %v2937 = vadd.f32 %v2935, %v726
    %v2938 = vsel %vm1244, %v2936, -inf
    %2939 = vmax.xlane.f32.xlu0 %v2938
    %v2940 = vpop.xlane.xlu0 %2939
    %v2941 = vsel %vm1244, %v2937, -inf
    %2942 = vmax.xlane.f32.xlu0 %v2941
    %v2943 = vpop.xlane.xlu0 %2942
    %v2944 = vsub.f32 %v2936, %v2940
    %v2945 = vsub.f32 %v2937, %v2943
    %v2946 = vmul.f32 %v2944, 1.442695
    %v2947 = vpow.pop %v2946
    %v2948 = vmul.f32 %v2945, 1.442695
    %v2949 = vpow.pop %v2948
    %v2950 = vsel %vm1244, %v2947, 0.0
    %2951 = vadd.xlane.f32.xlu0 %v2950
    %v2952 = vpop.xlane.xlu0 %2951
    %v2953 = vsel %vm1244, %v2949, 0.0
    %2954 = vadd.xlane.f32.xlu0 %v2953
    %v2955 = vpop.xlane.xlu0 %2954
    %v2956 = vrcp.pop %v2952
    %v2957 = vrcp.pop %v2955
    %v2958 = vmul.f32 %v2947, %v2956
    %v2959 = vmul.f32 %v2949, %v2957
    %v2961 = vsel %vm1244, %v2958, 0
    %v2964 = vsel %vm1244, %v2959, 0
    %2966 = vmatprep.subr.mxu0 0.0
    %2967 = vmatpush1.msra.mxu0 0.0
    %2968 = vmatprep.subr.mxu0 0.0
    %2969 = vmatpush1.msra.mxu0 0.0
    %2970 = vmatprep.subr.mxu0 0.0
    %2971 = vmatpush1.msra.mxu0 0.0
    %2972 = vmatprep.subr.mxu0 0.0
    %2973 = vmatpush1.msra.mxu0 0.0
    %2974 = vmatprep.subr.mxu0 0.0
    %2975 = vmatpush1.msra.mxu0 0.0
    %2976 = vmatprep.subr.mxu0 0.0
    %2977 = vmatpush1.msra.mxu0 0.0
    %2978 = vmatprep.subr.mxu0 0.0
    %2979 = vmatpush1.msra.mxu0 0.0
    %2980 = vmatprep.subr.mxu0 0.0
    %2981 = vmatpush1.msra.mxu0 0.0
    %2982 = vmatprep.subr.mxu0 0.0
    %2983 = vmatpush1.msra.mxu0 0.0
    %2984 = vmatprep.subr.mxu0 0.0
    %2985 = vmatpush1.msra.mxu0 0.0
    %2986 = vmatprep.subr.mxu0 0.0
    %2987 = vmatpush1.msra.mxu0 0.0
    %2988 = vmatprep.subr.mxu0 0.0
    %2989 = vmatpush1.msra.mxu0 0.0
    %2990 = vmatprep.subr.mxu0 0.0
    %2991 = vmatpush1.msra.mxu0 0.0
    %2992 = vmatprep.subr.mxu0 0.0
    %2993 = vmatpush1.msra.mxu0 0.0
    %2994 = vmatprep.subr.mxu0 0.0
    %2995 = vmatpush1.msra.mxu0 %v2844
    %2996 = vmatprep.subr.mxu0 0.0
    %2997 = vmatpush1.msra.mxu0 %v2839
    %2998 = vmatprep.subr.mxu0 0.0
    %2999 = vmatpush2.msra.mxu0 0.0
    %3000 = vmatprep.subr.mxu0 0.0
    %3001 = vmatpush2.msra.mxu0 0.0
    %3002 = vmatprep.subr.mxu0 0.0
    %3003 = vmatpush2.msra.mxu0 0.0
    %3004 = vmatprep.subr.mxu0 0.0
    %3005 = vmatpush2.msra.mxu0 0.0
    %3006 = vmatprep.subr.mxu0 0.0
    %3007 = vmatpush2.msra.mxu0 0.0
    %3008 = vmatprep.subr.mxu0 0.0
    %3009 = vmatpush2.msra.mxu0 0.0
    %3010 = vmatprep.subr.mxu0 0.0
    %3011 = vmatpush2.msra.mxu0 0.0
    %3012 = vmatprep.subr.mxu0 0.0
    %3013 = vmatpush2.msra.mxu0 0.0
    %3014 = vmatprep.subr.mxu0 0.0
    %3015 = vmatpush2.msra.mxu0 0.0
    %3016 = vmatprep.subr.mxu0 0.0
    %3017 = vmatpush2.msra.mxu0 0.0
    %3018 = vmatprep.subr.mxu0 0.0
    %3019 = vmatpush2.msra.mxu0 0.0
    %3020 = vmatprep.subr.mxu0 0.0
    %3021 = vmatpush2.msra.mxu0 0.0
    %3022 = vmatprep.subr.mxu0 0.0
    %3023 = vmatpush2.msra.mxu0 0.0
    %3024 = vmatprep.subr.mxu0 0.0
    %3025 = vmatpush2.msra.mxu0 0.0
    %3026 = vmatprep.subr.mxu0 0.0
    %3027 = vmatpush2.msra.mxu0 0.0
    %3028 = vmatprep.subr.mxu0 0.0
    %3029 = vmatpush2.msra.mxu0 0.0
    %3030 = vmatprep.mubr.f32.mxu0 0.0
    %3031 = vmatmul.mubr.f32.gmra.mxu0 %v2961
    %v3032 = vpop.f32.mrf.mxu0
    %v3033 = vadd.f32 0.0, %v3032
    %v3034 = vpop.f32.mrf.mxu0
    %3035 = vmatprep.mubr.f32.mxu0 0.0
    %3036 = vmatmul.mubr.f32.gmra.mxu0 %v2964
    %v3037 = vpop.f32.mrf.mxu0
    %v3038 = vadd.f32 0.0, %v3037
    %v3039 = vpop.f32.mrf.mxu0
    %3040 = vdwg.mxu0
    %3041 = vrot.lane.b32.xlu0 %v2677, 120
    %v3042 = vpop.permute.xlu0 %3041
    %3043 = vrot.lane.b32.xlu0 %v2682, 120
    %v3044 = vpop.permute.xlu0 %3043
    %3045 = vrot.lane.b32.xlu0 %v2758, 120
    %v3046 = vpop.permute.xlu0 %3045
    %3047 = vrot.lane.b32.xlu0 %v2763, 120
    %v3048 = vpop.permute.xlu0 %3047
    %v3049 = vsel %vm1152, %v3042, 0
    %v3051 = vsel %vm1152, %v3044, 0
    %v3053 = vsel %vm1152, %v3046, 0
    %v3055 = vsel %vm1152, %v3048, 0
    %3057 = vmatprep.subr.mxu0 0.0
    %3058 = vmatpush1.xpose.msra.mxu0 0.0
    %3059 = vmatprep.subr.mxu0 0.0
    %3060 = vmatpush1.xpose.msra.mxu0 0.0
    %3061 = vmatprep.subr.mxu0 0.0
    %3062 = vmatpush1.xpose.msra.mxu0 0.0
    %3063 = vmatprep.subr.mxu0 0.0
    %3064 = vmatpush1.xpose.msra.mxu0 0.0
    %3065 = vmatprep.subr.mxu0 0.0
    %3066 = vmatpush1.xpose.msra.mxu0 0.0
    %3067 = vmatprep.subr.mxu0 0.0
    %3068 = vmatpush1.xpose.msra.mxu0 0.0
    %3069 = vmatprep.subr.mxu0 0.0
    %3070 = vmatpush1.xpose.msra.mxu0 0.0
    %3071 = vmatprep.subr.mxu0 0.0
    %3072 = vmatpush1.xpose.msra.mxu0 0.0
    %3073 = vmatprep.subr.mxu0 0.0
    %3074 = vmatpush1.xpose.msra.mxu0 0.0
    %3075 = vmatprep.subr.mxu0 0.0
    %3076 = vmatpush1.xpose.msra.mxu0 0.0
    %3077 = vmatprep.subr.mxu0 0.0
    %3078 = vmatpush1.xpose.msra.mxu0 0.0
    %3079 = vmatprep.subr.mxu0 0.0
    %3080 = vmatpush1.xpose.msra.mxu0 0.0
    %3081 = vmatprep.subr.mxu0 0.0
    %3082 = vmatpush1.xpose.msra.mxu0 0.0
    %3083 = vmatprep.subr.mxu0 0.0
    %3084 = vmatpush1.xpose.msra.mxu0 0.0
    %3085 = vmatprep.subr.mxu0 0.0
    %3086 = vmatpush1.xpose.msra.mxu0 %v3055
    %3087 = vmatprep.subr.mxu0 0.0
    %3088 = vmatpush1.xpose.msra.mxu0 %v3053
    %3089 = vmatprep.subr.mxu0 0.0
    %3090 = vmatpush2.xpose.msra.mxu0 0.0
    %3091 = vmatprep.subr.mxu0 0.0
    %3092 = vmatpush2.xpose.msra.mxu0 0.0
    %3093 = vmatprep.subr.mxu0 0.0
    %3094 = vmatpush2.xpose.msra.mxu0 0.0
    %3095 = vmatprep.subr.mxu0 0.0
    %3096 = vmatpush2.xpose.msra.mxu0 0.0
    %3097 = vmatprep.subr.mxu0 0.0
    %3098 = vmatpush2.xpose.msra.mxu0 0.0
    %3099 = vmatprep.subr.mxu0 0.0
    %3100 = vmatpush2.xpose.msra.mxu0 0.0
    %3101 = vmatprep.subr.mxu0 0.0
    %3102 = vmatpush2.xpose.msra.mxu0 0.0
    %3103 = vmatprep.subr.mxu0 0.0
    %3104 = vmatpush2.xpose.msra.mxu0 0.0
    %3105 = vmatprep.subr.mxu0 0.0
    %3106 = vmatpush2.xpose.msra.mxu0 0.0
    %3107 = vmatprep.subr.mxu0 0.0
    %3108 = vmatpush2.xpose.msra.mxu0 0.0
    %3109 = vmatprep.subr.mxu0 0.0
    %3110 = vmatpush2.xpose.msra.mxu0 0.0
    %3111 = vmatprep.subr.mxu0 0.0
    %3112 = vmatpush2.xpose.msra.mxu0 0.0
    %3113 = vmatprep.subr.mxu0 0.0
    %3114 = vmatpush2.xpose.msra.mxu0 0.0
    %3115 = vmatprep.subr.mxu0 0.0
    %3116 = vmatpush2.xpose.msra.mxu0 0.0
    %3117 = vmatprep.subr.mxu0 0.0
    %3118 = vmatpush2.xpose.msra.mxu0 0.0
    %3119 = vmatprep.subr.mxu0 0.0
    %3120 = vmatpush2.xpose.msra.mxu0 0.0
    %3121 = vmatprep.mubr.f32.mxu0 0.0
    %3122 = vmatmul.mubr.f32.gmra.mxu0 %v3049
    %v3123 = vpop.f32.mrf.mxu0
    %v3124 = vadd.f32 0.0, %v3123
    %v3125 = vpop.f32.mrf.mxu0
    %3126 = vmatprep.mubr.f32.mxu0 0.0
    %3127 = vmatmul.mubr.f32.gmra.mxu0 %v3051
    %v3128 = vpop.f32.mrf.mxu0
    %v3129 = vadd.f32 0.0, %v3128
    %v3130 = vpop.f32.mrf.mxu0
    %3131 = vdwg.mxu0
    %v3132 = vmul.f32 %v3124, 0.35355338
    %v3133 = vmul.f32 %v3129, 0.35355338
    %v3134 = vadd.f32 %v3132, %v725
    %v3135 = vadd.f32 %v3133, %v726
    %v3136 = vsel %vm1244, %v3134, -inf
    %3137 = vmax.xlane.f32.xlu0 %v3136
    %v3138 = vpop.xlane.xlu0 %3137
    %v3139 = vsel %vm1244, %v3135, -inf
    %3140 = vmax.xlane.f32.xlu0 %v3139
    %v3141 = vpop.xlane.xlu0 %3140
    %v3142 = vsub.f32 %v3134, %v3138
    %v3143 = vsub.f32 %v3135, %v3141
    %v3144 = vmul.f32 %v3142, 1.442695
    %v3145 = vpow.pop %v3144
    %v3146 = vmul.f32 %v3143, 1.442695
    %v3147 = vpow.pop %v3146
    %v3148 = vsel %vm1244, %v3145, 0.0
    %3149 = vadd.xlane.f32.xlu0 %v3148
    %v3150 = vpop.xlane.xlu0 %3149
    %v3151 = vsel %vm1244, %v3147, 0.0
    %3152 = vadd.xlane.f32.xlu0 %v3151
    %v3153 = vpop.xlane.xlu0 %3152
    %v3154 = vrcp.pop %v3150
    %v3155 = vrcp.pop %v3153
    %v3156 = vmul.f32 %v3145, %v3154
    %v3157 = vmul.f32 %v3147, %v3155
    %3160 = vrot.lane.b32.xlu0 %v2839, 120
    %v3161 = vpop.permute.xlu0 %3160
    %3162 = vrot.lane.b32.xlu0 %v2844, 120
    %v3163 = vpop.permute.xlu0 %3162
    %v3167 = vsel %vm1244, %v3156, 0
    %v3170 = vsel %vm1244, %v3157, 0
    %3172 = vmatprep.subr.mxu0 0.0
    %3173 = vmatpush1.msra.mxu0 0.0
    %3174 = vmatprep.subr.mxu0 0.0
    %3175 = vmatpush1.msra.mxu0 0.0
    %3176 = vmatprep.subr.mxu0 0.0
    %3177 = vmatpush1.msra.mxu0 0.0
    %3178 = vmatprep.subr.mxu0 0.0
    %3179 = vmatpush1.msra.mxu0 0.0
    %3180 = vmatprep.subr.mxu0 0.0
    %3181 = vmatpush1.msra.mxu0 0.0
    %3182 = vmatprep.subr.mxu0 0.0
    %3183 = vmatpush1.msra.mxu0 0.0
    %3184 = vmatprep.subr.mxu0 0.0
    %3185 = vmatpush1.msra.mxu0 0.0
    %3186 = vmatprep.subr.mxu0 0.0
    %3187 = vmatpush1.msra.mxu0 0.0
    %3188 = vmatprep.subr.mxu0 0.0
    %3189 = vmatpush1.msra.mxu0 0.0
    %3190 = vmatprep.subr.mxu0 0.0
    %3191 = vmatpush1.msra.mxu0 0.0
    %3192 = vmatprep.subr.mxu0 0.0
    %3193 = vmatpush1.msra.mxu0 0.0
    %3194 = vmatprep.subr.mxu0 0.0
    %3195 = vmatpush1.msra.mxu0 0.0
    %3196 = vmatprep.subr.mxu0 0.0
    %3197 = vmatpush1.msra.mxu0 0.0
    %3198 = vmatprep.subr.mxu0 0.0
    %3199 = vmatpush1.msra.mxu0 0.0
    %3200 = vmatprep.subr.mxu0 0.0
    %3201 = vmatpush1.msra.mxu0 %v3163
    %3202 = vmatprep.subr.mxu0 0.0
    %3203 = vmatpush1.msra.mxu0 %v3161
    %3204 = vmatprep.subr.mxu0 0.0
    %3205 = vmatpush2.msra.mxu0 0.0
    %3206 = vmatprep.subr.mxu0 0.0
    %3207 = vmatpush2.msra.mxu0 0.0
    %3208 = vmatprep.subr.mxu0 0.0
    %3209 = vmatpush2.msra.mxu0 0.0
    %3210 = vmatprep.subr.mxu0 0.0
    %3211 = vmatpush2.msra.mxu0 0.0
    %3212 = vmatprep.subr.mxu0 0.0
    %3213 = vmatpush2.msra.mxu0 0.0
    %3214 = vmatprep.subr.mxu0 0.0
    %3215 = vmatpush2.msra.mxu0 0.0
    %3216 = vmatprep.subr.mxu0 0.0
    %3217 = vmatpush2.msra.mxu0 0.0
    %3218 = vmatprep.subr.mxu0 0.0
    %3219 = vmatpush2.msra.mxu0 0.0
    %3220 = vmatprep.subr.mxu0 0.0
    %3221 = vmatpush2.msra.mxu0 0.0
    %3222 = vmatprep.subr.mxu0 0.0
    %3223 = vmatpush2.msra.mxu0 0.0
    %3224 = vmatprep.subr.mxu0 0.0
    %3225 = vmatpush2.msra.mxu0 0.0
    %3226 = vmatprep.subr.mxu0 0.0
    %3227 = vmatpush2.msra.mxu0 0.0
    %3228 = vmatprep.subr.mxu0 0.0
    %3229 = vmatpush2.msra.mxu0 0.0
    %3230 = vmatprep.subr.mxu0 0.0
    %3231 = vmatpush2.msra.mxu0 0.0
    %3232 = vmatprep.subr.mxu0 0.0
    %3233 = vmatpush2.msra.mxu0 0.0
    %3234 = vmatprep.subr.mxu0 0.0
    %3235 = vmatpush2.msra.mxu0 0.0
    %3236 = vmatprep.mubr.f32.mxu0 0.0
    %3237 = vmatmul.mubr.f32.gmra.mxu0 %v3167
    %v3238 = vpop.f32.mrf.mxu0
    %v3239 = vadd.f32 0.0, %v3238
    %v3240 = vpop.f32.mrf.mxu0
    %3241 = vmatprep.mubr.f32.mxu0 0.0
    %3242 = vmatmul.mubr.f32.gmra.mxu0 %v3170
    %v3243 = vpop.f32.mrf.mxu0
    %v3244 = vadd.f32 0.0, %v3243
    %v3245 = vpop.f32.mrf.mxu0
    %3246 = vdwg.mxu0
    %v3248 = vsel %vm1152, %v3239, 0
    %v3251 = vsel %vm1152, %v3244, 0
    %3253 = vmatprep.subr.mxu0 0.0
    %3254 = vmatpush1.msra.mxu0 0.0
    %3255 = vmatprep.subr.mxu0 0.0
    %3256 = vmatpush1.msra.mxu0 0.0
    %3257 = vmatprep.subr.mxu0 0.0
    %3258 = vmatpush1.msra.mxu0 0.0
    %3259 = vmatprep.subr.mxu0 0.0
    %3260 = vmatpush1.msra.mxu0 0.0
    %3261 = vmatprep.subr.mxu0 0.0
    %3262 = vmatpush1.msra.mxu0 0.0
    %3263 = vmatprep.subr.mxu0 0.0
    %3264 = vmatpush1.msra.mxu0 0.0
    %3265 = vmatprep.subr.mxu0 0.0
    %3266 = vmatpush1.msra.mxu0 0.0
    %3267 = vmatprep.subr.mxu0 0.0
    %3268 = vmatpush1.msra.mxu0 0.0
    %3269 = vmatprep.subr.mxu0 0.0
    %3270 = vmatpush1.msra.mxu0 0.0
    %3271 = vmatprep.subr.mxu0 0.0
    %3272 = vmatpush1.msra.mxu0 0.0
    %3273 = vmatprep.subr.mxu0 0.0
    %3274 = vmatpush1.msra.mxu0 0.0
    %3275 = vmatprep.subr.mxu0 0.0
    %3276 = vmatpush1.msra.mxu0 0.0
    %3277 = vmatprep.subr.mxu0 0.0
    %3278 = vmatpush1.msra.mxu0 0.0
    %3279 = vmatprep.subr.mxu0 0.0
    %3280 = vmatpush1.msra.mxu0 0.0
    %3281 = vmatprep.subr.mxu0 0.0
    %3282 = vmatpush1.msra.mxu0 0.0
    %3283 = vmatprep.subr.mxu0 0.0
    %3284 = vmatpush1.msra.mxu0 %v2540
    %3285 = vmatprep.subr.mxu0 0.0
    %3286 = vmatpush2.msra.mxu0 0.0
    %3287 = vmatprep.subr.mxu0 0.0
    %3288 = vmatpush2.msra.mxu0 0.0
    %3289 = vmatprep.subr.mxu0 0.0
    %3290 = vmatpush2.msra.mxu0 0.0
    %3291 = vmatprep.subr.mxu0 0.0
    %3292 = vmatpush2.msra.mxu0 0.0
    %3293 = vmatprep.subr.mxu0 0.0
    %3294 = vmatpush2.msra.mxu0 0.0
    %3295 = vmatprep.subr.mxu0 0.0
    %3296 = vmatpush2.msra.mxu0 0.0
    %3297 = vmatprep.subr.mxu0 0.0
    %3298 = vmatpush2.msra.mxu0 0.0
    %3299 = vmatprep.subr.mxu0 0.0
    %3300 = vmatpush2.msra.mxu0 0.0
    %3301 = vmatprep.subr.mxu0 0.0
    %3302 = vmatpush2.msra.mxu0 0.0
    %3303 = vmatprep.subr.mxu0 0.0
    %3304 = vmatpush2.msra.mxu0 0.0
    %3305 = vmatprep.subr.mxu0 0.0
    %3306 = vmatpush2.msra.mxu0 0.0
    %3307 = vmatprep.subr.mxu0 0.0
    %3308 = vmatpush2.msra.mxu0 0.0
    %3309 = vmatprep.subr.mxu0 0.0
    %3310 = vmatpush2.msra.mxu0 0.0
    %3311 = vmatprep.subr.mxu0 0.0
    %3312 = vmatpush2.msra.mxu0 0.0
    %3313 = vmatprep.subr.mxu0 0.0
    %3314 = vmatpush2.msra.mxu0 0.0
    %3315 = vmatprep.subr.mxu0 0.0
    %3316 = vmatpush2.msra.mxu0 0.0
    %3317 = vmatprep.mubr.f32.mxu0 0.0
    %3318 = vmatmul.mubr.f32.gmra.mxu0 %v3248
    %v3319 = vpop.f32.mrf.mxu0
    %v3320 = vadd.f32 0.0, %v3319
    %v3321 = vpop.f32.mrf.mxu0
    %3322 = vmatprep.mubr.f32.mxu0 0.0
    %3323 = vmatmul.mubr.f32.gmra.mxu0 %v3251
    %v3324 = vpop.f32.mrf.mxu0
    %v3325 = vadd.f32 0.0, %v3324
    %v3326 = vpop.f32.mrf.mxu0
    %3327 = vdwg.mxu0
    %v3329 = vsel %vm1152, %v3033, 0
    %v3332 = vsel %vm1152, %v3038, 0
    %3334 = vmatprep.subr.mxu0 0.0
    %3335 = vmatpush1.msra.mxu0 0.0
    %3336 = vmatprep.subr.mxu0 0.0
    %3337 = vmatpush1.msra.mxu0 0.0
    %3338 = vmatprep.subr.mxu0 0.0
    %3339 = vmatpush1.msra.mxu0 0.0
    %3340 = vmatprep.subr.mxu0 0.0
    %3341 = vmatpush1.msra.mxu0 0.0
    %3342 = vmatprep.subr.mxu0 0.0
    %3343 = vmatpush1.msra.mxu0 0.0
    %3344 = vmatprep.subr.mxu0 0.0
    %3345 = vmatpush1.msra.mxu0 0.0
    %3346 = vmatprep.subr.mxu0 0.0
    %3347 = vmatpush1.msra.mxu0 0.0
    %3348 = vmatprep.subr.mxu0 0.0
    %3349 = vmatpush1.msra.mxu0 0.0
    %3350 = vmatprep.subr.mxu0 0.0
    %3351 = vmatpush1.msra.mxu0 0.0
    %3352 = vmatprep.subr.mxu0 0.0
    %3353 = vmatpush1.msra.mxu0 0.0
    %3354 = vmatprep.subr.mxu0 0.0
    %3355 = vmatpush1.msra.mxu0 0.0
    %3356 = vmatprep.subr.mxu0 0.0
    %3357 = vmatpush1.msra.mxu0 0.0
    %3358 = vmatprep.subr.mxu0 0.0
    %3359 = vmatpush1.msra.mxu0 0.0
    %3360 = vmatprep.subr.mxu0 0.0
    %3361 = vmatpush1.msra.mxu0 0.0
    %3362 = vmatprep.subr.mxu0 0.0
    %3363 = vmatpush1.msra.mxu0 0.0
    %3364 = vmatprep.subr.mxu0 0.0
    %3365 = vmatpush1.msra.mxu0 %v2539
    %3366 = vmatprep.subr.mxu0 0.0
    %3367 = vmatpush2.msra.mxu0 0.0
    %3368 = vmatprep.subr.mxu0 0.0
    %3369 = vmatpush2.msra.mxu0 0.0
    %3370 = vmatprep.subr.mxu0 0.0
    %3371 = vmatpush2.msra.mxu0 0.0
    %3372 = vmatprep.subr.mxu0 0.0
    %3373 = vmatpush2.msra.mxu0 0.0
    %3374 = vmatprep.subr.mxu0 0.0
    %3375 = vmatpush2.msra.mxu0 0.0
    %3376 = vmatprep.subr.mxu0 0.0
    %3377 = vmatpush2.msra.mxu0 0.0
    %3378 = vmatprep.subr.mxu0 0.0
    %3379 = vmatpush2.msra.mxu0 0.0
    %3380 = vmatprep.subr.mxu0 0.0
    %3381 = vmatpush2.msra.mxu0 0.0
    %3382 = vmatprep.subr.mxu0 0.0
    %3383 = vmatpush2.msra.mxu0 0.0
    %3384 = vmatprep.subr.mxu0 0.0
    %3385 = vmatpush2.msra.mxu0 0.0
    %3386 = vmatprep.subr.mxu0 0.0
    %3387 = vmatpush2.msra.mxu0 0.0
    %3388 = vmatprep.subr.mxu0 0.0
    %3389 = vmatpush2.msra.mxu0 0.0
    %3390 = vmatprep.subr.mxu0 0.0
    %3391 = vmatpush2.msra.mxu0 0.0
    %3392 = vmatprep.subr.mxu0 0.0
    %3393 = vmatpush2.msra.mxu0 0.0
    %3394 = vmatprep.subr.mxu0 0.0
    %3395 = vmatpush2.msra.mxu0 0.0
    %3396 = vmatprep.subr.mxu0 0.0
    %3397 = vmatpush2.msra.mxu0 0.0
    %3398 = vmatprep.mubr.f32.mxu0 0.0
    %3399 = vmatmul.mubr.f32.gmra.mxu0 %v3329
    %v3400 = vpop.f32.mrf.mxu0
    %v3401 = vadd.f32 %v3320, %v3400
    %v3402 = vpop.f32.mrf.mxu0
    %3403 = vmatprep.mubr.f32.mxu0 0.0
    %3404 = vmatmul.mubr.f32.gmra.mxu0 %v3332
    %v3405 = vpop.f32.mrf.mxu0
    %v3406 = vadd.f32 %v3325, %v3405
    %v3407 = vpop.f32.mrf.mxu0
    %3408 = vdwg.mxu0
    %3409 = vrot.lane.b32.xlu0 %v2677, 112
    %v3410 = vpop.permute.xlu0 %3409
    %3411 = vrot.lane.b32.xlu0 %v2682, 112
    %v3412 = vpop.permute.xlu0 %3411
    %3413 = vrot.lane.b32.xlu0 %v2758, 112
    %v3414 = vpop.permute.xlu0 %3413
    %3415 = vrot.lane.b32.xlu0 %v2763, 112
    %v3416 = vpop.permute.xlu0 %3415
    %v3417 = vsel %vm1152, %v3410, 0
    %v3419 = vsel %vm1152, %v3412, 0
    %v3421 = vsel %vm1152, %v3414, 0
    %v3423 = vsel %vm1152, %v3416, 0
    %3425 = vmatprep.subr.mxu0 0.0
    %3426 = vmatpush1.xpose.msra.mxu0 0.0
    %3427 = vmatprep.subr.mxu0 0.0
    %3428 = vmatpush1.xpose.msra.mxu0 0.0
    %3429 = vmatprep.subr.mxu0 0.0
    %3430 = vmatpush1.xpose.msra.mxu0 0.0
    %3431 = vmatprep.subr.mxu0 0.0
    %3432 = vmatpush1.xpose.msra.mxu0 0.0
    %3433 = vmatprep.subr.mxu0 0.0
    %3434 = vmatpush1.xpose.msra.mxu0 0.0
    %3435 = vmatprep.subr.mxu0 0.0
    %3436 = vmatpush1.xpose.msra.mxu0 0.0
    %3437 = vmatprep.subr.mxu0 0.0
    %3438 = vmatpush1.xpose.msra.mxu0 0.0
    %3439 = vmatprep.subr.mxu0 0.0
    %3440 = vmatpush1.xpose.msra.mxu0 0.0
    %3441 = vmatprep.subr.mxu0 0.0
    %3442 = vmatpush1.xpose.msra.mxu0 0.0
    %3443 = vmatprep.subr.mxu0 0.0
    %3444 = vmatpush1.xpose.msra.mxu0 0.0
    %3445 = vmatprep.subr.mxu0 0.0
    %3446 = vmatpush1.xpose.msra.mxu0 0.0
    %3447 = vmatprep.subr.mxu0 0.0
    %3448 = vmatpush1.xpose.msra.mxu0 0.0
    %3449 = vmatprep.subr.mxu0 0.0
    %3450 = vmatpush1.xpose.msra.mxu0 0.0
    %3451 = vmatprep.subr.mxu0 0.0
    %3452 = vmatpush1.xpose.msra.mxu0 0.0
    %3453 = vmatprep.subr.mxu0 0.0
    %3454 = vmatpush1.xpose.msra.mxu0 %v3423
    %3455 = vmatprep.subr.mxu0 0.0
    %3456 = vmatpush1.xpose.msra.mxu0 %v3421
    %3457 = vmatprep.subr.mxu0 0.0
    %3458 = vmatpush2.xpose.msra.mxu0 0.0
    %3459 = vmatprep.subr.mxu0 0.0
    %3460 = vmatpush2.xpose.msra.mxu0 0.0
    %3461 = vmatprep.subr.mxu0 0.0
    %3462 = vmatpush2.xpose.msra.mxu0 0.0
    %3463 = vmatprep.subr.mxu0 0.0
    %3464 = vmatpush2.xpose.msra.mxu0 0.0
    %3465 = vmatprep.subr.mxu0 0.0
    %3466 = vmatpush2.xpose.msra.mxu0 0.0
    %3467 = vmatprep.subr.mxu0 0.0
    %3468 = vmatpush2.xpose.msra.mxu0 0.0
    %3469 = vmatprep.subr.mxu0 0.0
    %3470 = vmatpush2.xpose.msra.mxu0 0.0
    %3471 = vmatprep.subr.mxu0 0.0
    %3472 = vmatpush2.xpose.msra.mxu0 0.0
    %3473 = vmatprep.subr.mxu0 0.0
    %3474 = vmatpush2.xpose.msra.mxu0 0.0
    %3475 = vmatprep.subr.mxu0 0.0
    %3476 = vmatpush2.xpose.msra.mxu0 0.0
    %3477 = vmatprep.subr.mxu0 0.0
    %3478 = vmatpush2.xpose.msra.mxu0 0.0
    %3479 = vmatprep.subr.mxu0 0.0
    %3480 = vmatpush2.xpose.msra.mxu0 0.0
    %3481 = vmatprep.subr.mxu0 0.0
    %3482 = vmatpush2.xpose.msra.mxu0 0.0
    %3483 = vmatprep.subr.mxu0 0.0
    %3484 = vmatpush2.xpose.msra.mxu0 0.0
    %3485 = vmatprep.subr.mxu0 0.0
    %3486 = vmatpush2.xpose.msra.mxu0 0.0
    %3487 = vmatprep.subr.mxu0 0.0
    %3488 = vmatpush2.xpose.msra.mxu0 0.0
    %3489 = vmatprep.mubr.f32.mxu0 0.0
    %3490 = vmatmul.mubr.f32.gmra.mxu0 %v3417
    %v3491 = vpop.f32.mrf.mxu0
    %v3492 = vadd.f32 0.0, %v3491
    %v3493 = vpop.f32.mrf.mxu0
    %3494 = vmatprep.mubr.f32.mxu0 0.0
    %3495 = vmatmul.mubr.f32.gmra.mxu0 %v3419
    %v3496 = vpop.f32.mrf.mxu0
    %v3497 = vadd.f32 0.0, %v3496
    %v3498 = vpop.f32.mrf.mxu0
    %3499 = vdwg.mxu0
    %v3500 = vmul.f32 %v3492, 0.35355338
    %v3501 = vmul.f32 %v3497, 0.35355338
    %v3502 = vadd.f32 %v3500, %v725
    %v3503 = vadd.f32 %v3501, %v726
    %v3504 = vsel %vm1244, %v3502, -inf
    %3505 = vmax.xlane.f32.xlu0 %v3504
    %v3506 = vpop.xlane.xlu0 %3505
    %v3507 = vsel %vm1244, %v3503, -inf
    %3508 = vmax.xlane.f32.xlu0 %v3507
    %v3509 = vpop.xlane.xlu0 %3508
    %v3510 = vsub.f32 %v3502, %v3506
    %v3511 = vsub.f32 %v3503, %v3509
    %v3512 = vmul.f32 %v3510, 1.442695
    %v3513 = vpow.pop %v3512
    %v3514 = vmul.f32 %v3511, 1.442695
    %v3515 = vpow.pop %v3514
    %v3516 = vsel %vm1244, %v3513, 0.0
    %3517 = vadd.xlane.f32.xlu0 %v3516
    %v3518 = vpop.xlane.xlu0 %3517
    %v3519 = vsel %vm1244, %v3515, 0.0
    %3520 = vadd.xlane.f32.xlu0 %v3519
    %v3521 = vpop.xlane.xlu0 %3520
    %v3522 = vrcp.pop %v3518
    %v3523 = vrcp.pop %v3521
    %v3524 = vmul.f32 %v3513, %v3522
    %v3525 = vmul.f32 %v3515, %v3523
    %3526 = vrot.lane.b32.xlu0 %v2839, 112
    %v3527 = vpop.permute.xlu0 %3526
    %3528 = vrot.lane.b32.xlu0 %v2844, 112
    %v3529 = vpop.permute.xlu0 %3528
    %v3533 = vsel %vm1244, %v3524, 0
    %v3536 = vsel %vm1244, %v3525, 0
    %3538 = vmatprep.subr.mxu0 0.0
    %3539 = vmatpush1.msra.mxu0 0.0
    %3540 = vmatprep.subr.mxu0 0.0
    %3541 = vmatpush1.msra.mxu0 0.0
    %3542 = vmatprep.subr.mxu0 0.0
    %3543 = vmatpush1.msra.mxu0 0.0
    %3544 = vmatprep.subr.mxu0 0.0
    %3545 = vmatpush1.msra.mxu0 0.0
    %3546 = vmatprep.subr.mxu0 0.0
    %3547 = vmatpush1.msra.mxu0 0.0
    %3548 = vmatprep.subr.mxu0 0.0
    %3549 = vmatpush1.msra.mxu0 0.0
    %3550 = vmatprep.subr.mxu0 0.0
    %3551 = vmatpush1.msra.mxu0 0.0
    %3552 = vmatprep.subr.mxu0 0.0
    %3553 = vmatpush1.msra.mxu0 0.0
    %3554 = vmatprep.subr.mxu0 0.0
    %3555 = vmatpush1.msra.mxu0 0.0
    %3556 = vmatprep.subr.mxu0 0.0
    %3557 = vmatpush1.msra.mxu0 0.0
    %3558 = vmatprep.subr.mxu0 0.0
    %3559 = vmatpush1.msra.mxu0 0.0
    %3560 = vmatprep.subr.mxu0 0.0
    %3561 = vmatpush1.msra.mxu0 0.0
    %3562 = vmatprep.subr.mxu0 0.0
    %3563 = vmatpush1.msra.mxu0 0.0
    %3564 = vmatprep.subr.mxu0 0.0
    %3565 = vmatpush1.msra.mxu0 0.0
    %3566 = vmatprep.subr.mxu0 0.0
    %3567 = vmatpush1.msra.mxu0 %v3529
    %3568 = vmatprep.subr.mxu0 0.0
    %3569 = vmatpush1.msra.mxu0 %v3527
    %3570 = vmatprep.subr.mxu0 0.0
    %3571 = vmatpush2.msra.mxu0 0.0
    %3572 = vmatprep.subr.mxu0 0.0
    %3573 = vmatpush2.msra.mxu0 0.0
    %3574 = vmatprep.subr.mxu0 0.0
    %3575 = vmatpush2.msra.mxu0 0.0
    %3576 = vmatprep.subr.mxu0 0.0
    %3577 = vmatpush2.msra.mxu0 0.0
    %3578 = vmatprep.subr.mxu0 0.0
    %3579 = vmatpush2.msra.mxu0 0.0
    %3580 = vmatprep.subr.mxu0 0.0
    %3581 = vmatpush2.msra.mxu0 0.0
    %3582 = vmatprep.subr.mxu0 0.0
    %3583 = vmatpush2.msra.mxu0 0.0
    %3584 = vmatprep.subr.mxu0 0.0
    %3585 = vmatpush2.msra.mxu0 0.0
    %3586 = vmatprep.subr.mxu0 0.0
    %3587 = vmatpush2.msra.mxu0 0.0
    %3588 = vmatprep.subr.mxu0 0.0
    %3589 = vmatpush2.msra.mxu0 0.0
    %3590 = vmatprep.subr.mxu0 0.0
    %3591 = vmatpush2.msra.mxu0 0.0
    %3592 = vmatprep.subr.mxu0 0.0
    %3593 = vmatpush2.msra.mxu0 0.0
    %3594 = vmatprep.subr.mxu0 0.0
    %3595 = vmatpush2.msra.mxu0 0.0
    %3596 = vmatprep.subr.mxu0 0.0
    %3597 = vmatpush2.msra.mxu0 0.0
    %3598 = vmatprep.subr.mxu0 0.0
    %3599 = vmatpush2.msra.mxu0 0.0
    %3600 = vmatprep.subr.mxu0 0.0
    %3601 = vmatpush2.msra.mxu0 0.0
    %3602 = vmatprep.mubr.f32.mxu0 0.0
    %3603 = vmatmul.mubr.f32.gmra.mxu0 %v3533
    %v3604 = vpop.f32.mrf.mxu0
    %v3605 = vadd.f32 0.0, %v3604
    %v3606 = vpop.f32.mrf.mxu0
    %3607 = vmatprep.mubr.f32.mxu0 0.0
    %3608 = vmatmul.mubr.f32.gmra.mxu0 %v3536
    %v3609 = vpop.f32.mrf.mxu0
    %v3610 = vadd.f32 0.0, %v3609
    %v3611 = vpop.f32.mrf.mxu0
    %3612 = vdwg.mxu0
    %v3614 = vsel %vm1152, %v3605, 0
    %v3617 = vsel %vm1152, %v3610, 0
    %3619 = vmatprep.subr.mxu0 0.0
    %3620 = vmatpush1.msra.mxu0 0.0
    %3621 = vmatprep.subr.mxu0 0.0
    %3622 = vmatpush1.msra.mxu0 0.0
    %3623 = vmatprep.subr.mxu0 0.0
    %3624 = vmatpush1.msra.mxu0 0.0
    %3625 = vmatprep.subr.mxu0 0.0
    %3626 = vmatpush1.msra.mxu0 0.0
    %3627 = vmatprep.subr.mxu0 0.0
    %3628 = vmatpush1.msra.mxu0 0.0
    %3629 = vmatprep.subr.mxu0 0.0
    %3630 = vmatpush1.msra.mxu0 0.0
    %3631 = vmatprep.subr.mxu0 0.0
    %3632 = vmatpush1.msra.mxu0 0.0
    %3633 = vmatprep.subr.mxu0 0.0
    %3634 = vmatpush1.msra.mxu0 0.0
    %3635 = vmatprep.subr.mxu0 0.0
    %3636 = vmatpush1.msra.mxu0 0.0
    %3637 = vmatprep.subr.mxu0 0.0
    %3638 = vmatpush1.msra.mxu0 0.0
    %3639 = vmatprep.subr.mxu0 0.0
    %3640 = vmatpush1.msra.mxu0 0.0
    %3641 = vmatprep.subr.mxu0 0.0
    %3642 = vmatpush1.msra.mxu0 0.0
    %3643 = vmatprep.subr.mxu0 0.0
    %3644 = vmatpush1.msra.mxu0 0.0
    %3645 = vmatprep.subr.mxu0 0.0
    %3646 = vmatpush1.msra.mxu0 0.0
    %3647 = vmatprep.subr.mxu0 0.0
    %3648 = vmatpush1.msra.mxu0 0.0
    %3649 = vmatprep.subr.mxu0 0.0
    %3650 = vmatpush1.msra.mxu0 %v2541
    %3651 = vmatprep.subr.mxu0 0.0
    %3652 = vmatpush2.msra.mxu0 0.0
    %3653 = vmatprep.subr.mxu0 0.0
    %3654 = vmatpush2.msra.mxu0 0.0
    %3655 = vmatprep.subr.mxu0 0.0
    %3656 = vmatpush2.msra.mxu0 0.0
    %3657 = vmatprep.subr.mxu0 0.0
    %3658 = vmatpush2.msra.mxu0 0.0
    %3659 = vmatprep.subr.mxu0 0.0
    %3660 = vmatpush2.msra.mxu0 0.0
    %3661 = vmatprep.subr.mxu0 0.0
    %3662 = vmatpush2.msra.mxu0 0.0
    %3663 = vmatprep.subr.mxu0 0.0
    %3664 = vmatpush2.msra.mxu0 0.0
    %3665 = vmatprep.subr.mxu0 0.0
    %3666 = vmatpush2.msra.mxu0 0.0
    %3667 = vmatprep.subr.mxu0 0.0
    %3668 = vmatpush2.msra.mxu0 0.0
    %3669 = vmatprep.subr.mxu0 0.0
    %3670 = vmatpush2.msra.mxu0 0.0
    %3671 = vmatprep.subr.mxu0 0.0
    %3672 = vmatpush2.msra.mxu0 0.0
    %3673 = vmatprep.subr.mxu0 0.0
    %3674 = vmatpush2.msra.mxu0 0.0
    %3675 = vmatprep.subr.mxu0 0.0
    %3676 = vmatpush2.msra.mxu0 0.0
    %3677 = vmatprep.subr.mxu0 0.0
    %3678 = vmatpush2.msra.mxu0 0.0
    %3679 = vmatprep.subr.mxu0 0.0
    %3680 = vmatpush2.msra.mxu0 0.0
    %3681 = vmatprep.subr.mxu0 0.0
    %3682 = vmatpush2.msra.mxu0 0.0
    %3683 = vmatprep.mubr.f32.mxu0 0.0
    %3684 = vmatmul.mubr.f32.gmra.mxu0 %v3614
    %v3685 = vpop.f32.mrf.mxu0
    %v3686 = vadd.f32 0.0, %v3685
    %v3687 = vpop.f32.mrf.mxu0
    %3688 = vmatprep.mubr.f32.mxu0 0.0
    %3689 = vmatmul.mubr.f32.gmra.mxu0 %v3617
    %v3690 = vpop.f32.mrf.mxu0
    %v3691 = vadd.f32 0.0, %v3690
    %v3692 = vpop.f32.mrf.mxu0
    %3693 = vdwg.mxu0
    %v3694 = vadd.f32 %v3401, %v3686
    %v3695 = vadd.f32 %v3406, %v3691
    %3696 = vrot.lane.b32.xlu0 %v2677, 104
    %v3697 = vpop.permute.xlu0 %3696
    %3698 = vrot.lane.b32.xlu0 %v2682, 104
    %v3699 = vpop.permute.xlu0 %3698
    %3700 = vrot.lane.b32.xlu0 %v2758, 104
    %v3701 = vpop.permute.xlu0 %3700
    %3702 = vrot.lane.b32.xlu0 %v2763, 104
    %v3703 = vpop.permute.xlu0 %3702
    %v3704 = vsel %vm1152, %v3697, 0
    %v3706 = vsel %vm1152, %v3699, 0
    %v3708 = vsel %vm1152, %v3701, 0
    %v3710 = vsel %vm1152, %v3703, 0
    %3712 = vmatprep.subr.mxu0 0.0
    %3713 = vmatpush1.xpose.msra.mxu0 0.0
    %3714 = vmatprep.subr.mxu0 0.0
    %3715 = vmatpush1.xpose.msra.mxu0 0.0
    %3716 = vmatprep.subr.mxu0 0.0
    %3717 = vmatpush1.xpose.msra.mxu0 0.0
    %3718 = vmatprep.subr.mxu0 0.0
    %3719 = vmatpush1.xpose.msra.mxu0 0.0
    %3720 = vmatprep.subr.mxu0 0.0
    %3721 = vmatpush1.xpose.msra.mxu0 0.0
    %3722 = vmatprep.subr.mxu0 0.0
    %3723 = vmatpush1.xpose.msra.mxu0 0.0
    %3724 = vmatprep.subr.mxu0 0.0
    %3725 = vmatpush1.xpose.msra.mxu0 0.0
    %3726 = vmatprep.subr.mxu0 0.0
    %3727 = vmatpush1.xpose.msra.mxu0 0.0
    %3728 = vmatprep.subr.mxu0 0.0
    %3729 = vmatpush1.xpose.msra.mxu0 0.0
    %3730 = vmatprep.subr.mxu0 0.0
    %3731 = vmatpush1.xpose.msra.mxu0 0.0
    %3732 = vmatprep.subr.mxu0 0.0
    %3733 = vmatpush1.xpose.msra.mxu0 0.0
    %3734 = vmatprep.subr.mxu0 0.0
    %3735 = vmatpush1.xpose.msra.mxu0 0.0
    %3736 = vmatprep.subr.mxu0 0.0
    %3737 = vmatpush1.xpose.msra.mxu0 0.0
    %3738 = vmatprep.subr.mxu0 0.0
    %3739 = vmatpush1.xpose.msra.mxu0 0.0
    %3740 = vmatprep.subr.mxu0 0.0
    %3741 = vmatpush1.xpose.msra.mxu0 %v3710
    %3742 = vmatprep.subr.mxu0 0.0
    %3743 = vmatpush1.xpose.msra.mxu0 %v3708
    %3744 = vmatprep.subr.mxu0 0.0
    %3745 = vmatpush2.xpose.msra.mxu0 0.0
    %3746 = vmatprep.subr.mxu0 0.0
    %3747 = vmatpush2.xpose.msra.mxu0 0.0
    %3748 = vmatprep.subr.mxu0 0.0
    %3749 = vmatpush2.xpose.msra.mxu0 0.0
    %3750 = vmatprep.subr.mxu0 0.0
    %3751 = vmatpush2.xpose.msra.mxu0 0.0
    %3752 = vmatprep.subr.mxu0 0.0
    %3753 = vmatpush2.xpose.msra.mxu0 0.0
    %3754 = vmatprep.subr.mxu0 0.0
    %3755 = vmatpush2.xpose.msra.mxu0 0.0
    %3756 = vmatprep.subr.mxu0 0.0
    %3757 = vmatpush2.xpose.msra.mxu0 0.0
    %3758 = vmatprep.subr.mxu0 0.0
    %3759 = vmatpush2.xpose.msra.mxu0 0.0
    %3760 = vmatprep.subr.mxu0 0.0
    %3761 = vmatpush2.xpose.msra.mxu0 0.0
    %3762 = vmatprep.subr.mxu0 0.0
    %3763 = vmatpush2.xpose.msra.mxu0 0.0
    %3764 = vmatprep.subr.mxu0 0.0
    %3765 = vmatpush2.xpose.msra.mxu0 0.0
    %3766 = vmatprep.subr.mxu0 0.0
    %3767 = vmatpush2.xpose.msra.mxu0 0.0
    %3768 = vmatprep.subr.mxu0 0.0
    %3769 = vmatpush2.xpose.msra.mxu0 0.0
    %3770 = vmatprep.subr.mxu0 0.0
    %3771 = vmatpush2.xpose.msra.mxu0 0.0
    %3772 = vmatprep.subr.mxu0 0.0
    %3773 = vmatpush2.xpose.msra.mxu0 0.0
    %3774 = vmatprep.subr.mxu0 0.0
    %3775 = vmatpush2.xpose.msra.mxu0 0.0
    %3776 = vmatprep.mubr.f32.mxu0 0.0
    %3777 = vmatmul.mubr.f32.gmra.mxu0 %v3704
    %v3778 = vpop.f32.mrf.mxu0
    %v3779 = vadd.f32 0.0, %v3778
    %v3780 = vpop.f32.mrf.mxu0
    %3781 = vmatprep.mubr.f32.mxu0 0.0
    %3782 = vmatmul.mubr.f32.gmra.mxu0 %v3706
    %v3783 = vpop.f32.mrf.mxu0
    %v3784 = vadd.f32 0.0, %v3783
    %v3785 = vpop.f32.mrf.mxu0
    %3786 = vdwg.mxu0
    %v3787 = vmul.f32 %v3779, 0.35355338
    %v3788 = vmul.f32 %v3784, 0.35355338
    %v3789 = vadd.f32 %v3787, %v725
    %v3790 = vadd.f32 %v3788, %v726
    %v3791 = vsel %vm1244, %v3789, -inf
    %3792 = vmax.xlane.f32.xlu0 %v3791
    %v3793 = vpop.xlane.xlu0 %3792
    %v3794 = vsel %vm1244, %v3790, -inf
    %3795 = vmax.xlane.f32.xlu0 %v3794
    %v3796 = vpop.xlane.xlu0 %3795
    %v3797 = vsub.f32 %v3789, %v3793
    %v3798 = vsub.f32 %v3790, %v3796
    %v3799 = vmul.f32 %v3797, 1.442695
    %v3800 = vpow.pop %v3799
    %v3801 = vmul.f32 %v3798, 1.442695
    %v3802 = vpow.pop %v3801
    %v3803 = vsel %vm1244, %v3800, 0.0
    %3804 = vadd.xlane.f32.xlu0 %v3803
    %v3805 = vpop.xlane.xlu0 %3804
    %v3806 = vsel %vm1244, %v3802, 0.0
    %3807 = vadd.xlane.f32.xlu0 %v3806
    %v3808 = vpop.xlane.xlu0 %3807
    %v3809 = vrcp.pop %v3805
    %v3810 = vrcp.pop %v3808
    %v3811 = vmul.f32 %v3800, %v3809
    %v3812 = vmul.f32 %v3802, %v3810
    %3813 = vrot.lane.b32.xlu0 %v2839, 104
    %v3814 = vpop.permute.xlu0 %3813
    %3815 = vrot.lane.b32.xlu0 %v2844, 104
    %v3816 = vpop.permute.xlu0 %3815
    %v3820 = vsel %vm1244, %v3811, 0
    %v3823 = vsel %vm1244, %v3812, 0
    %3825 = vmatprep.subr.mxu0 0.0
    %3826 = vmatpush1.msra.mxu0 0.0
    %3827 = vmatprep.subr.mxu0 0.0
    %3828 = vmatpush1.msra.mxu0 0.0
    %3829 = vmatprep.subr.mxu0 0.0
    %3830 = vmatpush1.msra.mxu0 0.0
    %3831 = vmatprep.subr.mxu0 0.0
    %3832 = vmatpush1.msra.mxu0 0.0
    %3833 = vmatprep.subr.mxu0 0.0
    %3834 = vmatpush1.msra.mxu0 0.0
    %3835 = vmatprep.subr.mxu0 0.0
    %3836 = vmatpush1.msra.mxu0 0.0
    %3837 = vmatprep.subr.mxu0 0.0
    %3838 = vmatpush1.msra.mxu0 0.0
    %3839 = vmatprep.subr.mxu0 0.0
    %3840 = vmatpush1.msra.mxu0 0.0
    %3841 = vmatprep.subr.mxu0 0.0
    %3842 = vmatpush1.msra.mxu0 0.0
    %3843 = vmatprep.subr.mxu0 0.0
    %3844 = vmatpush1.msra.mxu0 0.0
    %3845 = vmatprep.subr.mxu0 0.0
    %3846 = vmatpush1.msra.mxu0 0.0
    %3847 = vmatprep.subr.mxu0 0.0
    %3848 = vmatpush1.msra.mxu0 0.0
    %3849 = vmatprep.subr.mxu0 0.0
    %3850 = vmatpush1.msra.mxu0 0.0
    %3851 = vmatprep.subr.mxu0 0.0
    %3852 = vmatpush1.msra.mxu0 0.0
    %3853 = vmatprep.subr.mxu0 0.0
    %3854 = vmatpush1.msra.mxu0 %v3816
    %3855 = vmatprep.subr.mxu0 0.0
    %3856 = vmatpush1.msra.mxu0 %v3814
    %3857 = vmatprep.subr.mxu0 0.0
    %3858 = vmatpush2.msra.mxu0 0.0
    %3859 = vmatprep.subr.mxu0 0.0
    %3860 = vmatpush2.msra.mxu0 0.0
    %3861 = vmatprep.subr.mxu0 0.0
    %3862 = vmatpush2.msra.mxu0 0.0
    %3863 = vmatprep.subr.mxu0 0.0
    %3864 = vmatpush2.msra.mxu0 0.0
    %3865 = vmatprep.subr.mxu0 0.0
    %3866 = vmatpush2.msra.mxu0 0.0
    %3867 = vmatprep.subr.mxu0 0.0
    %3868 = vmatpush2.msra.mxu0 0.0
    %3869 = vmatprep.subr.mxu0 0.0
    %3870 = vmatpush2.msra.mxu0 0.0
    %3871 = vmatprep.subr.mxu0 0.0
    %3872 = vmatpush2.msra.mxu0 0.0
    %3873 = vmatprep.subr.mxu0 0.0
    %3874 = vmatpush2.msra.mxu0 0.0
    %3875 = vmatprep.subr.mxu0 0.0
    %3876 = vmatpush2.msra.mxu0 0.0
    %3877 = vmatprep.subr.mxu0 0.0
    %3878 = vmatpush2.msra.mxu0 0.0
    %3879 = vmatprep.subr.mxu0 0.0
    %3880 = vmatpush2.msra.mxu0 0.0
    %3881 = vmatprep.subr.mxu0 0.0
    %3882 = vmatpush2.msra.mxu0 0.0
    %3883 = vmatprep.subr.mxu0 0.0
    %3884 = vmatpush2.msra.mxu0 0.0
    %3885 = vmatprep.subr.mxu0 0.0
    %3886 = vmatpush2.msra.mxu0 0.0
    %3887 = vmatprep.subr.mxu0 0.0
    %3888 = vmatpush2.msra.mxu0 0.0
    %3889 = vmatprep.mubr.f32.mxu0 0.0
    %3890 = vmatmul.mubr.f32.gmra.mxu0 %v3820
    %v3891 = vpop.f32.mrf.mxu0
    %v3892 = vadd.f32 0.0, %v3891
    %v3893 = vpop.f32.mrf.mxu0
    %3894 = vmatprep.mubr.f32.mxu0 0.0
    %3895 = vmatmul.mubr.f32.gmra.mxu0 %v3823
    %v3896 = vpop.f32.mrf.mxu0
    %v3897 = vadd.f32 0.0, %v3896
    %v3898 = vpop.f32.mrf.mxu0
    %3899 = vdwg.mxu0
    %v3901 = vsel %vm1152, %v3892, 0
    %v3904 = vsel %vm1152, %v3897, 0
    %3906 = vmatprep.subr.mxu0 0.0
    %3907 = vmatpush1.msra.mxu0 0.0
    %3908 = vmatprep.subr.mxu0 0.0
    %3909 = vmatpush1.msra.mxu0 0.0
    %3910 = vmatprep.subr.mxu0 0.0
    %3911 = vmatpush1.msra.mxu0 0.0
    %3912 = vmatprep.subr.mxu0 0.0
    %3913 = vmatpush1.msra.mxu0 0.0
    %3914 = vmatprep.subr.mxu0 0.0
    %3915 = vmatpush1.msra.mxu0 0.0
    %3916 = vmatprep.subr.mxu0 0.0
    %3917 = vmatpush1.msra.mxu0 0.0
    %3918 = vmatprep.subr.mxu0 0.0
    %3919 = vmatpush1.msra.mxu0 0.0
    %3920 = vmatprep.subr.mxu0 0.0
    %3921 = vmatpush1.msra.mxu0 0.0
    %3922 = vmatprep.subr.mxu0 0.0
    %3923 = vmatpush1.msra.mxu0 0.0
    %3924 = vmatprep.subr.mxu0 0.0
    %3925 = vmatpush1.msra.mxu0 0.0
    %3926 = vmatprep.subr.mxu0 0.0
    %3927 = vmatpush1.msra.mxu0 0.0
    %3928 = vmatprep.subr.mxu0 0.0
    %3929 = vmatpush1.msra.mxu0 0.0
    %3930 = vmatprep.subr.mxu0 0.0
    %3931 = vmatpush1.msra.mxu0 0.0
    %3932 = vmatprep.subr.mxu0 0.0
    %3933 = vmatpush1.msra.mxu0 0.0
    %3934 = vmatprep.subr.mxu0 0.0
    %3935 = vmatpush1.msra.mxu0 0.0
    %3936 = vmatprep.subr.mxu0 0.0
    %3937 = vmatpush1.msra.mxu0 %v2542
    %3938 = vmatprep.subr.mxu0 0.0
    %3939 = vmatpush2.msra.mxu0 0.0
    %3940 = vmatprep.subr.mxu0 0.0
    %3941 = vmatpush2.msra.mxu0 0.0
    %3942 = vmatprep.subr.mxu0 0.0
    %3943 = vmatpush2.msra.mxu0 0.0
    %3944 = vmatprep.subr.mxu0 0.0
    %3945 = vmatpush2.msra.mxu0 0.0
    %3946 = vmatprep.subr.mxu0 0.0
    %3947 = vmatpush2.msra.mxu0 0.0
    %3948 = vmatprep.subr.mxu0 0.0
    %3949 = vmatpush2.msra.mxu0 0.0
    %3950 = vmatprep.subr.mxu0 0.0
    %3951 = vmatpush2.msra.mxu0 0.0
    %3952 = vmatprep.subr.mxu0 0.0
    %3953 = vmatpush2.msra.mxu0 0.0
    %3954 = vmatprep.subr.mxu0 0.0
    %3955 = vmatpush2.msra.mxu0 0.0
    %3956 = vmatprep.subr.mxu0 0.0
    %3957 = vmatpush2.msra.mxu0 0.0
    %3958 = vmatprep.subr.mxu0 0.0
    %3959 = vmatpush2.msra.mxu0 0.0
    %3960 = vmatprep.subr.mxu0 0.0
    %3961 = vmatpush2.msra.mxu0 0.0
    %3962 = vmatprep.subr.mxu0 0.0
    %3963 = vmatpush2.msra.mxu0 0.0
    %3964 = vmatprep.subr.mxu0 0.0
    %3965 = vmatpush2.msra.mxu0 0.0
    %3966 = vmatprep.subr.mxu0 0.0
    %3967 = vmatpush2.msra.mxu0 0.0
    %3968 = vmatprep.subr.mxu0 0.0
    %3969 = vmatpush2.msra.mxu0 0.0
    %3970 = vmatprep.mubr.f32.mxu0 0.0
    %3971 = vmatmul.mubr.f32.gmra.mxu0 %v3901
    %v3972 = vpop.f32.mrf.mxu0
    %v3973 = vadd.f32 0.0, %v3972
    %v3974 = vpop.f32.mrf.mxu0
    %3975 = vmatprep.mubr.f32.mxu0 0.0
    %3976 = vmatmul.mubr.f32.gmra.mxu0 %v3904
    %v3977 = vpop.f32.mrf.mxu0
    %v3978 = vadd.f32 0.0, %v3977
    %v3979 = vpop.f32.mrf.mxu0
    %3980 = vdwg.mxu0
    %v3981 = vadd.f32 %v3694, %v3973
    %v3982 = vadd.f32 %v3695, %v3978
    %v3984 = vlaneseq
    %v3985 = vshrl.u32 %v3984, 7
    %v3986 = vsub.s32 0, %v3985
    %v3987 = vrot.slane %v2543, %v3986
    %v3989 = vadd.f32 %v3981, %v3987
    %v3990 = vadd.f32 %v3982, %v3987
    %v3991 = vadd.f32 %v2520, %v3989
    %v3992 = vadd.f32 %v2521, %v3990
    %v3993 = vsel %vm859, %v3991, 0.0
    %3994 = vadd.xlane.f32.xlu0 %v3993
    %v3995 = vpop.xlane.xlu0 %3994
    %v3996 = vsel %vm859, %v3992, 0.0
    %3997 = vadd.xlane.f32.xlu0 %v3996
    %v3998 = vpop.xlane.xlu0 %3997
    %v3999 = vmul.f32 %v3995, %v866
    %v4000 = vmul.f32 %v3998, %v866
    %v4001 = vsub.f32 %v3991, %v3999
    %v4002 = vsub.f32 %v3992, %v4000
    %v4003 = vmul.f32 %v4001, %v4001
    %v4004 = vmul.f32 %v4002, %v4002
    %v4005 = vsel %vm859, %v4003, 0.0
    %4006 = vadd.xlane.f32.xlu0 %v4005
    %v4007 = vpop.xlane.xlu0 %4006
    %v4008 = vsel %vm859, %v4004, 0.0
    %4009 = vadd.xlane.f32.xlu0 %v4008
    %v4010 = vpop.xlane.xlu0 %4009
    %v4011 = vmul.f32 %v4007, %v866
    %v4012 = vmul.f32 %v4010, %v866
    %v4013 = vadd.f32 %v4011, 1e-05
    %v4014 = vadd.f32 %v4012, 1e-05
    %v4015 = vrsqrt.pop %v4013
    %v4016 = vrsqrt.pop %v4014
    %v4017 = vmul.f32 %v4001, %v4015
    %v4018 = vmul.f32 %v4002, %v4016
    %v4020 = vlaneseq
    %v4021 = vshrl.u32 %v4020, 7
    %v4022 = vsub.s32 0, %v4021
    %v4023 = vrot.slane %v2544, %v4022
    %v4025 = vmul.f32 %v4017, %v4023
    %v4026 = vmul.f32 %v4018, %v4023
    %v4028 = vlaneseq
    %v4029 = vshrl.u32 %v4028, 7
    %v4030 = vsub.s32 0, %v4029
    %v4031 = vrot.slane %v2545, %v4030
    %v4033 = vadd.f32 %v4025, %v4031
    %v4034 = vadd.f32 %v4026, %v4031
    %v4036 = vlaneseq
    %v4037 = vshrl.u32 %v4036, 7
    %v4038 = vsub.s32 0, %v4037
    %v4039 = vrot.slane %v2550, %v4038
    %v4042 = vsel %vm859, %v4033, 0
    %v4045 = vsel %vm859, %v4034, 0
    %4047 = vmatprep.subr.mxu0 0.0
    %4048 = vmatpush1.msra.mxu0 0.0
    %4049 = vmatprep.subr.mxu0 0.0
    %4050 = vmatpush1.msra.mxu0 0.0
    %4051 = vmatprep.subr.mxu0 0.0
    %4052 = vmatpush1.msra.mxu0 0.0
    %4053 = vmatprep.subr.mxu0 0.0
    %4054 = vmatpush1.msra.mxu0 0.0
    %4055 = vmatprep.subr.mxu0 0.0
    %4056 = vmatpush1.msra.mxu0 0.0
    %4057 = vmatprep.subr.mxu0 0.0
    %4058 = vmatpush1.msra.mxu0 0.0
    %4059 = vmatprep.subr.mxu0 0.0
    %4060 = vmatpush1.msra.mxu0 0.0
    %4061 = vmatprep.subr.mxu0 0.0
    %4062 = vmatpush1.msra.mxu0 0.0
    %4063 = vmatprep.subr.mxu0 0.0
    %4064 = vmatpush1.msra.mxu0 0.0
    %4065 = vmatprep.subr.mxu0 0.0
    %4066 = vmatpush1.msra.mxu0 0.0
    %4067 = vmatprep.subr.mxu0 0.0
    %4068 = vmatpush1.msra.mxu0 0.0
    %4069 = vmatprep.subr.mxu0 0.0
    %4070 = vmatpush1.msra.mxu0 0.0
    %4071 = vmatprep.subr.mxu0 0.0
    %4072 = vmatpush1.msra.mxu0 %v2549
    %4073 = vmatprep.subr.mxu0 0.0
    %4074 = vmatpush1.msra.mxu0 %v2548
    %4075 = vmatprep.subr.mxu0 0.0
    %4076 = vmatpush1.msra.mxu0 %v2547
    %4077 = vmatprep.subr.mxu0 0.0
    %4078 = vmatpush1.msra.mxu0 %v2546
    %4079 = vmatprep.subr.mxu0 0.0
    %4080 = vmatpush2.msra.mxu0 0.0
    %4081 = vmatprep.subr.mxu0 0.0
    %4082 = vmatpush2.msra.mxu0 0.0
    %4083 = vmatprep.subr.mxu0 0.0
    %4084 = vmatpush2.msra.mxu0 0.0
    %4085 = vmatprep.subr.mxu0 0.0
    %4086 = vmatpush2.msra.mxu0 0.0
    %4087 = vmatprep.subr.mxu0 0.0
    %4088 = vmatpush2.msra.mxu0 0.0
    %4089 = vmatprep.subr.mxu0 0.0
    %4090 = vmatpush2.msra.mxu0 0.0
    %4091 = vmatprep.subr.mxu0 0.0
    %4092 = vmatpush2.msra.mxu0 0.0
    %4093 = vmatprep.subr.mxu0 0.0
    %4094 = vmatpush2.msra.mxu0 0.0
    %4095 = vmatprep.subr.mxu0 0.0
    %4096 = vmatpush2.msra.mxu0 0.0
    %4097 = vmatprep.subr.mxu0 0.0
    %4098 = vmatpush2.msra.mxu0 0.0
    %4099 = vmatprep.subr.mxu0 0.0
    %4100 = vmatpush2.msra.mxu0 0.0
    %4101 = vmatprep.subr.mxu0 0.0
    %4102 = vmatpush2.msra.mxu0 0.0
    %4103 = vmatprep.subr.mxu0 0.0
    %4104 = vmatpush2.msra.mxu0 0.0
    %4105 = vmatprep.subr.mxu0 0.0
    %4106 = vmatpush2.msra.mxu0 0.0
    %4107 = vmatprep.subr.mxu0 0.0
    %4108 = vmatpush2.msra.mxu0 0.0
    %4109 = vmatprep.subr.mxu0 0.0
    %4110 = vmatpush2.msra.mxu0 0.0
    %4111 = vmatprep.mubr.f32.mxu0 0.0
    %4112 = vmatmul.mubr.f32.gmra.mxu0 %v4042
    %v4113 = vpop.f32.mrf.mxu0
    %v4114 = vadd.f32 %v4039, %v4113
    %v4115 = vpop.f32.mrf.mxu0
    %4116 = vmatprep.mubr.f32.mxu0 0.0
    %4117 = vmatmul.mubr.f32.gmra.mxu0 %v4045
    %v4118 = vpop.f32.mrf.mxu0
    %v4119 = vadd.f32 %v4039, %v4118
    %v4120 = vpop.f32.mrf.mxu0
    %4121 = vdwg.mxu0
    %v4122 = vmax.f32 %v4114, 0.0
    %v4123 = vmax.f32 %v4119, 0.0
    %v4125 = vsel %vm859, %v4122, 0
    %v4128 = vsel %vm859, %v4123, 0
    %4130 = vmatprep.subr.mxu0 0.0
    %4131 = vmatpush1.msra.mxu0 0.0
    %4132 = vmatprep.subr.mxu0 0.0
    %4133 = vmatpush1.msra.mxu0 0.0
    %4134 = vmatprep.subr.mxu0 0.0
    %4135 = vmatpush1.msra.mxu0 0.0
    %4136 = vmatprep.subr.mxu0 0.0
    %4137 = vmatpush1.msra.mxu0 0.0
    %4138 = vmatprep.subr.mxu0 0.0
    %4139 = vmatpush1.msra.mxu0 0.0
    %4140 = vmatprep.subr.mxu0 0.0
    %4141 = vmatpush1.msra.mxu0 0.0
    %4142 = vmatprep.subr.mxu0 0.0
    %4143 = vmatpush1.msra.mxu0 0.0
    %4144 = vmatprep.subr.mxu0 0.0
    %4145 = vmatpush1.msra.mxu0 0.0
    %4146 = vmatprep.subr.mxu0 0.0
    %4147 = vmatpush1.msra.mxu0 0.0
    %4148 = vmatprep.subr.mxu0 0.0
    %4149 = vmatpush1.msra.mxu0 0.0
    %4150 = vmatprep.subr.mxu0 0.0
    %4151 = vmatpush1.msra.mxu0 0.0
    %4152 = vmatprep.subr.mxu0 0.0
    %4153 = vmatpush1.msra.mxu0 0.0
    %4154 = vmatprep.subr.mxu0 0.0
    %4155 = vmatpush1.msra.mxu0 %v2554
    %4156 = vmatprep.subr.mxu0 0.0
    %4157 = vmatpush1.msra.mxu0 %v2553
    %4158 = vmatprep.subr.mxu0 0.0
    %4159 = vmatpush1.msra.mxu0 %v2552
    %4160 = vmatprep.subr.mxu0 0.0
    %4161 = vmatpush1.msra.mxu0 %v2551
    %4162 = vmatprep.subr.mxu0 0.0
    %4163 = vmatpush2.msra.mxu0 0.0
    %4164 = vmatprep.subr.mxu0 0.0
    %4165 = vmatpush2.msra.mxu0 0.0
    %4166 = vmatprep.subr.mxu0 0.0
    %4167 = vmatpush2.msra.mxu0 0.0
    %4168 = vmatprep.subr.mxu0 0.0
    %4169 = vmatpush2.msra.mxu0 0.0
    %4170 = vmatprep.subr.mxu0 0.0
    %4171 = vmatpush2.msra.mxu0 0.0
    %4172 = vmatprep.subr.mxu0 0.0
    %4173 = vmatpush2.msra.mxu0 0.0
    %4174 = vmatprep.subr.mxu0 0.0
    %4175 = vmatpush2.msra.mxu0 0.0
    %4176 = vmatprep.subr.mxu0 0.0
    %4177 = vmatpush2.msra.mxu0 0.0
    %4178 = vmatprep.subr.mxu0 0.0
    %4179 = vmatpush2.msra.mxu0 0.0
    %4180 = vmatprep.subr.mxu0 0.0
    %4181 = vmatpush2.msra.mxu0 0.0
    %4182 = vmatprep.subr.mxu0 0.0
    %4183 = vmatpush2.msra.mxu0 0.0
    %4184 = vmatprep.subr.mxu0 0.0
    %4185 = vmatpush2.msra.mxu0 0.0
    %4186 = vmatprep.subr.mxu0 0.0
    %4187 = vmatpush2.msra.mxu0 0.0
    %4188 = vmatprep.subr.mxu0 0.0
    %4189 = vmatpush2.msra.mxu0 0.0
    %4190 = vmatprep.subr.mxu0 0.0
    %4191 = vmatpush2.msra.mxu0 0.0
    %4192 = vmatprep.subr.mxu0 0.0
    %4193 = vmatpush2.msra.mxu0 0.0
    %4194 = vmatprep.mubr.f32.mxu0 0.0
    %4195 = vmatmul.mubr.f32.gmra.mxu0 %v4125
    %v4196 = vpop.f32.mrf.mxu0
    %v4197 = vadd.f32 0.0, %v4196
    %v4198 = vpop.f32.mrf.mxu0
    %4199 = vmatprep.mubr.f32.mxu0 0.0
    %4200 = vmatmul.mubr.f32.gmra.mxu0 %v4128
    %v4201 = vpop.f32.mrf.mxu0
    %v4202 = vadd.f32 0.0, %v4201
    %v4203 = vpop.f32.mrf.mxu0
    %4204 = vdwg.mxu0
    %v4205 = vadd.f32 %v3991, %v4197
    %v4206 = vadd.f32 %v3992, %v4202
    %v4208 = vlaneseq
    %v4209 = vshrl.u32 %v4208, 7
    %v4210 = vsub.s32 0, %v4209
    %v4211 = vrot.slane %v2555, %v4210
    %v4213 = vadd.f32 %v4205, %v4211
    %v4214 = vadd.f32 %v4206, %v4211
    %v4215 = vld [vmem:[#allocation56] sm:$0xff]
    %v4216 = vld [vmem:[#allocation56 + $0x8] sm:$0xff]
    %v4217 = vld [vmem:[#allocation56 + $0x10] sm:$0xff]
    %v4218 = vld [vmem:[#allocation56 + $0x18] sm:$0xff]
    %v4219 = vld [vmem:[#allocation58] sm:$0xff]
    %v4220 = vld [vmem:[#allocation58 + $0x8] sm:$0xff]
    %v4221 = vld [vmem:[#allocation58 + $0x10] sm:$0xff]
    %v4222 = vld [vmem:[#allocation58 + $0x18] sm:$0xff]
    %v4223 = vld [vmem:[%s79] sm:$0xff]
    %v4224 = vld [vmem:[%s79 + $0x8] sm:$0xff]
    %v4225 = vld [vmem:[%s79 + $0x10] sm:$0xff]
    %v4226 = vld [vmem:[%s79 + $0x18] sm:$0xff]
    %v4227 = vld [vmem:[#allocation59] sm:$0x1]
    %v4228 = vld [vmem:[%s83] sm:$0x1]
    %v4229 = vld [vmem:[%s85] sm:$0x1]
    %v4230 = vld [vmem:[#allocation61] sm:$0xff]
    %v4231 = vld [vmem:[#allocation61 + $0x8] sm:$0xff]
    %v4232 = vld [vmem:[#allocation61 + $0x10] sm:$0xff]
    %v4233 = vld [vmem:[#allocation61 + $0x18] sm:$0xff]
    %v4234 = vld [vmem:[%s89] sm:$0x1]
    %v4236 = vlaneseq
    %v4237 = vshrl.u32 %v4236, 7
    %v4238 = vsub.s32 0, %v4237
    %v4239 = vrot.slane %v4227, %v4238
    %v4242 = vsel %vm859, %v4213, 0
    %v4245 = vsel %vm859, %v4214, 0
    %4247 = vmatprep.subr.mxu0 0.0
    %4248 = vmatpush1.msra.mxu0 0.0
    %4249 = vmatprep.subr.mxu0 0.0
    %4250 = vmatpush1.msra.mxu0 0.0
    %4251 = vmatprep.subr.mxu0 0.0
    %4252 = vmatpush1.msra.mxu0 0.0
    %4253 = vmatprep.subr.mxu0 0.0
    %4254 = vmatpush1.msra.mxu0 0.0
    %4255 = vmatprep.subr.mxu0 0.0
    %4256 = vmatpush1.msra.mxu0 0.0
    %4257 = vmatprep.subr.mxu0 0.0
    %4258 = vmatpush1.msra.mxu0 0.0
    %4259 = vmatprep.subr.mxu0 0.0
    %4260 = vmatpush1.msra.mxu0 0.0
    %4261 = vmatprep.subr.mxu0 0.0
    %4262 = vmatpush1.msra.mxu0 0.0
    %4263 = vmatprep.subr.mxu0 0.0
    %4264 = vmatpush1.msra.mxu0 0.0
    %4265 = vmatprep.subr.mxu0 0.0
    %4266 = vmatpush1.msra.mxu0 0.0
    %4267 = vmatprep.subr.mxu0 0.0
    %4268 = vmatpush1.msra.mxu0 0.0
    %4269 = vmatprep.subr.mxu0 0.0
    %4270 = vmatpush1.msra.mxu0 0.0
    %4271 = vmatprep.subr.mxu0 0.0
    %4272 = vmatpush1.msra.mxu0 %v4218
    %4273 = vmatprep.subr.mxu0 0.0
    %4274 = vmatpush1.msra.mxu0 %v4217
    %4275 = vmatprep.subr.mxu0 0.0
    %4276 = vmatpush1.msra.mxu0 %v4216
    %4277 = vmatprep.subr.mxu0 0.0
    %4278 = vmatpush1.msra.mxu0 %v4215
    %4279 = vmatprep.subr.mxu0 0.0
    %4280 = vmatpush2.msra.mxu0 0.0
    %4281 = vmatprep.subr.mxu0 0.0
    %4282 = vmatpush2.msra.mxu0 0.0
    %4283 = vmatprep.subr.mxu0 0.0
    %4284 = vmatpush2.msra.mxu0 0.0
    %4285 = vmatprep.subr.mxu0 0.0
    %4286 = vmatpush2.msra.mxu0 0.0
    %4287 = vmatprep.subr.mxu0 0.0
    %4288 = vmatpush2.msra.mxu0 0.0
    %4289 = vmatprep.subr.mxu0 0.0
    %4290 = vmatpush2.msra.mxu0 0.0
    %4291 = vmatprep.subr.mxu0 0.0
    %4292 = vmatpush2.msra.mxu0 0.0
    %4293 = vmatprep.subr.mxu0 0.0
    %4294 = vmatpush2.msra.mxu0 0.0
    %4295 = vmatprep.subr.mxu0 0.0
    %4296 = vmatpush2.msra.mxu0 0.0
    %4297 = vmatprep.subr.mxu0 0.0
    %4298 = vmatpush2.msra.mxu0 0.0
    %4299 = vmatprep.subr.mxu0 0.0
    %4300 = vmatpush2.msra.mxu0 0.0
    %4301 = vmatprep.subr.mxu0 0.0
    %4302 = vmatpush2.msra.mxu0 0.0
    %4303 = vmatprep.subr.mxu0 0.0
    %4304 = vmatpush2.msra.mxu0 0.0
    %4305 = vmatprep.subr.mxu0 0.0
    %4306 = vmatpush2.msra.mxu0 0.0
    %4307 = vmatprep.subr.mxu0 0.0
    %4308 = vmatpush2.msra.mxu0 0.0
    %4309 = vmatprep.subr.mxu0 0.0
    %4310 = vmatpush2.msra.mxu0 0.0
    %4311 = vmatprep.mubr.f32.mxu0 0.0
    %4312 = vmatmul.mubr.f32.gmra.mxu0 %v4242
    %v4313 = vpop.f32.mrf.mxu0
    %v4314 = vadd.f32 %v4239, %v4313
    %v4315 = vpop.f32.mrf.mxu0
    %4316 = vmatprep.mubr.f32.mxu0 0.0
    %4317 = vmatmul.mubr.f32.gmra.mxu0 %v4245
    %v4318 = vpop.f32.mrf.mxu0
    %v4319 = vadd.f32 %v4239, %v4318
    %v4320 = vpop.f32.mrf.mxu0
    %4321 = vdwg.mxu0
    %v4323 = vlaneseq
    %v4324 = vshrl.u32 %v4323, 7
    %v4325 = vsub.s32 0, %v4324
    %v4326 = vrot.slane %v4228, %v4325
    %4328 = vmatprep.subr.mxu0 0.0
    %4329 = vmatpush1.msra.mxu0 0.0
    %4330 = vmatprep.subr.mxu0 0.0
    %4331 = vmatpush1.msra.mxu0 0.0
    %4332 = vmatprep.subr.mxu0 0.0
    %4333 = vmatpush1.msra.mxu0 0.0
    %4334 = vmatprep.subr.mxu0 0.0
    %4335 = vmatpush1.msra.mxu0 0.0
    %4336 = vmatprep.subr.mxu0 0.0
    %4337 = vmatpush1.msra.mxu0 0.0
    %4338 = vmatprep.subr.mxu0 0.0
    %4339 = vmatpush1.msra.mxu0 0.0
    %4340 = vmatprep.subr.mxu0 0.0
    %4341 = vmatpush1.msra.mxu0 0.0
    %4342 = vmatprep.subr.mxu0 0.0
    %4343 = vmatpush1.msra.mxu0 0.0
    %4344 = vmatprep.subr.mxu0 0.0
    %4345 = vmatpush1.msra.mxu0 0.0
    %4346 = vmatprep.subr.mxu0 0.0
    %4347 = vmatpush1.msra.mxu0 0.0
    %4348 = vmatprep.subr.mxu0 0.0
    %4349 = vmatpush1.msra.mxu0 0.0
    %4350 = vmatprep.subr.mxu0 0.0
    %4351 = vmatpush1.msra.mxu0 0.0
    %4352 = vmatprep.subr.mxu0 0.0
    %4353 = vmatpush1.msra.mxu0 %v4222
    %4354 = vmatprep.subr.mxu0 0.0
    %4355 = vmatpush1.msra.mxu0 %v4221
    %4356 = vmatprep.subr.mxu0 0.0
    %4357 = vmatpush1.msra.mxu0 %v4220
    %4358 = vmatprep.subr.mxu0 0.0
    %4359 = vmatpush1.msra.mxu0 %v4219
    %4360 = vmatprep.subr.mxu0 0.0
    %4361 = vmatpush2.msra.mxu0 0.0
    %4362 = vmatprep.subr.mxu0 0.0
    %4363 = vmatpush2.msra.mxu0 0.0
    %4364 = vmatprep.subr.mxu0 0.0
    %4365 = vmatpush2.msra.mxu0 0.0
    %4366 = vmatprep.subr.mxu0 0.0
    %4367 = vmatpush2.msra.mxu0 0.0
    %4368 = vmatprep.subr.mxu0 0.0
    %4369 = vmatpush2.msra.mxu0 0.0
    %4370 = vmatprep.subr.mxu0 0.0
    %4371 = vmatpush2.msra.mxu0 0.0
    %4372 = vmatprep.subr.mxu0 0.0
    %4373 = vmatpush2.msra.mxu0 0.0
    %4374 = vmatprep.subr.mxu0 0.0
    %4375 = vmatpush2.msra.mxu0 0.0
    %4376 = vmatprep.subr.mxu0 0.0
    %4377 = vmatpush2.msra.mxu0 0.0
    %4378 = vmatprep.subr.mxu0 0.0
    %4379 = vmatpush2.msra.mxu0 0.0
    %4380 = vmatprep.subr.mxu0 0.0
    %4381 = vmatpush2.msra.mxu0 0.0
    %4382 = vmatprep.subr.mxu0 0.0
    %4383 = vmatpush2.msra.mxu0 0.0
    %4384 = vmatprep.subr.mxu0 0.0
    %4385 = vmatpush2.msra.mxu0 0.0
    %4386 = vmatprep.subr.mxu0 0.0
    %4387 = vmatpush2.msra.mxu0 0.0
    %4388 = vmatprep.subr.mxu0 0.0
    %4389 = vmatpush2.msra.mxu0 0.0
    %4390 = vmatprep.subr.mxu0 0.0
    %4391 = vmatpush2.msra.mxu0 0.0
    %4392 = vmatprep.mubr.f32.mxu0 0.0
    %4393 = vmatmul.mubr.f32.gmra.mxu0 %v4242
    %v4394 = vpop.f32.mrf.mxu0
    %v4395 = vadd.f32 %v4326, %v4394
    %v4396 = vpop.f32.mrf.mxu0
    %4397 = vmatprep.mubr.f32.mxu0 0.0
    %4398 = vmatmul.mubr.f32.gmra.mxu0 %v4245
    %v4399 = vpop.f32.mrf.mxu0
    %v4400 = vadd.f32 %v4326, %v4399
    %v4401 = vpop.f32.mrf.mxu0
    %4402 = vdwg.mxu0
    %v4404 = vlaneseq
    %v4405 = vshrl.u32 %v4404, 7
    %v4406 = vsub.s32 0, %v4405
    %v4407 = vrot.slane %v4229, %v4406
    %4409 = vmatprep.subr.mxu0 0.0
    %4410 = vmatpush1.msra.mxu0 0.0
    %4411 = vmatprep.subr.mxu0 0.0
    %4412 = vmatpush1.msra.mxu0 0.0
    %4413 = vmatprep.subr.mxu0 0.0
    %4414 = vmatpush1.msra.mxu0 0.0
    %4415 = vmatprep.subr.mxu0 0.0
    %4416 = vmatpush1.msra.mxu0 0.0
    %4417 = vmatprep.subr.mxu0 0.0
    %4418 = vmatpush1.msra.mxu0 0.0
    %4419 = vmatprep.subr.mxu0 0.0
    %4420 = vmatpush1.msra.mxu0 0.0
    %4421 = vmatprep.subr.mxu0 0.0
    %4422 = vmatpush1.msra.mxu0 0.0
    %4423 = vmatprep.subr.mxu0 0.0
    %4424 = vmatpush1.msra.mxu0 0.0
    %4425 = vmatprep.subr.mxu0 0.0
    %4426 = vmatpush1.msra.mxu0 0.0
    %4427 = vmatprep.subr.mxu0 0.0
    %4428 = vmatpush1.msra.mxu0 0.0
    %4429 = vmatprep.subr.mxu0 0.0
    %4430 = vmatpush1.msra.mxu0 0.0
    %4431 = vmatprep.subr.mxu0 0.0
    %4432 = vmatpush1.msra.mxu0 0.0
    %4433 = vmatprep.subr.mxu0 0.0
    %4434 = vmatpush1.msra.mxu0 %v4226
    %4435 = vmatprep.subr.mxu0 0.0
    %4436 = vmatpush1.msra.mxu0 %v4225
    %4437 = vmatprep.subr.mxu0 0.0
    %4438 = vmatpush1.msra.mxu0 %v4224
    %4439 = vmatprep.subr.mxu0 0.0
    %4440 = vmatpush1.msra.mxu0 %v4223
    %4441 = vmatprep.subr.mxu0 0.0
    %4442 = vmatpush2.msra.mxu0 0.0
    %4443 = vmatprep.subr.mxu0 0.0
    %4444 = vmatpush2.msra.mxu0 0.0
    %4445 = vmatprep.subr.mxu0 0.0
    %4446 = vmatpush2.msra.mxu0 0.0
    %4447 = vmatprep.subr.mxu0 0.0
    %4448 = vmatpush2.msra.mxu0 0.0
    %4449 = vmatprep.subr.mxu0 0.0
    %4450 = vmatpush2.msra.mxu0 0.0
    %4451 = vmatprep.subr.mxu0 0.0
    %4452 = vmatpush2.msra.mxu0 0.0
    %4453 = vmatprep.subr.mxu0 0.0
    %4454 = vmatpush2.msra.mxu0 0.0
    %4455 = vmatprep.subr.mxu0 0.0
    %4456 = vmatpush2.msra.mxu0 0.0
    %4457 = vmatprep.subr.mxu0 0.0
    %4458 = vmatpush2.msra.mxu0 0.0
    %4459 = vmatprep.subr.mxu0 0.0
    %4460 = vmatpush2.msra.mxu0 0.0
    %4461 = vmatprep.subr.mxu0 0.0
    %4462 = vmatpush2.msra.mxu0 0.0
    %4463 = vmatprep.subr.mxu0 0.0
    %4464 = vmatpush2.msra.mxu0 0.0
    %4465 = vmatprep.subr.mxu0 0.0
    %4466 = vmatpush2.msra.mxu0 0.0
    %4467 = vmatprep.subr.mxu0 0.0
    %4468 = vmatpush2.msra.mxu0 0.0
    %4469 = vmatprep.subr.mxu0 0.0
    %4470 = vmatpush2.msra.mxu0 0.0
    %4471 = vmatprep.subr.mxu0 0.0
    %4472 = vmatpush2.msra.mxu0 0.0
    %4473 = vmatprep.mubr.f32.mxu0 0.0
    %4474 = vmatmul.mubr.f32.gmra.mxu0 %v4242
    %v4475 = vpop.f32.mrf.mxu0
    %v4476 = vadd.f32 %v4407, %v4475
    %v4477 = vpop.f32.mrf.mxu0
    %4478 = vmatprep.mubr.f32.mxu0 0.0
    %4479 = vmatmul.mubr.f32.gmra.mxu0 %v4245
    %v4480 = vpop.f32.mrf.mxu0
    %v4481 = vadd.f32 %v4407, %v4480
    %v4482 = vpop.f32.mrf.mxu0
    %4483 = vdwg.mxu0
    %v4485 = vsel %vm1152, %v4314, 0
    %v4488 = vsel %vm1152, %v4319, 0
    %v4491 = vsel %vm1152, %v4395, 0
    %v4494 = vsel %vm1152, %v4400, 0
    %4496 = vmatprep.subr.mxu0 0.0
    %4497 = vmatpush1.xpose.msra.mxu0 0.0
    %4498 = vmatprep.subr.mxu0 0.0
    %4499 = vmatpush1.xpose.msra.mxu0 0.0
    %4500 = vmatprep.subr.mxu0 0.0
    %4501 = vmatpush1.xpose.msra.mxu0 0.0
    %4502 = vmatprep.subr.mxu0 0.0
    %4503 = vmatpush1.xpose.msra.mxu0 0.0
    %4504 = vmatprep.subr.mxu0 0.0
    %4505 = vmatpush1.xpose.msra.mxu0 0.0
    %4506 = vmatprep.subr.mxu0 0.0
    %4507 = vmatpush1.xpose.msra.mxu0 0.0
    %4508 = vmatprep.subr.mxu0 0.0
    %4509 = vmatpush1.xpose.msra.mxu0 0.0
    %4510 = vmatprep.subr.mxu0 0.0
    %4511 = vmatpush1.xpose.msra.mxu0 0.0
    %4512 = vmatprep.subr.mxu0 0.0
    %4513 = vmatpush1.xpose.msra.mxu0 0.0
    %4514 = vmatprep.subr.mxu0 0.0
    %4515 = vmatpush1.xpose.msra.mxu0 0.0
    %4516 = vmatprep.subr.mxu0 0.0
    %4517 = vmatpush1.xpose.msra.mxu0 0.0
    %4518 = vmatprep.subr.mxu0 0.0
    %4519 = vmatpush1.xpose.msra.mxu0 0.0
    %4520 = vmatprep.subr.mxu0 0.0
    %4521 = vmatpush1.xpose.msra.mxu0 0.0
    %4522 = vmatprep.subr.mxu0 0.0
    %4523 = vmatpush1.xpose.msra.mxu0 0.0
    %4524 = vmatprep.subr.mxu0 0.0
    %4525 = vmatpush1.xpose.msra.mxu0 %v4494
    %4526 = vmatprep.subr.mxu0 0.0
    %4527 = vmatpush1.xpose.msra.mxu0 %v4491
    %4528 = vmatprep.subr.mxu0 0.0
    %4529 = vmatpush2.xpose.msra.mxu0 0.0
    %4530 = vmatprep.subr.mxu0 0.0
    %4531 = vmatpush2.xpose.msra.mxu0 0.0
    %4532 = vmatprep.subr.mxu0 0.0
    %4533 = vmatpush2.xpose.msra.mxu0 0.0
    %4534 = vmatprep.subr.mxu0 0.0
    %4535 = vmatpush2.xpose.msra.mxu0 0.0
    %4536 = vmatprep.subr.mxu0 0.0
    %4537 = vmatpush2.xpose.msra.mxu0 0.0
    %4538 = vmatprep.subr.mxu0 0.0
    %4539 = vmatpush2.xpose.msra.mxu0 0.0
    %4540 = vmatprep.subr.mxu0 0.0
    %4541 = vmatpush2.xpose.msra.mxu0 0.0
    %4542 = vmatprep.subr.mxu0 0.0
    %4543 = vmatpush2.xpose.msra.mxu0 0.0
    %4544 = vmatprep.subr.mxu0 0.0
    %4545 = vmatpush2.xpose.msra.mxu0 0.0
    %4546 = vmatprep.subr.mxu0 0.0
    %4547 = vmatpush2.xpose.msra.mxu0 0.0
    %4548 = vmatprep.subr.mxu0 0.0
    %4549 = vmatpush2.xpose.msra.mxu0 0.0
    %4550 = vmatprep.subr.mxu0 0.0
    %4551 = vmatpush2.xpose.msra.mxu0 0.0
    %4552 = vmatprep.subr.mxu0 0.0
    %4553 = vmatpush2.xpose.msra.mxu0 0.0
    %4554 = vmatprep.subr.mxu0 0.0
    %4555 = vmatpush2.xpose.msra.mxu0 0.0
    %4556 = vmatprep.subr.mxu0 0.0
    %4557 = vmatpush2.xpose.msra.mxu0 0.0
    %4558 = vmatprep.subr.mxu0 0.0
    %4559 = vmatpush2.xpose.msra.mxu0 0.0
    %4560 = vmatprep.mubr.f32.mxu0 0.0
    %4561 = vmatmul.mubr.f32.gmra.mxu0 %v4485
    %v4562 = vpop.f32.mrf.mxu0
    %v4563 = vadd.f32 0.0, %v4562
    %v4564 = vpop.f32.mrf.mxu0
    %4565 = vmatprep.mubr.f32.mxu0 0.0
    %4566 = vmatmul.mubr.f32.gmra.mxu0 %v4488
    %v4567 = vpop.f32.mrf.mxu0
    %v4568 = vadd.f32 0.0, %v4567
    %v4569 = vpop.f32.mrf.mxu0
    %4570 = vdwg.mxu0
    %v4571 = vmul.f32 %v4563, 0.35355338
    %v4572 = vmul.f32 %v4568, 0.35355338
    %v4573 = vadd.f32 %v4571, %v727
    %v4574 = vadd.f32 %v4572, %v728
    %v4575 = vsel %vm1244, %v4573, -inf
    %4576 = vmax.xlane.f32.xlu0 %v4575
    %v4577 = vpop.xlane.xlu0 %4576
    %v4578 = vsel %vm1244, %v4574, -inf
    %4579 = vmax.xlane.f32.xlu0 %v4578
    %v4580 = vpop.xlane.xlu0 %4579
    %v4581 = vsub.f32 %v4573, %v4577
    %v4582 = vsub.f32 %v4574, %v4580
    %v4583 = vmul.f32 %v4581, 1.442695
    %v4584 = vpow.pop %v4583
    %v4585 = vmul.f32 %v4582, 1.442695
    %v4586 = vpow.pop %v4585
    %v4587 = vsel %vm1244, %v4584, 0.0
    %4588 = vadd.xlane.f32.xlu0 %v4587
    %v4589 = vpop.xlane.xlu0 %4588
    %v4590 = vsel %vm1244, %v4586, 0.0
    %4591 = vadd.xlane.f32.xlu0 %v4590
    %v4592 = vpop.xlane.xlu0 %4591
    %v4593 = vrcp.pop %v4589
    %v4594 = vrcp.pop %v4592
    %v4595 = vmul.f32 %v4584, %v4593
    %v4596 = vmul.f32 %v4586, %v4594
    %v4598 = vsel %vm1244, %v4595, 0
    %v4601 = vsel %vm1244, %v4596, 0
    %4603 = vmatprep.subr.mxu0 0.0
    %4604 = vmatpush1.msra.mxu0 0.0
    %4605 = vmatprep.subr.mxu0 0.0
    %4606 = vmatpush1.msra.mxu0 0.0
    %4607 = vmatprep.subr.mxu0 0.0
    %4608 = vmatpush1.msra.mxu0 0.0
    %4609 = vmatprep.subr.mxu0 0.0
    %4610 = vmatpush1.msra.mxu0 0.0
    %4611 = vmatprep.subr.mxu0 0.0
    %4612 = vmatpush1.msra.mxu0 0.0
    %4613 = vmatprep.subr.mxu0 0.0
    %4614 = vmatpush1.msra.mxu0 0.0
    %4615 = vmatprep.subr.mxu0 0.0
    %4616 = vmatpush1.msra.mxu0 0.0
    %4617 = vmatprep.subr.mxu0 0.0
    %4618 = vmatpush1.msra.mxu0 0.0
    %4619 = vmatprep.subr.mxu0 0.0
    %4620 = vmatpush1.msra.mxu0 0.0
    %4621 = vmatprep.subr.mxu0 0.0
    %4622 = vmatpush1.msra.mxu0 0.0
    %4623 = vmatprep.subr.mxu0 0.0
    %4624 = vmatpush1.msra.mxu0 0.0
    %4625 = vmatprep.subr.mxu0 0.0
    %4626 = vmatpush1.msra.mxu0 0.0
    %4627 = vmatprep.subr.mxu0 0.0
    %4628 = vmatpush1.msra.mxu0 0.0
    %4629 = vmatprep.subr.mxu0 0.0
    %4630 = vmatpush1.msra.mxu0 0.0
    %4631 = vmatprep.subr.mxu0 0.0
    %4632 = vmatpush1.msra.mxu0 %v4481
    %4633 = vmatprep.subr.mxu0 0.0
    %4634 = vmatpush1.msra.mxu0 %v4476
    %4635 = vmatprep.subr.mxu0 0.0
    %4636 = vmatpush2.msra.mxu0 0.0
    %4637 = vmatprep.subr.mxu0 0.0
    %4638 = vmatpush2.msra.mxu0 0.0
    %4639 = vmatprep.subr.mxu0 0.0
    %4640 = vmatpush2.msra.mxu0 0.0
    %4641 = vmatprep.subr.mxu0 0.0
    %4642 = vmatpush2.msra.mxu0 0.0
    %4643 = vmatprep.subr.mxu0 0.0
    %4644 = vmatpush2.msra.mxu0 0.0
    %4645 = vmatprep.subr.mxu0 0.0
    %4646 = vmatpush2.msra.mxu0 0.0
    %4647 = vmatprep.subr.mxu0 0.0
    %4648 = vmatpush2.msra.mxu0 0.0
    %4649 = vmatprep.subr.mxu0 0.0
    %4650 = vmatpush2.msra.mxu0 0.0
    %4651 = vmatprep.subr.mxu0 0.0
    %4652 = vmatpush2.msra.mxu0 0.0
    %4653 = vmatprep.subr.mxu0 0.0
    %4654 = vmatpush2.msra.mxu0 0.0
    %4655 = vmatprep.subr.mxu0 0.0
    %4656 = vmatpush2.msra.mxu0 0.0
    %4657 = vmatprep.subr.mxu0 0.0
    %4658 = vmatpush2.msra.mxu0 0.0
    %4659 = vmatprep.subr.mxu0 0.0
    %4660 = vmatpush2.msra.mxu0 0.0
    %4661 = vmatprep.subr.mxu0 0.0
    %4662 = vmatpush2.msra.mxu0 0.0
    %4663 = vmatprep.subr.mxu0 0.0
    %4664 = vmatpush2.msra.mxu0 0.0
    %4665 = vmatprep.subr.mxu0 0.0
    %4666 = vmatpush2.msra.mxu0 0.0
    %4667 = vmatprep.mubr.f32.mxu0 0.0
    %4668 = vmatmul.mubr.f32.gmra.mxu0 %v4598
    %v4669 = vpop.f32.mrf.mxu0
    %v4670 = vadd.f32 0.0, %v4669
    %v4671 = vpop.f32.mrf.mxu0
    %4672 = vmatprep.mubr.f32.mxu0 0.0
    %4673 = vmatmul.mubr.f32.gmra.mxu0 %v4601
    %v4674 = vpop.f32.mrf.mxu0
    %v4675 = vadd.f32 0.0, %v4674
    %v4676 = vpop.f32.mrf.mxu0
    %4677 = vdwg.mxu0
    %4678 = vrot.lane.b32.xlu0 %v4314, 120
    %v4679 = vpop.permute.xlu0 %4678
    %4680 = vrot.lane.b32.xlu0 %v4319, 120
    %v4681 = vpop.permute.xlu0 %4680
    %4682 = vrot.lane.b32.xlu0 %v4395, 120
    %v4683 = vpop.permute.xlu0 %4682
    %4684 = vrot.lane.b32.xlu0 %v4400, 120
    %v4685 = vpop.permute.xlu0 %4684
    %v4686 = vsel %vm1152, %v4679, 0
    %v4688 = vsel %vm1152, %v4681, 0
    %v4690 = vsel %vm1152, %v4683, 0
    %v4692 = vsel %vm1152, %v4685, 0
    %4694 = vmatprep.subr.mxu0 0.0
    %4695 = vmatpush1.xpose.msra.mxu0 0.0
    %4696 = vmatprep.subr.mxu0 0.0
    %4697 = vmatpush1.xpose.msra.mxu0 0.0
    %4698 = vmatprep.subr.mxu0 0.0
    %4699 = vmatpush1.xpose.msra.mxu0 0.0
    %4700 = vmatprep.subr.mxu0 0.0
    %4701 = vmatpush1.xpose.msra.mxu0 0.0
    %4702 = vmatprep.subr.mxu0 0.0
    %4703 = vmatpush1.xpose.msra.mxu0 0.0
    %4704 = vmatprep.subr.mxu0 0.0
    %4705 = vmatpush1.xpose.msra.mxu0 0.0
    %4706 = vmatprep.subr.mxu0 0.0
    %4707 = vmatpush1.xpose.msra.mxu0 0.0
    %4708 = vmatprep.subr.mxu0 0.0
    %4709 = vmatpush1.xpose.msra.mxu0 0.0
    %4710 = vmatprep.subr.mxu0 0.0
    %4711 = vmatpush1.xpose.msra.mxu0 0.0
    %4712 = vmatprep.subr.mxu0 0.0
    %4713 = vmatpush1.xpose.msra.mxu0 0.0
    %4714 = vmatprep.subr.mxu0 0.0
    %4715 = vmatpush1.xpose.msra.mxu0 0.0
    %4716 = vmatprep.subr.mxu0 0.0
    %4717 = vmatpush1.xpose.msra.mxu0 0.0
    %4718 = vmatprep.subr.mxu0 0.0
    %4719 = vmatpush1.xpose.msra.mxu0 0.0
    %4720 = vmatprep.subr.mxu0 0.0
    %4721 = vmatpush1.xpose.msra.mxu0 0.0
    %4722 = vmatprep.subr.mxu0 0.0
    %4723 = vmatpush1.xpose.msra.mxu0 %v4692
    %4724 = vmatprep.subr.mxu0 0.0
    %4725 = vmatpush1.xpose.msra.mxu0 %v4690
    %4726 = vmatprep.subr.mxu0 0.0
    %4727 = vmatpush2.xpose.msra.mxu0 0.0
    %4728 = vmatprep.subr.mxu0 0.0
    %4729 = vmatpush2.xpose.msra.mxu0 0.0
    %4730 = vmatprep.subr.mxu0 0.0
    %4731 = vmatpush2.xpose.msra.mxu0 0.0
    %4732 = vmatprep.subr.mxu0 0.0
    %4733 = vmatpush2.xpose.msra.mxu0 0.0
    %4734 = vmatprep.subr.mxu0 0.0
    %4735 = vmatpush2.xpose.msra.mxu0 0.0
    %4736 = vmatprep.subr.mxu0 0.0
    %4737 = vmatpush2.xpose.msra.mxu0 0.0
    %4738 = vmatprep.subr.mxu0 0.0
    %4739 = vmatpush2.xpose.msra.mxu0 0.0
    %4740 = vmatprep.subr.mxu0 0.0
    %4741 = vmatpush2.xpose.msra.mxu0 0.0
    %4742 = vmatprep.subr.mxu0 0.0
    %4743 = vmatpush2.xpose.msra.mxu0 0.0
    %4744 = vmatprep.subr.mxu0 0.0
    %4745 = vmatpush2.xpose.msra.mxu0 0.0
    %4746 = vmatprep.subr.mxu0 0.0
    %4747 = vmatpush2.xpose.msra.mxu0 0.0
    %4748 = vmatprep.subr.mxu0 0.0
    %4749 = vmatpush2.xpose.msra.mxu0 0.0
    %4750 = vmatprep.subr.mxu0 0.0
    %4751 = vmatpush2.xpose.msra.mxu0 0.0
    %4752 = vmatprep.subr.mxu0 0.0
    %4753 = vmatpush2.xpose.msra.mxu0 0.0
    %4754 = vmatprep.subr.mxu0 0.0
    %4755 = vmatpush2.xpose.msra.mxu0 0.0
    %4756 = vmatprep.subr.mxu0 0.0
    %4757 = vmatpush2.xpose.msra.mxu0 0.0
    %4758 = vmatprep.mubr.f32.mxu0 0.0
    %4759 = vmatmul.mubr.f32.gmra.mxu0 %v4686
    %v4760 = vpop.f32.mrf.mxu0
    %v4761 = vadd.f32 0.0, %v4760
    %v4762 = vpop.f32.mrf.mxu0
    %4763 = vmatprep.mubr.f32.mxu0 0.0
    %4764 = vmatmul.mubr.f32.gmra.mxu0 %v4688
    %v4765 = vpop.f32.mrf.mxu0
    %v4766 = vadd.f32 0.0, %v4765
    %v4767 = vpop.f32.mrf.mxu0
    %4768 = vdwg.mxu0
    %v4769 = vmul.f32 %v4761, 0.35355338
    %v4770 = vmul.f32 %v4766, 0.35355338
    %v4771 = vadd.f32 %v4769, %v727
    %v4772 = vadd.f32 %v4770, %v728
    %v4773 = vsel %vm1244, %v4771, -inf
    %4774 = vmax.xlane.f32.xlu0 %v4773
    %v4775 = vpop.xlane.xlu0 %4774
    %v4776 = vsel %vm1244, %v4772, -inf
    %4777 = vmax.xlane.f32.xlu0 %v4776
    %v4778 = vpop.xlane.xlu0 %4777
    %v4779 = vsub.f32 %v4771, %v4775
    %v4780 = vsub.f32 %v4772, %v4778
    %v4781 = vmul.f32 %v4779, 1.442695
    %v4782 = vpow.pop %v4781
    %v4783 = vmul.f32 %v4780, 1.442695
    %v4784 = vpow.pop %v4783
    %v4785 = vsel %vm1244, %v4782, 0.0
    %4786 = vadd.xlane.f32.xlu0 %v4785
    %v4787 = vpop.xlane.xlu0 %4786
    %v4788 = vsel %vm1244, %v4784, 0.0
    %4789 = vadd.xlane.f32.xlu0 %v4788
    %v4790 = vpop.xlane.xlu0 %4789
    %v4791 = vrcp.pop %v4787
    %v4792 = vrcp.pop %v4790
    %v4793 = vmul.f32 %v4782, %v4791
    %v4794 = vmul.f32 %v4784, %v4792
    %4797 = vrot.lane.b32.xlu0 %v4476, 120
    %v4798 = vpop.permute.xlu0 %4797
    %4799 = vrot.lane.b32.xlu0 %v4481, 120
    %v4800 = vpop.permute.xlu0 %4799
    %v4804 = vsel %vm1244, %v4793, 0
    %v4807 = vsel %vm1244, %v4794, 0
    %4809 = vmatprep.subr.mxu0 0.0
    %4810 = vmatpush1.msra.mxu0 0.0
    %4811 = vmatprep.subr.mxu0 0.0
    %4812 = vmatpush1.msra.mxu0 0.0
    %4813 = vmatprep.subr.mxu0 0.0
    %4814 = vmatpush1.msra.mxu0 0.0
    %4815 = vmatprep.subr.mxu0 0.0
    %4816 = vmatpush1.msra.mxu0 0.0
    %4817 = vmatprep.subr.mxu0 0.0
    %4818 = vmatpush1.msra.mxu0 0.0
    %4819 = vmatprep.subr.mxu0 0.0
    %4820 = vmatpush1.msra.mxu0 0.0
    %4821 = vmatprep.subr.mxu0 0.0
    %4822 = vmatpush1.msra.mxu0 0.0
    %4823 = vmatprep.subr.mxu0 0.0
    %4824 = vmatpush1.msra.mxu0 0.0
    %4825 = vmatprep.subr.mxu0 0.0
    %4826 = vmatpush1.msra.mxu0 0.0
    %4827 = vmatprep.subr.mxu0 0.0
    %4828 = vmatpush1.msra.mxu0 0.0
    %4829 = vmatprep.subr.mxu0 0.0
    %4830 = vmatpush1.msra.mxu0 0.0
    %4831 = vmatprep.subr.mxu0 0.0
    %4832 = vmatpush1.msra.mxu0 0.0
    %4833 = vmatprep.subr.mxu0 0.0
    %4834 = vmatpush1.msra.mxu0 0.0
    %4835 = vmatprep.subr.mxu0 0.0
    %4836 = vmatpush1.msra.mxu0 0.0
    %4837 = vmatprep.subr.mxu0 0.0
    %4838 = vmatpush1.msra.mxu0 %v4800
    %4839 = vmatprep.subr.mxu0 0.0
    %4840 = vmatpush1.msra.mxu0 %v4798
    %4841 = vmatprep.subr.mxu0 0.0
    %4842 = vmatpush2.msra.mxu0 0.0
    %4843 = vmatprep.subr.mxu0 0.0
    %4844 = vmatpush2.msra.mxu0 0.0
    %4845 = vmatprep.subr.mxu0 0.0
    %4846 = vmatpush2.msra.mxu0 0.0
    %4847 = vmatprep.subr.mxu0 0.0
    %4848 = vmatpush2.msra.mxu0 0.0
    %4849 = vmatprep.subr.mxu0 0.0
    %4850 = vmatpush2.msra.mxu0 0.0
    %4851 = vmatprep.subr.mxu0 0.0
    %4852 = vmatpush2.msra.mxu0 0.0
    %4853 = vmatprep.subr.mxu0 0.0
    %4854 = vmatpush2.msra.mxu0 0.0
    %4855 = vmatprep.subr.mxu0 0.0
    %4856 = vmatpush2.msra.mxu0 0.0
    %4857 = vmatprep.subr.mxu0 0.0
    %4858 = vmatpush2.msra.mxu0 0.0
    %4859 = vmatprep.subr.mxu0 0.0
    %4860 = vmatpush2.msra.mxu0 0.0
    %4861 = vmatprep.subr.mxu0 0.0
    %4862 = vmatpush2.msra.mxu0 0.0
    %4863 = vmatprep.subr.mxu0 0.0
    %4864 = vmatpush2.msra.mxu0 0.0
    %4865 = vmatprep.subr.mxu0 0.0
    %4866 = vmatpush2.msra.mxu0 0.0
    %4867 = vmatprep.subr.mxu0 0.0
    %4868 = vmatpush2.msra.mxu0 0.0
    %4869 = vmatprep.subr.mxu0 0.0
    %4870 = vmatpush2.msra.mxu0 0.0
    %4871 = vmatprep.subr.mxu0 0.0
    %4872 = vmatpush2.msra.mxu0 0.0
    %4873 = vmatprep.mubr.f32.mxu0 0.0
    %4874 = vmatmul.mubr.f32.gmra.mxu0 %v4804
    %v4875 = vpop.f32.mrf.mxu0
    %v4876 = vadd.f32 0.0, %v4875
    %v4877 = vpop.f32.mrf.mxu0
    %4878 = vmatprep.mubr.f32.mxu0 0.0
    %4879 = vmatmul.mubr.f32.gmra.mxu0 %v4807
    %v4880 = vpop.f32.mrf.mxu0
    %v4881 = vadd.f32 0.0, %v4880
    %v4882 = vpop.f32.mrf.mxu0
    %4883 = vdwg.mxu0
    %v4885 = vsel %vm1152, %v4876, 0
    %v4888 = vsel %vm1152, %v4881, 0
    %4890 = vmatprep.subr.mxu0 0.0
    %4891 = vmatpush1.msra.mxu0 0.0
    %4892 = vmatprep.subr.mxu0 0.0
    %4893 = vmatpush1.msra.mxu0 0.0
    %4894 = vmatprep.subr.mxu0 0.0
    %4895 = vmatpush1.msra.mxu0 0.0
    %4896 = vmatprep.subr.mxu0 0.0
    %4897 = vmatpush1.msra.mxu0 0.0
    %4898 = vmatprep.subr.mxu0 0.0
    %4899 = vmatpush1.msra.mxu0 0.0
    %4900 = vmatprep.subr.mxu0 0.0
    %4901 = vmatpush1.msra.mxu0 0.0
    %4902 = vmatprep.subr.mxu0 0.0
    %4903 = vmatpush1.msra.mxu0 0.0
    %4904 = vmatprep.subr.mxu0 0.0
    %4905 = vmatpush1.msra.mxu0 0.0
    %4906 = vmatprep.subr.mxu0 0.0
    %4907 = vmatpush1.msra.mxu0 0.0
    %4908 = vmatprep.subr.mxu0 0.0
    %4909 = vmatpush1.msra.mxu0 0.0
    %4910 = vmatprep.subr.mxu0 0.0
    %4911 = vmatpush1.msra.mxu0 0.0
    %4912 = vmatprep.subr.mxu0 0.0
    %4913 = vmatpush1.msra.mxu0 0.0
    %4914 = vmatprep.subr.mxu0 0.0
    %4915 = vmatpush1.msra.mxu0 0.0
    %4916 = vmatprep.subr.mxu0 0.0
    %4917 = vmatpush1.msra.mxu0 0.0
    %4918 = vmatprep.subr.mxu0 0.0
    %4919 = vmatpush1.msra.mxu0 0.0
    %4920 = vmatprep.subr.mxu0 0.0
    %4921 = vmatpush1.msra.mxu0 %v4231
    %4922 = vmatprep.subr.mxu0 0.0
    %4923 = vmatpush2.msra.mxu0 0.0
    %4924 = vmatprep.subr.mxu0 0.0
    %4925 = vmatpush2.msra.mxu0 0.0
    %4926 = vmatprep.subr.mxu0 0.0
    %4927 = vmatpush2.msra.mxu0 0.0
    %4928 = vmatprep.subr.mxu0 0.0
    %4929 = vmatpush2.msra.mxu0 0.0
    %4930 = vmatprep.subr.mxu0 0.0
    %4931 = vmatpush2.msra.mxu0 0.0
    %4932 = vmatprep.subr.mxu0 0.0
    %4933 = vmatpush2.msra.mxu0 0.0
    %4934 = vmatprep.subr.mxu0 0.0
    %4935 = vmatpush2.msra.mxu0 0.0
    %4936 = vmatprep.subr.mxu0 0.0
    %4937 = vmatpush2.msra.mxu0 0.0
    %4938 = vmatprep.subr.mxu0 0.0
    %4939 = vmatpush2.msra.mxu0 0.0
    %4940 = vmatprep.subr.mxu0 0.0
    %4941 = vmatpush2.msra.mxu0 0.0
    %4942 = vmatprep.subr.mxu0 0.0
    %4943 = vmatpush2.msra.mxu0 0.0
    %4944 = vmatprep.subr.mxu0 0.0
    %4945 = vmatpush2.msra.mxu0 0.0
    %4946 = vmatprep.subr.mxu0 0.0
    %4947 = vmatpush2.msra.mxu0 0.0
    %4948 = vmatprep.subr.mxu0 0.0
    %4949 = vmatpush2.msra.mxu0 0.0
    %4950 = vmatprep.subr.mxu0 0.0
    %4951 = vmatpush2.msra.mxu0 0.0
    %4952 = vmatprep.subr.mxu0 0.0
    %4953 = vmatpush2.msra.mxu0 0.0
    %4954 = vmatprep.mubr.f32.mxu0 0.0
    %4955 = vmatmul.mubr.f32.gmra.mxu0 %v4885
    %v4956 = vpop.f32.mrf.mxu0
    %v4957 = vadd.f32 0.0, %v4956
    %v4958 = vpop.f32.mrf.mxu0
    %4959 = vmatprep.mubr.f32.mxu0 0.0
    %4960 = vmatmul.mubr.f32.gmra.mxu0 %v4888
    %v4961 = vpop.f32.mrf.mxu0
    %v4962 = vadd.f32 0.0, %v4961
    %v4963 = vpop.f32.mrf.mxu0
    %4964 = vdwg.mxu0
    %v4966 = vsel %vm1152, %v4670, 0
    %v4969 = vsel %vm1152, %v4675, 0
    %4971 = vmatprep.subr.mxu0 0.0
    %4972 = vmatpush1.msra.mxu0 0.0
    %4973 = vmatprep.subr.mxu0 0.0
    %4974 = vmatpush1.msra.mxu0 0.0
    %4975 = vmatprep.subr.mxu0 0.0
    %4976 = vmatpush1.msra.mxu0 0.0
    %4977 = vmatprep.subr.mxu0 0.0
    %4978 = vmatpush1.msra.mxu0 0.0
    %4979 = vmatprep.subr.mxu0 0.0
    %4980 = vmatpush1.msra.mxu0 0.0
    %4981 = vmatprep.subr.mxu0 0.0
    %4982 = vmatpush1.msra.mxu0 0.0
    %4983 = vmatprep.subr.mxu0 0.0
    %4984 = vmatpush1.msra.mxu0 0.0
    %4985 = vmatprep.subr.mxu0 0.0
    %4986 = vmatpush1.msra.mxu0 0.0
    %4987 = vmatprep.subr.mxu0 0.0
    %4988 = vmatpush1.msra.mxu0 0.0
    %4989 = vmatprep.subr.mxu0 0.0
    %4990 = vmatpush1.msra.mxu0 0.0
    %4991 = vmatprep.subr.mxu0 0.0
    %4992 = vmatpush1.msra.mxu0 0.0
    %4993 = vmatprep.subr.mxu0 0.0
    %4994 = vmatpush1.msra.mxu0 0.0
    %4995 = vmatprep.subr.mxu0 0.0
    %4996 = vmatpush1.msra.mxu0 0.0
    %4997 = vmatprep.subr.mxu0 0.0
    %4998 = vmatpush1.msra.mxu0 0.0
    %4999 = vmatprep.subr.mxu0 0.0
    %5000 = vmatpush1.msra.mxu0 0.0
    %5001 = vmatprep.subr.mxu0 0.0
    %5002 = vmatpush1.msra.mxu0 %v4230
    %5003 = vmatprep.subr.mxu0 0.0
    %5004 = vmatpush2.msra.mxu0 0.0
    %5005 = vmatprep.subr.mxu0 0.0
    %5006 = vmatpush2.msra.mxu0 0.0
    %5007 = vmatprep.subr.mxu0 0.0
    %5008 = vmatpush2.msra.mxu0 0.0
    %5009 = vmatprep.subr.mxu0 0.0
    %5010 = vmatpush2.msra.mxu0 0.0
    %5011 = vmatprep.subr.mxu0 0.0
    %5012 = vmatpush2.msra.mxu0 0.0
    %5013 = vmatprep.subr.mxu0 0.0
    %5014 = vmatpush2.msra.mxu0 0.0
    %5015 = vmatprep.subr.mxu0 0.0
    %5016 = vmatpush2.msra.mxu0 0.0
    %5017 = vmatprep.subr.mxu0 0.0
    %5018 = vmatpush2.msra.mxu0 0.0
    %5019 = vmatprep.subr.mxu0 0.0
    %5020 = vmatpush2.msra.mxu0 0.0
    %5021 = vmatprep.subr.mxu0 0.0
    %5022 = vmatpush2.msra.mxu0 0.0
    %5023 = vmatprep.subr.mxu0 0.0
    %5024 = vmatpush2.msra.mxu0 0.0
    %5025 = vmatprep.subr.mxu0 0.0
    %5026 = vmatpush2.msra.mxu0 0.0
    %5027 = vmatprep.subr.mxu0 0.0
    %5028 = vmatpush2.msra.mxu0 0.0
    %5029 = vmatprep.subr.mxu0 0.0
    %5030 = vmatpush2.msra.mxu0 0.0
    %5031 = vmatprep.subr.mxu0 0.0
    %5032 = vmatpush2.msra.mxu0 0.0
    %5033 = vmatprep.subr.mxu0 0.0
    %5034 = vmatpush2.msra.mxu0 0.0
    %5035 = vmatprep.mubr.f32.mxu0 0.0
    %5036 = vmatmul.mubr.f32.gmra.mxu0 %v4966
    %v5037 = vpop.f32.mrf.mxu0
    %v5038 = vadd.f32 %v4957, %v5037
    %v5039 = vpop.f32.mrf.mxu0
    %5040 = vmatprep.mubr.f32.mxu0 0.0
    %5041 = vmatmul.mubr.f32.gmra.mxu0 %v4969
    %v5042 = vpop.f32.mrf.mxu0
    %v5043 = vadd.f32 %v4962, %v5042
    %v5044 = vpop.f32.mrf.mxu0
    %5045 = vdwg.mxu0
    %5046 = vrot.lane.b32.xlu0 %v4314, 112
    %v5047 = vpop.permute.xlu0 %5046
    %5048 = vrot.lane.b32.xlu0 %v4319, 112
    %v5049 = vpop.permute.xlu0 %5048
    %5050 = vrot.lane.b32.xlu0 %v4395, 112
    %v5051 = vpop.permute.xlu0 %5050
    %5052 = vrot.lane.b32.xlu0 %v4400, 112
    %v5053 = vpop.permute.xlu0 %5052
    %v5054 = vsel %vm1152, %v5047, 0
    %v5056 = vsel %vm1152, %v5049, 0
    %v5058 = vsel %vm1152, %v5051, 0
    %v5060 = vsel %vm1152, %v5053, 0
    %5062 = vmatprep.subr.mxu0 0.0
    %5063 = vmatpush1.xpose.msra.mxu0 0.0
    %5064 = vmatprep.subr.mxu0 0.0
    %5065 = vmatpush1.xpose.msra.mxu0 0.0
    %5066 = vmatprep.subr.mxu0 0.0
    %5067 = vmatpush1.xpose.msra.mxu0 0.0
    %5068 = vmatprep.subr.mxu0 0.0
    %5069 = vmatpush1.xpose.msra.mxu0 0.0
    %5070 = vmatprep.subr.mxu0 0.0
    %5071 = vmatpush1.xpose.msra.mxu0 0.0
    %5072 = vmatprep.subr.mxu0 0.0
    %5073 = vmatpush1.xpose.msra.mxu0 0.0
    %5074 = vmatprep.subr.mxu0 0.0
    %5075 = vmatpush1.xpose.msra.mxu0 0.0
    %5076 = vmatprep.subr.mxu0 0.0
    %5077 = vmatpush1.xpose.msra.mxu0 0.0
    %5078 = vmatprep.subr.mxu0 0.0
    %5079 = vmatpush1.xpose.msra.mxu0 0.0
    %5080 = vmatprep.subr.mxu0 0.0
    %5081 = vmatpush1.xpose.msra.mxu0 0.0
    %5082 = vmatprep.subr.mxu0 0.0
    %5083 = vmatpush1.xpose.msra.mxu0 0.0
    %5084 = vmatprep.subr.mxu0 0.0
    %5085 = vmatpush1.xpose.msra.mxu0 0.0
    %5086 = vmatprep.subr.mxu0 0.0
    %5087 = vmatpush1.xpose.msra.mxu0 0.0
    %5088 = vmatprep.subr.mxu0 0.0
    %5089 = vmatpush1.xpose.msra.mxu0 0.0
    %5090 = vmatprep.subr.mxu0 0.0
    %5091 = vmatpush1.xpose.msra.mxu0 %v5060
    %5092 = vmatprep.subr.mxu0 0.0
    %5093 = vmatpush1.xpose.msra.mxu0 %v5058
    %5094 = vmatprep.subr.mxu0 0.0
    %5095 = vmatpush2.xpose.msra.mxu0 0.0
    %5096 = vmatprep.subr.mxu0 0.0
    %5097 = vmatpush2.xpose.msra.mxu0 0.0
    %5098 = vmatprep.subr.mxu0 0.0
    %5099 = vmatpush2.xpose.msra.mxu0 0.0
    %5100 = vmatprep.subr.mxu0 0.0
    %5101 = vmatpush2.xpose.msra.mxu0 0.0
    %5102 = vmatprep.subr.mxu0 0.0
    %5103 = vmatpush2.xpose.msra.mxu0 0.0
    %5104 = vmatprep.subr.mxu0 0.0
    %5105 = vmatpush2.xpose.msra.mxu0 0.0
    %5106 = vmatprep.subr.mxu0 0.0
    %5107 = vmatpush2.xpose.msra.mxu0 0.0
    %5108 = vmatprep.subr.mxu0 0.0
    %5109 = vmatpush2.xpose.msra.mxu0 0.0
    %5110 = vmatprep.subr.mxu0 0.0
    %5111 = vmatpush2.xpose.msra.mxu0 0.0
    %5112 = vmatprep.subr.mxu0 0.0
    %5113 = vmatpush2.xpose.msra.mxu0 0.0
    %5114 = vmatprep.subr.mxu0 0.0
    %5115 = vmatpush2.xpose.msra.mxu0 0.0
    %5116 = vmatprep.subr.mxu0 0.0
    %5117 = vmatpush2.xpose.msra.mxu0 0.0
    %5118 = vmatprep.subr.mxu0 0.0
    %5119 = vmatpush2.xpose.msra.mxu0 0.0
    %5120 = vmatprep.subr.mxu0 0.0
    %5121 = vmatpush2.xpose.msra.mxu0 0.0
    %5122 = vmatprep.subr.mxu0 0.0
    %5123 = vmatpush2.xpose.msra.mxu0 0.0
    %5124 = vmatprep.subr.mxu0 0.0
    %5125 = vmatpush2.xpose.msra.mxu0 0.0
    %5126 = vmatprep.mubr.f32.mxu0 0.0
    %5127 = vmatmul.mubr.f32.gmra.mxu0 %v5054
    %v5128 = vpop.f32.mrf.mxu0
    %v5129 = vadd.f32 0.0, %v5128
    %v5130 = vpop.f32.mrf.mxu0
    %5131 = vmatprep.mubr.f32.mxu0 0.0
    %5132 = vmatmul.mubr.f32.gmra.mxu0 %v5056
    %v5133 = vpop.f32.mrf.mxu0
    %v5134 = vadd.f32 0.0, %v5133
    %v5135 = vpop.f32.mrf.mxu0
    %5136 = vdwg.mxu0
    %v5137 = vmul.f32 %v5129, 0.35355338
    %v5138 = vmul.f32 %v5134, 0.35355338
    %v5139 = vadd.f32 %v5137, %v727
    %v5140 = vadd.f32 %v5138, %v728
    %v5141 = vsel %vm1244, %v5139, -inf
    %5142 = vmax.xlane.f32.xlu0 %v5141
    %v5143 = vpop.xlane.xlu0 %5142
    %v5144 = vsel %vm1244, %v5140, -inf
    %5145 = vmax.xlane.f32.xlu0 %v5144
    %v5146 = vpop.xlane.xlu0 %5145
    %v5147 = vsub.f32 %v5139, %v5143
    %v5148 = vsub.f32 %v5140, %v5146
    %v5149 = vmul.f32 %v5147, 1.442695
    %v5150 = vpow.pop %v5149
    %v5151 = vmul.f32 %v5148, 1.442695
    %v5152 = vpow.pop %v5151
    %v5153 = vsel %vm1244, %v5150, 0.0
    %5154 = vadd.xlane.f32.xlu0 %v5153
    %v5155 = vpop.xlane.xlu0 %5154
    %v5156 = vsel %vm1244, %v5152, 0.0
    %5157 = vadd.xlane.f32.xlu0 %v5156
    %v5158 = vpop.xlane.xlu0 %5157
    %v5159 = vrcp.pop %v5155
    %v5160 = vrcp.pop %v5158
    %v5161 = vmul.f32 %v5150, %v5159
    %v5162 = vmul.f32 %v5152, %v5160
    %5163 = vrot.lane.b32.xlu0 %v4476, 112
    %v5164 = vpop.permute.xlu0 %5163
    %5165 = vrot.lane.b32.xlu0 %v4481, 112
    %v5166 = vpop.permute.xlu0 %5165
    %v5170 = vsel %vm1244, %v5161, 0
    %v5173 = vsel %vm1244, %v5162, 0
    %5175 = vmatprep.subr.mxu0 0.0
    %5176 = vmatpush1.msra.mxu0 0.0
    %5177 = vmatprep.subr.mxu0 0.0
    %5178 = vmatpush1.msra.mxu0 0.0
    %5179 = vmatprep.subr.mxu0 0.0
    %5180 = vmatpush1.msra.mxu0 0.0
    %5181 = vmatprep.subr.mxu0 0.0
    %5182 = vmatpush1.msra.mxu0 0.0
    %5183 = vmatprep.subr.mxu0 0.0
    %5184 = vmatpush1.msra.mxu0 0.0
    %5185 = vmatprep.subr.mxu0 0.0
    %5186 = vmatpush1.msra.mxu0 0.0
    %5187 = vmatprep.subr.mxu0 0.0
    %5188 = vmatpush1.msra.mxu0 0.0
    %5189 = vmatprep.subr.mxu0 0.0
    %5190 = vmatpush1.msra.mxu0 0.0
    %5191 = vmatprep.subr.mxu0 0.0
    %5192 = vmatpush1.msra.mxu0 0.0
    %5193 = vmatprep.subr.mxu0 0.0
    %5194 = vmatpush1.msra.mxu0 0.0
    %5195 = vmatprep.subr.mxu0 0.0
    %5196 = vmatpush1.msra.mxu0 0.0
    %5197 = vmatprep.subr.mxu0 0.0
    %5198 = vmatpush1.msra.mxu0 0.0
    %5199 = vmatprep.subr.mxu0 0.0
    %5200 = vmatpush1.msra.mxu0 0.0
    %5201 = vmatprep.subr.mxu0 0.0
    %5202 = vmatpush1.msra.mxu0 0.0
    %5203 = vmatprep.subr.mxu0 0.0
    %5204 = vmatpush1.msra.mxu0 %v5166
    %5205 = vmatprep.subr.mxu0 0.0
    %5206 = vmatpush1.msra.mxu0 %v5164
    %5207 = vmatprep.subr.mxu0 0.0
    %5208 = vmatpush2.msra.mxu0 0.0
    %5209 = vmatprep.subr.mxu0 0.0
    %5210 = vmatpush2.msra.mxu0 0.0
    %5211 = vmatprep.subr.mxu0 0.0
    %5212 = vmatpush2.msra.mxu0 0.0
    %5213 = vmatprep.subr.mxu0 0.0
    %5214 = vmatpush2.msra.mxu0 0.0
    %5215 = vmatprep.subr.mxu0 0.0
    %5216 = vmatpush2.msra.mxu0 0.0
    %5217 = vmatprep.subr.mxu0 0.0
    %5218 = vmatpush2.msra.mxu0 0.0
    %5219 = vmatprep.subr.mxu0 0.0
    %5220 = vmatpush2.msra.mxu0 0.0
    %5221 = vmatprep.subr.mxu0 0.0
    %5222 = vmatpush2.msra.mxu0 0.0
    %5223 = vmatprep.subr.mxu0 0.0
    %5224 = vmatpush2.msra.mxu0 0.0
    %5225 = vmatprep.subr.mxu0 0.0
    %5226 = vmatpush2.msra.mxu0 0.0
    %5227 = vmatprep.subr.mxu0 0.0
    %5228 = vmatpush2.msra.mxu0 0.0
    %5229 = vmatprep.subr.mxu0 0.0
    %5230 = vmatpush2.msra.mxu0 0.0
    %5231 = vmatprep.subr.mxu0 0.0
    %5232 = vmatpush2.msra.mxu0 0.0
    %5233 = vmatprep.subr.mxu0 0.0
    %5234 = vmatpush2.msra.mxu0 0.0
    %5235 = vmatprep.subr.mxu0 0.0
    %5236 = vmatpush2.msra.mxu0 0.0
    %5237 = vmatprep.subr.mxu0 0.0
    %5238 = vmatpush2.msra.mxu0 0.0
    %5239 = vmatprep.mubr.f32.mxu0 0.0
    %5240 = vmatmul.mubr.f32.gmra.mxu0 %v5170
    %v5241 = vpop.f32.mrf.mxu0
    %v5242 = vadd.f32 0.0, %v5241
    %v5243 = vpop.f32.mrf.mxu0
    %5244 = vmatprep.mubr.f32.mxu0 0.0
    %5245 = vmatmul.mubr.f32.gmra.mxu0 %v5173
    %v5246 = vpop.f32.mrf.mxu0
    %v5247 = vadd.f32 0.0, %v5246
    %v5248 = vpop.f32.mrf.mxu0
    %5249 = vdwg.mxu0
    %v5251 = vsel %vm1152, %v5242, 0
    %v5254 = vsel %vm1152, %v5247, 0
    %5256 = vmatprep.subr.mxu0 0.0
    %5257 = vmatpush1.msra.mxu0 0.0
    %5258 = vmatprep.subr.mxu0 0.0
    %5259 = vmatpush1.msra.mxu0 0.0
    %5260 = vmatprep.subr.mxu0 0.0
    %5261 = vmatpush1.msra.mxu0 0.0
    %5262 = vmatprep.subr.mxu0 0.0
    %5263 = vmatpush1.msra.mxu0 0.0
    %5264 = vmatprep.subr.mxu0 0.0
    %5265 = vmatpush1.msra.mxu0 0.0
    %5266 = vmatprep.subr.mxu0 0.0
    %5267 = vmatpush1.msra.mxu0 0.0
    %5268 = vmatprep.subr.mxu0 0.0
    %5269 = vmatpush1.msra.mxu0 0.0
    %5270 = vmatprep.subr.mxu0 0.0
    %5271 = vmatpush1.msra.mxu0 0.0
    %5272 = vmatprep.subr.mxu0 0.0
    %5273 = vmatpush1.msra.mxu0 0.0
    %5274 = vmatprep.subr.mxu0 0.0
    %5275 = vmatpush1.msra.mxu0 0.0
    %5276 = vmatprep.subr.mxu0 0.0
    %5277 = vmatpush1.msra.mxu0 0.0
    %5278 = vmatprep.subr.mxu0 0.0
    %5279 = vmatpush1.msra.mxu0 0.0
    %5280 = vmatprep.subr.mxu0 0.0
    %5281 = vmatpush1.msra.mxu0 0.0
    %5282 = vmatprep.subr.mxu0 0.0
    %5283 = vmatpush1.msra.mxu0 0.0
    %5284 = vmatprep.subr.mxu0 0.0
    %5285 = vmatpush1.msra.mxu0 0.0
    %5286 = vmatprep.subr.mxu0 0.0
    %5287 = vmatpush1.msra.mxu0 %v4232
    %5288 = vmatprep.subr.mxu0 0.0
    %5289 = vmatpush2.msra.mxu0 0.0
    %5290 = vmatprep.subr.mxu0 0.0
    %5291 = vmatpush2.msra.mxu0 0.0
    %5292 = vmatprep.subr.mxu0 0.0
    %5293 = vmatpush2.msra.mxu0 0.0
    %5294 = vmatprep.subr.mxu0 0.0
    %5295 = vmatpush2.msra.mxu0 0.0
    %5296 = vmatprep.subr.mxu0 0.0
    %5297 = vmatpush2.msra.mxu0 0.0
    %5298 = vmatprep.subr.mxu0 0.0
    %5299 = vmatpush2.msra.mxu0 0.0
    %5300 = vmatprep.subr.mxu0 0.0
    %5301 = vmatpush2.msra.mxu0 0.0
    %5302 = vmatprep.subr.mxu0 0.0
    %5303 = vmatpush2.msra.mxu0 0.0
    %5304 = vmatprep.subr.mxu0 0.0
    %5305 = vmatpush2.msra.mxu0 0.0
    %5306 = vmatprep.subr.mxu0 0.0
    %5307 = vmatpush2.msra.mxu0 0.0
    %5308 = vmatprep.subr.mxu0 0.0
    %5309 = vmatpush2.msra.mxu0 0.0
    %5310 = vmatprep.subr.mxu0 0.0
    %5311 = vmatpush2.msra.mxu0 0.0
    %5312 = vmatprep.subr.mxu0 0.0
    %5313 = vmatpush2.msra.mxu0 0.0
    %5314 = vmatprep.subr.mxu0 0.0
    %5315 = vmatpush2.msra.mxu0 0.0
    %5316 = vmatprep.subr.mxu0 0.0
    %5317 = vmatpush2.msra.mxu0 0.0
    %5318 = vmatprep.subr.mxu0 0.0
    %5319 = vmatpush2.msra.mxu0 0.0
    %5320 = vmatprep.mubr.f32.mxu0 0.0
    %5321 = vmatmul.mubr.f32.gmra.mxu0 %v5251
    %v5322 = vpop.f32.mrf.mxu0
    %v5323 = vadd.f32 0.0, %v5322
    %v5324 = vpop.f32.mrf.mxu0
    %5325 = vmatprep.mubr.f32.mxu0 0.0
    %5326 = vmatmul.mubr.f32.gmra.mxu0 %v5254
    %v5327 = vpop.f32.mrf.mxu0
    %v5328 = vadd.f32 0.0, %v5327
    %v5329 = vpop.f32.mrf.mxu0
    %5330 = vdwg.mxu0
    %v5331 = vadd.f32 %v5038, %v5323
    %v5332 = vadd.f32 %v5043, %v5328
    %5333 = vrot.lane.b32.xlu0 %v4314, 104
    %v5334 = vpop.permute.xlu0 %5333
    %5335 = vrot.lane.b32.xlu0 %v4319, 104
    %v5336 = vpop.permute.xlu0 %5335
    %5337 = vrot.lane.b32.xlu0 %v4395, 104
    %v5338 = vpop.permute.xlu0 %5337
    %5339 = vrot.lane.b32.xlu0 %v4400, 104
    %v5340 = vpop.permute.xlu0 %5339
    %v5341 = vsel %vm1152, %v5334, 0
    %v5343 = vsel %vm1152, %v5336, 0
    %v5345 = vsel %vm1152, %v5338, 0
    %v5347 = vsel %vm1152, %v5340, 0
    %5349 = vmatprep.subr.mxu0 0.0
    %5350 = vmatpush1.xpose.msra.mxu0 0.0
    %5351 = vmatprep.subr.mxu0 0.0
    %5352 = vmatpush1.xpose.msra.mxu0 0.0
    %5353 = vmatprep.subr.mxu0 0.0
    %5354 = vmatpush1.xpose.msra.mxu0 0.0
    %5355 = vmatprep.subr.mxu0 0.0
    %5356 = vmatpush1.xpose.msra.mxu0 0.0
    %5357 = vmatprep.subr.mxu0 0.0
    %5358 = vmatpush1.xpose.msra.mxu0 0.0
    %5359 = vmatprep.subr.mxu0 0.0
    %5360 = vmatpush1.xpose.msra.mxu0 0.0
    %5361 = vmatprep.subr.mxu0 0.0
    %5362 = vmatpush1.xpose.msra.mxu0 0.0
    %5363 = vmatprep.subr.mxu0 0.0
    %5364 = vmatpush1.xpose.msra.mxu0 0.0
    %5365 = vmatprep.subr.mxu0 0.0
    %5366 = vmatpush1.xpose.msra.mxu0 0.0
    %5367 = vmatprep.subr.mxu0 0.0
    %5368 = vmatpush1.xpose.msra.mxu0 0.0
    %5369 = vmatprep.subr.mxu0 0.0
    %5370 = vmatpush1.xpose.msra.mxu0 0.0
    %5371 = vmatprep.subr.mxu0 0.0
    %5372 = vmatpush1.xpose.msra.mxu0 0.0
    %5373 = vmatprep.subr.mxu0 0.0
    %5374 = vmatpush1.xpose.msra.mxu0 0.0
    %5375 = vmatprep.subr.mxu0 0.0
    %5376 = vmatpush1.xpose.msra.mxu0 0.0
    %5377 = vmatprep.subr.mxu0 0.0
    %5378 = vmatpush1.xpose.msra.mxu0 %v5347
    %5379 = vmatprep.subr.mxu0 0.0
    %5380 = vmatpush1.xpose.msra.mxu0 %v5345
    %5381 = vmatprep.subr.mxu0 0.0
    %5382 = vmatpush2.xpose.msra.mxu0 0.0
    %5383 = vmatprep.subr.mxu0 0.0
    %5384 = vmatpush2.xpose.msra.mxu0 0.0
    %5385 = vmatprep.subr.mxu0 0.0
    %5386 = vmatpush2.xpose.msra.mxu0 0.0
    %5387 = vmatprep.subr.mxu0 0.0
    %5388 = vmatpush2.xpose.msra.mxu0 0.0
    %5389 = vmatprep.subr.mxu0 0.0
    %5390 = vmatpush2.xpose.msra.mxu0 0.0
    %5391 = vmatprep.subr.mxu0 0.0
    %5392 = vmatpush2.xpose.msra.mxu0 0.0
    %5393 = vmatprep.subr.mxu0 0.0
    %5394 = vmatpush2.xpose.msra.mxu0 0.0
    %5395 = vmatprep.subr.mxu0 0.0
    %5396 = vmatpush2.xpose.msra.mxu0 0.0
    %5397 = vmatprep.subr.mxu0 0.0
    %5398 = vmatpush2.xpose.msra.mxu0 0.0
    %5399 = vmatprep.subr.mxu0 0.0
    %5400 = vmatpush2.xpose.msra.mxu0 0.0
    %5401 = vmatprep.subr.mxu0 0.0
    %5402 = vmatpush2.xpose.msra.mxu0 0.0
    %5403 = vmatprep.subr.mxu0 0.0
    %5404 = vmatpush2.xpose.msra.mxu0 0.0
    %5405 = vmatprep.subr.mxu0 0.0
    %5406 = vmatpush2.xpose.msra.mxu0 0.0
    %5407 = vmatprep.subr.mxu0 0.0
    %5408 = vmatpush2.xpose.msra.mxu0 0.0
    %5409 = vmatprep.subr.mxu0 0.0
    %5410 = vmatpush2.xpose.msra.mxu0 0.0
    %5411 = vmatprep.subr.mxu0 0.0
    %5412 = vmatpush2.xpose.msra.mxu0 0.0
    %5413 = vmatprep.mubr.f32.mxu0 0.0
    %5414 = vmatmul.mubr.f32.gmra.mxu0 %v5341
    %v5415 = vpop.f32.mrf.mxu0
    %v5416 = vadd.f32 0.0, %v5415
    %v5417 = vpop.f32.mrf.mxu0
    %5418 = vmatprep.mubr.f32.mxu0 0.0
    %5419 = vmatmul.mubr.f32.gmra.mxu0 %v5343
    %v5420 = vpop.f32.mrf.mxu0
    %v5421 = vadd.f32 0.0, %v5420
    %v5422 = vpop.f32.mrf.mxu0
    %5423 = vdwg.mxu0
    %v5424 = vmul.f32 %v5416, 0.35355338
    %v5425 = vmul.f32 %v5421, 0.35355338
    %v5426 = vadd.f32 %v5424, %v727
    %v5427 = vadd.f32 %v5425, %v728
    %v5428 = vsel %vm1244, %v5426, -inf
    %5429 = vmax.xlane.f32.xlu0 %v5428
    %v5430 = vpop.xlane.xlu0 %5429
    %v5431 = vsel %vm1244, %v5427, -inf
    %5432 = vmax.xlane.f32.xlu0 %v5431
    %v5433 = vpop.xlane.xlu0 %5432
    %v5434 = vsub.f32 %v5426, %v5430
    %v5435 = vsub.f32 %v5427, %v5433
    %v5436 = vmul.f32 %v5434, 1.442695
    %v5437 = vpow.pop %v5436
    %v5438 = vmul.f32 %v5435, 1.442695
    %v5439 = vpow.pop %v5438
    %v5440 = vsel %vm1244, %v5437, 0.0
    %5441 = vadd.xlane.f32.xlu0 %v5440
    %v5442 = vpop.xlane.xlu0 %5441
    %v5443 = vsel %vm1244, %v5439, 0.0
    %5444 = vadd.xlane.f32.xlu0 %v5443
    %v5445 = vpop.xlane.xlu0 %5444
    %v5446 = vrcp.pop %v5442
    %v5447 = vrcp.pop %v5445
    %v5448 = vmul.f32 %v5437, %v5446
    %v5449 = vmul.f32 %v5439, %v5447
    %5450 = vrot.lane.b32.xlu0 %v4476, 104
    %v5451 = vpop.permute.xlu0 %5450
    %5452 = vrot.lane.b32.xlu0 %v4481, 104
    %v5453 = vpop.permute.xlu0 %5452
    %v5457 = vsel %vm1244, %v5448, 0
    %v5460 = vsel %vm1244, %v5449, 0
    %5462 = vmatprep.subr.mxu0 0.0
    %5463 = vmatpush1.msra.mxu0 0.0
    %5464 = vmatprep.subr.mxu0 0.0
    %5465 = vmatpush1.msra.mxu0 0.0
    %5466 = vmatprep.subr.mxu0 0.0
    %5467 = vmatpush1.msra.mxu0 0.0
    %5468 = vmatprep.subr.mxu0 0.0
    %5469 = vmatpush1.msra.mxu0 0.0
    %5470 = vmatprep.subr.mxu0 0.0
    %5471 = vmatpush1.msra.mxu0 0.0
    %5472 = vmatprep.subr.mxu0 0.0
    %5473 = vmatpush1.msra.mxu0 0.0
    %5474 = vmatprep.subr.mxu0 0.0
    %5475 = vmatpush1.msra.mxu0 0.0
    %5476 = vmatprep.subr.mxu0 0.0
    %5477 = vmatpush1.msra.mxu0 0.0
    %5478 = vmatprep.subr.mxu0 0.0
    %5479 = vmatpush1.msra.mxu0 0.0
    %5480 = vmatprep.subr.mxu0 0.0
    %5481 = vmatpush1.msra.mxu0 0.0
    %5482 = vmatprep.subr.mxu0 0.0
    %5483 = vmatpush1.msra.mxu0 0.0
    %5484 = vmatprep.subr.mxu0 0.0
    %5485 = vmatpush1.msra.mxu0 0.0
    %5486 = vmatprep.subr.mxu0 0.0
    %5487 = vmatpush1.msra.mxu0 0.0
    %5488 = vmatprep.subr.mxu0 0.0
    %5489 = vmatpush1.msra.mxu0 0.0
    %5490 = vmatprep.subr.mxu0 0.0
    %5491 = vmatpush1.msra.mxu0 %v5453
    %5492 = vmatprep.subr.mxu0 0.0
    %5493 = vmatpush1.msra.mxu0 %v5451
    %5494 = vmatprep.subr.mxu0 0.0
    %5495 = vmatpush2.msra.mxu0 0.0
    %5496 = vmatprep.subr.mxu0 0.0
    %5497 = vmatpush2.msra.mxu0 0.0
    %5498 = vmatprep.subr.mxu0 0.0
    %5499 = vmatpush2.msra.mxu0 0.0
    %5500 = vmatprep.subr.mxu0 0.0
    %5501 = vmatpush2.msra.mxu0 0.0
    %5502 = vmatprep.subr.mxu0 0.0
    %5503 = vmatpush2.msra.mxu0 0.0
    %5504 = vmatprep.subr.mxu0 0.0
    %5505 = vmatpush2.msra.mxu0 0.0
    %5506 = vmatprep.subr.mxu0 0.0
    %5507 = vmatpush2.msra.mxu0 0.0
    %5508 = vmatprep.subr.mxu0 0.0
    %5509 = vmatpush2.msra.mxu0 0.0
    %5510 = vmatprep.subr.mxu0 0.0
    %5511 = vmatpush2.msra.mxu0 0.0
    %5512 = vmatprep.subr.mxu0 0.0
    %5513 = vmatpush2.msra.mxu0 0.0
    %5514 = vmatprep.subr.mxu0 0.0
    %5515 = vmatpush2.msra.mxu0 0.0
    %5516 = vmatprep.subr.mxu0 0.0
    %5517 = vmatpush2.msra.mxu0 0.0
    %5518 = vmatprep.subr.mxu0 0.0
    %5519 = vmatpush2.msra.mxu0 0.0
    %5520 = vmatprep.subr.mxu0 0.0
    %5521 = vmatpush2.msra.mxu0 0.0
    %5522 = vmatprep.subr.mxu0 0.0
    %5523 = vmatpush2.msra.mxu0 0.0
    %5524 = vmatprep.subr.mxu0 0.0
    %5525 = vmatpush2.msra.mxu0 0.0
    %5526 = vmatprep.mubr.f32.mxu0 0.0
    %5527 = vmatmul.mubr.f32.gmra.mxu0 %v5457
    %v5528 = vpop.f32.mrf.mxu0
    %v5529 = vadd.f32 0.0, %v5528
    %v5530 = vpop.f32.mrf.mxu0
    %5531 = vmatprep.mubr.f32.mxu0 0.0
    %5532 = vmatmul.mubr.f32.gmra.mxu0 %v5460
    %v5533 = vpop.f32.mrf.mxu0
    %v5534 = vadd.f32 0.0, %v5533
    %v5535 = vpop.f32.mrf.mxu0
    %5536 = vdwg.mxu0
    %v5538 = vsel %vm1152, %v5529, 0
    %v5541 = vsel %vm1152, %v5534, 0
    %5543 = vmatprep.subr.mxu0 0.0
    %5544 = vmatpush1.msra.mxu0 0.0
    %5545 = vmatprep.subr.mxu0 0.0
    %5546 = vmatpush1.msra.mxu0 0.0
    %5547 = vmatprep.subr.mxu0 0.0
    %5548 = vmatpush1.msra.mxu0 0.0
    %5549 = vmatprep.subr.mxu0 0.0
    %5550 = vmatpush1.msra.mxu0 0.0
    %5551 = vmatprep.subr.mxu0 0.0
    %5552 = vmatpush1.msra.mxu0 0.0
    %5553 = vmatprep.subr.mxu0 0.0
    %5554 = vmatpush1.msra.mxu0 0.0
    %5555 = vmatprep.subr.mxu0 0.0
    %5556 = vmatpush1.msra.mxu0 0.0
    %5557 = vmatprep.subr.mxu0 0.0
    %5558 = vmatpush1.msra.mxu0 0.0
    %5559 = vmatprep.subr.mxu0 0.0
    %5560 = vmatpush1.msra.mxu0 0.0
    %5561 = vmatprep.subr.mxu0 0.0
    %5562 = vmatpush1.msra.mxu0 0.0
    %5563 = vmatprep.subr.mxu0 0.0
    %5564 = vmatpush1.msra.mxu0 0.0
    %5565 = vmatprep.subr.mxu0 0.0
    %5566 = vmatpush1.msra.mxu0 0.0
    %5567 = vmatprep.subr.mxu0 0.0
    %5568 = vmatpush1.msra.mxu0 0.0
    %5569 = vmatprep.subr.mxu0 0.0
    %5570 = vmatpush1.msra.mxu0 0.0
    %5571 = vmatprep.subr.mxu0 0.0
    %5572 = vmatpush1.msra.mxu0 0.0
    %5573 = vmatprep.subr.mxu0 0.0
    %5574 = vmatpush1.msra.mxu0 %v4233
    %5575 = vmatprep.subr.mxu0 0.0
    %5576 = vmatpush2.msra.mxu0 0.0
    %5577 = vmatprep.subr.mxu0 0.0
    %5578 = vmatpush2.msra.mxu0 0.0
    %5579 = vmatprep.subr.mxu0 0.0
    %5580 = vmatpush2.msra.mxu0 0.0
    %5581 = vmatprep.subr.mxu0 0.0
    %5582 = vmatpush2.msra.mxu0 0.0
    %5583 = vmatprep.subr.mxu0 0.0
    %5584 = vmatpush2.msra.mxu0 0.0
    %5585 = vmatprep.subr.mxu0 0.0
    %5586 = vmatpush2.msra.mxu0 0.0
    %5587 = vmatprep.subr.mxu0 0.0
    %5588 = vmatpush2.msra.mxu0 0.0
    %5589 = vmatprep.subr.mxu0 0.0
    %5590 = vmatpush2.msra.mxu0 0.0
    %5591 = vmatprep.subr.mxu0 0.0
    %5592 = vmatpush2.msra.mxu0 0.0
    %5593 = vmatprep.subr.mxu0 0.0
    %5594 = vmatpush2.msra.mxu0 0.0
    %5595 = vmatprep.subr.mxu0 0.0
    %5596 = vmatpush2.msra.mxu0 0.0
    %5597 = vmatprep.subr.mxu0 0.0
    %5598 = vmatpush2.msra.mxu0 0.0
    %5599 = vmatprep.subr.mxu0 0.0
    %5600 = vmatpush2.msra.mxu0 0.0
    %5601 = vmatprep.subr.mxu0 0.0
    %5602 = vmatpush2.msra.mxu0 0.0
    %5603 = vmatprep.subr.mxu0 0.0
    %5604 = vmatpush2.msra.mxu0 0.0
    %5605 = vmatprep.subr.mxu0 0.0
    %5606 = vmatpush2.msra.mxu0 0.0
    %5607 = vmatprep.mubr.f32.mxu0 0.0
    %5608 = vmatmul.mubr.f32.gmra.mxu0 %v5538
    %v5609 = vpop.f32.mrf.mxu0
    %v5610 = vadd.f32 0.0, %v5609
    %v5611 = vpop.f32.mrf.mxu0
    %5612 = vmatprep.mubr.f32.mxu0 0.0
    %5613 = vmatmul.mubr.f32.gmra.mxu0 %v5541
    %v5614 = vpop.f32.mrf.mxu0
    %v5615 = vadd.f32 0.0, %v5614
    %v5616 = vpop.f32.mrf.mxu0
    %5617 = vdwg.mxu0
    %v5618 = vadd.f32 %v5331, %v5610
    %v5619 = vadd.f32 %v5332, %v5615
    %v5621 = vlaneseq
    %v5622 = vshrl.u32 %v5621, 7
    %v5623 = vsub.s32 0, %v5622
    %v5624 = vrot.slane %v4234, %v5623
    %v5626 = vadd.f32 %v5618, %v5624
    %v5627 = vadd.f32 %v5619, %v5624
    %v5628 = vsel %vm859, %v5626, -inf
    %v5629 = vrot.slane %v5628, 4
    %v5630 = vmax.f32 %v5628, %v5629
    %v5631 = vrot.slane %v5630, 2
    %v5632 = vmax.f32 %v5630, %v5631
    %v5633 = vrot.slane %v5632, 1
    %v5634 = vmax.f32 %v5632, %v5633
    %v5635 = vsel %vm859, %v5627, -inf
    %v5636 = vrot.slane %v5635, 4
    %v5637 = vmax.f32 %v5635, %v5636
    %v5638 = vrot.slane %v5637, 2
    %v5639 = vmax.f32 %v5637, %v5638
    %v5640 = vrot.slane %v5639, 1
    %v5641 = vmax.f32 %v5639, %v5640
    %vm5642 = vcmask 1040384
    %v5643 = vsel %vm5642, %v5634, %v5641
    %v5644 = vld [vmem:[#allocation62] sm:$0xff]
    %v5645 = vld [vmem:[#allocation62 + $0x8] sm:$0xff]
    %v5646 = vld [vmem:[#allocation62 + $0x10] sm:$0xff]
    %v5647 = vld [vmem:[#allocation62 + $0x18] sm:$0xff]
    %v5648 = vld [vmem:[%s93] sm:$0x1]
    %v5649 = vld [vmem:[%s95] sm:$0xff]
    %v5650 = vld [vmem:[%s95 + $0x8] sm:$0xff]
    %v5651 = vld [vmem:[%s95 + $0x10] sm:$0xff]
    %v5652 = vld [vmem:[%s95 + $0x18] sm:$0xff]
    %v5653 = vld [vmem:[%s95 + $0x20] sm:$0xff]
    %v5654 = vld [vmem:[%s95 + $0x28] sm:$0xff]
    %v5655 = vld [vmem:[%s95 + $0x30] sm:$0xff]
    %v5656 = vld [vmem:[%s95 + $0x38] sm:$0xff]
    %v5657 = vld [vmem:[%s95 + $0x40] sm:$0xff]
    %v5658 = vld [vmem:[%s95 + $0x48] sm:$0xff]
    %v5659 = vld [vmem:[%s95 + $0x50] sm:$0xff]
    %v5660 = vld [vmem:[%s95 + $0x58] sm:$0xff]
    %v5661 = vld [vmem:[%s95 + $0x60] sm:$0xff]
    %v5662 = vld [vmem:[%s95 + $0x68] sm:$0xff]
    %v5663 = vld [vmem:[%s95 + $0x70] sm:$0xff]
    %v5664 = vld [vmem:[%s95 + $0x78] sm:$0xff]
    %v5665 = vld [vmem:[%s97] sm:$0x1]
    %v5666 = vld [vmem:[%s99] sm:$0xff]
    %v5667 = vld [vmem:[%s99 + $0x8] sm:$0xff]
    %v5668 = vld [vmem:[%s99 + $0x10] sm:$0xff]
    %v5669 = vld [vmem:[%s99 + $0x18] sm:$0xff]
    %v5670 = vld [vmem:[%s99 + $0x20] sm:$0xff]
    %v5671 = vld [vmem:[%s99 + $0x28] sm:$0xff]
    %v5672 = vld [vmem:[%s99 + $0x30] sm:$0xff]
    %v5673 = vld [vmem:[%s99 + $0x38] sm:$0xff]
    %v5674 = vld [vmem:[%s99 + $0x40] sm:$0xff]
    %v5675 = vld [vmem:[%s99 + $0x48] sm:$0xff]
    %v5676 = vld [vmem:[%s99 + $0x50] sm:$0xff]
    %v5677 = vld [vmem:[%s99 + $0x58] sm:$0xff]
    %v5678 = vld [vmem:[%s99 + $0x60] sm:$0xff]
    %v5679 = vld [vmem:[%s99 + $0x68] sm:$0xff]
    %v5680 = vld [vmem:[%s99 + $0x70] sm:$0xff]
    %v5681 = vld [vmem:[%s99 + $0x78] sm:$0xff]
    %v5682 = vld [vmem:[%s101] sm:$0x1]
    %v5683 = vld [vmem:[%s103] sm:$0xff]
    %v5684 = vld [vmem:[%s103 + $0x8] sm:$0xff]
    %v5685 = vld [vmem:[%s103 + $0x10] sm:$0xff]
    %v5686 = vld [vmem:[%s103 + $0x18] sm:$0xff]
    %v5687 = vld [vmem:[%s103 + $0x20] sm:$0xff]
    %v5688 = vld [vmem:[%s103 + $0x28] sm:$0xff]
    %v5689 = vld [vmem:[%s103 + $0x30] sm:$0xff]
    %v5690 = vld [vmem:[%s103 + $0x38] sm:$0xff]
    %v5691 = vld [vmem:[%s103 + $0x40] sm:$0xff]
    %v5692 = vld [vmem:[%s103 + $0x48] sm:$0xff]
    %v5693 = vld [vmem:[%s103 + $0x50] sm:$0xff]
    %v5694 = vld [vmem:[%s103 + $0x58] sm:$0xff]
    %v5695 = vld [vmem:[%s103 + $0x60] sm:$0xff]
    %v5696 = vld [vmem:[%s103 + $0x68] sm:$0xff]
    %v5697 = vld [vmem:[%s103 + $0x70] sm:$0xff]
    %v5698 = vld [vmem:[%s103 + $0x78] sm:$0xff]
    %v5699 = vld [vmem:[%s105] sm:$0x1]
    %v5700 = vld [vmem:[%s107] sm:$0xff]
    %v5701 = vld [vmem:[%s107 + $0x8] sm:$0xff]
    %v5702 = vld [vmem:[%s107 + $0x10] sm:$0xff]
    %v5703 = vld [vmem:[%s107 + $0x18] sm:$0xff]
    %v5704 = vld [vmem:[%s107 + $0x20] sm:$0xff]
    %v5705 = vld [vmem:[%s107 + $0x28] sm:$0xff]
    %v5706 = vld [vmem:[%s107 + $0x30] sm:$0xff]
    %v5707 = vld [vmem:[%s107 + $0x38] sm:$0xff]
    %v5708 = vld [vmem:[#allocation2] sm:$0x1]
    %v5710 = vlaneseq
    %v5711 = vshrl.u32 %v5710, 7
    %v5712 = vsub.s32 0, %v5711
    %v5713 = vrot.slane %v5648, %v5712
    %v5716 = vsel %vm859, %v5643, 0
    %5718 = vmatprep.subr.mxu0 0.0
    %5719 = vmatpush1.msra.mxu0 0.0
    %5720 = vmatprep.subr.mxu0 0.0
    %5721 = vmatpush1.msra.mxu0 0.0
    %5722 = vmatprep.subr.mxu0 0.0
    %5723 = vmatpush1.msra.mxu0 0.0
    %5724 = vmatprep.subr.mxu0 0.0
    %5725 = vmatpush1.msra.mxu0 0.0
    %5726 = vmatprep.subr.mxu0 0.0
    %5727 = vmatpush1.msra.mxu0 0.0
    %5728 = vmatprep.subr.mxu0 0.0
    %5729 = vmatpush1.msra.mxu0 0.0
    %5730 = vmatprep.subr.mxu0 0.0
    %5731 = vmatpush1.msra.mxu0 0.0
    %5732 = vmatprep.subr.mxu0 0.0
    %5733 = vmatpush1.msra.mxu0 0.0
    %5734 = vmatprep.subr.mxu0 0.0
    %5735 = vmatpush1.msra.mxu0 0.0
    %5736 = vmatprep.subr.mxu0 0.0
    %5737 = vmatpush1.msra.mxu0 0.0
    %5738 = vmatprep.subr.mxu0 0.0
    %5739 = vmatpush1.msra.mxu0 0.0
    %5740 = vmatprep.subr.mxu0 0.0
    %5741 = vmatpush1.msra.mxu0 0.0
    %5742 = vmatprep.subr.mxu0 0.0
    %5743 = vmatpush1.msra.mxu0 %v5647
    %5744 = vmatprep.subr.mxu0 0.0
    %5745 = vmatpush1.msra.mxu0 %v5646
    %5746 = vmatprep.subr.mxu0 0.0
    %5747 = vmatpush1.msra.mxu0 %v5645
    %5748 = vmatprep.subr.mxu0 0.0
    %5749 = vmatpush1.msra.mxu0 %v5644
    %5750 = vmatprep.subr.mxu0 0.0
    %5751 = vmatpush2.msra.mxu0 0.0
    %5752 = vmatprep.subr.mxu0 0.0
    %5753 = vmatpush2.msra.mxu0 0.0
    %5754 = vmatprep.subr.mxu0 0.0
    %5755 = vmatpush2.msra.mxu0 0.0
    %5756 = vmatprep.subr.mxu0 0.0
    %5757 = vmatpush2.msra.mxu0 0.0
    %5758 = vmatprep.subr.mxu0 0.0
    %5759 = vmatpush2.msra.mxu0 0.0
    %5760 = vmatprep.subr.mxu0 0.0
    %5761 = vmatpush2.msra.mxu0 0.0
    %5762 = vmatprep.subr.mxu0 0.0
    %5763 = vmatpush2.msra.mxu0 0.0
    %5764 = vmatprep.subr.mxu0 0.0
    %5765 = vmatpush2.msra.mxu0 0.0
    %5766 = vmatprep.subr.mxu0 0.0
    %5767 = vmatpush2.msra.mxu0 0.0
    %5768 = vmatprep.subr.mxu0 0.0
    %5769 = vmatpush2.msra.mxu0 0.0
    %5770 = vmatprep.subr.mxu0 0.0
    %5771 = vmatpush2.msra.mxu0 0.0
    %5772 = vmatprep.subr.mxu0 0.0
    %5773 = vmatpush2.msra.mxu0 0.0
    %5774 = vmatprep.subr.mxu0 0.0
    %5775 = vmatpush2.msra.mxu0 0.0
    %5776 = vmatprep.subr.mxu0 0.0
    %5777 = vmatpush2.msra.mxu0 0.0
    %5778 = vmatprep.subr.mxu0 0.0
    %5779 = vmatpush2.msra.mxu0 0.0
    %5780 = vmatprep.subr.mxu0 0.0
    %5781 = vmatpush2.msra.mxu0 0.0
    %5782 = vmatprep.mubr.f32.mxu0 0.0
    %5783 = vmatmul.mubr.f32.gmra.mxu0 %v5716
    %v5784 = vpop.f32.mrf.mxu0
    %v5785 = vadd.f32 %v5713, %v5784
    %v5786 = vpop.f32.mrf.mxu0
    %5787 = vdwg.mxu0
    %vm5788 = vcmp.gt.f32.partialorder %v5785, 0.0
    %v5789 = vmul.f32 %v5785, 0.01
    %v5790 = vsel %vm5788, %v5785, %v5789
    %v5792 = vlaneseq
    %v5793 = vshrl.u32 %v5792, 7
    %v5794 = vsub.s32 0, %v5793
    %v5795 = vrot.slane %v5665, %v5794
    %5797 = vmatprep.subr.mxu0 0.0
    %5798 = vmatpush1.msra.mxu0 %v5664
    %5799 = vmatprep.subr.mxu0 0.0
    %5800 = vmatpush1.msra.mxu0 %v5663
    %5801 = vmatprep.subr.mxu0 0.0
    %5802 = vmatpush1.msra.mxu0 %v5662
    %5803 = vmatprep.subr.mxu0 0.0
    %5804 = vmatpush1.msra.mxu0 %v5661
    %5805 = vmatprep.subr.mxu0 0.0
    %5806 = vmatpush1.msra.mxu0 %v5660
    %5807 = vmatprep.subr.mxu0 0.0
    %5808 = vmatpush1.msra.mxu0 %v5659
    %5809 = vmatprep.subr.mxu0 0.0
    %5810 = vmatpush1.msra.mxu0 %v5658
    %5811 = vmatprep.subr.mxu0 0.0
    %5812 = vmatpush1.msra.mxu0 %v5657
    %5813 = vmatprep.subr.mxu0 0.0
    %5814 = vmatpush1.msra.mxu0 %v5656
    %5815 = vmatprep.subr.mxu0 0.0
    %5816 = vmatpush1.msra.mxu0 %v5655
    %5817 = vmatprep.subr.mxu0 0.0
    %5818 = vmatpush1.msra.mxu0 %v5654
    %5819 = vmatprep.subr.mxu0 0.0
    %5820 = vmatpush1.msra.mxu0 %v5653
    %5821 = vmatprep.subr.mxu0 0.0
    %5822 = vmatpush1.msra.mxu0 %v5652
    %5823 = vmatprep.subr.mxu0 0.0
    %5824 = vmatpush1.msra.mxu0 %v5651
    %5825 = vmatprep.subr.mxu0 0.0
    %5826 = vmatpush1.msra.mxu0 %v5650
    %5827 = vmatprep.subr.mxu0 0.0
    %5828 = vmatpush1.msra.mxu0 %v5649
    %5829 = vmatprep.subr.mxu0 0.0
    %5830 = vmatpush2.msra.mxu0 0.0
    %5831 = vmatprep.subr.mxu0 0.0
    %5832 = vmatpush2.msra.mxu0 0.0
    %5833 = vmatprep.subr.mxu0 0.0
    %5834 = vmatpush2.msra.mxu0 0.0
    %5835 = vmatprep.subr.mxu0 0.0
    %5836 = vmatpush2.msra.mxu0 0.0
    %5837 = vmatprep.subr.mxu0 0.0
    %5838 = vmatpush2.msra.mxu0 0.0
    %5839 = vmatprep.subr.mxu0 0.0
    %5840 = vmatpush2.msra.mxu0 0.0
    %5841 = vmatprep.subr.mxu0 0.0
    %5842 = vmatpush2.msra.mxu0 0.0
    %5843 = vmatprep.subr.mxu0 0.0
    %5844 = vmatpush2.msra.mxu0 0.0
    %5845 = vmatprep.subr.mxu0 0.0
    %5846 = vmatpush2.msra.mxu0 0.0
    %5847 = vmatprep.subr.mxu0 0.0
    %5848 = vmatpush2.msra.mxu0 0.0
    %5849 = vmatprep.subr.mxu0 0.0
    %5850 = vmatpush2.msra.mxu0 0.0
    %5851 = vmatprep.subr.mxu0 0.0
    %5852 = vmatpush2.msra.mxu0 0.0
    %5853 = vmatprep.subr.mxu0 0.0
    %5854 = vmatpush2.msra.mxu0 0.0
    %5855 = vmatprep.subr.mxu0 0.0
    %5856 = vmatpush2.msra.mxu0 0.0
    %5857 = vmatprep.subr.mxu0 0.0
    %5858 = vmatpush2.msra.mxu0 0.0
    %5859 = vmatprep.subr.mxu0 0.0
    %5860 = vmatpush2.msra.mxu0 0.0
    %5861 = vmatprep.mubr.f32.mxu0 0.0
    %5862 = vmatmul.mubr.f32.gmra.mxu0 %v5790
    %v5863 = vpop.f32.mrf.mxu0
    %v5864 = vadd.f32 %v5795, %v5863
    %v5865 = vpop.f32.mrf.mxu0
    %5866 = vdwg.mxu0
    %v5867 = vmax.f32 %v5864, 0.0
    %5868 = vmatprep.subr.mxu0 0.0
    %5869 = vmatpush1.msra.mxu0 %v5681
    %5870 = vmatprep.subr.mxu0 0.0
    %5871 = vmatpush1.msra.mxu0 %v5680
    %5872 = vmatprep.subr.mxu0 0.0
    %5873 = vmatpush1.msra.mxu0 %v5679
    %5874 = vmatprep.subr.mxu0 0.0
    %5875 = vmatpush1.msra.mxu0 %v5678
    %5876 = vmatprep.subr.mxu0 0.0
    %5877 = vmatpush1.msra.mxu0 %v5677
    %5878 = vmatprep.subr.mxu0 0.0
    %5879 = vmatpush1.msra.mxu0 %v5676
    %5880 = vmatprep.subr.mxu0 0.0
    %5881 = vmatpush1.msra.mxu0 %v5675
    %5882 = vmatprep.subr.mxu0 0.0
    %5883 = vmatpush1.msra.mxu0 %v5674
    %5884 = vmatprep.subr.mxu0 0.0
    %5885 = vmatpush1.msra.mxu0 %v5673
    %5886 = vmatprep.subr.mxu0 0.0
    %5887 = vmatpush1.msra.mxu0 %v5672
    %5888 = vmatprep.subr.mxu0 0.0
    %5889 = vmatpush1.msra.mxu0 %v5671
    %5890 = vmatprep.subr.mxu0 0.0
    %5891 = vmatpush1.msra.mxu0 %v5670
    %5892 = vmatprep.subr.mxu0 0.0
    %5893 = vmatpush1.msra.mxu0 %v5669
    %5894 = vmatprep.subr.mxu0 0.0
    %5895 = vmatpush1.msra.mxu0 %v5668
    %5896 = vmatprep.subr.mxu0 0.0
    %5897 = vmatpush1.msra.mxu0 %v5667
    %5898 = vmatprep.subr.mxu0 0.0
    %5899 = vmatpush1.msra.mxu0 %v5666
    %5900 = vmatprep.subr.mxu0 0.0
    %5901 = vmatpush2.msra.mxu0 0.0
    %5902 = vmatprep.subr.mxu0 0.0
    %5903 = vmatpush2.msra.mxu0 0.0
    %5904 = vmatprep.subr.mxu0 0.0
    %5905 = vmatpush2.msra.mxu0 0.0
    %5906 = vmatprep.subr.mxu0 0.0
    %5907 = vmatpush2.msra.mxu0 0.0
    %5908 = vmatprep.subr.mxu0 0.0
    %5909 = vmatpush2.msra.mxu0 0.0
    %5910 = vmatprep.subr.mxu0 0.0
    %5911 = vmatpush2.msra.mxu0 0.0
    %5912 = vmatprep.subr.mxu0 0.0
    %5913 = vmatpush2.msra.mxu0 0.0
    %5914 = vmatprep.subr.mxu0 0.0
    %5915 = vmatpush2.msra.mxu0 0.0
    %5916 = vmatprep.subr.mxu0 0.0
    %5917 = vmatpush2.msra.mxu0 0.0
    %5918 = vmatprep.subr.mxu0 0.0
    %5919 = vmatpush2.msra.mxu0 0.0
    %5920 = vmatprep.subr.mxu0 0.0
    %5921 = vmatpush2.msra.mxu0 0.0
    %5922 = vmatprep.subr.mxu0 0.0
    %5923 = vmatpush2.msra.mxu0 0.0
    %5924 = vmatprep.subr.mxu0 0.0
    %5925 = vmatpush2.msra.mxu0 0.0
    %5926 = vmatprep.subr.mxu0 0.0
    %5927 = vmatpush2.msra.mxu0 0.0
    %5928 = vmatprep.subr.mxu0 0.0
    %5929 = vmatpush2.msra.mxu0 0.0
    %5930 = vmatprep.subr.mxu0 0.0
    %5931 = vmatpush2.msra.mxu0 0.0
    %5932 = vmatprep.mubr.f32.mxu0 0.0
    %5933 = vmatmul.mubr.f32.gmra.mxu0 %v5867
    %v5934 = vpop.f32.mrf.mxu0
    %v5935 = vadd.f32 0.0, %v5934
    %v5936 = vpop.f32.mrf.mxu0
    %5937 = vdwg.mxu0
    %v5938 = vadd.f32 %v5790, %v5935
    %v5940 = vlaneseq
    %v5941 = vshrl.u32 %v5940, 7
    %v5942 = vsub.s32 0, %v5941
    %v5943 = vrot.slane %v5682, %v5942
    %v5945 = vadd.f32 %v5938, %v5943
    %v5947 = vlaneseq
    %v5948 = vshrl.u32 %v5947, 7
    %v5949 = vsub.s32 0, %v5948
    %v5950 = vrot.slane %v5699, %v5949
    %5952 = vmatprep.subr.mxu0 0.0
    %5953 = vmatpush1.msra.mxu0 %v5698
    %5954 = vmatprep.subr.mxu0 0.0
    %5955 = vmatpush1.msra.mxu0 %v5697
    %5956 = vmatprep.subr.mxu0 0.0
    %5957 = vmatpush1.msra.mxu0 %v5696
    %5958 = vmatprep.subr.mxu0 0.0
    %5959 = vmatpush1.msra.mxu0 %v5695
    %5960 = vmatprep.subr.mxu0 0.0
    %5961 = vmatpush1.msra.mxu0 %v5694
    %5962 = vmatprep.subr.mxu0 0.0
    %5963 = vmatpush1.msra.mxu0 %v5693
    %5964 = vmatprep.subr.mxu0 0.0
    %5965 = vmatpush1.msra.mxu0 %v5692
    %5966 = vmatprep.subr.mxu0 0.0
    %5967 = vmatpush1.msra.mxu0 %v5691
    %5968 = vmatprep.subr.mxu0 0.0
    %5969 = vmatpush1.msra.mxu0 %v5690
    %5970 = vmatprep.subr.mxu0 0.0
    %5971 = vmatpush1.msra.mxu0 %v5689
    %5972 = vmatprep.subr.mxu0 0.0
    %5973 = vmatpush1.msra.mxu0 %v5688
    %5974 = vmatprep.subr.mxu0 0.0
    %5975 = vmatpush1.msra.mxu0 %v5687
    %5976 = vmatprep.subr.mxu0 0.0
    %5977 = vmatpush1.msra.mxu0 %v5686
    %5978 = vmatprep.subr.mxu0 0.0
    %5979 = vmatpush1.msra.mxu0 %v5685
    %5980 = vmatprep.subr.mxu0 0.0
    %5981 = vmatpush1.msra.mxu0 %v5684
    %5982 = vmatprep.subr.mxu0 0.0
    %5983 = vmatpush1.msra.mxu0 %v5683
    %5984 = vmatprep.subr.mxu0 0.0
    %5985 = vmatpush2.msra.mxu0 0.0
    %5986 = vmatprep.subr.mxu0 0.0
    %5987 = vmatpush2.msra.mxu0 0.0
    %5988 = vmatprep.subr.mxu0 0.0
    %5989 = vmatpush2.msra.mxu0 0.0
    %5990 = vmatprep.subr.mxu0 0.0
    %5991 = vmatpush2.msra.mxu0 0.0
    %5992 = vmatprep.subr.mxu0 0.0
    %5993 = vmatpush2.msra.mxu0 0.0
    %5994 = vmatprep.subr.mxu0 0.0
    %5995 = vmatpush2.msra.mxu0 0.0
    %5996 = vmatprep.subr.mxu0 0.0
    %5997 = vmatpush2.msra.mxu0 0.0
    %5998 = vmatprep.subr.mxu0 0.0
    %5999 = vmatpush2.msra.mxu0 0.0
    %6000 = vmatprep.subr.mxu0 0.0
    %6001 = vmatpush2.msra.mxu0 0.0
    %6002 = vmatprep.subr.mxu0 0.0
    %6003 = vmatpush2.msra.mxu0 0.0
    %6004 = vmatprep.subr.mxu0 0.0
    %6005 = vmatpush2.msra.mxu0 0.0
    %6006 = vmatprep.subr.mxu0 0.0
    %6007 = vmatpush2.msra.mxu0 0.0
    %6008 = vmatprep.subr.mxu0 0.0
    %6009 = vmatpush2.msra.mxu0 0.0
    %6010 = vmatprep.subr.mxu0 0.0
    %6011 = vmatpush2.msra.mxu0 0.0
    %6012 = vmatprep.subr.mxu0 0.0
    %6013 = vmatpush2.msra.mxu0 0.0
    %6014 = vmatprep.subr.mxu0 0.0
    %6015 = vmatpush2.msra.mxu0 0.0
    %6016 = vmatprep.mubr.f32.mxu0 0.0
    %6017 = vmatmul.mubr.f32.gmra.mxu0 %v5945
    %v6018 = vpop.f32.mrf.mxu0
    %v6019 = vadd.f32 %v5950, %v6018
    %v6020 = vpop.f32.mrf.mxu0
    %6021 = vdwg.mxu0
    %vm6022 = vcmp.gt.f32.partialorder %v6019, 0.0
    %v6023 = vmul.f32 %v6019, 0.01
    %v6024 = vsel %vm6022, %v6019, %v6023
    %v6026 = vlaneseq
    %v6027 = vshrl.u32 %v6026, 7
    %v6028 = vsub.s32 0, %v6027
    %v6029 = vrot.slane %v5708, %v6028
    %vm6031 = vcmask 523264
    %v6033 = vsel %vm6031, %v6024, 0
    %6035 = vmatprep.subr.mxu0 0.0
    %6036 = vmatpush1.msra.mxu0 0.0
    %6037 = vmatprep.subr.mxu0 0.0
    %6038 = vmatpush1.msra.mxu0 0.0
    %6039 = vmatprep.subr.mxu0 0.0
    %6040 = vmatpush1.msra.mxu0 0.0
    %6041 = vmatprep.subr.mxu0 0.0
    %6042 = vmatpush1.msra.mxu0 0.0
    %6043 = vmatprep.subr.mxu0 0.0
    %6044 = vmatpush1.msra.mxu0 0.0
    %6045 = vmatprep.subr.mxu0 0.0
    %6046 = vmatpush1.msra.mxu0 0.0
    %6047 = vmatprep.subr.mxu0 0.0
    %6048 = vmatpush1.msra.mxu0 0.0
    %6049 = vmatprep.subr.mxu0 0.0
    %6050 = vmatpush1.msra.mxu0 0.0
    %6051 = vmatprep.subr.mxu0 0.0
    %6052 = vmatpush1.msra.mxu0 %v5707
    %6053 = vmatprep.subr.mxu0 0.0
    %6054 = vmatpush1.msra.mxu0 %v5706
    %6055 = vmatprep.subr.mxu0 0.0
    %6056 = vmatpush1.msra.mxu0 %v5705
    %6057 = vmatprep.subr.mxu0 0.0
    %6058 = vmatpush1.msra.mxu0 %v5704
    %6059 = vmatprep.subr.mxu0 0.0
    %6060 = vmatpush1.msra.mxu0 %v5703
    %6061 = vmatprep.subr.mxu0 0.0
    %6062 = vmatpush1.msra.mxu0 %v5702
    %6063 = vmatprep.subr.mxu0 0.0
    %6064 = vmatpush1.msra.mxu0 %v5701
    %6065 = vmatprep.subr.mxu0 0.0
    %6066 = vmatpush1.msra.mxu0 %v5700
    %6067 = vmatprep.subr.mxu0 0.0
    %6068 = vmatpush2.msra.mxu0 0.0
    %6069 = vmatprep.subr.mxu0 0.0
    %6070 = vmatpush2.msra.mxu0 0.0
    %6071 = vmatprep.subr.mxu0 0.0
    %6072 = vmatpush2.msra.mxu0 0.0
    %6073 = vmatprep.subr.mxu0 0.0
    %6074 = vmatpush2.msra.mxu0 0.0
    %6075 = vmatprep.subr.mxu0 0.0
    %6076 = vmatpush2.msra.mxu0 0.0
    %6077 = vmatprep.subr.mxu0 0.0
    %6078 = vmatpush2.msra.mxu0 0.0
    %6079 = vmatprep.subr.mxu0 0.0
    %6080 = vmatpush2.msra.mxu0 0.0
    %6081 = vmatprep.subr.mxu0 0.0
    %6082 = vmatpush2.msra.mxu0 0.0
    %6083 = vmatprep.subr.mxu0 0.0
    %6084 = vmatpush2.msra.mxu0 0.0
    %6085 = vmatprep.subr.mxu0 0.0
    %6086 = vmatpush2.msra.mxu0 0.0
    %6087 = vmatprep.subr.mxu0 0.0
    %6088 = vmatpush2.msra.mxu0 0.0
    %6089 = vmatprep.subr.mxu0 0.0
    %6090 = vmatpush2.msra.mxu0 0.0
    %6091 = vmatprep.subr.mxu0 0.0
    %6092 = vmatpush2.msra.mxu0 0.0
    %6093 = vmatprep.subr.mxu0 0.0
    %6094 = vmatpush2.msra.mxu0 0.0
    %6095 = vmatprep.subr.mxu0 0.0
    %6096 = vmatpush2.msra.mxu0 0.0
    %6097 = vmatprep.subr.mxu0 0.0
    %6098 = vmatpush2.msra.mxu0 0.0
    %6099 = vmatprep.mubr.f32.mxu0 0.0
    %6100 = vmatmul.mubr.f32.gmra.mxu0 %v6033
    %v6101 = vpop.f32.mrf.mxu0
    %v6102 = vadd.f32 %v6029, %v6101
    %v6103 = vpop.f32.mrf.mxu0
    %6104 = vdwg.mxu0
    %vm6105 = vcmask 1024
    %6106 = vst.msk [vmem:[%s111] sm:$0x3] %vm6105, %v6102
    // Predicated region
    $region382: #{tpu_custom_call.1} parent=1 // pred_check
      _
    $region383: #{tpu_custom_call.1} parent=1 // pred_check_branch
      %6108 = sbr.rel (0) target = $region385
    $region384: #{tpu_custom_call.1} parent=1 // pred_region
      _
    $region385: #{tpu_custom_call.1} parent=1 // pred_fallthru
      _
    // Predicated region
    $region386: #{tpu_custom_call.1} parent=1 // pred_check
      _
    $region387: #{tpu_custom_call.1} parent=1 // pred_check_branch
      %6110 = sbr.rel (0) target = $region389
    $region388: #{tpu_custom_call.1} parent=1 // pred_region
      _
    $region389: #{tpu_custom_call.1} parent=1 // pred_fallthru
      _
    %6111 = vsyncpa [#allocation4], 1
    %6112 = vsyncpa [#allocation6], 1
    %6113 = vsyncpa [#allocation9], 1
    %6114 = vsyncpa [#allocation12], 1
    %6115 = vsyncpa [#allocation15], 1
    %6116 = vsyncpa [#allocation18], 1
    %6117 = vsyncpa [#allocation21], 1
    %6118 = vsyncpa [#allocation24], 1
    %6119 = vsyncpa [#allocation27], 1
    %6120 = vsyncpa [#allocation30], 1
    %6121 = vsyncpa [#allocation33], 1
    %6122 = vsyncpa [#allocation36], 1
    %6123 = vsyncpa [#allocation39], 1
    %6124 = vsyncpa [#allocation42], 1
    %6125 = vsyncpa [#allocation45], 1
    %6126 = vsyncpa [#allocation48], 1
    %6127 = vsyncpa [#allocation51], 1
    %6128 = vsyncpa [#allocation54], 1
    %6129 = vsyncpa [#allocation57], 1
    %6130 = vsyncpa [#allocation60], 1
    %6131 = vsyncpa [#allocation63], 1

</llo_original>
